<compile_context>
chip_gen: v7x
topology: tpu7x:2x2x1
jax: 0.10.0
libtpu: 0.0.40
codegen_flags: <defaults>
</compile_context>

<pallas_src>
import functools

import jax
import jax.numpy as jnp
from jax.experimental import pallas as pl
from jax.experimental.pallas import tpu as pltpu


_TARGET_BLOCK_BYTES = 4 * 1024 * 1024    # ~4 MiB/block -> 16 MiB VMEM with in+out double-buffered
_VMEM_LIMIT_BYTES = 32 * 1024 * 1024     # explicit: above v5e's 16 MiB scoped default, under v7x physical
_SMALL_INPUT_BYTES = 256 * 1024          # below this, plain jnp (fused elementwise) wins
_PREFERRED_LANES = (2048, 1024, 512, 256, 128)


def _h_sigmoid_kernel(x_ref, o_ref, *, scale):
    x = x_ref[...]
    # Compute natively in bf16/f32 (VALU has huge slack either way); upcast others to f32.
    if x.dtype not in (jnp.float32, jnp.bfloat16):
        x = x.astype(jnp.float32)
    y = jnp.clip(x + 3.0, 0.0, 6.0) * scale   # scale = h_max/6, baked at trace time
    o_ref[...] = y.astype(o_ref.dtype)


def _jnp_h_sigmoid(x, scale, out_dtype):
    # Mirrors the kernel's dtype handling so fallback results match the kernel path.
    if x.dtype not in (jnp.float32, jnp.bfloat16):
        x = x.astype(jnp.float32)
    return (jnp.clip(x + 3.0, 0.0, 6.0) * scale).astype(out_dtype)


def _round_up(a, b):
    return -(-a // b) * b


def _choose_lanes(n):
    """Widest lane-dense view of a flat, 128-divisible length (prefer sublane-friendly rows)."""
    for lanes in _PREFERRED_LANES:
        if n % (lanes * 8) == 0:
            return lanes
    for lanes in _PREFERRED_LANES:
        if n % lanes == 0:
            return lanes
    return 128  # unreachable: n is a multiple of 128


def _pallas_h_sigmoid_2d(x2d, scale, out_dtype):
    """Streaming elementwise kernel over a 2-D view, tiled along rows only."""
    rows, cols = x2d.shape
    itemsize = jnp.dtype(x2d.dtype).itemsize
    row_bytes = cols * itemsize

    max_block_rows = (_TARGET_BLOCK_BYTES // row_bytes) // 32 * 32
    if max_block_rows == 0:
        # A single row is wider than the block budget (rare, ragged-only case):
        # plain jnp is already at the HBM roofline for an elementwise op.
        return _jnp_h_sigmoid(x2d, scale, out_dtype)

    if rows <= max_block_rows:
        block_rows, grid = rows, 1           # single block; full dims are always legal
    else:
        steps = pl.cdiv(rows, max_block_rows)
        steps = 2 * -(-steps // 2)           # round up to an even step count (v7x 2-TC balance)
        block_rows = min(max_block_rows, _round_up(pl.cdiv(rows, steps), 32))
        grid = pl.cdiv(rows, block_rows)     # ragged final block (if any) is masked by Pallas

    n = rows * cols
    cost = pl.CostEstimate(
        flops=4 * n,                         # add + 2x clamp + mul per element
        transcendentals=0,
        bytes_accessed=2 * n * itemsize,     # one read + one write
    )

    return pl.pallas_call(
        functools.partial(_h_sigmoid_kernel, scale=scale),
        out_shape=jax.ShapeDtypeStruct((rows, cols), out_dtype),
        grid_spec=pltpu.PrefetchScalarGridSpec(
            num_scalar_prefetch=0,
            grid=(grid,),
            in_specs=[pl.BlockSpec((block_rows, cols), lambda i: (i, 0))],
            out_specs=pl.BlockSpec((block_rows, cols), lambda i: (i, 0)),
        ),
        compiler_params=pltpu.CompilerParams(
            dimension_semantics=("parallel",),
            vmem_limit_bytes=_VMEM_LIMIT_BYTES,
        ),
        cost_estimate=cost,
    )(x2d)


def h_sigmoid(x, h_max: float = 1.0):
    """Elementwise hard-sigmoid: relu6(x + 3) * h_max / 6. Any shape; same shape/dtype out."""
    orig_shape, orig_dtype = x.shape, x.dtype
    n = x.size
    scale = float(h_max) / 6.0
    if n == 0:
        return x

    # Non-float dtypes: match torch's `/ 6` promotion to float (out of kernel scope).
    if not jnp.issubdtype(orig_dtype, jnp.floating):
        return _jnp_h_sigmoid(x, scale, jnp.float32)

    itemsize = jnp.dtype(orig_dtype).itemsize
    if n * itemsize < _SMALL_INPUT_BYTES:
        # Tiny tensors: pallas_call launch/DMA-setup overhead dominates.
        return _jnp_h_sigmoid(x, scale, orig_dtype)

    if n % 128 == 0:
        # Lane-dense flattened view (pure reshape, no copy) -> unmasked wide vector stores.
        lanes = _choose_lanes(n)
        x2d = x.reshape(n // lanes, lanes)
    else:
        # Ragged total size: keep the original last dim as lanes (no copy, no tail pass);
        # Pallas masks the ragged final row-block, keeping traffic at 1 read + 1 write.
        if x.ndim >= 2:
            x2d = x.reshape(n // orig_shape[-1], orig_shape[-1])
        else:
            x2d = x.reshape(1, n)

    out2d = _pallas_h_sigmoid_2d(x2d, scale, orig_dtype)
    return out2d.reshape(orig_shape)


if __name__ == "__main__":
    key = jax.random.PRNGKey(0)
    k1, k2, k3, k4 = jax.random.split(key, 4)

    def ref_fn(x, h_max=1.0):
        return jnp.clip(x.astype(jnp.float32) + 3.0, 0.0, 6.0) * (float(h_max) / 6.0)

    # 1) Small NCHW input matching the module's conv-activation use (fast jnp path).
    x_small = jax.random.normal(k1, (2, 4, 16, 16), dtype=jnp.float32) * 4.0
    y_small = jax.block_until_ready(h_sigmoid(x_small, h_max=1.0))
    assert y_small.shape == x_small.shape and y_small.dtype == x_small.dtype
    assert jnp.max(jnp.abs(y_small - ref_fn(x_small))) < 1e-6

    # 2) Larger 128-divisible tensor: lane-dense Pallas path with balanced grid steps.
    x_big = jax.random.normal(k2, (8, 32, 64, 64), dtype=jnp.float32) * 4.0
    y_big = jax.block_until_ready(h_sigmoid(x_big, h_max=1.0))
    assert y_big.shape == x_big.shape and y_big.dtype == x_big.dtype
    assert jnp.max(jnp.abs(y_big - ref_fn(x_big))) < 1e-6

    # 3) Non-128-divisible total size: ragged Pallas path (no extra HBM copies).
    x_rag = jax.random.normal(k3, (8, 6, 50, 50), dtype=jnp.float32) * 4.0
    y_rag = jax.block_until_ready(h_sigmoid(x_rag, h_max=1.0))
    assert y_rag.shape == x_rag.shape
    assert jnp.max(jnp.abs(y_rag - ref_fn(x_rag))) < 1e-6

    # 4) bf16 input exercises the native-bf16 kernel compute path (relaxed tolerance).
    x_bf = (jax.random.normal(k4, (8, 32, 64, 64), dtype=jnp.float32) * 4.0).astype(jnp.bfloat16)
    y_bf = jax.block_until_ready(h_sigmoid(x_bf, h_max=1.0))
    assert y_bf.dtype == jnp.bfloat16 and y_bf.shape == x_bf.shape
    assert jnp.max(jnp.abs(y_bf.astype(jnp.float32) - ref_fn(x_bf))) < 3e-2

    print("KERNEL_OK")
</pallas_src>

<mosaic_0001>
module attributes {stable_mosaic.version = 11 : i64} {
  func.func @_h_sigmoid_kernel(%arg0: i32, %arg1: memref<512x2048xf32, #tpu.memory_space<vmem>>, %arg2: memref<512x2048xf32, #tpu.memory_space<vmem>>) attributes {dimension_semantics = [#tpu.dimension_semantics<parallel>], iteration_bounds = array<i64: 1>, scalar_prefetch = 0 : i64, scratch_operands = 0 : i64, tpu.core_type = #tpu.core_type<tc>, window_params = [{transform_indices = @transform_0, window_bounds = array<i64: 512, 2048>}, {transform_indices = @transform_1, window_bounds = array<i64: 512, 2048>}]} {
    %c0 = arith.constant 0 : index
    %c0_0 = arith.constant 0 : index
    %0 = vector.load %arg1[%c0, %c0_0] : memref<512x2048xf32, #tpu.memory_space<vmem>>, vector<512x2048xf32>
    %cst = arith.constant 3.000000e+00 : f32
    %1 = vector.broadcast %cst : f32 to vector<512x2048xf32>
    %2 = arith.addf %0, %1 : vector<512x2048xf32>
    %cst_1 = arith.constant 0.000000e+00 : f32
    %cst_2 = arith.constant 6.000000e+00 : f32
    %3 = vector.broadcast %cst_1 : f32 to vector<512x2048xf32>
    %4 = arith.maximumf %3, %2 : vector<512x2048xf32>
    %5 = vector.broadcast %cst_2 : f32 to vector<512x2048xf32>
    %6 = arith.minimumf %5, %4 : vector<512x2048xf32>
    %cst_3 = arith.constant 0.166666672 : f32
    %7 = vector.broadcast %cst_3 : f32 to vector<512x2048xf32>
    %8 = arith.mulf %6, %7 : vector<512x2048xf32>
    %c0_4 = arith.constant 0 : index
    %c0_5 = arith.constant 0 : index
    %9 = vector.load %arg2[%c0_4, %c0_5] : memref<512x2048xf32, #tpu.memory_space<vmem>>, vector<512x2048xf32>
    tpu.vector_store %arg2[%c0_4, %c0_5], %8 {strides = array<i32>} : memref<512x2048xf32, #tpu.memory_space<vmem>>, vector<512x2048xf32>,
    return
  }
  func.func @transform_0(%arg0: i32) -> (i32, i32) {
    %c0_i32 = arith.constant 0 : i32
    %c0_i32_0 = arith.constant 0 : i32
    return %arg0, %c0_i32 : i32, i32
  }
  func.func @transform_1(%arg0: i32) -> (i32, i32) {
    %c0_i32 = arith.constant 0 : i32
    %c0_i32_0 = arith.constant 0 : i32
    return %arg0, %c0_i32 : i32, i32
  }
}

</mosaic_0001>

<llo_original>
// kernel: tpu_custom_call.1
$region0: #{tpu_custom_call.1}
  #allocation0 [shape = 'u32[]', space=smem, size = 0x4, offset = 0x4, fixed_abs, tag = 'smem constant byte address 0x4 - core index']
  #allocation1 [shape = 'u32[144,128]{1,0:T(1,128)}', space=vmem, size = 0x12000, scoped, tag = 'internal scratch']
  %s0 = inlined_call_operand.hbm [shape: f32[512,2048], index: 0, kind: input, shape index: {}]
  %s1 = inlined_call_operand.hbm [shape: f32[512,2048], index: 1, kind: output, shape index: {}]
  %s2 = sld [smem:[#allocation0]]
  $region18: #{tpu_custom_call.1} parent=0
    _
  %s4 = ssub.s32 1, %s2
  %s5 = scalar_select 0, %s4, %s2
  $region1: #{tpu_custom_call.1} parent=0
    #allocation2 [shape = 'u8[4194304]{0}', space=vmem, size = 0x400000, scoped, tag = 'input window, operand 0, single buffered']
    #allocation3 [shape = 's32[1]{0}', space=sflag, size = 0x4, scoped, tag = 'scoped memory for tpu_custom_call.1']
    #allocation4 [shape = 's32[1]{0}', space=sflag, size = 0x4, scoped, tag = 'scoped memory for tpu_custom_call.1']
    #allocation5 [shape = 'u8[4194304]{0}', space=vmem, size = 0x400000, scoped, tag = 'output window, operand 0, single buffered']
    %6 = vsyncpa [#allocation3], 0
    %7 = vsyncpa [#allocation4], 0
    // Predicated region
    $region2: #{tpu_custom_call.1} parent=1 // pred_check
      _
    $region3: #{tpu_custom_call.1} parent=1 // pred_check_branch
      %9 = sbr.rel (0) target = $region5
    $region4: #{tpu_custom_call.1} parent=1 // pred_region
      %s11 = ssub.s32 131072, 131072
      %12 = vsyncadd [#allocation3], %s11
      %s13 = sshll.u32 [#allocation2], 4
      %s14 = int_to_ptr.vmem [resolvable:$true] %s13
      %19 = dma.hbm_to_vmem [thread:$0]  %s0, 131072, %s14, [#allocation3], 2048, 2048, 128
    $region5: #{tpu_custom_call.1} parent=1 // pred_fallthru
      _
    // Predicated region
    $region6: #{tpu_custom_call.1} parent=1 // pred_check
      _
    $region7: #{tpu_custom_call.1} parent=1 // pred_check_branch
      %21 = sbr.rel (0) target = $region9
    $region8: #{tpu_custom_call.1} parent=1 // pred_region
      %22 = dma.done [#allocation3], 131072
    $region9: #{tpu_custom_call.1} parent=1 // pred_fallthru
      _
    %v23 = vld [vmem:[#allocation2] sm:$0xff]
    %v24 = vld [vmem:[#allocation2 + $0x8] sm:$0xff]
    %v25 = vld [vmem:[#allocation2 + $0x10] sm:$0xff]
    %v26 = vld [vmem:[#allocation2 + $0x18] sm:$0xff]
    %v27 = vld [vmem:[#allocation2 + $0x20] sm:$0xff]
    %v28 = vld [vmem:[#allocation2 + $0x28] sm:$0xff]
    %v29 = vld [vmem:[#allocation2 + $0x30] sm:$0xff]
    %v30 = vld [vmem:[#allocation2 + $0x38] sm:$0xff]
    %v31 = vld [vmem:[#allocation2 + $0x40] sm:$0xff]
    %v32 = vld [vmem:[#allocation2 + $0x48] sm:$0xff]
    %v33 = vld [vmem:[#allocation2 + $0x50] sm:$0xff]
    %v34 = vld [vmem:[#allocation2 + $0x58] sm:$0xff]
    %v35 = vld [vmem:[#allocation2 + $0x60] sm:$0xff]
    %v36 = vld [vmem:[#allocation2 + $0x68] sm:$0xff]
    %v37 = vld [vmem:[#allocation2 + $0x70] sm:$0xff]
    %v38 = vld [vmem:[#allocation2 + $0x78] sm:$0xff]
    %v39 = vld [vmem:[#allocation2 + $0x80] sm:$0xff]
    %v40 = vld [vmem:[#allocation2 + $0x88] sm:$0xff]
    %v41 = vld [vmem:[#allocation2 + $0x90] sm:$0xff]
    %v42 = vld [vmem:[#allocation2 + $0x98] sm:$0xff]
    %v43 = vld [vmem:[#allocation2 + $0xa0] sm:$0xff]
    %v44 = vld [vmem:[#allocation2 + $0xa8] sm:$0xff]
    %v45 = vld [vmem:[#allocation2 + $0xb0] sm:$0xff]
    %v46 = vld [vmem:[#allocation2 + $0xb8] sm:$0xff]
    %v47 = vld [vmem:[#allocation2 + $0xc0] sm:$0xff]
    %v48 = vld [vmem:[#allocation2 + $0xc8] sm:$0xff]
    %v49 = vld [vmem:[#allocation2 + $0xd0] sm:$0xff]
    %v50 = vld [vmem:[#allocation2 + $0xd8] sm:$0xff]
    %v51 = vld [vmem:[#allocation2 + $0xe0] sm:$0xff]
    %v52 = vld [vmem:[#allocation2 + $0xe8] sm:$0xff]
    %v53 = vld [vmem:[#allocation2 + $0xf0] sm:$0xff]
    %v54 = vld [vmem:[#allocation2 + $0xf8] sm:$0xff]
    %v55 = vld [vmem:[#allocation2 + $0x100] sm:$0xff]
    %v56 = vld [vmem:[#allocation2 + $0x108] sm:$0xff]
    %v57 = vld [vmem:[#allocation2 + $0x110] sm:$0xff]
    %v58 = vld [vmem:[#allocation2 + $0x118] sm:$0xff]
    %v59 = vld [vmem:[#allocation2 + $0x120] sm:$0xff]
    %v60 = vld [vmem:[#allocation2 + $0x128] sm:$0xff]
    %v61 = vld [vmem:[#allocation2 + $0x130] sm:$0xff]
    %v62 = vld [vmem:[#allocation2 + $0x138] sm:$0xff]
    %v63 = vld [vmem:[#allocation2 + $0x140] sm:$0xff]
    %v64 = vld [vmem:[#allocation2 + $0x148] sm:$0xff]
    %v65 = vld [vmem:[#allocation2 + $0x150] sm:$0xff]
    %v66 = vld [vmem:[#allocation2 + $0x158] sm:$0xff]
    %v67 = vld [vmem:[#allocation2 + $0x160] sm:$0xff]
    %v68 = vld [vmem:[#allocation2 + $0x168] sm:$0xff]
    %v69 = vld [vmem:[#allocation2 + $0x170] sm:$0xff]
    %v70 = vld [vmem:[#allocation2 + $0x178] sm:$0xff]
    %v71 = vld [vmem:[#allocation2 + $0x180] sm:$0xff]
    %v72 = vld [vmem:[#allocation2 + $0x188] sm:$0xff]
    %v73 = vld [vmem:[#allocation2 + $0x190] sm:$0xff]
    %v74 = vld [vmem:[#allocation2 + $0x198] sm:$0xff]
    %v75 = vld [vmem:[#allocation2 + $0x1a0] sm:$0xff]
    %v76 = vld [vmem:[#allocation2 + $0x1a8] sm:$0xff]
    %v77 = vld [vmem:[#allocation2 + $0x1b0] sm:$0xff]
    %v78 = vld [vmem:[#allocation2 + $0x1b8] sm:$0xff]
    %v79 = vld [vmem:[#allocation2 + $0x1c0] sm:$0xff]
    %v80 = vld [vmem:[#allocation2 + $0x1c8] sm:$0xff]
    %v81 = vld [vmem:[#allocation2 + $0x1d0] sm:$0xff]
    %v82 = vld [vmem:[#allocation2 + $0x1d8] sm:$0xff]
    %v83 = vld [vmem:[#allocation2 + $0x1e0] sm:$0xff]
    %v84 = vld [vmem:[#allocation2 + $0x1e8] sm:$0xff]
    %v85 = vld [vmem:[#allocation2 + $0x1f0] sm:$0xff]
    %v86 = vld [vmem:[#allocation2 + $0x1f8] sm:$0xff]
    %v87 = vld [vmem:[#allocation2 + $0x200] sm:$0xff]
    %v88 = vld [vmem:[#allocation2 + $0x208] sm:$0xff]
    %v89 = vld [vmem:[#allocation2 + $0x210] sm:$0xff]
    %v90 = vld [vmem:[#allocation2 + $0x218] sm:$0xff]
    %v91 = vld [vmem:[#allocation2 + $0x220] sm:$0xff]
    %v92 = vld [vmem:[#allocation2 + $0x228] sm:$0xff]
    %v93 = vld [vmem:[#allocation2 + $0x230] sm:$0xff]
    %v94 = vld [vmem:[#allocation2 + $0x238] sm:$0xff]
    %v95 = vld [vmem:[#allocation2 + $0x240] sm:$0xff]
    %v96 = vld [vmem:[#allocation2 + $0x248] sm:$0xff]
    %v97 = vld [vmem:[#allocation2 + $0x250] sm:$0xff]
    %v98 = vld [vmem:[#allocation2 + $0x258] sm:$0xff]
    %v99 = vld [vmem:[#allocation2 + $0x260] sm:$0xff]
    %v100 = vld [vmem:[#allocation2 + $0x268] sm:$0xff]
    %v101 = vld [vmem:[#allocation2 + $0x270] sm:$0xff]
    %v102 = vld [vmem:[#allocation2 + $0x278] sm:$0xff]
    %v103 = vld [vmem:[#allocation2 + $0x280] sm:$0xff]
    %v104 = vld [vmem:[#allocation2 + $0x288] sm:$0xff]
    %v105 = vld [vmem:[#allocation2 + $0x290] sm:$0xff]
    %v106 = vld [vmem:[#allocation2 + $0x298] sm:$0xff]
    %v107 = vld [vmem:[#allocation2 + $0x2a0] sm:$0xff]
    %v108 = vld [vmem:[#allocation2 + $0x2a8] sm:$0xff]
    %v109 = vld [vmem:[#allocation2 + $0x2b0] sm:$0xff]
    %v110 = vld [vmem:[#allocation2 + $0x2b8] sm:$0xff]
    %v111 = vld [vmem:[#allocation2 + $0x2c0] sm:$0xff]
    %v112 = vld [vmem:[#allocation2 + $0x2c8] sm:$0xff]
    %v113 = vld [vmem:[#allocation2 + $0x2d0] sm:$0xff]
    %v114 = vld [vmem:[#allocation2 + $0x2d8] sm:$0xff]
    %v115 = vld [vmem:[#allocation2 + $0x2e0] sm:$0xff]
    %v116 = vld [vmem:[#allocation2 + $0x2e8] sm:$0xff]
    %v117 = vld [vmem:[#allocation2 + $0x2f0] sm:$0xff]
    %v118 = vld [vmem:[#allocation2 + $0x2f8] sm:$0xff]
    %v119 = vld [vmem:[#allocation2 + $0x300] sm:$0xff]
    %v120 = vld [vmem:[#allocation2 + $0x308] sm:$0xff]
    %v121 = vld [vmem:[#allocation2 + $0x310] sm:$0xff]
    %v122 = vld [vmem:[#allocation2 + $0x318] sm:$0xff]
    %v123 = vld [vmem:[#allocation2 + $0x320] sm:$0xff]
    %v124 = vld [vmem:[#allocation2 + $0x328] sm:$0xff]
    %v125 = vld [vmem:[#allocation2 + $0x330] sm:$0xff]
    %v126 = vld [vmem:[#allocation2 + $0x338] sm:$0xff]
    %v127 = vld [vmem:[#allocation2 + $0x340] sm:$0xff]
    %v128 = vld [vmem:[#allocation2 + $0x348] sm:$0xff]
    %v129 = vld [vmem:[#allocation2 + $0x350] sm:$0xff]
    %v130 = vld [vmem:[#allocation2 + $0x358] sm:$0xff]
    %v131 = vld [vmem:[#allocation2 + $0x360] sm:$0xff]
    %v132 = vld [vmem:[#allocation2 + $0x368] sm:$0xff]
    %v133 = vld [vmem:[#allocation2 + $0x370] sm:$0xff]
    %v134 = vld [vmem:[#allocation2 + $0x378] sm:$0xff]
    %v135 = vld [vmem:[#allocation2 + $0x380] sm:$0xff]
    %v136 = vld [vmem:[#allocation2 + $0x388] sm:$0xff]
    %v137 = vld [vmem:[#allocation2 + $0x390] sm:$0xff]
    %v138 = vld [vmem:[#allocation2 + $0x398] sm:$0xff]
    %v139 = vld [vmem:[#allocation2 + $0x3a0] sm:$0xff]
    %v140 = vld [vmem:[#allocation2 + $0x3a8] sm:$0xff]
    %v141 = vld [vmem:[#allocation2 + $0x3b0] sm:$0xff]
    %v142 = vld [vmem:[#allocation2 + $0x3b8] sm:$0xff]
    %v143 = vld [vmem:[#allocation2 + $0x3c0] sm:$0xff]
    %v144 = vld [vmem:[#allocation2 + $0x3c8] sm:$0xff]
    %v145 = vld [vmem:[#allocation2 + $0x3d0] sm:$0xff]
    %v146 = vld [vmem:[#allocation2 + $0x3d8] sm:$0xff]
    %v147 = vld [vmem:[#allocation2 + $0x3e0] sm:$0xff]
    %v148 = vld [vmem:[#allocation2 + $0x3e8] sm:$0xff]
    %v149 = vld [vmem:[#allocation2 + $0x3f0] sm:$0xff]
    %v150 = vld [vmem:[#allocation2 + $0x3f8] sm:$0xff]
    %v151 = vld [vmem:[#allocation2 + $0x400] sm:$0xff]
    %v152 = vld [vmem:[#allocation2 + $0x408] sm:$0xff]
    %v153 = vld [vmem:[#allocation2 + $0x410] sm:$0xff]
    %v154 = vld [vmem:[#allocation2 + $0x418] sm:$0xff]
    %v155 = vld [vmem:[#allocation2 + $0x420] sm:$0xff]
    %v156 = vld [vmem:[#allocation2 + $0x428] sm:$0xff]
    %v157 = vld [vmem:[#allocation2 + $0x430] sm:$0xff]
    %v158 = vld [vmem:[#allocation2 + $0x438] sm:$0xff]
    %v159 = vld [vmem:[#allocation2 + $0x440] sm:$0xff]
    %v160 = vld [vmem:[#allocation2 + $0x448] sm:$0xff]
    %v161 = vld [vmem:[#allocation2 + $0x450] sm:$0xff]
    %v162 = vld [vmem:[#allocation2 + $0x458] sm:$0xff]
    %v163 = vld [vmem:[#allocation2 + $0x460] sm:$0xff]
    %v164 = vld [vmem:[#allocation2 + $0x468] sm:$0xff]
    %v165 = vld [vmem:[#allocation2 + $0x470] sm:$0xff]
    %v166 = vld [vmem:[#allocation2 + $0x478] sm:$0xff]
    %v167 = vld [vmem:[#allocation2 + $0x480] sm:$0xff]
    %v168 = vld [vmem:[#allocation2 + $0x488] sm:$0xff]
    %v169 = vld [vmem:[#allocation2 + $0x490] sm:$0xff]
    %v170 = vld [vmem:[#allocation2 + $0x498] sm:$0xff]
    %v171 = vld [vmem:[#allocation2 + $0x4a0] sm:$0xff]
    %v172 = vld [vmem:[#allocation2 + $0x4a8] sm:$0xff]
    %v173 = vld [vmem:[#allocation2 + $0x4b0] sm:$0xff]
    %v174 = vld [vmem:[#allocation2 + $0x4b8] sm:$0xff]
    %v175 = vld [vmem:[#allocation2 + $0x4c0] sm:$0xff]
    %v176 = vld [vmem:[#allocation2 + $0x4c8] sm:$0xff]
    %v177 = vld [vmem:[#allocation2 + $0x4d0] sm:$0xff]
    %v178 = vld [vmem:[#allocation2 + $0x4d8] sm:$0xff]
    %v179 = vld [vmem:[#allocation2 + $0x4e0] sm:$0xff]
    %v180 = vld [vmem:[#allocation2 + $0x4e8] sm:$0xff]
    %v181 = vld [vmem:[#allocation2 + $0x4f0] sm:$0xff]
    %v182 = vld [vmem:[#allocation2 + $0x4f8] sm:$0xff]
    %v183 = vld [vmem:[#allocation2 + $0x500] sm:$0xff]
    %v184 = vld [vmem:[#allocation2 + $0x508] sm:$0xff]
    %v185 = vld [vmem:[#allocation2 + $0x510] sm:$0xff]
    %v186 = vld [vmem:[#allocation2 + $0x518] sm:$0xff]
    %v187 = vld [vmem:[#allocation2 + $0x520] sm:$0xff]
    %v188 = vld [vmem:[#allocation2 + $0x528] sm:$0xff]
    %v189 = vld [vmem:[#allocation2 + $0x530] sm:$0xff]
    %v190 = vld [vmem:[#allocation2 + $0x538] sm:$0xff]
    %v191 = vld [vmem:[#allocation2 + $0x540] sm:$0xff]
    %v192 = vld [vmem:[#allocation2 + $0x548] sm:$0xff]
    %v193 = vld [vmem:[#allocation2 + $0x550] sm:$0xff]
    %v194 = vld [vmem:[#allocation2 + $0x558] sm:$0xff]
    %v195 = vld [vmem:[#allocation2 + $0x560] sm:$0xff]
    %v196 = vld [vmem:[#allocation2 + $0x568] sm:$0xff]
    %v197 = vld [vmem:[#allocation2 + $0x570] sm:$0xff]
    %v198 = vld [vmem:[#allocation2 + $0x578] sm:$0xff]
    %v199 = vld [vmem:[#allocation2 + $0x580] sm:$0xff]
    %v200 = vld [vmem:[#allocation2 + $0x588] sm:$0xff]
    %v201 = vld [vmem:[#allocation2 + $0x590] sm:$0xff]
    %v202 = vld [vmem:[#allocation2 + $0x598] sm:$0xff]
    %v203 = vld [vmem:[#allocation2 + $0x5a0] sm:$0xff]
    %v204 = vld [vmem:[#allocation2 + $0x5a8] sm:$0xff]
    %v205 = vld [vmem:[#allocation2 + $0x5b0] sm:$0xff]
    %v206 = vld [vmem:[#allocation2 + $0x5b8] sm:$0xff]
    %v207 = vld [vmem:[#allocation2 + $0x5c0] sm:$0xff]
    %v208 = vld [vmem:[#allocation2 + $0x5c8] sm:$0xff]
    %v209 = vld [vmem:[#allocation2 + $0x5d0] sm:$0xff]
    %v210 = vld [vmem:[#allocation2 + $0x5d8] sm:$0xff]
    %v211 = vld [vmem:[#allocation2 + $0x5e0] sm:$0xff]
    %v212 = vld [vmem:[#allocation2 + $0x5e8] sm:$0xff]
    %v213 = vld [vmem:[#allocation2 + $0x5f0] sm:$0xff]
    %v214 = vld [vmem:[#allocation2 + $0x5f8] sm:$0xff]
    %v215 = vld [vmem:[#allocation2 + $0x600] sm:$0xff]
    %v216 = vld [vmem:[#allocation2 + $0x608] sm:$0xff]
    %v217 = vld [vmem:[#allocation2 + $0x610] sm:$0xff]
    %v218 = vld [vmem:[#allocation2 + $0x618] sm:$0xff]
    %v219 = vld [vmem:[#allocation2 + $0x620] sm:$0xff]
    %v220 = vld [vmem:[#allocation2 + $0x628] sm:$0xff]
    %v221 = vld [vmem:[#allocation2 + $0x630] sm:$0xff]
    %v222 = vld [vmem:[#allocation2 + $0x638] sm:$0xff]
    %v223 = vld [vmem:[#allocation2 + $0x640] sm:$0xff]
    %v224 = vld [vmem:[#allocation2 + $0x648] sm:$0xff]
    %v225 = vld [vmem:[#allocation2 + $0x650] sm:$0xff]
    %v226 = vld [vmem:[#allocation2 + $0x658] sm:$0xff]
    %v227 = vld [vmem:[#allocation2 + $0x660] sm:$0xff]
    %v228 = vld [vmem:[#allocation2 + $0x668] sm:$0xff]
    %v229 = vld [vmem:[#allocation2 + $0x670] sm:$0xff]
    %v230 = vld [vmem:[#allocation2 + $0x678] sm:$0xff]
    %v231 = vld [vmem:[#allocation2 + $0x680] sm:$0xff]
    %v232 = vld [vmem:[#allocation2 + $0x688] sm:$0xff]
    %v233 = vld [vmem:[#allocation2 + $0x690] sm:$0xff]
    %v234 = vld [vmem:[#allocation2 + $0x698] sm:$0xff]
    %v235 = vld [vmem:[#allocation2 + $0x6a0] sm:$0xff]
    %v236 = vld [vmem:[#allocation2 + $0x6a8] sm:$0xff]
    %v237 = vld [vmem:[#allocation2 + $0x6b0] sm:$0xff]
    %v238 = vld [vmem:[#allocation2 + $0x6b8] sm:$0xff]
    %v239 = vld [vmem:[#allocation2 + $0x6c0] sm:$0xff]
    %v240 = vld [vmem:[#allocation2 + $0x6c8] sm:$0xff]
    %v241 = vld [vmem:[#allocation2 + $0x6d0] sm:$0xff]
    %v242 = vld [vmem:[#allocation2 + $0x6d8] sm:$0xff]
    %v243 = vld [vmem:[#allocation2 + $0x6e0] sm:$0xff]
    %v244 = vld [vmem:[#allocation2 + $0x6e8] sm:$0xff]
    %v245 = vld [vmem:[#allocation2 + $0x6f0] sm:$0xff]
    %v246 = vld [vmem:[#allocation2 + $0x6f8] sm:$0xff]
    %v247 = vld [vmem:[#allocation2 + $0x700] sm:$0xff]
    %v248 = vld [vmem:[#allocation2 + $0x708] sm:$0xff]
    %v249 = vld [vmem:[#allocation2 + $0x710] sm:$0xff]
    %v250 = vld [vmem:[#allocation2 + $0x718] sm:$0xff]
    %v251 = vld [vmem:[#allocation2 + $0x720] sm:$0xff]
    %v252 = vld [vmem:[#allocation2 + $0x728] sm:$0xff]
    %v253 = vld [vmem:[#allocation2 + $0x730] sm:$0xff]
    %v254 = vld [vmem:[#allocation2 + $0x738] sm:$0xff]
    %v255 = vld [vmem:[#allocation2 + $0x740] sm:$0xff]
    %v256 = vld [vmem:[#allocation2 + $0x748] sm:$0xff]
    %v257 = vld [vmem:[#allocation2 + $0x750] sm:$0xff]
    %v258 = vld [vmem:[#allocation2 + $0x758] sm:$0xff]
    %v259 = vld [vmem:[#allocation2 + $0x760] sm:$0xff]
    %v260 = vld [vmem:[#allocation2 + $0x768] sm:$0xff]
    %v261 = vld [vmem:[#allocation2 + $0x770] sm:$0xff]
    %v262 = vld [vmem:[#allocation2 + $0x778] sm:$0xff]
    %v263 = vld [vmem:[#allocation2 + $0x780] sm:$0xff]
    %v264 = vld [vmem:[#allocation2 + $0x788] sm:$0xff]
    %v265 = vld [vmem:[#allocation2 + $0x790] sm:$0xff]
    %v266 = vld [vmem:[#allocation2 + $0x798] sm:$0xff]
    %v267 = vld [vmem:[#allocation2 + $0x7a0] sm:$0xff]
    %v268 = vld [vmem:[#allocation2 + $0x7a8] sm:$0xff]
    %v269 = vld [vmem:[#allocation2 + $0x7b0] sm:$0xff]
    %v270 = vld [vmem:[#allocation2 + $0x7b8] sm:$0xff]
    %v271 = vld [vmem:[#allocation2 + $0x7c0] sm:$0xff]
    %v272 = vld [vmem:[#allocation2 + $0x7c8] sm:$0xff]
    %v273 = vld [vmem:[#allocation2 + $0x7d0] sm:$0xff]
    %v274 = vld [vmem:[#allocation2 + $0x7d8] sm:$0xff]
    %v275 = vld [vmem:[#allocation2 + $0x7e0] sm:$0xff]
    %v276 = vld [vmem:[#allocation2 + $0x7e8] sm:$0xff]
    %v277 = vld [vmem:[#allocation2 + $0x7f0] sm:$0xff]
    %v278 = vld [vmem:[#allocation2 + $0x7f8] sm:$0xff]
    %v279 = vld [vmem:[#allocation2 + $0x800] sm:$0xff]
    %v280 = vld [vmem:[#allocation2 + $0x808] sm:$0xff]
    %v281 = vld [vmem:[#allocation2 + $0x810] sm:$0xff]
    %v282 = vld [vmem:[#allocation2 + $0x818] sm:$0xff]
    %v283 = vld [vmem:[#allocation2 + $0x820] sm:$0xff]
    %v284 = vld [vmem:[#allocation2 + $0x828] sm:$0xff]
    %v285 = vld [vmem:[#allocation2 + $0x830] sm:$0xff]
    %v286 = vld [vmem:[#allocation2 + $0x838] sm:$0xff]
    %v287 = vld [vmem:[#allocation2 + $0x840] sm:$0xff]
    %v288 = vld [vmem:[#allocation2 + $0x848] sm:$0xff]
    %v289 = vld [vmem:[#allocation2 + $0x850] sm:$0xff]
    %v290 = vld [vmem:[#allocation2 + $0x858] sm:$0xff]
    %v291 = vld [vmem:[#allocation2 + $0x860] sm:$0xff]
    %v292 = vld [vmem:[#allocation2 + $0x868] sm:$0xff]
    %v293 = vld [vmem:[#allocation2 + $0x870] sm:$0xff]
    %v294 = vld [vmem:[#allocation2 + $0x878] sm:$0xff]
    %v295 = vld [vmem:[#allocation2 + $0x880] sm:$0xff]
    %v296 = vld [vmem:[#allocation2 + $0x888] sm:$0xff]
    %v297 = vld [vmem:[#allocation2 + $0x890] sm:$0xff]
    %v298 = vld [vmem:[#allocation2 + $0x898] sm:$0xff]
    %v299 = vld [vmem:[#allocation2 + $0x8a0] sm:$0xff]
    %v300 = vld [vmem:[#allocation2 + $0x8a8] sm:$0xff]
    %v301 = vld [vmem:[#allocation2 + $0x8b0] sm:$0xff]
    %v302 = vld [vmem:[#allocation2 + $0x8b8] sm:$0xff]
    %v303 = vld [vmem:[#allocation2 + $0x8c0] sm:$0xff]
    %v304 = vld [vmem:[#allocation2 + $0x8c8] sm:$0xff]
    %v305 = vld [vmem:[#allocation2 + $0x8d0] sm:$0xff]
    %v306 = vld [vmem:[#allocation2 + $0x8d8] sm:$0xff]
    %v307 = vld [vmem:[#allocation2 + $0x8e0] sm:$0xff]
    %v308 = vld [vmem:[#allocation2 + $0x8e8] sm:$0xff]
    %v309 = vld [vmem:[#allocation2 + $0x8f0] sm:$0xff]
    %v310 = vld [vmem:[#allocation2 + $0x8f8] sm:$0xff]
    %v311 = vld [vmem:[#allocation2 + $0x900] sm:$0xff]
    %v312 = vld [vmem:[#allocation2 + $0x908] sm:$0xff]
    %v313 = vld [vmem:[#allocation2 + $0x910] sm:$0xff]
    %v314 = vld [vmem:[#allocation2 + $0x918] sm:$0xff]
    %v315 = vld [vmem:[#allocation2 + $0x920] sm:$0xff]
    %v316 = vld [vmem:[#allocation2 + $0x928] sm:$0xff]
    %v317 = vld [vmem:[#allocation2 + $0x930] sm:$0xff]
    %v318 = vld [vmem:[#allocation2 + $0x938] sm:$0xff]
    %v319 = vld [vmem:[#allocation2 + $0x940] sm:$0xff]
    %v320 = vld [vmem:[#allocation2 + $0x948] sm:$0xff]
    %v321 = vld [vmem:[#allocation2 + $0x950] sm:$0xff]
    %v322 = vld [vmem:[#allocation2 + $0x958] sm:$0xff]
    %v323 = vld [vmem:[#allocation2 + $0x960] sm:$0xff]
    %v324 = vld [vmem:[#allocation2 + $0x968] sm:$0xff]
    %v325 = vld [vmem:[#allocation2 + $0x970] sm:$0xff]
    %v326 = vld [vmem:[#allocation2 + $0x978] sm:$0xff]
    %v327 = vld [vmem:[#allocation2 + $0x980] sm:$0xff]
    %v328 = vld [vmem:[#allocation2 + $0x988] sm:$0xff]
    %v329 = vld [vmem:[#allocation2 + $0x990] sm:$0xff]
    %v330 = vld [vmem:[#allocation2 + $0x998] sm:$0xff]
    %v331 = vld [vmem:[#allocation2 + $0x9a0] sm:$0xff]
    %v332 = vld [vmem:[#allocation2 + $0x9a8] sm:$0xff]
    %v333 = vld [vmem:[#allocation2 + $0x9b0] sm:$0xff]
    %v334 = vld [vmem:[#allocation2 + $0x9b8] sm:$0xff]
    %v335 = vld [vmem:[#allocation2 + $0x9c0] sm:$0xff]
    %v336 = vld [vmem:[#allocation2 + $0x9c8] sm:$0xff]
    %v337 = vld [vmem:[#allocation2 + $0x9d0] sm:$0xff]
    %v338 = vld [vmem:[#allocation2 + $0x9d8] sm:$0xff]
    %v339 = vld [vmem:[#allocation2 + $0x9e0] sm:$0xff]
    %v340 = vld [vmem:[#allocation2 + $0x9e8] sm:$0xff]
    %v341 = vld [vmem:[#allocation2 + $0x9f0] sm:$0xff]
    %v342 = vld [vmem:[#allocation2 + $0x9f8] sm:$0xff]
    %v343 = vld [vmem:[#allocation2 + $0xa00] sm:$0xff]
    %v344 = vld [vmem:[#allocation2 + $0xa08] sm:$0xff]
    %v345 = vld [vmem:[#allocation2 + $0xa10] sm:$0xff]
    %v346 = vld [vmem:[#allocation2 + $0xa18] sm:$0xff]
    %v347 = vld [vmem:[#allocation2 + $0xa20] sm:$0xff]
    %v348 = vld [vmem:[#allocation2 + $0xa28] sm:$0xff]
    %v349 = vld [vmem:[#allocation2 + $0xa30] sm:$0xff]
    %v350 = vld [vmem:[#allocation2 + $0xa38] sm:$0xff]
    %v351 = vld [vmem:[#allocation2 + $0xa40] sm:$0xff]
    %v352 = vld [vmem:[#allocation2 + $0xa48] sm:$0xff]
    %v353 = vld [vmem:[#allocation2 + $0xa50] sm:$0xff]
    %v354 = vld [vmem:[#allocation2 + $0xa58] sm:$0xff]
    %v355 = vld [vmem:[#allocation2 + $0xa60] sm:$0xff]
    %v356 = vld [vmem:[#allocation2 + $0xa68] sm:$0xff]
    %v357 = vld [vmem:[#allocation2 + $0xa70] sm:$0xff]
    %v358 = vld [vmem:[#allocation2 + $0xa78] sm:$0xff]
    %v359 = vld [vmem:[#allocation2 + $0xa80] sm:$0xff]
    %v360 = vld [vmem:[#allocation2 + $0xa88] sm:$0xff]
    %v361 = vld [vmem:[#allocation2 + $0xa90] sm:$0xff]
    %v362 = vld [vmem:[#allocation2 + $0xa98] sm:$0xff]
    %v363 = vld [vmem:[#allocation2 + $0xaa0] sm:$0xff]
    %v364 = vld [vmem:[#allocation2 + $0xaa8] sm:$0xff]
    %v365 = vld [vmem:[#allocation2 + $0xab0] sm:$0xff]
    %v366 = vld [vmem:[#allocation2 + $0xab8] sm:$0xff]
    %v367 = vld [vmem:[#allocation2 + $0xac0] sm:$0xff]
    %v368 = vld [vmem:[#allocation2 + $0xac8] sm:$0xff]
    %v369 = vld [vmem:[#allocation2 + $0xad0] sm:$0xff]
    %v370 = vld [vmem:[#allocation2 + $0xad8] sm:$0xff]
    %v371 = vld [vmem:[#allocation2 + $0xae0] sm:$0xff]
    %v372 = vld [vmem:[#allocation2 + $0xae8] sm:$0xff]
    %v373 = vld [vmem:[#allocation2 + $0xaf0] sm:$0xff]
    %v374 = vld [vmem:[#allocation2 + $0xaf8] sm:$0xff]
    %v375 = vld [vmem:[#allocation2 + $0xb00] sm:$0xff]
    %v376 = vld [vmem:[#allocation2 + $0xb08] sm:$0xff]
    %v377 = vld [vmem:[#allocation2 + $0xb10] sm:$0xff]
    %v378 = vld [vmem:[#allocation2 + $0xb18] sm:$0xff]
    %v379 = vld [vmem:[#allocation2 + $0xb20] sm:$0xff]
    %v380 = vld [vmem:[#allocation2 + $0xb28] sm:$0xff]
    %v381 = vld [vmem:[#allocation2 + $0xb30] sm:$0xff]
    %v382 = vld [vmem:[#allocation2 + $0xb38] sm:$0xff]
    %v383 = vld [vmem:[#allocation2 + $0xb40] sm:$0xff]
    %v384 = vld [vmem:[#allocation2 + $0xb48] sm:$0xff]
    %v385 = vld [vmem:[#allocation2 + $0xb50] sm:$0xff]
    %v386 = vld [vmem:[#allocation2 + $0xb58] sm:$0xff]
    %v387 = vld [vmem:[#allocation2 + $0xb60] sm:$0xff]
    %v388 = vld [vmem:[#allocation2 + $0xb68] sm:$0xff]
    %v389 = vld [vmem:[#allocation2 + $0xb70] sm:$0xff]
    %v390 = vld [vmem:[#allocation2 + $0xb78] sm:$0xff]
    %v391 = vld [vmem:[#allocation2 + $0xb80] sm:$0xff]
    %v392 = vld [vmem:[#allocation2 + $0xb88] sm:$0xff]
    %v393 = vld [vmem:[#allocation2 + $0xb90] sm:$0xff]
    %v394 = vld [vmem:[#allocation2 + $0xb98] sm:$0xff]
    %v395 = vld [vmem:[#allocation2 + $0xba0] sm:$0xff]
    %v396 = vld [vmem:[#allocation2 + $0xba8] sm:$0xff]
    %v397 = vld [vmem:[#allocation2 + $0xbb0] sm:$0xff]
    %v398 = vld [vmem:[#allocation2 + $0xbb8] sm:$0xff]
    %v399 = vld [vmem:[#allocation2 + $0xbc0] sm:$0xff]
    %v400 = vld [vmem:[#allocation2 + $0xbc8] sm:$0xff]
    %v401 = vld [vmem:[#allocation2 + $0xbd0] sm:$0xff]
    %v402 = vld [vmem:[#allocation2 + $0xbd8] sm:$0xff]
    %v403 = vld [vmem:[#allocation2 + $0xbe0] sm:$0xff]
    %v404 = vld [vmem:[#allocation2 + $0xbe8] sm:$0xff]
    %v405 = vld [vmem:[#allocation2 + $0xbf0] sm:$0xff]
    %v406 = vld [vmem:[#allocation2 + $0xbf8] sm:$0xff]
    %v407 = vld [vmem:[#allocation2 + $0xc00] sm:$0xff]
    %v408 = vld [vmem:[#allocation2 + $0xc08] sm:$0xff]
    %v409 = vld [vmem:[#allocation2 + $0xc10] sm:$0xff]
    %v410 = vld [vmem:[#allocation2 + $0xc18] sm:$0xff]
    %v411 = vld [vmem:[#allocation2 + $0xc20] sm:$0xff]
    %v412 = vld [vmem:[#allocation2 + $0xc28] sm:$0xff]
    %v413 = vld [vmem:[#allocation2 + $0xc30] sm:$0xff]
    %v414 = vld [vmem:[#allocation2 + $0xc38] sm:$0xff]
    %v415 = vld [vmem:[#allocation2 + $0xc40] sm:$0xff]
    %v416 = vld [vmem:[#allocation2 + $0xc48] sm:$0xff]
    %v417 = vld [vmem:[#allocation2 + $0xc50] sm:$0xff]
    %v418 = vld [vmem:[#allocation2 + $0xc58] sm:$0xff]
    %v419 = vld [vmem:[#allocation2 + $0xc60] sm:$0xff]
    %v420 = vld [vmem:[#allocation2 + $0xc68] sm:$0xff]
    %v421 = vld [vmem:[#allocation2 + $0xc70] sm:$0xff]
    %v422 = vld [vmem:[#allocation2 + $0xc78] sm:$0xff]
    %v423 = vld [vmem:[#allocation2 + $0xc80] sm:$0xff]
    %v424 = vld [vmem:[#allocation2 + $0xc88] sm:$0xff]
    %v425 = vld [vmem:[#allocation2 + $0xc90] sm:$0xff]
    %v426 = vld [vmem:[#allocation2 + $0xc98] sm:$0xff]
    %v427 = vld [vmem:[#allocation2 + $0xca0] sm:$0xff]
    %v428 = vld [vmem:[#allocation2 + $0xca8] sm:$0xff]
    %v429 = vld [vmem:[#allocation2 + $0xcb0] sm:$0xff]
    %v430 = vld [vmem:[#allocation2 + $0xcb8] sm:$0xff]
    %v431 = vld [vmem:[#allocation2 + $0xcc0] sm:$0xff]
    %v432 = vld [vmem:[#allocation2 + $0xcc8] sm:$0xff]
    %v433 = vld [vmem:[#allocation2 + $0xcd0] sm:$0xff]
    %v434 = vld [vmem:[#allocation2 + $0xcd8] sm:$0xff]
    %v435 = vld [vmem:[#allocation2 + $0xce0] sm:$0xff]
    %v436 = vld [vmem:[#allocation2 + $0xce8] sm:$0xff]
    %v437 = vld [vmem:[#allocation2 + $0xcf0] sm:$0xff]
    %v438 = vld [vmem:[#allocation2 + $0xcf8] sm:$0xff]
    %v439 = vld [vmem:[#allocation2 + $0xd00] sm:$0xff]
    %v440 = vld [vmem:[#allocation2 + $0xd08] sm:$0xff]
    %v441 = vld [vmem:[#allocation2 + $0xd10] sm:$0xff]
    %v442 = vld [vmem:[#allocation2 + $0xd18] sm:$0xff]
    %v443 = vld [vmem:[#allocation2 + $0xd20] sm:$0xff]
    %v444 = vld [vmem:[#allocation2 + $0xd28] sm:$0xff]
    %v445 = vld [vmem:[#allocation2 + $0xd30] sm:$0xff]
    %v446 = vld [vmem:[#allocation2 + $0xd38] sm:$0xff]
    %v447 = vld [vmem:[#allocation2 + $0xd40] sm:$0xff]
    %v448 = vld [vmem:[#allocation2 + $0xd48] sm:$0xff]
    %v449 = vld [vmem:[#allocation2 + $0xd50] sm:$0xff]
    %v450 = vld [vmem:[#allocation2 + $0xd58] sm:$0xff]
    %v451 = vld [vmem:[#allocation2 + $0xd60] sm:$0xff]
    %v452 = vld [vmem:[#allocation2 + $0xd68] sm:$0xff]
    %v453 = vld [vmem:[#allocation2 + $0xd70] sm:$0xff]
    %v454 = vld [vmem:[#allocation2 + $0xd78] sm:$0xff]
    %v455 = vld [vmem:[#allocation2 + $0xd80] sm:$0xff]
    %v456 = vld [vmem:[#allocation2 + $0xd88] sm:$0xff]
    %v457 = vld [vmem:[#allocation2 + $0xd90] sm:$0xff]
    %v458 = vld [vmem:[#allocation2 + $0xd98] sm:$0xff]
    %v459 = vld [vmem:[#allocation2 + $0xda0] sm:$0xff]
    %v460 = vld [vmem:[#allocation2 + $0xda8] sm:$0xff]
    %v461 = vld [vmem:[#allocation2 + $0xdb0] sm:$0xff]
    %v462 = vld [vmem:[#allocation2 + $0xdb8] sm:$0xff]
    %v463 = vld [vmem:[#allocation2 + $0xdc0] sm:$0xff]
    %v464 = vld [vmem:[#allocation2 + $0xdc8] sm:$0xff]
    %v465 = vld [vmem:[#allocation2 + $0xdd0] sm:$0xff]
    %v466 = vld [vmem:[#allocation2 + $0xdd8] sm:$0xff]
    %v467 = vld [vmem:[#allocation2 + $0xde0] sm:$0xff]
    %v468 = vld [vmem:[#allocation2 + $0xde8] sm:$0xff]
    %v469 = vld [vmem:[#allocation2 + $0xdf0] sm:$0xff]
    %v470 = vld [vmem:[#allocation2 + $0xdf8] sm:$0xff]
    %v471 = vld [vmem:[#allocation2 + $0xe00] sm:$0xff]
    %v472 = vld [vmem:[#allocation2 + $0xe08] sm:$0xff]
    %v473 = vld [vmem:[#allocation2 + $0xe10] sm:$0xff]
    %v474 = vld [vmem:[#allocation2 + $0xe18] sm:$0xff]
    %v475 = vld [vmem:[#allocation2 + $0xe20] sm:$0xff]
    %v476 = vld [vmem:[#allocation2 + $0xe28] sm:$0xff]
    %v477 = vld [vmem:[#allocation2 + $0xe30] sm:$0xff]
    %v478 = vld [vmem:[#allocation2 + $0xe38] sm:$0xff]
    %v479 = vld [vmem:[#allocation2 + $0xe40] sm:$0xff]
    %v480 = vld [vmem:[#allocation2 + $0xe48] sm:$0xff]
    %v481 = vld [vmem:[#allocation2 + $0xe50] sm:$0xff]
    %v482 = vld [vmem:[#allocation2 + $0xe58] sm:$0xff]
    %v483 = vld [vmem:[#allocation2 + $0xe60] sm:$0xff]
    %v484 = vld [vmem:[#allocation2 + $0xe68] sm:$0xff]
    %v485 = vld [vmem:[#allocation2 + $0xe70] sm:$0xff]
    %v486 = vld [vmem:[#allocation2 + $0xe78] sm:$0xff]
    %v487 = vld [vmem:[#allocation2 + $0xe80] sm:$0xff]
    %v488 = vld [vmem:[#allocation2 + $0xe88] sm:$0xff]
    %v489 = vld [vmem:[#allocation2 + $0xe90] sm:$0xff]
    %v490 = vld [vmem:[#allocation2 + $0xe98] sm:$0xff]
    %v491 = vld [vmem:[#allocation2 + $0xea0] sm:$0xff]
    %v492 = vld [vmem:[#allocation2 + $0xea8] sm:$0xff]
    %v493 = vld [vmem:[#allocation2 + $0xeb0] sm:$0xff]
    %v494 = vld [vmem:[#allocation2 + $0xeb8] sm:$0xff]
    %v495 = vld [vmem:[#allocation2 + $0xec0] sm:$0xff]
    %v496 = vld [vmem:[#allocation2 + $0xec8] sm:$0xff]
    %v497 = vld [vmem:[#allocation2 + $0xed0] sm:$0xff]
    %v498 = vld [vmem:[#allocation2 + $0xed8] sm:$0xff]
    %v499 = vld [vmem:[#allocation2 + $0xee0] sm:$0xff]
    %v500 = vld [vmem:[#allocation2 + $0xee8] sm:$0xff]
    %v501 = vld [vmem:[#allocation2 + $0xef0] sm:$0xff]
    %v502 = vld [vmem:[#allocation2 + $0xef8] sm:$0xff]
    %v503 = vld [vmem:[#allocation2 + $0xf00] sm:$0xff]
    %v504 = vld [vmem:[#allocation2 + $0xf08] sm:$0xff]
    %v505 = vld [vmem:[#allocation2 + $0xf10] sm:$0xff]
    %v506 = vld [vmem:[#allocation2 + $0xf18] sm:$0xff]
    %v507 = vld [vmem:[#allocation2 + $0xf20] sm:$0xff]
    %v508 = vld [vmem:[#allocation2 + $0xf28] sm:$0xff]
    %v509 = vld [vmem:[#allocation2 + $0xf30] sm:$0xff]
    %v510 = vld [vmem:[#allocation2 + $0xf38] sm:$0xff]
    %v511 = vld [vmem:[#allocation2 + $0xf40] sm:$0xff]
    %v512 = vld [vmem:[#allocation2 + $0xf48] sm:$0xff]
    %v513 = vld [vmem:[#allocation2 + $0xf50] sm:$0xff]
    %v514 = vld [vmem:[#allocation2 + $0xf58] sm:$0xff]
    %v515 = vld [vmem:[#allocation2 + $0xf60] sm:$0xff]
    %v516 = vld [vmem:[#allocation2 + $0xf68] sm:$0xff]
    %v517 = vld [vmem:[#allocation2 + $0xf70] sm:$0xff]
    %v518 = vld [vmem:[#allocation2 + $0xf78] sm:$0xff]
    %v519 = vld [vmem:[#allocation2 + $0xf80] sm:$0xff]
    %v520 = vld [vmem:[#allocation2 + $0xf88] sm:$0xff]
    %v521 = vld [vmem:[#allocation2 + $0xf90] sm:$0xff]
    %v522 = vld [vmem:[#allocation2 + $0xf98] sm:$0xff]
    %v523 = vld [vmem:[#allocation2 + $0xfa0] sm:$0xff]
    %v524 = vld [vmem:[#allocation2 + $0xfa8] sm:$0xff]
    %v525 = vld [vmem:[#allocation2 + $0xfb0] sm:$0xff]
    %v526 = vld [vmem:[#allocation2 + $0xfb8] sm:$0xff]
    %v527 = vld [vmem:[#allocation2 + $0xfc0] sm:$0xff]
    %v528 = vld [vmem:[#allocation2 + $0xfc8] sm:$0xff]
    %v529 = vld [vmem:[#allocation2 + $0xfd0] sm:$0xff]
    %v530 = vld [vmem:[#allocation2 + $0xfd8] sm:$0xff]
    %v531 = vld [vmem:[#allocation2 + $0xfe0] sm:$0xff]
    %v532 = vld [vmem:[#allocation2 + $0xfe8] sm:$0xff]
    %v533 = vld [vmem:[#allocation2 + $0xff0] sm:$0xff]
    %v534 = vld [vmem:[#allocation2 + $0xff8] sm:$0xff]
    %v535 = vld [vmem:[#allocation2 + $0x1000] sm:$0xff]
    %v536 = vld [vmem:[#allocation2 + $0x1008] sm:$0xff]
    %v537 = vld [vmem:[#allocation2 + $0x1010] sm:$0xff]
    %v538 = vld [vmem:[#allocation2 + $0x1018] sm:$0xff]
    %v539 = vld [vmem:[#allocation2 + $0x1020] sm:$0xff]
    %v540 = vld [vmem:[#allocation2 + $0x1028] sm:$0xff]
    %v541 = vld [vmem:[#allocation2 + $0x1030] sm:$0xff]
    %v542 = vld [vmem:[#allocation2 + $0x1038] sm:$0xff]
    %v543 = vld [vmem:[#allocation2 + $0x1040] sm:$0xff]
    %v544 = vld [vmem:[#allocation2 + $0x1048] sm:$0xff]
    %v545 = vld [vmem:[#allocation2 + $0x1050] sm:$0xff]
    %v546 = vld [vmem:[#allocation2 + $0x1058] sm:$0xff]
    %v547 = vld [vmem:[#allocation2 + $0x1060] sm:$0xff]
    %v548 = vld [vmem:[#allocation2 + $0x1068] sm:$0xff]
    %v549 = vld [vmem:[#allocation2 + $0x1070] sm:$0xff]
    %v550 = vld [vmem:[#allocation2 + $0x1078] sm:$0xff]
    %v551 = vld [vmem:[#allocation2 + $0x1080] sm:$0xff]
    %v552 = vld [vmem:[#allocation2 + $0x1088] sm:$0xff]
    %v553 = vld [vmem:[#allocation2 + $0x1090] sm:$0xff]
    %v554 = vld [vmem:[#allocation2 + $0x1098] sm:$0xff]
    %v555 = vld [vmem:[#allocation2 + $0x10a0] sm:$0xff]
    %v556 = vld [vmem:[#allocation2 + $0x10a8] sm:$0xff]
    %v557 = vld [vmem:[#allocation2 + $0x10b0] sm:$0xff]
    %v558 = vld [vmem:[#allocation2 + $0x10b8] sm:$0xff]
    %v559 = vld [vmem:[#allocation2 + $0x10c0] sm:$0xff]
    %v560 = vld [vmem:[#allocation2 + $0x10c8] sm:$0xff]
    %v561 = vld [vmem:[#allocation2 + $0x10d0] sm:$0xff]
    %v562 = vld [vmem:[#allocation2 + $0x10d8] sm:$0xff]
    %v563 = vld [vmem:[#allocation2 + $0x10e0] sm:$0xff]
    %v564 = vld [vmem:[#allocation2 + $0x10e8] sm:$0xff]
    %v565 = vld [vmem:[#allocation2 + $0x10f0] sm:$0xff]
    %v566 = vld [vmem:[#allocation2 + $0x10f8] sm:$0xff]
    %v567 = vld [vmem:[#allocation2 + $0x1100] sm:$0xff]
    %v568 = vld [vmem:[#allocation2 + $0x1108] sm:$0xff]
    %v569 = vld [vmem:[#allocation2 + $0x1110] sm:$0xff]
    %v570 = vld [vmem:[#allocation2 + $0x1118] sm:$0xff]
    %v571 = vld [vmem:[#allocation2 + $0x1120] sm:$0xff]
    %v572 = vld [vmem:[#allocation2 + $0x1128] sm:$0xff]
    %v573 = vld [vmem:[#allocation2 + $0x1130] sm:$0xff]
    %v574 = vld [vmem:[#allocation2 + $0x1138] sm:$0xff]
    %v575 = vld [vmem:[#allocation2 + $0x1140] sm:$0xff]
    %v576 = vld [vmem:[#allocation2 + $0x1148] sm:$0xff]
    %v577 = vld [vmem:[#allocation2 + $0x1150] sm:$0xff]
    %v578 = vld [vmem:[#allocation2 + $0x1158] sm:$0xff]
    %v579 = vld [vmem:[#allocation2 + $0x1160] sm:$0xff]
    %v580 = vld [vmem:[#allocation2 + $0x1168] sm:$0xff]
    %v581 = vld [vmem:[#allocation2 + $0x1170] sm:$0xff]
    %v582 = vld [vmem:[#allocation2 + $0x1178] sm:$0xff]
    %v583 = vld [vmem:[#allocation2 + $0x1180] sm:$0xff]
    %v584 = vld [vmem:[#allocation2 + $0x1188] sm:$0xff]
    %v585 = vld [vmem:[#allocation2 + $0x1190] sm:$0xff]
    %v586 = vld [vmem:[#allocation2 + $0x1198] sm:$0xff]
    %v587 = vld [vmem:[#allocation2 + $0x11a0] sm:$0xff]
    %v588 = vld [vmem:[#allocation2 + $0x11a8] sm:$0xff]
    %v589 = vld [vmem:[#allocation2 + $0x11b0] sm:$0xff]
    %v590 = vld [vmem:[#allocation2 + $0x11b8] sm:$0xff]
    %v591 = vld [vmem:[#allocation2 + $0x11c0] sm:$0xff]
    %v592 = vld [vmem:[#allocation2 + $0x11c8] sm:$0xff]
    %v593 = vld [vmem:[#allocation2 + $0x11d0] sm:$0xff]
    %v594 = vld [vmem:[#allocation2 + $0x11d8] sm:$0xff]
    %v595 = vld [vmem:[#allocation2 + $0x11e0] sm:$0xff]
    %v596 = vld [vmem:[#allocation2 + $0x11e8] sm:$0xff]
    %v597 = vld [vmem:[#allocation2 + $0x11f0] sm:$0xff]
    %v598 = vld [vmem:[#allocation2 + $0x11f8] sm:$0xff]
    %v599 = vld [vmem:[#allocation2 + $0x1200] sm:$0xff]
    %v600 = vld [vmem:[#allocation2 + $0x1208] sm:$0xff]
    %v601 = vld [vmem:[#allocation2 + $0x1210] sm:$0xff]
    %v602 = vld [vmem:[#allocation2 + $0x1218] sm:$0xff]
    %v603 = vld [vmem:[#allocation2 + $0x1220] sm:$0xff]
    %v604 = vld [vmem:[#allocation2 + $0x1228] sm:$0xff]
    %v605 = vld [vmem:[#allocation2 + $0x1230] sm:$0xff]
    %v606 = vld [vmem:[#allocation2 + $0x1238] sm:$0xff]
    %v607 = vld [vmem:[#allocation2 + $0x1240] sm:$0xff]
    %v608 = vld [vmem:[#allocation2 + $0x1248] sm:$0xff]
    %v609 = vld [vmem:[#allocation2 + $0x1250] sm:$0xff]
    %v610 = vld [vmem:[#allocation2 + $0x1258] sm:$0xff]
    %v611 = vld [vmem:[#allocation2 + $0x1260] sm:$0xff]
    %v612 = vld [vmem:[#allocation2 + $0x1268] sm:$0xff]
    %v613 = vld [vmem:[#allocation2 + $0x1270] sm:$0xff]
    %v614 = vld [vmem:[#allocation2 + $0x1278] sm:$0xff]
    %v615 = vld [vmem:[#allocation2 + $0x1280] sm:$0xff]
    %v616 = vld [vmem:[#allocation2 + $0x1288] sm:$0xff]
    %v617 = vld [vmem:[#allocation2 + $0x1290] sm:$0xff]
    %v618 = vld [vmem:[#allocation2 + $0x1298] sm:$0xff]
    %v619 = vld [vmem:[#allocation2 + $0x12a0] sm:$0xff]
    %v620 = vld [vmem:[#allocation2 + $0x12a8] sm:$0xff]
    %v621 = vld [vmem:[#allocation2 + $0x12b0] sm:$0xff]
    %v622 = vld [vmem:[#allocation2 + $0x12b8] sm:$0xff]
    %v623 = vld [vmem:[#allocation2 + $0x12c0] sm:$0xff]
    %v624 = vld [vmem:[#allocation2 + $0x12c8] sm:$0xff]
    %v625 = vld [vmem:[#allocation2 + $0x12d0] sm:$0xff]
    %v626 = vld [vmem:[#allocation2 + $0x12d8] sm:$0xff]
    %v627 = vld [vmem:[#allocation2 + $0x12e0] sm:$0xff]
    %v628 = vld [vmem:[#allocation2 + $0x12e8] sm:$0xff]
    %v629 = vld [vmem:[#allocation2 + $0x12f0] sm:$0xff]
    %v630 = vld [vmem:[#allocation2 + $0x12f8] sm:$0xff]
    %v631 = vld [vmem:[#allocation2 + $0x1300] sm:$0xff]
    %v632 = vld [vmem:[#allocation2 + $0x1308] sm:$0xff]
    %v633 = vld [vmem:[#allocation2 + $0x1310] sm:$0xff]
    %v634 = vld [vmem:[#allocation2 + $0x1318] sm:$0xff]
    %v635 = vld [vmem:[#allocation2 + $0x1320] sm:$0xff]
    %v636 = vld [vmem:[#allocation2 + $0x1328] sm:$0xff]
    %v637 = vld [vmem:[#allocation2 + $0x1330] sm:$0xff]
    %v638 = vld [vmem:[#allocation2 + $0x1338] sm:$0xff]
    %v639 = vld [vmem:[#allocation2 + $0x1340] sm:$0xff]
    %v640 = vld [vmem:[#allocation2 + $0x1348] sm:$0xff]
    %v641 = vld [vmem:[#allocation2 + $0x1350] sm:$0xff]
    %v642 = vld [vmem:[#allocation2 + $0x1358] sm:$0xff]
    %v643 = vld [vmem:[#allocation2 + $0x1360] sm:$0xff]
    %v644 = vld [vmem:[#allocation2 + $0x1368] sm:$0xff]
    %v645 = vld [vmem:[#allocation2 + $0x1370] sm:$0xff]
    %v646 = vld [vmem:[#allocation2 + $0x1378] sm:$0xff]
    %v647 = vld [vmem:[#allocation2 + $0x1380] sm:$0xff]
    %v648 = vld [vmem:[#allocation2 + $0x1388] sm:$0xff]
    %v649 = vld [vmem:[#allocation2 + $0x1390] sm:$0xff]
    %v650 = vld [vmem:[#allocation2 + $0x1398] sm:$0xff]
    %v651 = vld [vmem:[#allocation2 + $0x13a0] sm:$0xff]
    %v652 = vld [vmem:[#allocation2 + $0x13a8] sm:$0xff]
    %v653 = vld [vmem:[#allocation2 + $0x13b0] sm:$0xff]
    %v654 = vld [vmem:[#allocation2 + $0x13b8] sm:$0xff]
    %v655 = vld [vmem:[#allocation2 + $0x13c0] sm:$0xff]
    %v656 = vld [vmem:[#allocation2 + $0x13c8] sm:$0xff]
    %v657 = vld [vmem:[#allocation2 + $0x13d0] sm:$0xff]
    %v658 = vld [vmem:[#allocation2 + $0x13d8] sm:$0xff]
    %v659 = vld [vmem:[#allocation2 + $0x13e0] sm:$0xff]
    %v660 = vld [vmem:[#allocation2 + $0x13e8] sm:$0xff]
    %v661 = vld [vmem:[#allocation2 + $0x13f0] sm:$0xff]
    %v662 = vld [vmem:[#allocation2 + $0x13f8] sm:$0xff]
    %v663 = vld [vmem:[#allocation2 + $0x1400] sm:$0xff]
    %v664 = vld [vmem:[#allocation2 + $0x1408] sm:$0xff]
    %v665 = vld [vmem:[#allocation2 + $0x1410] sm:$0xff]
    %v666 = vld [vmem:[#allocation2 + $0x1418] sm:$0xff]
    %v667 = vld [vmem:[#allocation2 + $0x1420] sm:$0xff]
    %v668 = vld [vmem:[#allocation2 + $0x1428] sm:$0xff]
    %v669 = vld [vmem:[#allocation2 + $0x1430] sm:$0xff]
    %v670 = vld [vmem:[#allocation2 + $0x1438] sm:$0xff]
    %v671 = vld [vmem:[#allocation2 + $0x1440] sm:$0xff]
    %v672 = vld [vmem:[#allocation2 + $0x1448] sm:$0xff]
    %v673 = vld [vmem:[#allocation2 + $0x1450] sm:$0xff]
    %v674 = vld [vmem:[#allocation2 + $0x1458] sm:$0xff]
    %v675 = vld [vmem:[#allocation2 + $0x1460] sm:$0xff]
    %v676 = vld [vmem:[#allocation2 + $0x1468] sm:$0xff]
    %v677 = vld [vmem:[#allocation2 + $0x1470] sm:$0xff]
    %v678 = vld [vmem:[#allocation2 + $0x1478] sm:$0xff]
    %v679 = vld [vmem:[#allocation2 + $0x1480] sm:$0xff]
    %v680 = vld [vmem:[#allocation2 + $0x1488] sm:$0xff]
    %v681 = vld [vmem:[#allocation2 + $0x1490] sm:$0xff]
    %v682 = vld [vmem:[#allocation2 + $0x1498] sm:$0xff]
    %v683 = vld [vmem:[#allocation2 + $0x14a0] sm:$0xff]
    %v684 = vld [vmem:[#allocation2 + $0x14a8] sm:$0xff]
    %v685 = vld [vmem:[#allocation2 + $0x14b0] sm:$0xff]
    %v686 = vld [vmem:[#allocation2 + $0x14b8] sm:$0xff]
    %v687 = vld [vmem:[#allocation2 + $0x14c0] sm:$0xff]
    %v688 = vld [vmem:[#allocation2 + $0x14c8] sm:$0xff]
    %v689 = vld [vmem:[#allocation2 + $0x14d0] sm:$0xff]
    %v690 = vld [vmem:[#allocation2 + $0x14d8] sm:$0xff]
    %v691 = vld [vmem:[#allocation2 + $0x14e0] sm:$0xff]
    %v692 = vld [vmem:[#allocation2 + $0x14e8] sm:$0xff]
    %v693 = vld [vmem:[#allocation2 + $0x14f0] sm:$0xff]
    %v694 = vld [vmem:[#allocation2 + $0x14f8] sm:$0xff]
    %v695 = vld [vmem:[#allocation2 + $0x1500] sm:$0xff]
    %v696 = vld [vmem:[#allocation2 + $0x1508] sm:$0xff]
    %v697 = vld [vmem:[#allocation2 + $0x1510] sm:$0xff]
    %v698 = vld [vmem:[#allocation2 + $0x1518] sm:$0xff]
    %v699 = vld [vmem:[#allocation2 + $0x1520] sm:$0xff]
    %v700 = vld [vmem:[#allocation2 + $0x1528] sm:$0xff]
    %v701 = vld [vmem:[#allocation2 + $0x1530] sm:$0xff]
    %v702 = vld [vmem:[#allocation2 + $0x1538] sm:$0xff]
    %v703 = vld [vmem:[#allocation2 + $0x1540] sm:$0xff]
    %v704 = vld [vmem:[#allocation2 + $0x1548] sm:$0xff]
    %v705 = vld [vmem:[#allocation2 + $0x1550] sm:$0xff]
    %v706 = vld [vmem:[#allocation2 + $0x1558] sm:$0xff]
    %v707 = vld [vmem:[#allocation2 + $0x1560] sm:$0xff]
    %v708 = vld [vmem:[#allocation2 + $0x1568] sm:$0xff]
    %v709 = vld [vmem:[#allocation2 + $0x1570] sm:$0xff]
    %v710 = vld [vmem:[#allocation2 + $0x1578] sm:$0xff]
    %v711 = vld [vmem:[#allocation2 + $0x1580] sm:$0xff]
    %v712 = vld [vmem:[#allocation2 + $0x1588] sm:$0xff]
    %v713 = vld [vmem:[#allocation2 + $0x1590] sm:$0xff]
    %v714 = vld [vmem:[#allocation2 + $0x1598] sm:$0xff]
    %v715 = vld [vmem:[#allocation2 + $0x15a0] sm:$0xff]
    %v716 = vld [vmem:[#allocation2 + $0x15a8] sm:$0xff]
    %v717 = vld [vmem:[#allocation2 + $0x15b0] sm:$0xff]
    %v718 = vld [vmem:[#allocation2 + $0x15b8] sm:$0xff]
    %v719 = vld [vmem:[#allocation2 + $0x15c0] sm:$0xff]
    %v720 = vld [vmem:[#allocation2 + $0x15c8] sm:$0xff]
    %v721 = vld [vmem:[#allocation2 + $0x15d0] sm:$0xff]
    %v722 = vld [vmem:[#allocation2 + $0x15d8] sm:$0xff]
    %v723 = vld [vmem:[#allocation2 + $0x15e0] sm:$0xff]
    %v724 = vld [vmem:[#allocation2 + $0x15e8] sm:$0xff]
    %v725 = vld [vmem:[#allocation2 + $0x15f0] sm:$0xff]
    %v726 = vld [vmem:[#allocation2 + $0x15f8] sm:$0xff]
    %v727 = vld [vmem:[#allocation2 + $0x1600] sm:$0xff]
    %v728 = vld [vmem:[#allocation2 + $0x1608] sm:$0xff]
    %v729 = vld [vmem:[#allocation2 + $0x1610] sm:$0xff]
    %v730 = vld [vmem:[#allocation2 + $0x1618] sm:$0xff]
    %v731 = vld [vmem:[#allocation2 + $0x1620] sm:$0xff]
    %v732 = vld [vmem:[#allocation2 + $0x1628] sm:$0xff]
    %v733 = vld [vmem:[#allocation2 + $0x1630] sm:$0xff]
    %v734 = vld [vmem:[#allocation2 + $0x1638] sm:$0xff]
    %v735 = vld [vmem:[#allocation2 + $0x1640] sm:$0xff]
    %v736 = vld [vmem:[#allocation2 + $0x1648] sm:$0xff]
    %v737 = vld [vmem:[#allocation2 + $0x1650] sm:$0xff]
    %v738 = vld [vmem:[#allocation2 + $0x1658] sm:$0xff]
    %v739 = vld [vmem:[#allocation2 + $0x1660] sm:$0xff]
    %v740 = vld [vmem:[#allocation2 + $0x1668] sm:$0xff]
    %v741 = vld [vmem:[#allocation2 + $0x1670] sm:$0xff]
    %v742 = vld [vmem:[#allocation2 + $0x1678] sm:$0xff]
    %v743 = vld [vmem:[#allocation2 + $0x1680] sm:$0xff]
    %v744 = vld [vmem:[#allocation2 + $0x1688] sm:$0xff]
    %v745 = vld [vmem:[#allocation2 + $0x1690] sm:$0xff]
    %v746 = vld [vmem:[#allocation2 + $0x1698] sm:$0xff]
    %v747 = vld [vmem:[#allocation2 + $0x16a0] sm:$0xff]
    %v748 = vld [vmem:[#allocation2 + $0x16a8] sm:$0xff]
    %v749 = vld [vmem:[#allocation2 + $0x16b0] sm:$0xff]
    %v750 = vld [vmem:[#allocation2 + $0x16b8] sm:$0xff]
    %v751 = vld [vmem:[#allocation2 + $0x16c0] sm:$0xff]
    %v752 = vld [vmem:[#allocation2 + $0x16c8] sm:$0xff]
    %v753 = vld [vmem:[#allocation2 + $0x16d0] sm:$0xff]
    %v754 = vld [vmem:[#allocation2 + $0x16d8] sm:$0xff]
    %v755 = vld [vmem:[#allocation2 + $0x16e0] sm:$0xff]
    %v756 = vld [vmem:[#allocation2 + $0x16e8] sm:$0xff]
    %v757 = vld [vmem:[#allocation2 + $0x16f0] sm:$0xff]
    %v758 = vld [vmem:[#allocation2 + $0x16f8] sm:$0xff]
    %v759 = vld [vmem:[#allocation2 + $0x1700] sm:$0xff]
    %v760 = vld [vmem:[#allocation2 + $0x1708] sm:$0xff]
    %v761 = vld [vmem:[#allocation2 + $0x1710] sm:$0xff]
    %v762 = vld [vmem:[#allocation2 + $0x1718] sm:$0xff]
    %v763 = vld [vmem:[#allocation2 + $0x1720] sm:$0xff]
    %v764 = vld [vmem:[#allocation2 + $0x1728] sm:$0xff]
    %v765 = vld [vmem:[#allocation2 + $0x1730] sm:$0xff]
    %v766 = vld [vmem:[#allocation2 + $0x1738] sm:$0xff]
    %v767 = vld [vmem:[#allocation2 + $0x1740] sm:$0xff]
    %v768 = vld [vmem:[#allocation2 + $0x1748] sm:$0xff]
    %v769 = vld [vmem:[#allocation2 + $0x1750] sm:$0xff]
    %v770 = vld [vmem:[#allocation2 + $0x1758] sm:$0xff]
    %v771 = vld [vmem:[#allocation2 + $0x1760] sm:$0xff]
    %v772 = vld [vmem:[#allocation2 + $0x1768] sm:$0xff]
    %v773 = vld [vmem:[#allocation2 + $0x1770] sm:$0xff]
    %v774 = vld [vmem:[#allocation2 + $0x1778] sm:$0xff]
    %v775 = vld [vmem:[#allocation2 + $0x1780] sm:$0xff]
    %v776 = vld [vmem:[#allocation2 + $0x1788] sm:$0xff]
    %v777 = vld [vmem:[#allocation2 + $0x1790] sm:$0xff]
    %v778 = vld [vmem:[#allocation2 + $0x1798] sm:$0xff]
    %v779 = vld [vmem:[#allocation2 + $0x17a0] sm:$0xff]
    %v780 = vld [vmem:[#allocation2 + $0x17a8] sm:$0xff]
    %v781 = vld [vmem:[#allocation2 + $0x17b0] sm:$0xff]
    %v782 = vld [vmem:[#allocation2 + $0x17b8] sm:$0xff]
    %v783 = vld [vmem:[#allocation2 + $0x17c0] sm:$0xff]
    %v784 = vld [vmem:[#allocation2 + $0x17c8] sm:$0xff]
    %v785 = vld [vmem:[#allocation2 + $0x17d0] sm:$0xff]
    %v786 = vld [vmem:[#allocation2 + $0x17d8] sm:$0xff]
    %v787 = vld [vmem:[#allocation2 + $0x17e0] sm:$0xff]
    %v788 = vld [vmem:[#allocation2 + $0x17e8] sm:$0xff]
    %v789 = vld [vmem:[#allocation2 + $0x17f0] sm:$0xff]
    %v790 = vld [vmem:[#allocation2 + $0x17f8] sm:$0xff]
    %v791 = vld [vmem:[#allocation2 + $0x1800] sm:$0xff]
    %v792 = vld [vmem:[#allocation2 + $0x1808] sm:$0xff]
    %v793 = vld [vmem:[#allocation2 + $0x1810] sm:$0xff]
    %v794 = vld [vmem:[#allocation2 + $0x1818] sm:$0xff]
    %v795 = vld [vmem:[#allocation2 + $0x1820] sm:$0xff]
    %v796 = vld [vmem:[#allocation2 + $0x1828] sm:$0xff]
    %v797 = vld [vmem:[#allocation2 + $0x1830] sm:$0xff]
    %v798 = vld [vmem:[#allocation2 + $0x1838] sm:$0xff]
    %v799 = vld [vmem:[#allocation2 + $0x1840] sm:$0xff]
    %v800 = vld [vmem:[#allocation2 + $0x1848] sm:$0xff]
    %v801 = vld [vmem:[#allocation2 + $0x1850] sm:$0xff]
    %v802 = vld [vmem:[#allocation2 + $0x1858] sm:$0xff]
    %v803 = vld [vmem:[#allocation2 + $0x1860] sm:$0xff]
    %v804 = vld [vmem:[#allocation2 + $0x1868] sm:$0xff]
    %v805 = vld [vmem:[#allocation2 + $0x1870] sm:$0xff]
    %v806 = vld [vmem:[#allocation2 + $0x1878] sm:$0xff]
    %v807 = vld [vmem:[#allocation2 + $0x1880] sm:$0xff]
    %v808 = vld [vmem:[#allocation2 + $0x1888] sm:$0xff]
    %v809 = vld [vmem:[#allocation2 + $0x1890] sm:$0xff]
    %v810 = vld [vmem:[#allocation2 + $0x1898] sm:$0xff]
    %v811 = vld [vmem:[#allocation2 + $0x18a0] sm:$0xff]
    %v812 = vld [vmem:[#allocation2 + $0x18a8] sm:$0xff]
    %v813 = vld [vmem:[#allocation2 + $0x18b0] sm:$0xff]
    %v814 = vld [vmem:[#allocation2 + $0x18b8] sm:$0xff]
    %v815 = vld [vmem:[#allocation2 + $0x18c0] sm:$0xff]
    %v816 = vld [vmem:[#allocation2 + $0x18c8] sm:$0xff]
    %v817 = vld [vmem:[#allocation2 + $0x18d0] sm:$0xff]
    %v818 = vld [vmem:[#allocation2 + $0x18d8] sm:$0xff]
    %v819 = vld [vmem:[#allocation2 + $0x18e0] sm:$0xff]
    %v820 = vld [vmem:[#allocation2 + $0x18e8] sm:$0xff]
    %v821 = vld [vmem:[#allocation2 + $0x18f0] sm:$0xff]
    %v822 = vld [vmem:[#allocation2 + $0x18f8] sm:$0xff]
    %v823 = vld [vmem:[#allocation2 + $0x1900] sm:$0xff]
    %v824 = vld [vmem:[#allocation2 + $0x1908] sm:$0xff]
    %v825 = vld [vmem:[#allocation2 + $0x1910] sm:$0xff]
    %v826 = vld [vmem:[#allocation2 + $0x1918] sm:$0xff]
    %v827 = vld [vmem:[#allocation2 + $0x1920] sm:$0xff]
    %v828 = vld [vmem:[#allocation2 + $0x1928] sm:$0xff]
    %v829 = vld [vmem:[#allocation2 + $0x1930] sm:$0xff]
    %v830 = vld [vmem:[#allocation2 + $0x1938] sm:$0xff]
    %v831 = vld [vmem:[#allocation2 + $0x1940] sm:$0xff]
    %v832 = vld [vmem:[#allocation2 + $0x1948] sm:$0xff]
    %v833 = vld [vmem:[#allocation2 + $0x1950] sm:$0xff]
    %v834 = vld [vmem:[#allocation2 + $0x1958] sm:$0xff]
    %v835 = vld [vmem:[#allocation2 + $0x1960] sm:$0xff]
    %v836 = vld [vmem:[#allocation2 + $0x1968] sm:$0xff]
    %v837 = vld [vmem:[#allocation2 + $0x1970] sm:$0xff]
    %v838 = vld [vmem:[#allocation2 + $0x1978] sm:$0xff]
    %v839 = vld [vmem:[#allocation2 + $0x1980] sm:$0xff]
    %v840 = vld [vmem:[#allocation2 + $0x1988] sm:$0xff]
    %v841 = vld [vmem:[#allocation2 + $0x1990] sm:$0xff]
    %v842 = vld [vmem:[#allocation2 + $0x1998] sm:$0xff]
    %v843 = vld [vmem:[#allocation2 + $0x19a0] sm:$0xff]
    %v844 = vld [vmem:[#allocation2 + $0x19a8] sm:$0xff]
    %v845 = vld [vmem:[#allocation2 + $0x19b0] sm:$0xff]
    %v846 = vld [vmem:[#allocation2 + $0x19b8] sm:$0xff]
    %v847 = vld [vmem:[#allocation2 + $0x19c0] sm:$0xff]
    %v848 = vld [vmem:[#allocation2 + $0x19c8] sm:$0xff]
    %v849 = vld [vmem:[#allocation2 + $0x19d0] sm:$0xff]
    %v850 = vld [vmem:[#allocation2 + $0x19d8] sm:$0xff]
    %v851 = vld [vmem:[#allocation2 + $0x19e0] sm:$0xff]
    %v852 = vld [vmem:[#allocation2 + $0x19e8] sm:$0xff]
    %v853 = vld [vmem:[#allocation2 + $0x19f0] sm:$0xff]
    %v854 = vld [vmem:[#allocation2 + $0x19f8] sm:$0xff]
    %v855 = vld [vmem:[#allocation2 + $0x1a00] sm:$0xff]
    %v856 = vld [vmem:[#allocation2 + $0x1a08] sm:$0xff]
    %v857 = vld [vmem:[#allocation2 + $0x1a10] sm:$0xff]
    %v858 = vld [vmem:[#allocation2 + $0x1a18] sm:$0xff]
    %v859 = vld [vmem:[#allocation2 + $0x1a20] sm:$0xff]
    %v860 = vld [vmem:[#allocation2 + $0x1a28] sm:$0xff]
    %v861 = vld [vmem:[#allocation2 + $0x1a30] sm:$0xff]
    %v862 = vld [vmem:[#allocation2 + $0x1a38] sm:$0xff]
    %v863 = vld [vmem:[#allocation2 + $0x1a40] sm:$0xff]
    %v864 = vld [vmem:[#allocation2 + $0x1a48] sm:$0xff]
    %v865 = vld [vmem:[#allocation2 + $0x1a50] sm:$0xff]
    %v866 = vld [vmem:[#allocation2 + $0x1a58] sm:$0xff]
    %v867 = vld [vmem:[#allocation2 + $0x1a60] sm:$0xff]
    %v868 = vld [vmem:[#allocation2 + $0x1a68] sm:$0xff]
    %v869 = vld [vmem:[#allocation2 + $0x1a70] sm:$0xff]
    %v870 = vld [vmem:[#allocation2 + $0x1a78] sm:$0xff]
    %v871 = vld [vmem:[#allocation2 + $0x1a80] sm:$0xff]
    %v872 = vld [vmem:[#allocation2 + $0x1a88] sm:$0xff]
    %v873 = vld [vmem:[#allocation2 + $0x1a90] sm:$0xff]
    %v874 = vld [vmem:[#allocation2 + $0x1a98] sm:$0xff]
    %v875 = vld [vmem:[#allocation2 + $0x1aa0] sm:$0xff]
    %v876 = vld [vmem:[#allocation2 + $0x1aa8] sm:$0xff]
    %v877 = vld [vmem:[#allocation2 + $0x1ab0] sm:$0xff]
    %v878 = vld [vmem:[#allocation2 + $0x1ab8] sm:$0xff]
    %v879 = vld [vmem:[#allocation2 + $0x1ac0] sm:$0xff]
    %v880 = vld [vmem:[#allocation2 + $0x1ac8] sm:$0xff]
    %v881 = vld [vmem:[#allocation2 + $0x1ad0] sm:$0xff]
    %v882 = vld [vmem:[#allocation2 + $0x1ad8] sm:$0xff]
    %v883 = vld [vmem:[#allocation2 + $0x1ae0] sm:$0xff]
    %v884 = vld [vmem:[#allocation2 + $0x1ae8] sm:$0xff]
    %v885 = vld [vmem:[#allocation2 + $0x1af0] sm:$0xff]
    %v886 = vld [vmem:[#allocation2 + $0x1af8] sm:$0xff]
    %v887 = vld [vmem:[#allocation2 + $0x1b00] sm:$0xff]
    %v888 = vld [vmem:[#allocation2 + $0x1b08] sm:$0xff]
    %v889 = vld [vmem:[#allocation2 + $0x1b10] sm:$0xff]
    %v890 = vld [vmem:[#allocation2 + $0x1b18] sm:$0xff]
    %v891 = vld [vmem:[#allocation2 + $0x1b20] sm:$0xff]
    %v892 = vld [vmem:[#allocation2 + $0x1b28] sm:$0xff]
    %v893 = vld [vmem:[#allocation2 + $0x1b30] sm:$0xff]
    %v894 = vld [vmem:[#allocation2 + $0x1b38] sm:$0xff]
    %v895 = vld [vmem:[#allocation2 + $0x1b40] sm:$0xff]
    %v896 = vld [vmem:[#allocation2 + $0x1b48] sm:$0xff]
    %v897 = vld [vmem:[#allocation2 + $0x1b50] sm:$0xff]
    %v898 = vld [vmem:[#allocation2 + $0x1b58] sm:$0xff]
    %v899 = vld [vmem:[#allocation2 + $0x1b60] sm:$0xff]
    %v900 = vld [vmem:[#allocation2 + $0x1b68] sm:$0xff]
    %v901 = vld [vmem:[#allocation2 + $0x1b70] sm:$0xff]
    %v902 = vld [vmem:[#allocation2 + $0x1b78] sm:$0xff]
    %v903 = vld [vmem:[#allocation2 + $0x1b80] sm:$0xff]
    %v904 = vld [vmem:[#allocation2 + $0x1b88] sm:$0xff]
    %v905 = vld [vmem:[#allocation2 + $0x1b90] sm:$0xff]
    %v906 = vld [vmem:[#allocation2 + $0x1b98] sm:$0xff]
    %v907 = vld [vmem:[#allocation2 + $0x1ba0] sm:$0xff]
    %v908 = vld [vmem:[#allocation2 + $0x1ba8] sm:$0xff]
    %v909 = vld [vmem:[#allocation2 + $0x1bb0] sm:$0xff]
    %v910 = vld [vmem:[#allocation2 + $0x1bb8] sm:$0xff]
    %v911 = vld [vmem:[#allocation2 + $0x1bc0] sm:$0xff]
    %v912 = vld [vmem:[#allocation2 + $0x1bc8] sm:$0xff]
    %v913 = vld [vmem:[#allocation2 + $0x1bd0] sm:$0xff]
    %v914 = vld [vmem:[#allocation2 + $0x1bd8] sm:$0xff]
    %v915 = vld [vmem:[#allocation2 + $0x1be0] sm:$0xff]
    %v916 = vld [vmem:[#allocation2 + $0x1be8] sm:$0xff]
    %v917 = vld [vmem:[#allocation2 + $0x1bf0] sm:$0xff]
    %v918 = vld [vmem:[#allocation2 + $0x1bf8] sm:$0xff]
    %v919 = vld [vmem:[#allocation2 + $0x1c00] sm:$0xff]
    %v920 = vld [vmem:[#allocation2 + $0x1c08] sm:$0xff]
    %v921 = vld [vmem:[#allocation2 + $0x1c10] sm:$0xff]
    %v922 = vld [vmem:[#allocation2 + $0x1c18] sm:$0xff]
    %v923 = vld [vmem:[#allocation2 + $0x1c20] sm:$0xff]
    %v924 = vld [vmem:[#allocation2 + $0x1c28] sm:$0xff]
    %v925 = vld [vmem:[#allocation2 + $0x1c30] sm:$0xff]
    %v926 = vld [vmem:[#allocation2 + $0x1c38] sm:$0xff]
    %v927 = vld [vmem:[#allocation2 + $0x1c40] sm:$0xff]
    %v928 = vld [vmem:[#allocation2 + $0x1c48] sm:$0xff]
    %v929 = vld [vmem:[#allocation2 + $0x1c50] sm:$0xff]
    %v930 = vld [vmem:[#allocation2 + $0x1c58] sm:$0xff]
    %v931 = vld [vmem:[#allocation2 + $0x1c60] sm:$0xff]
    %v932 = vld [vmem:[#allocation2 + $0x1c68] sm:$0xff]
    %v933 = vld [vmem:[#allocation2 + $0x1c70] sm:$0xff]
    %v934 = vld [vmem:[#allocation2 + $0x1c78] sm:$0xff]
    %v935 = vld [vmem:[#allocation2 + $0x1c80] sm:$0xff]
    %v936 = vld [vmem:[#allocation2 + $0x1c88] sm:$0xff]
    %v937 = vld [vmem:[#allocation2 + $0x1c90] sm:$0xff]
    %v938 = vld [vmem:[#allocation2 + $0x1c98] sm:$0xff]
    %v939 = vld [vmem:[#allocation2 + $0x1ca0] sm:$0xff]
    %v940 = vld [vmem:[#allocation2 + $0x1ca8] sm:$0xff]
    %v941 = vld [vmem:[#allocation2 + $0x1cb0] sm:$0xff]
    %v942 = vld [vmem:[#allocation2 + $0x1cb8] sm:$0xff]
    %v943 = vld [vmem:[#allocation2 + $0x1cc0] sm:$0xff]
    %v944 = vld [vmem:[#allocation2 + $0x1cc8] sm:$0xff]
    %v945 = vld [vmem:[#allocation2 + $0x1cd0] sm:$0xff]
    %v946 = vld [vmem:[#allocation2 + $0x1cd8] sm:$0xff]
    %v947 = vld [vmem:[#allocation2 + $0x1ce0] sm:$0xff]
    %v948 = vld [vmem:[#allocation2 + $0x1ce8] sm:$0xff]
    %v949 = vld [vmem:[#allocation2 + $0x1cf0] sm:$0xff]
    %v950 = vld [vmem:[#allocation2 + $0x1cf8] sm:$0xff]
    %v951 = vld [vmem:[#allocation2 + $0x1d00] sm:$0xff]
    %v952 = vld [vmem:[#allocation2 + $0x1d08] sm:$0xff]
    %v953 = vld [vmem:[#allocation2 + $0x1d10] sm:$0xff]
    %v954 = vld [vmem:[#allocation2 + $0x1d18] sm:$0xff]
    %v955 = vld [vmem:[#allocation2 + $0x1d20] sm:$0xff]
    %v956 = vld [vmem:[#allocation2 + $0x1d28] sm:$0xff]
    %v957 = vld [vmem:[#allocation2 + $0x1d30] sm:$0xff]
    %v958 = vld [vmem:[#allocation2 + $0x1d38] sm:$0xff]
    %v959 = vld [vmem:[#allocation2 + $0x1d40] sm:$0xff]
    %v960 = vld [vmem:[#allocation2 + $0x1d48] sm:$0xff]
    %v961 = vld [vmem:[#allocation2 + $0x1d50] sm:$0xff]
    %v962 = vld [vmem:[#allocation2 + $0x1d58] sm:$0xff]
    %v963 = vld [vmem:[#allocation2 + $0x1d60] sm:$0xff]
    %v964 = vld [vmem:[#allocation2 + $0x1d68] sm:$0xff]
    %v965 = vld [vmem:[#allocation2 + $0x1d70] sm:$0xff]
    %v966 = vld [vmem:[#allocation2 + $0x1d78] sm:$0xff]
    %v967 = vld [vmem:[#allocation2 + $0x1d80] sm:$0xff]
    %v968 = vld [vmem:[#allocation2 + $0x1d88] sm:$0xff]
    %v969 = vld [vmem:[#allocation2 + $0x1d90] sm:$0xff]
    %v970 = vld [vmem:[#allocation2 + $0x1d98] sm:$0xff]
    %v971 = vld [vmem:[#allocation2 + $0x1da0] sm:$0xff]
    %v972 = vld [vmem:[#allocation2 + $0x1da8] sm:$0xff]
    %v973 = vld [vmem:[#allocation2 + $0x1db0] sm:$0xff]
    %v974 = vld [vmem:[#allocation2 + $0x1db8] sm:$0xff]
    %v975 = vld [vmem:[#allocation2 + $0x1dc0] sm:$0xff]
    %v976 = vld [vmem:[#allocation2 + $0x1dc8] sm:$0xff]
    %v977 = vld [vmem:[#allocation2 + $0x1dd0] sm:$0xff]
    %v978 = vld [vmem:[#allocation2 + $0x1dd8] sm:$0xff]
    %v979 = vld [vmem:[#allocation2 + $0x1de0] sm:$0xff]
    %v980 = vld [vmem:[#allocation2 + $0x1de8] sm:$0xff]
    %v981 = vld [vmem:[#allocation2 + $0x1df0] sm:$0xff]
    %v982 = vld [vmem:[#allocation2 + $0x1df8] sm:$0xff]
    %v983 = vld [vmem:[#allocation2 + $0x1e00] sm:$0xff]
    %v984 = vld [vmem:[#allocation2 + $0x1e08] sm:$0xff]
    %v985 = vld [vmem:[#allocation2 + $0x1e10] sm:$0xff]
    %v986 = vld [vmem:[#allocation2 + $0x1e18] sm:$0xff]
    %v987 = vld [vmem:[#allocation2 + $0x1e20] sm:$0xff]
    %v988 = vld [vmem:[#allocation2 + $0x1e28] sm:$0xff]
    %v989 = vld [vmem:[#allocation2 + $0x1e30] sm:$0xff]
    %v990 = vld [vmem:[#allocation2 + $0x1e38] sm:$0xff]
    %v991 = vld [vmem:[#allocation2 + $0x1e40] sm:$0xff]
    %v992 = vld [vmem:[#allocation2 + $0x1e48] sm:$0xff]
    %v993 = vld [vmem:[#allocation2 + $0x1e50] sm:$0xff]
    %v994 = vld [vmem:[#allocation2 + $0x1e58] sm:$0xff]
    %v995 = vld [vmem:[#allocation2 + $0x1e60] sm:$0xff]
    %v996 = vld [vmem:[#allocation2 + $0x1e68] sm:$0xff]
    %v997 = vld [vmem:[#allocation2 + $0x1e70] sm:$0xff]
    %v998 = vld [vmem:[#allocation2 + $0x1e78] sm:$0xff]
    %v999 = vld [vmem:[#allocation2 + $0x1e80] sm:$0xff]
    %v1000 = vld [vmem:[#allocation2 + $0x1e88] sm:$0xff]
    %v1001 = vld [vmem:[#allocation2 + $0x1e90] sm:$0xff]
    %v1002 = vld [vmem:[#allocation2 + $0x1e98] sm:$0xff]
    %v1003 = vld [vmem:[#allocation2 + $0x1ea0] sm:$0xff]
    %v1004 = vld [vmem:[#allocation2 + $0x1ea8] sm:$0xff]
    %v1005 = vld [vmem:[#allocation2 + $0x1eb0] sm:$0xff]
    %v1006 = vld [vmem:[#allocation2 + $0x1eb8] sm:$0xff]
    %v1007 = vld [vmem:[#allocation2 + $0x1ec0] sm:$0xff]
    %v1008 = vld [vmem:[#allocation2 + $0x1ec8] sm:$0xff]
    %v1009 = vld [vmem:[#allocation2 + $0x1ed0] sm:$0xff]
    %v1010 = vld [vmem:[#allocation2 + $0x1ed8] sm:$0xff]
    %v1011 = vld [vmem:[#allocation2 + $0x1ee0] sm:$0xff]
    %v1012 = vld [vmem:[#allocation2 + $0x1ee8] sm:$0xff]
    %v1013 = vld [vmem:[#allocation2 + $0x1ef0] sm:$0xff]
    %v1014 = vld [vmem:[#allocation2 + $0x1ef8] sm:$0xff]
    %v1015 = vld [vmem:[#allocation2 + $0x1f00] sm:$0xff]
    %v1016 = vld [vmem:[#allocation2 + $0x1f08] sm:$0xff]
    %v1017 = vld [vmem:[#allocation2 + $0x1f10] sm:$0xff]
    %v1018 = vld [vmem:[#allocation2 + $0x1f18] sm:$0xff]
    %v1019 = vld [vmem:[#allocation2 + $0x1f20] sm:$0xff]
    %v1020 = vld [vmem:[#allocation2 + $0x1f28] sm:$0xff]
    %v1021 = vld [vmem:[#allocation2 + $0x1f30] sm:$0xff]
    %v1022 = vld [vmem:[#allocation2 + $0x1f38] sm:$0xff]
    %v1023 = vld [vmem:[#allocation2 + $0x1f40] sm:$0xff]
    %v1024 = vld [vmem:[#allocation2 + $0x1f48] sm:$0xff]
    %v1025 = vld [vmem:[#allocation2 + $0x1f50] sm:$0xff]
    %v1026 = vld [vmem:[#allocation2 + $0x1f58] sm:$0xff]
    %v1027 = vld [vmem:[#allocation2 + $0x1f60] sm:$0xff]
    %v1028 = vld [vmem:[#allocation2 + $0x1f68] sm:$0xff]
    %v1029 = vld [vmem:[#allocation2 + $0x1f70] sm:$0xff]
    %v1030 = vld [vmem:[#allocation2 + $0x1f78] sm:$0xff]
    %v1031 = vld [vmem:[#allocation2 + $0x1f80] sm:$0xff]
    %v1032 = vld [vmem:[#allocation2 + $0x1f88] sm:$0xff]
    %v1033 = vld [vmem:[#allocation2 + $0x1f90] sm:$0xff]
    %v1034 = vld [vmem:[#allocation2 + $0x1f98] sm:$0xff]
    %v1035 = vld [vmem:[#allocation2 + $0x1fa0] sm:$0xff]
    %v1036 = vld [vmem:[#allocation2 + $0x1fa8] sm:$0xff]
    %v1037 = vld [vmem:[#allocation2 + $0x1fb0] sm:$0xff]
    %v1038 = vld [vmem:[#allocation2 + $0x1fb8] sm:$0xff]
    %v1039 = vld [vmem:[#allocation2 + $0x1fc0] sm:$0xff]
    %v1040 = vld [vmem:[#allocation2 + $0x1fc8] sm:$0xff]
    %v1041 = vld [vmem:[#allocation2 + $0x1fd0] sm:$0xff]
    %v1042 = vld [vmem:[#allocation2 + $0x1fd8] sm:$0xff]
    %v1043 = vld [vmem:[#allocation2 + $0x1fe0] sm:$0xff]
    %v1044 = vld [vmem:[#allocation2 + $0x1fe8] sm:$0xff]
    %v1045 = vld [vmem:[#allocation2 + $0x1ff0] sm:$0xff]
    %v1046 = vld [vmem:[#allocation2 + $0x1ff8] sm:$0xff]
    %v1047 = vadd.f32 %v23, 3.0
    %v1048 = vadd.f32 %v24, 3.0
    %v1049 = vadd.f32 %v25, 3.0
    %v1050 = vadd.f32 %v26, 3.0
    %v1051 = vadd.f32 %v27, 3.0
    %v1052 = vadd.f32 %v28, 3.0
    %v1053 = vadd.f32 %v29, 3.0
    %v1054 = vadd.f32 %v30, 3.0
    %v1055 = vadd.f32 %v31, 3.0
    %v1056 = vadd.f32 %v32, 3.0
    %v1057 = vadd.f32 %v33, 3.0
    %v1058 = vadd.f32 %v34, 3.0
    %v1059 = vadd.f32 %v35, 3.0
    %v1060 = vadd.f32 %v36, 3.0
    %v1061 = vadd.f32 %v37, 3.0
    %v1062 = vadd.f32 %v38, 3.0
    %v1063 = vadd.f32 %v39, 3.0
    %v1064 = vadd.f32 %v40, 3.0
    %v1065 = vadd.f32 %v41, 3.0
    %v1066 = vadd.f32 %v42, 3.0
    %v1067 = vadd.f32 %v43, 3.0
    %v1068 = vadd.f32 %v44, 3.0
    %v1069 = vadd.f32 %v45, 3.0
    %v1070 = vadd.f32 %v46, 3.0
    %v1071 = vadd.f32 %v47, 3.0
    %v1072 = vadd.f32 %v48, 3.0
    %v1073 = vadd.f32 %v49, 3.0
    %v1074 = vadd.f32 %v50, 3.0
    %v1075 = vadd.f32 %v51, 3.0
    %v1076 = vadd.f32 %v52, 3.0
    %v1077 = vadd.f32 %v53, 3.0
    %v1078 = vadd.f32 %v54, 3.0
    %v1079 = vadd.f32 %v55, 3.0
    %v1080 = vadd.f32 %v56, 3.0
    %v1081 = vadd.f32 %v57, 3.0
    %v1082 = vadd.f32 %v58, 3.0
    %v1083 = vadd.f32 %v59, 3.0
    %v1084 = vadd.f32 %v60, 3.0
    %v1085 = vadd.f32 %v61, 3.0
    %v1086 = vadd.f32 %v62, 3.0
    %v1087 = vadd.f32 %v63, 3.0
    %v1088 = vadd.f32 %v64, 3.0
    %v1089 = vadd.f32 %v65, 3.0
    %v1090 = vadd.f32 %v66, 3.0
    %v1091 = vadd.f32 %v67, 3.0
    %v1092 = vadd.f32 %v68, 3.0
    %v1093 = vadd.f32 %v69, 3.0
    %v1094 = vadd.f32 %v70, 3.0
    %v1095 = vadd.f32 %v71, 3.0
    %v1096 = vadd.f32 %v72, 3.0
    %v1097 = vadd.f32 %v73, 3.0
    %v1098 = vadd.f32 %v74, 3.0
    %v1099 = vadd.f32 %v75, 3.0
    %v1100 = vadd.f32 %v76, 3.0
    %v1101 = vadd.f32 %v77, 3.0
    %v1102 = vadd.f32 %v78, 3.0
    %v1103 = vadd.f32 %v79, 3.0
    %v1104 = vadd.f32 %v80, 3.0
    %v1105 = vadd.f32 %v81, 3.0
    %v1106 = vadd.f32 %v82, 3.0
    %v1107 = vadd.f32 %v83, 3.0
    %v1108 = vadd.f32 %v84, 3.0
    %v1109 = vadd.f32 %v85, 3.0
    %v1110 = vadd.f32 %v86, 3.0
    %v1111 = vadd.f32 %v87, 3.0
    %v1112 = vadd.f32 %v88, 3.0
    %v1113 = vadd.f32 %v89, 3.0
    %v1114 = vadd.f32 %v90, 3.0
    %v1115 = vadd.f32 %v91, 3.0
    %v1116 = vadd.f32 %v92, 3.0
    %v1117 = vadd.f32 %v93, 3.0
    %v1118 = vadd.f32 %v94, 3.0
    %v1119 = vadd.f32 %v95, 3.0
    %v1120 = vadd.f32 %v96, 3.0
    %v1121 = vadd.f32 %v97, 3.0
    %v1122 = vadd.f32 %v98, 3.0
    %v1123 = vadd.f32 %v99, 3.0
    %v1124 = vadd.f32 %v100, 3.0
    %v1125 = vadd.f32 %v101, 3.0
    %v1126 = vadd.f32 %v102, 3.0
    %v1127 = vadd.f32 %v103, 3.0
    %v1128 = vadd.f32 %v104, 3.0
    %v1129 = vadd.f32 %v105, 3.0
    %v1130 = vadd.f32 %v106, 3.0
    %v1131 = vadd.f32 %v107, 3.0
    %v1132 = vadd.f32 %v108, 3.0
    %v1133 = vadd.f32 %v109, 3.0
    %v1134 = vadd.f32 %v110, 3.0
    %v1135 = vadd.f32 %v111, 3.0
    %v1136 = vadd.f32 %v112, 3.0
    %v1137 = vadd.f32 %v113, 3.0
    %v1138 = vadd.f32 %v114, 3.0
    %v1139 = vadd.f32 %v115, 3.0
    %v1140 = vadd.f32 %v116, 3.0
    %v1141 = vadd.f32 %v117, 3.0
    %v1142 = vadd.f32 %v118, 3.0
    %v1143 = vadd.f32 %v119, 3.0
    %v1144 = vadd.f32 %v120, 3.0
    %v1145 = vadd.f32 %v121, 3.0
    %v1146 = vadd.f32 %v122, 3.0
    %v1147 = vadd.f32 %v123, 3.0
    %v1148 = vadd.f32 %v124, 3.0
    %v1149 = vadd.f32 %v125, 3.0
    %v1150 = vadd.f32 %v126, 3.0
    %v1151 = vadd.f32 %v127, 3.0
    %v1152 = vadd.f32 %v128, 3.0
    %v1153 = vadd.f32 %v129, 3.0
    %v1154 = vadd.f32 %v130, 3.0
    %v1155 = vadd.f32 %v131, 3.0
    %v1156 = vadd.f32 %v132, 3.0
    %v1157 = vadd.f32 %v133, 3.0
    %v1158 = vadd.f32 %v134, 3.0
    %v1159 = vadd.f32 %v135, 3.0
    %v1160 = vadd.f32 %v136, 3.0
    %v1161 = vadd.f32 %v137, 3.0
    %v1162 = vadd.f32 %v138, 3.0
    %v1163 = vadd.f32 %v139, 3.0
    %v1164 = vadd.f32 %v140, 3.0
    %v1165 = vadd.f32 %v141, 3.0
    %v1166 = vadd.f32 %v142, 3.0
    %v1167 = vadd.f32 %v143, 3.0
    %v1168 = vadd.f32 %v144, 3.0
    %v1169 = vadd.f32 %v145, 3.0
    %v1170 = vadd.f32 %v146, 3.0
    %v1171 = vadd.f32 %v147, 3.0
    %v1172 = vadd.f32 %v148, 3.0
    %v1173 = vadd.f32 %v149, 3.0
    %v1174 = vadd.f32 %v150, 3.0
    %v1175 = vadd.f32 %v151, 3.0
    %v1176 = vadd.f32 %v152, 3.0
    %v1177 = vadd.f32 %v153, 3.0
    %v1178 = vadd.f32 %v154, 3.0
    %v1179 = vadd.f32 %v155, 3.0
    %v1180 = vadd.f32 %v156, 3.0
    %v1181 = vadd.f32 %v157, 3.0
    %v1182 = vadd.f32 %v158, 3.0
    %v1183 = vadd.f32 %v159, 3.0
    %v1184 = vadd.f32 %v160, 3.0
    %v1185 = vadd.f32 %v161, 3.0
    %v1186 = vadd.f32 %v162, 3.0
    %v1187 = vadd.f32 %v163, 3.0
    %v1188 = vadd.f32 %v164, 3.0
    %v1189 = vadd.f32 %v165, 3.0
    %v1190 = vadd.f32 %v166, 3.0
    %v1191 = vadd.f32 %v167, 3.0
    %v1192 = vadd.f32 %v168, 3.0
    %v1193 = vadd.f32 %v169, 3.0
    %v1194 = vadd.f32 %v170, 3.0
    %v1195 = vadd.f32 %v171, 3.0
    %v1196 = vadd.f32 %v172, 3.0
    %v1197 = vadd.f32 %v173, 3.0
    %v1198 = vadd.f32 %v174, 3.0
    %v1199 = vadd.f32 %v175, 3.0
    %v1200 = vadd.f32 %v176, 3.0
    %v1201 = vadd.f32 %v177, 3.0
    %v1202 = vadd.f32 %v178, 3.0
    %v1203 = vadd.f32 %v179, 3.0
    %v1204 = vadd.f32 %v180, 3.0
    %v1205 = vadd.f32 %v181, 3.0
    %v1206 = vadd.f32 %v182, 3.0
    %v1207 = vadd.f32 %v183, 3.0
    %v1208 = vadd.f32 %v184, 3.0
    %v1209 = vadd.f32 %v185, 3.0
    %v1210 = vadd.f32 %v186, 3.0
    %v1211 = vadd.f32 %v187, 3.0
    %v1212 = vadd.f32 %v188, 3.0
    %v1213 = vadd.f32 %v189, 3.0
    %v1214 = vadd.f32 %v190, 3.0
    %v1215 = vadd.f32 %v191, 3.0
    %v1216 = vadd.f32 %v192, 3.0
    %v1217 = vadd.f32 %v193, 3.0
    %v1218 = vadd.f32 %v194, 3.0
    %v1219 = vadd.f32 %v195, 3.0
    %v1220 = vadd.f32 %v196, 3.0
    %v1221 = vadd.f32 %v197, 3.0
    %v1222 = vadd.f32 %v198, 3.0
    %v1223 = vadd.f32 %v199, 3.0
    %v1224 = vadd.f32 %v200, 3.0
    %v1225 = vadd.f32 %v201, 3.0
    %v1226 = vadd.f32 %v202, 3.0
    %v1227 = vadd.f32 %v203, 3.0
    %v1228 = vadd.f32 %v204, 3.0
    %v1229 = vadd.f32 %v205, 3.0
    %v1230 = vadd.f32 %v206, 3.0
    %v1231 = vadd.f32 %v207, 3.0
    %v1232 = vadd.f32 %v208, 3.0
    %v1233 = vadd.f32 %v209, 3.0
    %v1234 = vadd.f32 %v210, 3.0
    %v1235 = vadd.f32 %v211, 3.0
    %v1236 = vadd.f32 %v212, 3.0
    %v1237 = vadd.f32 %v213, 3.0
    %v1238 = vadd.f32 %v214, 3.0
    %v1239 = vadd.f32 %v215, 3.0
    %v1240 = vadd.f32 %v216, 3.0
    %v1241 = vadd.f32 %v217, 3.0
    %v1242 = vadd.f32 %v218, 3.0
    %v1243 = vadd.f32 %v219, 3.0
    %v1244 = vadd.f32 %v220, 3.0
    %v1245 = vadd.f32 %v221, 3.0
    %v1246 = vadd.f32 %v222, 3.0
    %v1247 = vadd.f32 %v223, 3.0
    %v1248 = vadd.f32 %v224, 3.0
    %v1249 = vadd.f32 %v225, 3.0
    %v1250 = vadd.f32 %v226, 3.0
    %v1251 = vadd.f32 %v227, 3.0
    %v1252 = vadd.f32 %v228, 3.0
    %v1253 = vadd.f32 %v229, 3.0
    %v1254 = vadd.f32 %v230, 3.0
    %v1255 = vadd.f32 %v231, 3.0
    %v1256 = vadd.f32 %v232, 3.0
    %v1257 = vadd.f32 %v233, 3.0
    %v1258 = vadd.f32 %v234, 3.0
    %v1259 = vadd.f32 %v235, 3.0
    %v1260 = vadd.f32 %v236, 3.0
    %v1261 = vadd.f32 %v237, 3.0
    %v1262 = vadd.f32 %v238, 3.0
    %v1263 = vadd.f32 %v239, 3.0
    %v1264 = vadd.f32 %v240, 3.0
    %v1265 = vadd.f32 %v241, 3.0
    %v1266 = vadd.f32 %v242, 3.0
    %v1267 = vadd.f32 %v243, 3.0
    %v1268 = vadd.f32 %v244, 3.0
    %v1269 = vadd.f32 %v245, 3.0
    %v1270 = vadd.f32 %v246, 3.0
    %v1271 = vadd.f32 %v247, 3.0
    %v1272 = vadd.f32 %v248, 3.0
    %v1273 = vadd.f32 %v249, 3.0
    %v1274 = vadd.f32 %v250, 3.0
    %v1275 = vadd.f32 %v251, 3.0
    %v1276 = vadd.f32 %v252, 3.0
    %v1277 = vadd.f32 %v253, 3.0
    %v1278 = vadd.f32 %v254, 3.0
    %v1279 = vadd.f32 %v255, 3.0
    %v1280 = vadd.f32 %v256, 3.0
    %v1281 = vadd.f32 %v257, 3.0
    %v1282 = vadd.f32 %v258, 3.0
    %v1283 = vadd.f32 %v259, 3.0
    %v1284 = vadd.f32 %v260, 3.0
    %v1285 = vadd.f32 %v261, 3.0
    %v1286 = vadd.f32 %v262, 3.0
    %v1287 = vadd.f32 %v263, 3.0
    %v1288 = vadd.f32 %v264, 3.0
    %v1289 = vadd.f32 %v265, 3.0
    %v1290 = vadd.f32 %v266, 3.0
    %v1291 = vadd.f32 %v267, 3.0
    %v1292 = vadd.f32 %v268, 3.0
    %v1293 = vadd.f32 %v269, 3.0
    %v1294 = vadd.f32 %v270, 3.0
    %v1295 = vadd.f32 %v271, 3.0
    %v1296 = vadd.f32 %v272, 3.0
    %v1297 = vadd.f32 %v273, 3.0
    %v1298 = vadd.f32 %v274, 3.0
    %v1299 = vadd.f32 %v275, 3.0
    %v1300 = vadd.f32 %v276, 3.0
    %v1301 = vadd.f32 %v277, 3.0
    %v1302 = vadd.f32 %v278, 3.0
    %v1303 = vadd.f32 %v279, 3.0
    %v1304 = vadd.f32 %v280, 3.0
    %v1305 = vadd.f32 %v281, 3.0
    %v1306 = vadd.f32 %v282, 3.0
    %v1307 = vadd.f32 %v283, 3.0
    %v1308 = vadd.f32 %v284, 3.0
    %v1309 = vadd.f32 %v285, 3.0
    %v1310 = vadd.f32 %v286, 3.0
    %v1311 = vadd.f32 %v287, 3.0
    %v1312 = vadd.f32 %v288, 3.0
    %v1313 = vadd.f32 %v289, 3.0
    %v1314 = vadd.f32 %v290, 3.0
    %v1315 = vadd.f32 %v291, 3.0
    %v1316 = vadd.f32 %v292, 3.0
    %v1317 = vadd.f32 %v293, 3.0
    %v1318 = vadd.f32 %v294, 3.0
    %v1319 = vadd.f32 %v295, 3.0
    %v1320 = vadd.f32 %v296, 3.0
    %v1321 = vadd.f32 %v297, 3.0
    %v1322 = vadd.f32 %v298, 3.0
    %v1323 = vadd.f32 %v299, 3.0
    %v1324 = vadd.f32 %v300, 3.0
    %v1325 = vadd.f32 %v301, 3.0
    %v1326 = vadd.f32 %v302, 3.0
    %v1327 = vadd.f32 %v303, 3.0
    %v1328 = vadd.f32 %v304, 3.0
    %v1329 = vadd.f32 %v305, 3.0
    %v1330 = vadd.f32 %v306, 3.0
    %v1331 = vadd.f32 %v307, 3.0
    %v1332 = vadd.f32 %v308, 3.0
    %v1333 = vadd.f32 %v309, 3.0
    %v1334 = vadd.f32 %v310, 3.0
    %v1335 = vadd.f32 %v311, 3.0
    %v1336 = vadd.f32 %v312, 3.0
    %v1337 = vadd.f32 %v313, 3.0
    %v1338 = vadd.f32 %v314, 3.0
    %v1339 = vadd.f32 %v315, 3.0
    %v1340 = vadd.f32 %v316, 3.0
    %v1341 = vadd.f32 %v317, 3.0
    %v1342 = vadd.f32 %v318, 3.0
    %v1343 = vadd.f32 %v319, 3.0
    %v1344 = vadd.f32 %v320, 3.0
    %v1345 = vadd.f32 %v321, 3.0
    %v1346 = vadd.f32 %v322, 3.0
    %v1347 = vadd.f32 %v323, 3.0
    %v1348 = vadd.f32 %v324, 3.0
    %v1349 = vadd.f32 %v325, 3.0
    %v1350 = vadd.f32 %v326, 3.0
    %v1351 = vadd.f32 %v327, 3.0
    %v1352 = vadd.f32 %v328, 3.0
    %v1353 = vadd.f32 %v329, 3.0
    %v1354 = vadd.f32 %v330, 3.0
    %v1355 = vadd.f32 %v331, 3.0
    %v1356 = vadd.f32 %v332, 3.0
    %v1357 = vadd.f32 %v333, 3.0
    %v1358 = vadd.f32 %v334, 3.0
    %v1359 = vadd.f32 %v335, 3.0
    %v1360 = vadd.f32 %v336, 3.0
    %v1361 = vadd.f32 %v337, 3.0
    %v1362 = vadd.f32 %v338, 3.0
    %v1363 = vadd.f32 %v339, 3.0
    %v1364 = vadd.f32 %v340, 3.0
    %v1365 = vadd.f32 %v341, 3.0
    %v1366 = vadd.f32 %v342, 3.0
    %v1367 = vadd.f32 %v343, 3.0
    %v1368 = vadd.f32 %v344, 3.0
    %v1369 = vadd.f32 %v345, 3.0
    %v1370 = vadd.f32 %v346, 3.0
    %v1371 = vadd.f32 %v347, 3.0
    %v1372 = vadd.f32 %v348, 3.0
    %v1373 = vadd.f32 %v349, 3.0
    %v1374 = vadd.f32 %v350, 3.0
    %v1375 = vadd.f32 %v351, 3.0
    %v1376 = vadd.f32 %v352, 3.0
    %v1377 = vadd.f32 %v353, 3.0
    %v1378 = vadd.f32 %v354, 3.0
    %v1379 = vadd.f32 %v355, 3.0
    %v1380 = vadd.f32 %v356, 3.0
    %v1381 = vadd.f32 %v357, 3.0
    %v1382 = vadd.f32 %v358, 3.0
    %v1383 = vadd.f32 %v359, 3.0
    %v1384 = vadd.f32 %v360, 3.0
    %v1385 = vadd.f32 %v361, 3.0
    %v1386 = vadd.f32 %v362, 3.0
    %v1387 = vadd.f32 %v363, 3.0
    %v1388 = vadd.f32 %v364, 3.0
    %v1389 = vadd.f32 %v365, 3.0
    %v1390 = vadd.f32 %v366, 3.0
    %v1391 = vadd.f32 %v367, 3.0
    %v1392 = vadd.f32 %v368, 3.0
    %v1393 = vadd.f32 %v369, 3.0
    %v1394 = vadd.f32 %v370, 3.0
    %v1395 = vadd.f32 %v371, 3.0
    %v1396 = vadd.f32 %v372, 3.0
    %v1397 = vadd.f32 %v373, 3.0
    %v1398 = vadd.f32 %v374, 3.0
    %v1399 = vadd.f32 %v375, 3.0
    %v1400 = vadd.f32 %v376, 3.0
    %v1401 = vadd.f32 %v377, 3.0
    %v1402 = vadd.f32 %v378, 3.0
    %v1403 = vadd.f32 %v379, 3.0
    %v1404 = vadd.f32 %v380, 3.0
    %v1405 = vadd.f32 %v381, 3.0
    %v1406 = vadd.f32 %v382, 3.0
    %v1407 = vadd.f32 %v383, 3.0
    %v1408 = vadd.f32 %v384, 3.0
    %v1409 = vadd.f32 %v385, 3.0
    %v1410 = vadd.f32 %v386, 3.0
    %v1411 = vadd.f32 %v387, 3.0
    %v1412 = vadd.f32 %v388, 3.0
    %v1413 = vadd.f32 %v389, 3.0
    %v1414 = vadd.f32 %v390, 3.0
    %v1415 = vadd.f32 %v391, 3.0
    %v1416 = vadd.f32 %v392, 3.0
    %v1417 = vadd.f32 %v393, 3.0
    %v1418 = vadd.f32 %v394, 3.0
    %v1419 = vadd.f32 %v395, 3.0
    %v1420 = vadd.f32 %v396, 3.0
    %v1421 = vadd.f32 %v397, 3.0
    %v1422 = vadd.f32 %v398, 3.0
    %v1423 = vadd.f32 %v399, 3.0
    %v1424 = vadd.f32 %v400, 3.0
    %v1425 = vadd.f32 %v401, 3.0
    %v1426 = vadd.f32 %v402, 3.0
    %v1427 = vadd.f32 %v403, 3.0
    %v1428 = vadd.f32 %v404, 3.0
    %v1429 = vadd.f32 %v405, 3.0
    %v1430 = vadd.f32 %v406, 3.0
    %v1431 = vadd.f32 %v407, 3.0
    %v1432 = vadd.f32 %v408, 3.0
    %v1433 = vadd.f32 %v409, 3.0
    %v1434 = vadd.f32 %v410, 3.0
    %v1435 = vadd.f32 %v411, 3.0
    %v1436 = vadd.f32 %v412, 3.0
    %v1437 = vadd.f32 %v413, 3.0
    %v1438 = vadd.f32 %v414, 3.0
    %v1439 = vadd.f32 %v415, 3.0
    %v1440 = vadd.f32 %v416, 3.0
    %v1441 = vadd.f32 %v417, 3.0
    %v1442 = vadd.f32 %v418, 3.0
    %v1443 = vadd.f32 %v419, 3.0
    %v1444 = vadd.f32 %v420, 3.0
    %v1445 = vadd.f32 %v421, 3.0
    %v1446 = vadd.f32 %v422, 3.0
    %v1447 = vadd.f32 %v423, 3.0
    %v1448 = vadd.f32 %v424, 3.0
    %v1449 = vadd.f32 %v425, 3.0
    %v1450 = vadd.f32 %v426, 3.0
    %v1451 = vadd.f32 %v427, 3.0
    %v1452 = vadd.f32 %v428, 3.0
    %v1453 = vadd.f32 %v429, 3.0
    %v1454 = vadd.f32 %v430, 3.0
    %v1455 = vadd.f32 %v431, 3.0
    %v1456 = vadd.f32 %v432, 3.0
    %v1457 = vadd.f32 %v433, 3.0
    %v1458 = vadd.f32 %v434, 3.0
    %v1459 = vadd.f32 %v435, 3.0
    %v1460 = vadd.f32 %v436, 3.0
    %v1461 = vadd.f32 %v437, 3.0
    %v1462 = vadd.f32 %v438, 3.0
    %v1463 = vadd.f32 %v439, 3.0
    %v1464 = vadd.f32 %v440, 3.0
    %v1465 = vadd.f32 %v441, 3.0
    %v1466 = vadd.f32 %v442, 3.0
    %v1467 = vadd.f32 %v443, 3.0
    %v1468 = vadd.f32 %v444, 3.0
    %v1469 = vadd.f32 %v445, 3.0
    %v1470 = vadd.f32 %v446, 3.0
    %v1471 = vadd.f32 %v447, 3.0
    %v1472 = vadd.f32 %v448, 3.0
    %v1473 = vadd.f32 %v449, 3.0
    %v1474 = vadd.f32 %v450, 3.0
    %v1475 = vadd.f32 %v451, 3.0
    %v1476 = vadd.f32 %v452, 3.0
    %v1477 = vadd.f32 %v453, 3.0
    %v1478 = vadd.f32 %v454, 3.0
    %v1479 = vadd.f32 %v455, 3.0
    %v1480 = vadd.f32 %v456, 3.0
    %v1481 = vadd.f32 %v457, 3.0
    %v1482 = vadd.f32 %v458, 3.0
    %v1483 = vadd.f32 %v459, 3.0
    %v1484 = vadd.f32 %v460, 3.0
    %v1485 = vadd.f32 %v461, 3.0
    %v1486 = vadd.f32 %v462, 3.0
    %v1487 = vadd.f32 %v463, 3.0
    %v1488 = vadd.f32 %v464, 3.0
    %v1489 = vadd.f32 %v465, 3.0
    %v1490 = vadd.f32 %v466, 3.0
    %v1491 = vadd.f32 %v467, 3.0
    %v1492 = vadd.f32 %v468, 3.0
    %v1493 = vadd.f32 %v469, 3.0
    %v1494 = vadd.f32 %v470, 3.0
    %v1495 = vadd.f32 %v471, 3.0
    %v1496 = vadd.f32 %v472, 3.0
    %v1497 = vadd.f32 %v473, 3.0
    %v1498 = vadd.f32 %v474, 3.0
    %v1499 = vadd.f32 %v475, 3.0
    %v1500 = vadd.f32 %v476, 3.0
    %v1501 = vadd.f32 %v477, 3.0
    %v1502 = vadd.f32 %v478, 3.0
    %v1503 = vadd.f32 %v479, 3.0
    %v1504 = vadd.f32 %v480, 3.0
    %v1505 = vadd.f32 %v481, 3.0
    %v1506 = vadd.f32 %v482, 3.0
    %v1507 = vadd.f32 %v483, 3.0
    %v1508 = vadd.f32 %v484, 3.0
    %v1509 = vadd.f32 %v485, 3.0
    %v1510 = vadd.f32 %v486, 3.0
    %v1511 = vadd.f32 %v487, 3.0
    %v1512 = vadd.f32 %v488, 3.0
    %v1513 = vadd.f32 %v489, 3.0
    %v1514 = vadd.f32 %v490, 3.0
    %v1515 = vadd.f32 %v491, 3.0
    %v1516 = vadd.f32 %v492, 3.0
    %v1517 = vadd.f32 %v493, 3.0
    %v1518 = vadd.f32 %v494, 3.0
    %v1519 = vadd.f32 %v495, 3.0
    %v1520 = vadd.f32 %v496, 3.0
    %v1521 = vadd.f32 %v497, 3.0
    %v1522 = vadd.f32 %v498, 3.0
    %v1523 = vadd.f32 %v499, 3.0
    %v1524 = vadd.f32 %v500, 3.0
    %v1525 = vadd.f32 %v501, 3.0
    %v1526 = vadd.f32 %v502, 3.0
    %v1527 = vadd.f32 %v503, 3.0
    %v1528 = vadd.f32 %v504, 3.0
    %v1529 = vadd.f32 %v505, 3.0
    %v1530 = vadd.f32 %v506, 3.0
    %v1531 = vadd.f32 %v507, 3.0
    %v1532 = vadd.f32 %v508, 3.0
    %v1533 = vadd.f32 %v509, 3.0
    %v1534 = vadd.f32 %v510, 3.0
    %v1535 = vadd.f32 %v511, 3.0
    %v1536 = vadd.f32 %v512, 3.0
    %v1537 = vadd.f32 %v513, 3.0
    %v1538 = vadd.f32 %v514, 3.0
    %v1539 = vadd.f32 %v515, 3.0
    %v1540 = vadd.f32 %v516, 3.0
    %v1541 = vadd.f32 %v517, 3.0
    %v1542 = vadd.f32 %v518, 3.0
    %v1543 = vadd.f32 %v519, 3.0
    %v1544 = vadd.f32 %v520, 3.0
    %v1545 = vadd.f32 %v521, 3.0
    %v1546 = vadd.f32 %v522, 3.0
    %v1547 = vadd.f32 %v523, 3.0
    %v1548 = vadd.f32 %v524, 3.0
    %v1549 = vadd.f32 %v525, 3.0
    %v1550 = vadd.f32 %v526, 3.0
    %v1551 = vadd.f32 %v527, 3.0
    %v1552 = vadd.f32 %v528, 3.0
    %v1553 = vadd.f32 %v529, 3.0
    %v1554 = vadd.f32 %v530, 3.0
    %v1555 = vadd.f32 %v531, 3.0
    %v1556 = vadd.f32 %v532, 3.0
    %v1557 = vadd.f32 %v533, 3.0
    %v1558 = vadd.f32 %v534, 3.0
    %v1559 = vadd.f32 %v535, 3.0
    %v1560 = vadd.f32 %v536, 3.0
    %v1561 = vadd.f32 %v537, 3.0
    %v1562 = vadd.f32 %v538, 3.0
    %v1563 = vadd.f32 %v539, 3.0
    %v1564 = vadd.f32 %v540, 3.0
    %v1565 = vadd.f32 %v541, 3.0
    %v1566 = vadd.f32 %v542, 3.0
    %v1567 = vadd.f32 %v543, 3.0
    %v1568 = vadd.f32 %v544, 3.0
    %v1569 = vadd.f32 %v545, 3.0
    %v1570 = vadd.f32 %v546, 3.0
    %v1571 = vadd.f32 %v547, 3.0
    %v1572 = vadd.f32 %v548, 3.0
    %v1573 = vadd.f32 %v549, 3.0
    %v1574 = vadd.f32 %v550, 3.0
    %v1575 = vadd.f32 %v551, 3.0
    %v1576 = vadd.f32 %v552, 3.0
    %v1577 = vadd.f32 %v553, 3.0
    %v1578 = vadd.f32 %v554, 3.0
    %v1579 = vadd.f32 %v555, 3.0
    %v1580 = vadd.f32 %v556, 3.0
    %v1581 = vadd.f32 %v557, 3.0
    %v1582 = vadd.f32 %v558, 3.0
    %v1583 = vadd.f32 %v559, 3.0
    %v1584 = vadd.f32 %v560, 3.0
    %v1585 = vadd.f32 %v561, 3.0
    %v1586 = vadd.f32 %v562, 3.0
    %v1587 = vadd.f32 %v563, 3.0
    %v1588 = vadd.f32 %v564, 3.0
    %v1589 = vadd.f32 %v565, 3.0
    %v1590 = vadd.f32 %v566, 3.0
    %v1591 = vadd.f32 %v567, 3.0
    %v1592 = vadd.f32 %v568, 3.0
    %v1593 = vadd.f32 %v569, 3.0
    %v1594 = vadd.f32 %v570, 3.0
    %v1595 = vadd.f32 %v571, 3.0
    %v1596 = vadd.f32 %v572, 3.0
    %v1597 = vadd.f32 %v573, 3.0
    %v1598 = vadd.f32 %v574, 3.0
    %v1599 = vadd.f32 %v575, 3.0
    %v1600 = vadd.f32 %v576, 3.0
    %v1601 = vadd.f32 %v577, 3.0
    %v1602 = vadd.f32 %v578, 3.0
    %v1603 = vadd.f32 %v579, 3.0
    %v1604 = vadd.f32 %v580, 3.0
    %v1605 = vadd.f32 %v581, 3.0
    %v1606 = vadd.f32 %v582, 3.0
    %v1607 = vadd.f32 %v583, 3.0
    %v1608 = vadd.f32 %v584, 3.0
    %v1609 = vadd.f32 %v585, 3.0
    %v1610 = vadd.f32 %v586, 3.0
    %v1611 = vadd.f32 %v587, 3.0
    %v1612 = vadd.f32 %v588, 3.0
    %v1613 = vadd.f32 %v589, 3.0
    %v1614 = vadd.f32 %v590, 3.0
    %v1615 = vadd.f32 %v591, 3.0
    %v1616 = vadd.f32 %v592, 3.0
    %v1617 = vadd.f32 %v593, 3.0
    %v1618 = vadd.f32 %v594, 3.0
    %v1619 = vadd.f32 %v595, 3.0
    %v1620 = vadd.f32 %v596, 3.0
    %v1621 = vadd.f32 %v597, 3.0
    %v1622 = vadd.f32 %v598, 3.0
    %v1623 = vadd.f32 %v599, 3.0
    %v1624 = vadd.f32 %v600, 3.0
    %v1625 = vadd.f32 %v601, 3.0
    %v1626 = vadd.f32 %v602, 3.0
    %v1627 = vadd.f32 %v603, 3.0
    %v1628 = vadd.f32 %v604, 3.0
    %v1629 = vadd.f32 %v605, 3.0
    %v1630 = vadd.f32 %v606, 3.0
    %v1631 = vadd.f32 %v607, 3.0
    %v1632 = vadd.f32 %v608, 3.0
    %v1633 = vadd.f32 %v609, 3.0
    %v1634 = vadd.f32 %v610, 3.0
    %v1635 = vadd.f32 %v611, 3.0
    %v1636 = vadd.f32 %v612, 3.0
    %v1637 = vadd.f32 %v613, 3.0
    %v1638 = vadd.f32 %v614, 3.0
    %v1639 = vadd.f32 %v615, 3.0
    %v1640 = vadd.f32 %v616, 3.0
    %v1641 = vadd.f32 %v617, 3.0
    %v1642 = vadd.f32 %v618, 3.0
    %v1643 = vadd.f32 %v619, 3.0
    %v1644 = vadd.f32 %v620, 3.0
    %v1645 = vadd.f32 %v621, 3.0
    %v1646 = vadd.f32 %v622, 3.0
    %v1647 = vadd.f32 %v623, 3.0
    %v1648 = vadd.f32 %v624, 3.0
    %v1649 = vadd.f32 %v625, 3.0
    %v1650 = vadd.f32 %v626, 3.0
    %v1651 = vadd.f32 %v627, 3.0
    %v1652 = vadd.f32 %v628, 3.0
    %v1653 = vadd.f32 %v629, 3.0
    %v1654 = vadd.f32 %v630, 3.0
    %v1655 = vadd.f32 %v631, 3.0
    %v1656 = vadd.f32 %v632, 3.0
    %v1657 = vadd.f32 %v633, 3.0
    %v1658 = vadd.f32 %v634, 3.0
    %v1659 = vadd.f32 %v635, 3.0
    %v1660 = vadd.f32 %v636, 3.0
    %v1661 = vadd.f32 %v637, 3.0
    %v1662 = vadd.f32 %v638, 3.0
    %v1663 = vadd.f32 %v639, 3.0
    %v1664 = vadd.f32 %v640, 3.0
    %v1665 = vadd.f32 %v641, 3.0
    %v1666 = vadd.f32 %v642, 3.0
    %v1667 = vadd.f32 %v643, 3.0
    %v1668 = vadd.f32 %v644, 3.0
    %v1669 = vadd.f32 %v645, 3.0
    %v1670 = vadd.f32 %v646, 3.0
    %v1671 = vadd.f32 %v647, 3.0
    %v1672 = vadd.f32 %v648, 3.0
    %v1673 = vadd.f32 %v649, 3.0
    %v1674 = vadd.f32 %v650, 3.0
    %v1675 = vadd.f32 %v651, 3.0
    %v1676 = vadd.f32 %v652, 3.0
    %v1677 = vadd.f32 %v653, 3.0
    %v1678 = vadd.f32 %v654, 3.0
    %v1679 = vadd.f32 %v655, 3.0
    %v1680 = vadd.f32 %v656, 3.0
    %v1681 = vadd.f32 %v657, 3.0
    %v1682 = vadd.f32 %v658, 3.0
    %v1683 = vadd.f32 %v659, 3.0
    %v1684 = vadd.f32 %v660, 3.0
    %v1685 = vadd.f32 %v661, 3.0
    %v1686 = vadd.f32 %v662, 3.0
    %v1687 = vadd.f32 %v663, 3.0
    %v1688 = vadd.f32 %v664, 3.0
    %v1689 = vadd.f32 %v665, 3.0
    %v1690 = vadd.f32 %v666, 3.0
    %v1691 = vadd.f32 %v667, 3.0
    %v1692 = vadd.f32 %v668, 3.0
    %v1693 = vadd.f32 %v669, 3.0
    %v1694 = vadd.f32 %v670, 3.0
    %v1695 = vadd.f32 %v671, 3.0
    %v1696 = vadd.f32 %v672, 3.0
    %v1697 = vadd.f32 %v673, 3.0
    %v1698 = vadd.f32 %v674, 3.0
    %v1699 = vadd.f32 %v675, 3.0
    %v1700 = vadd.f32 %v676, 3.0
    %v1701 = vadd.f32 %v677, 3.0
    %v1702 = vadd.f32 %v678, 3.0
    %v1703 = vadd.f32 %v679, 3.0
    %v1704 = vadd.f32 %v680, 3.0
    %v1705 = vadd.f32 %v681, 3.0
    %v1706 = vadd.f32 %v682, 3.0
    %v1707 = vadd.f32 %v683, 3.0
    %v1708 = vadd.f32 %v684, 3.0
    %v1709 = vadd.f32 %v685, 3.0
    %v1710 = vadd.f32 %v686, 3.0
    %v1711 = vadd.f32 %v687, 3.0
    %v1712 = vadd.f32 %v688, 3.0
    %v1713 = vadd.f32 %v689, 3.0
    %v1714 = vadd.f32 %v690, 3.0
    %v1715 = vadd.f32 %v691, 3.0
    %v1716 = vadd.f32 %v692, 3.0
    %v1717 = vadd.f32 %v693, 3.0
    %v1718 = vadd.f32 %v694, 3.0
    %v1719 = vadd.f32 %v695, 3.0
    %v1720 = vadd.f32 %v696, 3.0
    %v1721 = vadd.f32 %v697, 3.0
    %v1722 = vadd.f32 %v698, 3.0
    %v1723 = vadd.f32 %v699, 3.0
    %v1724 = vadd.f32 %v700, 3.0
    %v1725 = vadd.f32 %v701, 3.0
    %v1726 = vadd.f32 %v702, 3.0
    %v1727 = vadd.f32 %v703, 3.0
    %v1728 = vadd.f32 %v704, 3.0
    %v1729 = vadd.f32 %v705, 3.0
    %v1730 = vadd.f32 %v706, 3.0
    %v1731 = vadd.f32 %v707, 3.0
    %v1732 = vadd.f32 %v708, 3.0
    %v1733 = vadd.f32 %v709, 3.0
    %v1734 = vadd.f32 %v710, 3.0
    %v1735 = vadd.f32 %v711, 3.0
    %v1736 = vadd.f32 %v712, 3.0
    %v1737 = vadd.f32 %v713, 3.0
    %v1738 = vadd.f32 %v714, 3.0
    %v1739 = vadd.f32 %v715, 3.0
    %v1740 = vadd.f32 %v716, 3.0
    %v1741 = vadd.f32 %v717, 3.0
    %v1742 = vadd.f32 %v718, 3.0
    %v1743 = vadd.f32 %v719, 3.0
    %v1744 = vadd.f32 %v720, 3.0
    %v1745 = vadd.f32 %v721, 3.0
    %v1746 = vadd.f32 %v722, 3.0
    %v1747 = vadd.f32 %v723, 3.0
    %v1748 = vadd.f32 %v724, 3.0
    %v1749 = vadd.f32 %v725, 3.0
    %v1750 = vadd.f32 %v726, 3.0
    %v1751 = vadd.f32 %v727, 3.0
    %v1752 = vadd.f32 %v728, 3.0
    %v1753 = vadd.f32 %v729, 3.0
    %v1754 = vadd.f32 %v730, 3.0
    %v1755 = vadd.f32 %v731, 3.0
    %v1756 = vadd.f32 %v732, 3.0
    %v1757 = vadd.f32 %v733, 3.0
    %v1758 = vadd.f32 %v734, 3.0
    %v1759 = vadd.f32 %v735, 3.0
    %v1760 = vadd.f32 %v736, 3.0
    %v1761 = vadd.f32 %v737, 3.0
    %v1762 = vadd.f32 %v738, 3.0
    %v1763 = vadd.f32 %v739, 3.0
    %v1764 = vadd.f32 %v740, 3.0
    %v1765 = vadd.f32 %v741, 3.0
    %v1766 = vadd.f32 %v742, 3.0
    %v1767 = vadd.f32 %v743, 3.0
    %v1768 = vadd.f32 %v744, 3.0
    %v1769 = vadd.f32 %v745, 3.0
    %v1770 = vadd.f32 %v746, 3.0
    %v1771 = vadd.f32 %v747, 3.0
    %v1772 = vadd.f32 %v748, 3.0
    %v1773 = vadd.f32 %v749, 3.0
    %v1774 = vadd.f32 %v750, 3.0
    %v1775 = vadd.f32 %v751, 3.0
    %v1776 = vadd.f32 %v752, 3.0
    %v1777 = vadd.f32 %v753, 3.0
    %v1778 = vadd.f32 %v754, 3.0
    %v1779 = vadd.f32 %v755, 3.0
    %v1780 = vadd.f32 %v756, 3.0
    %v1781 = vadd.f32 %v757, 3.0
    %v1782 = vadd.f32 %v758, 3.0
    %v1783 = vadd.f32 %v759, 3.0
    %v1784 = vadd.f32 %v760, 3.0
    %v1785 = vadd.f32 %v761, 3.0
    %v1786 = vadd.f32 %v762, 3.0
    %v1787 = vadd.f32 %v763, 3.0
    %v1788 = vadd.f32 %v764, 3.0
    %v1789 = vadd.f32 %v765, 3.0
    %v1790 = vadd.f32 %v766, 3.0
    %v1791 = vadd.f32 %v767, 3.0
    %v1792 = vadd.f32 %v768, 3.0
    %v1793 = vadd.f32 %v769, 3.0
    %v1794 = vadd.f32 %v770, 3.0
    %v1795 = vadd.f32 %v771, 3.0
    %v1796 = vadd.f32 %v772, 3.0
    %v1797 = vadd.f32 %v773, 3.0
    %v1798 = vadd.f32 %v774, 3.0
    %v1799 = vadd.f32 %v775, 3.0
    %v1800 = vadd.f32 %v776, 3.0
    %v1801 = vadd.f32 %v777, 3.0
    %v1802 = vadd.f32 %v778, 3.0
    %v1803 = vadd.f32 %v779, 3.0
    %v1804 = vadd.f32 %v780, 3.0
    %v1805 = vadd.f32 %v781, 3.0
    %v1806 = vadd.f32 %v782, 3.0
    %v1807 = vadd.f32 %v783, 3.0
    %v1808 = vadd.f32 %v784, 3.0
    %v1809 = vadd.f32 %v785, 3.0
    %v1810 = vadd.f32 %v786, 3.0
    %v1811 = vadd.f32 %v787, 3.0
    %v1812 = vadd.f32 %v788, 3.0
    %v1813 = vadd.f32 %v789, 3.0
    %v1814 = vadd.f32 %v790, 3.0
    %v1815 = vadd.f32 %v791, 3.0
    %v1816 = vadd.f32 %v792, 3.0
    %v1817 = vadd.f32 %v793, 3.0
    %v1818 = vadd.f32 %v794, 3.0
    %v1819 = vadd.f32 %v795, 3.0
    %v1820 = vadd.f32 %v796, 3.0
    %v1821 = vadd.f32 %v797, 3.0
    %v1822 = vadd.f32 %v798, 3.0
    %v1823 = vadd.f32 %v799, 3.0
    %v1824 = vadd.f32 %v800, 3.0
    %v1825 = vadd.f32 %v801, 3.0
    %v1826 = vadd.f32 %v802, 3.0
    %v1827 = vadd.f32 %v803, 3.0
    %v1828 = vadd.f32 %v804, 3.0
    %v1829 = vadd.f32 %v805, 3.0
    %v1830 = vadd.f32 %v806, 3.0
    %v1831 = vadd.f32 %v807, 3.0
    %v1832 = vadd.f32 %v808, 3.0
    %v1833 = vadd.f32 %v809, 3.0
    %v1834 = vadd.f32 %v810, 3.0
    %v1835 = vadd.f32 %v811, 3.0
    %v1836 = vadd.f32 %v812, 3.0
    %v1837 = vadd.f32 %v813, 3.0
    %v1838 = vadd.f32 %v814, 3.0
    %v1839 = vadd.f32 %v815, 3.0
    %v1840 = vadd.f32 %v816, 3.0
    %v1841 = vadd.f32 %v817, 3.0
    %v1842 = vadd.f32 %v818, 3.0
    %v1843 = vadd.f32 %v819, 3.0
    %v1844 = vadd.f32 %v820, 3.0
    %v1845 = vadd.f32 %v821, 3.0
    %v1846 = vadd.f32 %v822, 3.0
    %v1847 = vadd.f32 %v823, 3.0
    %v1848 = vadd.f32 %v824, 3.0
    %v1849 = vadd.f32 %v825, 3.0
    %v1850 = vadd.f32 %v826, 3.0
    %v1851 = vadd.f32 %v827, 3.0
    %v1852 = vadd.f32 %v828, 3.0
    %v1853 = vadd.f32 %v829, 3.0
    %v1854 = vadd.f32 %v830, 3.0
    %v1855 = vadd.f32 %v831, 3.0
    %v1856 = vadd.f32 %v832, 3.0
    %v1857 = vadd.f32 %v833, 3.0
    %v1858 = vadd.f32 %v834, 3.0
    %v1859 = vadd.f32 %v835, 3.0
    %v1860 = vadd.f32 %v836, 3.0
    %v1861 = vadd.f32 %v837, 3.0
    %v1862 = vadd.f32 %v838, 3.0
    %v1863 = vadd.f32 %v839, 3.0
    %v1864 = vadd.f32 %v840, 3.0
    %v1865 = vadd.f32 %v841, 3.0
    %v1866 = vadd.f32 %v842, 3.0
    %v1867 = vadd.f32 %v843, 3.0
    %v1868 = vadd.f32 %v844, 3.0
    %v1869 = vadd.f32 %v845, 3.0
    %v1870 = vadd.f32 %v846, 3.0
    %v1871 = vadd.f32 %v847, 3.0
    %v1872 = vadd.f32 %v848, 3.0
    %v1873 = vadd.f32 %v849, 3.0
    %v1874 = vadd.f32 %v850, 3.0
    %v1875 = vadd.f32 %v851, 3.0
    %v1876 = vadd.f32 %v852, 3.0
    %v1877 = vadd.f32 %v853, 3.0
    %v1878 = vadd.f32 %v854, 3.0
    %v1879 = vadd.f32 %v855, 3.0
    %v1880 = vadd.f32 %v856, 3.0
    %v1881 = vadd.f32 %v857, 3.0
    %v1882 = vadd.f32 %v858, 3.0
    %v1883 = vadd.f32 %v859, 3.0
    %v1884 = vadd.f32 %v860, 3.0
    %v1885 = vadd.f32 %v861, 3.0
    %v1886 = vadd.f32 %v862, 3.0
    %v1887 = vadd.f32 %v863, 3.0
    %v1888 = vadd.f32 %v864, 3.0
    %v1889 = vadd.f32 %v865, 3.0
    %v1890 = vadd.f32 %v866, 3.0
    %v1891 = vadd.f32 %v867, 3.0
    %v1892 = vadd.f32 %v868, 3.0
    %v1893 = vadd.f32 %v869, 3.0
    %v1894 = vadd.f32 %v870, 3.0
    %v1895 = vadd.f32 %v871, 3.0
    %v1896 = vadd.f32 %v872, 3.0
    %v1897 = vadd.f32 %v873, 3.0
    %v1898 = vadd.f32 %v874, 3.0
    %v1899 = vadd.f32 %v875, 3.0
    %v1900 = vadd.f32 %v876, 3.0
    %v1901 = vadd.f32 %v877, 3.0
    %v1902 = vadd.f32 %v878, 3.0
    %v1903 = vadd.f32 %v879, 3.0
    %v1904 = vadd.f32 %v880, 3.0
    %v1905 = vadd.f32 %v881, 3.0
    %v1906 = vadd.f32 %v882, 3.0
    %v1907 = vadd.f32 %v883, 3.0
    %v1908 = vadd.f32 %v884, 3.0
    %v1909 = vadd.f32 %v885, 3.0
    %v1910 = vadd.f32 %v886, 3.0
    %v1911 = vadd.f32 %v887, 3.0
    %v1912 = vadd.f32 %v888, 3.0
    %v1913 = vadd.f32 %v889, 3.0
    %v1914 = vadd.f32 %v890, 3.0
    %v1915 = vadd.f32 %v891, 3.0
    %v1916 = vadd.f32 %v892, 3.0
    %v1917 = vadd.f32 %v893, 3.0
    %v1918 = vadd.f32 %v894, 3.0
    %v1919 = vadd.f32 %v895, 3.0
    %v1920 = vadd.f32 %v896, 3.0
    %v1921 = vadd.f32 %v897, 3.0
    %v1922 = vadd.f32 %v898, 3.0
    %v1923 = vadd.f32 %v899, 3.0
    %v1924 = vadd.f32 %v900, 3.0
    %v1925 = vadd.f32 %v901, 3.0
    %v1926 = vadd.f32 %v902, 3.0
    %v1927 = vadd.f32 %v903, 3.0
    %v1928 = vadd.f32 %v904, 3.0
    %v1929 = vadd.f32 %v905, 3.0
    %v1930 = vadd.f32 %v906, 3.0
    %v1931 = vadd.f32 %v907, 3.0
    %v1932 = vadd.f32 %v908, 3.0
    %v1933 = vadd.f32 %v909, 3.0
    %v1934 = vadd.f32 %v910, 3.0
    %v1935 = vadd.f32 %v911, 3.0
    %v1936 = vadd.f32 %v912, 3.0
    %v1937 = vadd.f32 %v913, 3.0
    %v1938 = vadd.f32 %v914, 3.0
    %v1939 = vadd.f32 %v915, 3.0
    %v1940 = vadd.f32 %v916, 3.0
    %v1941 = vadd.f32 %v917, 3.0
    %v1942 = vadd.f32 %v918, 3.0
    %v1943 = vadd.f32 %v919, 3.0
    %v1944 = vadd.f32 %v920, 3.0
    %v1945 = vadd.f32 %v921, 3.0
    %v1946 = vadd.f32 %v922, 3.0
    %v1947 = vadd.f32 %v923, 3.0
    %v1948 = vadd.f32 %v924, 3.0
    %v1949 = vadd.f32 %v925, 3.0
    %v1950 = vadd.f32 %v926, 3.0
    %v1951 = vadd.f32 %v927, 3.0
    %v1952 = vadd.f32 %v928, 3.0
    %v1953 = vadd.f32 %v929, 3.0
    %v1954 = vadd.f32 %v930, 3.0
    %v1955 = vadd.f32 %v931, 3.0
    %v1956 = vadd.f32 %v932, 3.0
    %v1957 = vadd.f32 %v933, 3.0
    %v1958 = vadd.f32 %v934, 3.0
    %v1959 = vadd.f32 %v935, 3.0
    %v1960 = vadd.f32 %v936, 3.0
    %v1961 = vadd.f32 %v937, 3.0
    %v1962 = vadd.f32 %v938, 3.0
    %v1963 = vadd.f32 %v939, 3.0
    %v1964 = vadd.f32 %v940, 3.0
    %v1965 = vadd.f32 %v941, 3.0
    %v1966 = vadd.f32 %v942, 3.0
    %v1967 = vadd.f32 %v943, 3.0
    %v1968 = vadd.f32 %v944, 3.0
    %v1969 = vadd.f32 %v945, 3.0
    %v1970 = vadd.f32 %v946, 3.0
    %v1971 = vadd.f32 %v947, 3.0
    %v1972 = vadd.f32 %v948, 3.0
    %v1973 = vadd.f32 %v949, 3.0
    %v1974 = vadd.f32 %v950, 3.0
    %v1975 = vadd.f32 %v951, 3.0
    %v1976 = vadd.f32 %v952, 3.0
    %v1977 = vadd.f32 %v953, 3.0
    %v1978 = vadd.f32 %v954, 3.0
    %v1979 = vadd.f32 %v955, 3.0
    %v1980 = vadd.f32 %v956, 3.0
    %v1981 = vadd.f32 %v957, 3.0
    %v1982 = vadd.f32 %v958, 3.0
    %v1983 = vadd.f32 %v959, 3.0
    %v1984 = vadd.f32 %v960, 3.0
    %v1985 = vadd.f32 %v961, 3.0
    %v1986 = vadd.f32 %v962, 3.0
    %v1987 = vadd.f32 %v963, 3.0
    %v1988 = vadd.f32 %v964, 3.0
    %v1989 = vadd.f32 %v965, 3.0
    %v1990 = vadd.f32 %v966, 3.0
    %v1991 = vadd.f32 %v967, 3.0
    %v1992 = vadd.f32 %v968, 3.0
    %v1993 = vadd.f32 %v969, 3.0
    %v1994 = vadd.f32 %v970, 3.0
    %v1995 = vadd.f32 %v971, 3.0
    %v1996 = vadd.f32 %v972, 3.0
    %v1997 = vadd.f32 %v973, 3.0
    %v1998 = vadd.f32 %v974, 3.0
    %v1999 = vadd.f32 %v975, 3.0
    %v2000 = vadd.f32 %v976, 3.0
    %v2001 = vadd.f32 %v977, 3.0
    %v2002 = vadd.f32 %v978, 3.0
    %v2003 = vadd.f32 %v979, 3.0
    %v2004 = vadd.f32 %v980, 3.0
    %v2005 = vadd.f32 %v981, 3.0
    %v2006 = vadd.f32 %v982, 3.0
    %v2007 = vadd.f32 %v983, 3.0
    %v2008 = vadd.f32 %v984, 3.0
    %v2009 = vadd.f32 %v985, 3.0
    %v2010 = vadd.f32 %v986, 3.0
    %v2011 = vadd.f32 %v987, 3.0
    %v2012 = vadd.f32 %v988, 3.0
    %v2013 = vadd.f32 %v989, 3.0
    %v2014 = vadd.f32 %v990, 3.0
    %v2015 = vadd.f32 %v991, 3.0
    %v2016 = vadd.f32 %v992, 3.0
    %v2017 = vadd.f32 %v993, 3.0
    %v2018 = vadd.f32 %v994, 3.0
    %v2019 = vadd.f32 %v995, 3.0
    %v2020 = vadd.f32 %v996, 3.0
    %v2021 = vadd.f32 %v997, 3.0
    %v2022 = vadd.f32 %v998, 3.0
    %v2023 = vadd.f32 %v999, 3.0
    %v2024 = vadd.f32 %v1000, 3.0
    %v2025 = vadd.f32 %v1001, 3.0
    %v2026 = vadd.f32 %v1002, 3.0
    %v2027 = vadd.f32 %v1003, 3.0
    %v2028 = vadd.f32 %v1004, 3.0
    %v2029 = vadd.f32 %v1005, 3.0
    %v2030 = vadd.f32 %v1006, 3.0
    %v2031 = vadd.f32 %v1007, 3.0
    %v2032 = vadd.f32 %v1008, 3.0
    %v2033 = vadd.f32 %v1009, 3.0
    %v2034 = vadd.f32 %v1010, 3.0
    %v2035 = vadd.f32 %v1011, 3.0
    %v2036 = vadd.f32 %v1012, 3.0
    %v2037 = vadd.f32 %v1013, 3.0
    %v2038 = vadd.f32 %v1014, 3.0
    %v2039 = vadd.f32 %v1015, 3.0
    %v2040 = vadd.f32 %v1016, 3.0
    %v2041 = vadd.f32 %v1017, 3.0
    %v2042 = vadd.f32 %v1018, 3.0
    %v2043 = vadd.f32 %v1019, 3.0
    %v2044 = vadd.f32 %v1020, 3.0
    %v2045 = vadd.f32 %v1021, 3.0
    %v2046 = vadd.f32 %v1022, 3.0
    %v2047 = vadd.f32 %v1023, 3.0
    %v2048 = vadd.f32 %v1024, 3.0
    %v2049 = vadd.f32 %v1025, 3.0
    %v2050 = vadd.f32 %v1026, 3.0
    %v2051 = vadd.f32 %v1027, 3.0
    %v2052 = vadd.f32 %v1028, 3.0
    %v2053 = vadd.f32 %v1029, 3.0
    %v2054 = vadd.f32 %v1030, 3.0
    %v2055 = vadd.f32 %v1031, 3.0
    %v2056 = vadd.f32 %v1032, 3.0
    %v2057 = vadd.f32 %v1033, 3.0
    %v2058 = vadd.f32 %v1034, 3.0
    %v2059 = vadd.f32 %v1035, 3.0
    %v2060 = vadd.f32 %v1036, 3.0
    %v2061 = vadd.f32 %v1037, 3.0
    %v2062 = vadd.f32 %v1038, 3.0
    %v2063 = vadd.f32 %v1039, 3.0
    %v2064 = vadd.f32 %v1040, 3.0
    %v2065 = vadd.f32 %v1041, 3.0
    %v2066 = vadd.f32 %v1042, 3.0
    %v2067 = vadd.f32 %v1043, 3.0
    %v2068 = vadd.f32 %v1044, 3.0
    %v2069 = vadd.f32 %v1045, 3.0
    %v2070 = vadd.f32 %v1046, 3.0
    %v2071 = vmax.f32 %v1047, 0.0
    %v2072 = vmax.f32 %v1048, 0.0
    %v2073 = vmax.f32 %v1049, 0.0
    %v2074 = vmax.f32 %v1050, 0.0
    %v2075 = vmax.f32 %v1051, 0.0
    %v2076 = vmax.f32 %v1052, 0.0
    %v2077 = vmax.f32 %v1053, 0.0
    %v2078 = vmax.f32 %v1054, 0.0
    %v2079 = vmax.f32 %v1055, 0.0
    %v2080 = vmax.f32 %v1056, 0.0
    %v2081 = vmax.f32 %v1057, 0.0
    %v2082 = vmax.f32 %v1058, 0.0
    %v2083 = vmax.f32 %v1059, 0.0
    %v2084 = vmax.f32 %v1060, 0.0
    %v2085 = vmax.f32 %v1061, 0.0
    %v2086 = vmax.f32 %v1062, 0.0
    %v2087 = vmax.f32 %v1063, 0.0
    %v2088 = vmax.f32 %v1064, 0.0
    %v2089 = vmax.f32 %v1065, 0.0
    %v2090 = vmax.f32 %v1066, 0.0
    %v2091 = vmax.f32 %v1067, 0.0
    %v2092 = vmax.f32 %v1068, 0.0
    %v2093 = vmax.f32 %v1069, 0.0
    %v2094 = vmax.f32 %v1070, 0.0
    %v2095 = vmax.f32 %v1071, 0.0
    %v2096 = vmax.f32 %v1072, 0.0
    %v2097 = vmax.f32 %v1073, 0.0
    %v2098 = vmax.f32 %v1074, 0.0
    %v2099 = vmax.f32 %v1075, 0.0
    %v2100 = vmax.f32 %v1076, 0.0
    %v2101 = vmax.f32 %v1077, 0.0
    %v2102 = vmax.f32 %v1078, 0.0
    %v2103 = vmax.f32 %v1079, 0.0
    %v2104 = vmax.f32 %v1080, 0.0
    %v2105 = vmax.f32 %v1081, 0.0
    %v2106 = vmax.f32 %v1082, 0.0
    %v2107 = vmax.f32 %v1083, 0.0
    %v2108 = vmax.f32 %v1084, 0.0
    %v2109 = vmax.f32 %v1085, 0.0
    %v2110 = vmax.f32 %v1086, 0.0
    %v2111 = vmax.f32 %v1087, 0.0
    %v2112 = vmax.f32 %v1088, 0.0
    %v2113 = vmax.f32 %v1089, 0.0
    %v2114 = vmax.f32 %v1090, 0.0
    %v2115 = vmax.f32 %v1091, 0.0
    %v2116 = vmax.f32 %v1092, 0.0
    %v2117 = vmax.f32 %v1093, 0.0
    %v2118 = vmax.f32 %v1094, 0.0
    %v2119 = vmax.f32 %v1095, 0.0
    %v2120 = vmax.f32 %v1096, 0.0
    %v2121 = vmax.f32 %v1097, 0.0
    %v2122 = vmax.f32 %v1098, 0.0
    %v2123 = vmax.f32 %v1099, 0.0
    %v2124 = vmax.f32 %v1100, 0.0
    %v2125 = vmax.f32 %v1101, 0.0
    %v2126 = vmax.f32 %v1102, 0.0
    %v2127 = vmax.f32 %v1103, 0.0
    %v2128 = vmax.f32 %v1104, 0.0
    %v2129 = vmax.f32 %v1105, 0.0
    %v2130 = vmax.f32 %v1106, 0.0
    %v2131 = vmax.f32 %v1107, 0.0
    %v2132 = vmax.f32 %v1108, 0.0
    %v2133 = vmax.f32 %v1109, 0.0
    %v2134 = vmax.f32 %v1110, 0.0
    %v2135 = vmax.f32 %v1111, 0.0
    %v2136 = vmax.f32 %v1112, 0.0
    %v2137 = vmax.f32 %v1113, 0.0
    %v2138 = vmax.f32 %v1114, 0.0
    %v2139 = vmax.f32 %v1115, 0.0
    %v2140 = vmax.f32 %v1116, 0.0
    %v2141 = vmax.f32 %v1117, 0.0
    %v2142 = vmax.f32 %v1118, 0.0
    %v2143 = vmax.f32 %v1119, 0.0
    %v2144 = vmax.f32 %v1120, 0.0
    %v2145 = vmax.f32 %v1121, 0.0
    %v2146 = vmax.f32 %v1122, 0.0
    %v2147 = vmax.f32 %v1123, 0.0
    %v2148 = vmax.f32 %v1124, 0.0
    %v2149 = vmax.f32 %v1125, 0.0
    %v2150 = vmax.f32 %v1126, 0.0
    %v2151 = vmax.f32 %v1127, 0.0
    %v2152 = vmax.f32 %v1128, 0.0
    %v2153 = vmax.f32 %v1129, 0.0
    %v2154 = vmax.f32 %v1130, 0.0
    %v2155 = vmax.f32 %v1131, 0.0
    %v2156 = vmax.f32 %v1132, 0.0
    %v2157 = vmax.f32 %v1133, 0.0
    %v2158 = vmax.f32 %v1134, 0.0
    %v2159 = vmax.f32 %v1135, 0.0
    %v2160 = vmax.f32 %v1136, 0.0
    %v2161 = vmax.f32 %v1137, 0.0
    %v2162 = vmax.f32 %v1138, 0.0
    %v2163 = vmax.f32 %v1139, 0.0
    %v2164 = vmax.f32 %v1140, 0.0
    %v2165 = vmax.f32 %v1141, 0.0
    %v2166 = vmax.f32 %v1142, 0.0
    %v2167 = vmax.f32 %v1143, 0.0
    %v2168 = vmax.f32 %v1144, 0.0
    %v2169 = vmax.f32 %v1145, 0.0
    %v2170 = vmax.f32 %v1146, 0.0
    %v2171 = vmax.f32 %v1147, 0.0
    %v2172 = vmax.f32 %v1148, 0.0
    %v2173 = vmax.f32 %v1149, 0.0
    %v2174 = vmax.f32 %v1150, 0.0
    %v2175 = vmax.f32 %v1151, 0.0
    %v2176 = vmax.f32 %v1152, 0.0
    %v2177 = vmax.f32 %v1153, 0.0
    %v2178 = vmax.f32 %v1154, 0.0
    %v2179 = vmax.f32 %v1155, 0.0
    %v2180 = vmax.f32 %v1156, 0.0
    %v2181 = vmax.f32 %v1157, 0.0
    %v2182 = vmax.f32 %v1158, 0.0
    %v2183 = vmax.f32 %v1159, 0.0
    %v2184 = vmax.f32 %v1160, 0.0
    %v2185 = vmax.f32 %v1161, 0.0
    %v2186 = vmax.f32 %v1162, 0.0
    %v2187 = vmax.f32 %v1163, 0.0
    %v2188 = vmax.f32 %v1164, 0.0
    %v2189 = vmax.f32 %v1165, 0.0
    %v2190 = vmax.f32 %v1166, 0.0
    %v2191 = vmax.f32 %v1167, 0.0
    %v2192 = vmax.f32 %v1168, 0.0
    %v2193 = vmax.f32 %v1169, 0.0
    %v2194 = vmax.f32 %v1170, 0.0
    %v2195 = vmax.f32 %v1171, 0.0
    %v2196 = vmax.f32 %v1172, 0.0
    %v2197 = vmax.f32 %v1173, 0.0
    %v2198 = vmax.f32 %v1174, 0.0
    %v2199 = vmax.f32 %v1175, 0.0
    %v2200 = vmax.f32 %v1176, 0.0
    %v2201 = vmax.f32 %v1177, 0.0
    %v2202 = vmax.f32 %v1178, 0.0
    %v2203 = vmax.f32 %v1179, 0.0
    %v2204 = vmax.f32 %v1180, 0.0
    %v2205 = vmax.f32 %v1181, 0.0
    %v2206 = vmax.f32 %v1182, 0.0
    %v2207 = vmax.f32 %v1183, 0.0
    %v2208 = vmax.f32 %v1184, 0.0
    %v2209 = vmax.f32 %v1185, 0.0
    %v2210 = vmax.f32 %v1186, 0.0
    %v2211 = vmax.f32 %v1187, 0.0
    %v2212 = vmax.f32 %v1188, 0.0
    %v2213 = vmax.f32 %v1189, 0.0
    %v2214 = vmax.f32 %v1190, 0.0
    %v2215 = vmax.f32 %v1191, 0.0
    %v2216 = vmax.f32 %v1192, 0.0
    %v2217 = vmax.f32 %v1193, 0.0
    %v2218 = vmax.f32 %v1194, 0.0
    %v2219 = vmax.f32 %v1195, 0.0
    %v2220 = vmax.f32 %v1196, 0.0
    %v2221 = vmax.f32 %v1197, 0.0
    %v2222 = vmax.f32 %v1198, 0.0
    %v2223 = vmax.f32 %v1199, 0.0
    %v2224 = vmax.f32 %v1200, 0.0
    %v2225 = vmax.f32 %v1201, 0.0
    %v2226 = vmax.f32 %v1202, 0.0
    %v2227 = vmax.f32 %v1203, 0.0
    %v2228 = vmax.f32 %v1204, 0.0
    %v2229 = vmax.f32 %v1205, 0.0
    %v2230 = vmax.f32 %v1206, 0.0
    %v2231 = vmax.f32 %v1207, 0.0
    %v2232 = vmax.f32 %v1208, 0.0
    %v2233 = vmax.f32 %v1209, 0.0
    %v2234 = vmax.f32 %v1210, 0.0
    %v2235 = vmax.f32 %v1211, 0.0
    %v2236 = vmax.f32 %v1212, 0.0
    %v2237 = vmax.f32 %v1213, 0.0
    %v2238 = vmax.f32 %v1214, 0.0
    %v2239 = vmax.f32 %v1215, 0.0
    %v2240 = vmax.f32 %v1216, 0.0
    %v2241 = vmax.f32 %v1217, 0.0
    %v2242 = vmax.f32 %v1218, 0.0
    %v2243 = vmax.f32 %v1219, 0.0
    %v2244 = vmax.f32 %v1220, 0.0
    %v2245 = vmax.f32 %v1221, 0.0
    %v2246 = vmax.f32 %v1222, 0.0
    %v2247 = vmax.f32 %v1223, 0.0
    %v2248 = vmax.f32 %v1224, 0.0
    %v2249 = vmax.f32 %v1225, 0.0
    %v2250 = vmax.f32 %v1226, 0.0
    %v2251 = vmax.f32 %v1227, 0.0
    %v2252 = vmax.f32 %v1228, 0.0
    %v2253 = vmax.f32 %v1229, 0.0
    %v2254 = vmax.f32 %v1230, 0.0
    %v2255 = vmax.f32 %v1231, 0.0
    %v2256 = vmax.f32 %v1232, 0.0
    %v2257 = vmax.f32 %v1233, 0.0
    %v2258 = vmax.f32 %v1234, 0.0
    %v2259 = vmax.f32 %v1235, 0.0
    %v2260 = vmax.f32 %v1236, 0.0
    %v2261 = vmax.f32 %v1237, 0.0
    %v2262 = vmax.f32 %v1238, 0.0
    %v2263 = vmax.f32 %v1239, 0.0
    %v2264 = vmax.f32 %v1240, 0.0
    %v2265 = vmax.f32 %v1241, 0.0
    %v2266 = vmax.f32 %v1242, 0.0
    %v2267 = vmax.f32 %v1243, 0.0
    %v2268 = vmax.f32 %v1244, 0.0
    %v2269 = vmax.f32 %v1245, 0.0
    %v2270 = vmax.f32 %v1246, 0.0
    %v2271 = vmax.f32 %v1247, 0.0
    %v2272 = vmax.f32 %v1248, 0.0
    %v2273 = vmax.f32 %v1249, 0.0
    %v2274 = vmax.f32 %v1250, 0.0
    %v2275 = vmax.f32 %v1251, 0.0
    %v2276 = vmax.f32 %v1252, 0.0
    %v2277 = vmax.f32 %v1253, 0.0
    %v2278 = vmax.f32 %v1254, 0.0
    %v2279 = vmax.f32 %v1255, 0.0
    %v2280 = vmax.f32 %v1256, 0.0
    %v2281 = vmax.f32 %v1257, 0.0
    %v2282 = vmax.f32 %v1258, 0.0
    %v2283 = vmax.f32 %v1259, 0.0
    %v2284 = vmax.f32 %v1260, 0.0
    %v2285 = vmax.f32 %v1261, 0.0
    %v2286 = vmax.f32 %v1262, 0.0
    %v2287 = vmax.f32 %v1263, 0.0
    %v2288 = vmax.f32 %v1264, 0.0
    %v2289 = vmax.f32 %v1265, 0.0
    %v2290 = vmax.f32 %v1266, 0.0
    %v2291 = vmax.f32 %v1267, 0.0
    %v2292 = vmax.f32 %v1268, 0.0
    %v2293 = vmax.f32 %v1269, 0.0
    %v2294 = vmax.f32 %v1270, 0.0
    %v2295 = vmax.f32 %v1271, 0.0
    %v2296 = vmax.f32 %v1272, 0.0
    %v2297 = vmax.f32 %v1273, 0.0
    %v2298 = vmax.f32 %v1274, 0.0
    %v2299 = vmax.f32 %v1275, 0.0
    %v2300 = vmax.f32 %v1276, 0.0
    %v2301 = vmax.f32 %v1277, 0.0
    %v2302 = vmax.f32 %v1278, 0.0
    %v2303 = vmax.f32 %v1279, 0.0
    %v2304 = vmax.f32 %v1280, 0.0
    %v2305 = vmax.f32 %v1281, 0.0
    %v2306 = vmax.f32 %v1282, 0.0
    %v2307 = vmax.f32 %v1283, 0.0
    %v2308 = vmax.f32 %v1284, 0.0
    %v2309 = vmax.f32 %v1285, 0.0
    %v2310 = vmax.f32 %v1286, 0.0
    %v2311 = vmax.f32 %v1287, 0.0
    %v2312 = vmax.f32 %v1288, 0.0
    %v2313 = vmax.f32 %v1289, 0.0
    %v2314 = vmax.f32 %v1290, 0.0
    %v2315 = vmax.f32 %v1291, 0.0
    %v2316 = vmax.f32 %v1292, 0.0
    %v2317 = vmax.f32 %v1293, 0.0
    %v2318 = vmax.f32 %v1294, 0.0
    %v2319 = vmax.f32 %v1295, 0.0
    %v2320 = vmax.f32 %v1296, 0.0
    %v2321 = vmax.f32 %v1297, 0.0
    %v2322 = vmax.f32 %v1298, 0.0
    %v2323 = vmax.f32 %v1299, 0.0
    %v2324 = vmax.f32 %v1300, 0.0
    %v2325 = vmax.f32 %v1301, 0.0
    %v2326 = vmax.f32 %v1302, 0.0
    %v2327 = vmax.f32 %v1303, 0.0
    %v2328 = vmax.f32 %v1304, 0.0
    %v2329 = vmax.f32 %v1305, 0.0
    %v2330 = vmax.f32 %v1306, 0.0
    %v2331 = vmax.f32 %v1307, 0.0
    %v2332 = vmax.f32 %v1308, 0.0
    %v2333 = vmax.f32 %v1309, 0.0
    %v2334 = vmax.f32 %v1310, 0.0
    %v2335 = vmax.f32 %v1311, 0.0
    %v2336 = vmax.f32 %v1312, 0.0
    %v2337 = vmax.f32 %v1313, 0.0
    %v2338 = vmax.f32 %v1314, 0.0
    %v2339 = vmax.f32 %v1315, 0.0
    %v2340 = vmax.f32 %v1316, 0.0
    %v2341 = vmax.f32 %v1317, 0.0
    %v2342 = vmax.f32 %v1318, 0.0
    %v2343 = vmax.f32 %v1319, 0.0
    %v2344 = vmax.f32 %v1320, 0.0
    %v2345 = vmax.f32 %v1321, 0.0
    %v2346 = vmax.f32 %v1322, 0.0
    %v2347 = vmax.f32 %v1323, 0.0
    %v2348 = vmax.f32 %v1324, 0.0
    %v2349 = vmax.f32 %v1325, 0.0
    %v2350 = vmax.f32 %v1326, 0.0
    %v2351 = vmax.f32 %v1327, 0.0
    %v2352 = vmax.f32 %v1328, 0.0
    %v2353 = vmax.f32 %v1329, 0.0
    %v2354 = vmax.f32 %v1330, 0.0
    %v2355 = vmax.f32 %v1331, 0.0
    %v2356 = vmax.f32 %v1332, 0.0
    %v2357 = vmax.f32 %v1333, 0.0
    %v2358 = vmax.f32 %v1334, 0.0
    %v2359 = vmax.f32 %v1335, 0.0
    %v2360 = vmax.f32 %v1336, 0.0
    %v2361 = vmax.f32 %v1337, 0.0
    %v2362 = vmax.f32 %v1338, 0.0
    %v2363 = vmax.f32 %v1339, 0.0
    %v2364 = vmax.f32 %v1340, 0.0
    %v2365 = vmax.f32 %v1341, 0.0
    %v2366 = vmax.f32 %v1342, 0.0
    %v2367 = vmax.f32 %v1343, 0.0
    %v2368 = vmax.f32 %v1344, 0.0
    %v2369 = vmax.f32 %v1345, 0.0
    %v2370 = vmax.f32 %v1346, 0.0
    %v2371 = vmax.f32 %v1347, 0.0
    %v2372 = vmax.f32 %v1348, 0.0
    %v2373 = vmax.f32 %v1349, 0.0
    %v2374 = vmax.f32 %v1350, 0.0
    %v2375 = vmax.f32 %v1351, 0.0
    %v2376 = vmax.f32 %v1352, 0.0
    %v2377 = vmax.f32 %v1353, 0.0
    %v2378 = vmax.f32 %v1354, 0.0
    %v2379 = vmax.f32 %v1355, 0.0
    %v2380 = vmax.f32 %v1356, 0.0
    %v2381 = vmax.f32 %v1357, 0.0
    %v2382 = vmax.f32 %v1358, 0.0
    %v2383 = vmax.f32 %v1359, 0.0
    %v2384 = vmax.f32 %v1360, 0.0
    %v2385 = vmax.f32 %v1361, 0.0
    %v2386 = vmax.f32 %v1362, 0.0
    %v2387 = vmax.f32 %v1363, 0.0
    %v2388 = vmax.f32 %v1364, 0.0
    %v2389 = vmax.f32 %v1365, 0.0
    %v2390 = vmax.f32 %v1366, 0.0
    %v2391 = vmax.f32 %v1367, 0.0
    %v2392 = vmax.f32 %v1368, 0.0
    %v2393 = vmax.f32 %v1369, 0.0
    %v2394 = vmax.f32 %v1370, 0.0
    %v2395 = vmax.f32 %v1371, 0.0
    %v2396 = vmax.f32 %v1372, 0.0
    %v2397 = vmax.f32 %v1373, 0.0
    %v2398 = vmax.f32 %v1374, 0.0
    %v2399 = vmax.f32 %v1375, 0.0
    %v2400 = vmax.f32 %v1376, 0.0
    %v2401 = vmax.f32 %v1377, 0.0
    %v2402 = vmax.f32 %v1378, 0.0
    %v2403 = vmax.f32 %v1379, 0.0
    %v2404 = vmax.f32 %v1380, 0.0
    %v2405 = vmax.f32 %v1381, 0.0
    %v2406 = vmax.f32 %v1382, 0.0
    %v2407 = vmax.f32 %v1383, 0.0
    %v2408 = vmax.f32 %v1384, 0.0
    %v2409 = vmax.f32 %v1385, 0.0
    %v2410 = vmax.f32 %v1386, 0.0
    %v2411 = vmax.f32 %v1387, 0.0
    %v2412 = vmax.f32 %v1388, 0.0
    %v2413 = vmax.f32 %v1389, 0.0
    %v2414 = vmax.f32 %v1390, 0.0
    %v2415 = vmax.f32 %v1391, 0.0
    %v2416 = vmax.f32 %v1392, 0.0
    %v2417 = vmax.f32 %v1393, 0.0
    %v2418 = vmax.f32 %v1394, 0.0
    %v2419 = vmax.f32 %v1395, 0.0
    %v2420 = vmax.f32 %v1396, 0.0
    %v2421 = vmax.f32 %v1397, 0.0
    %v2422 = vmax.f32 %v1398, 0.0
    %v2423 = vmax.f32 %v1399, 0.0
    %v2424 = vmax.f32 %v1400, 0.0
    %v2425 = vmax.f32 %v1401, 0.0
    %v2426 = vmax.f32 %v1402, 0.0
    %v2427 = vmax.f32 %v1403, 0.0
    %v2428 = vmax.f32 %v1404, 0.0
    %v2429 = vmax.f32 %v1405, 0.0
    %v2430 = vmax.f32 %v1406, 0.0
    %v2431 = vmax.f32 %v1407, 0.0
    %v2432 = vmax.f32 %v1408, 0.0
    %v2433 = vmax.f32 %v1409, 0.0
    %v2434 = vmax.f32 %v1410, 0.0
    %v2435 = vmax.f32 %v1411, 0.0
    %v2436 = vmax.f32 %v1412, 0.0
    %v2437 = vmax.f32 %v1413, 0.0
    %v2438 = vmax.f32 %v1414, 0.0
    %v2439 = vmax.f32 %v1415, 0.0
    %v2440 = vmax.f32 %v1416, 0.0
    %v2441 = vmax.f32 %v1417, 0.0
    %v2442 = vmax.f32 %v1418, 0.0
    %v2443 = vmax.f32 %v1419, 0.0
    %v2444 = vmax.f32 %v1420, 0.0
    %v2445 = vmax.f32 %v1421, 0.0
    %v2446 = vmax.f32 %v1422, 0.0
    %v2447 = vmax.f32 %v1423, 0.0
    %v2448 = vmax.f32 %v1424, 0.0
    %v2449 = vmax.f32 %v1425, 0.0
    %v2450 = vmax.f32 %v1426, 0.0
    %v2451 = vmax.f32 %v1427, 0.0
    %v2452 = vmax.f32 %v1428, 0.0
    %v2453 = vmax.f32 %v1429, 0.0
    %v2454 = vmax.f32 %v1430, 0.0
    %v2455 = vmax.f32 %v1431, 0.0
    %v2456 = vmax.f32 %v1432, 0.0
    %v2457 = vmax.f32 %v1433, 0.0
    %v2458 = vmax.f32 %v1434, 0.0
    %v2459 = vmax.f32 %v1435, 0.0
    %v2460 = vmax.f32 %v1436, 0.0
    %v2461 = vmax.f32 %v1437, 0.0
    %v2462 = vmax.f32 %v1438, 0.0
    %v2463 = vmax.f32 %v1439, 0.0
    %v2464 = vmax.f32 %v1440, 0.0
    %v2465 = vmax.f32 %v1441, 0.0
    %v2466 = vmax.f32 %v1442, 0.0
    %v2467 = vmax.f32 %v1443, 0.0
    %v2468 = vmax.f32 %v1444, 0.0
    %v2469 = vmax.f32 %v1445, 0.0
    %v2470 = vmax.f32 %v1446, 0.0
    %v2471 = vmax.f32 %v1447, 0.0
    %v2472 = vmax.f32 %v1448, 0.0
    %v2473 = vmax.f32 %v1449, 0.0
    %v2474 = vmax.f32 %v1450, 0.0
    %v2475 = vmax.f32 %v1451, 0.0
    %v2476 = vmax.f32 %v1452, 0.0
    %v2477 = vmax.f32 %v1453, 0.0
    %v2478 = vmax.f32 %v1454, 0.0
    %v2479 = vmax.f32 %v1455, 0.0
    %v2480 = vmax.f32 %v1456, 0.0
    %v2481 = vmax.f32 %v1457, 0.0
    %v2482 = vmax.f32 %v1458, 0.0
    %v2483 = vmax.f32 %v1459, 0.0
    %v2484 = vmax.f32 %v1460, 0.0
    %v2485 = vmax.f32 %v1461, 0.0
    %v2486 = vmax.f32 %v1462, 0.0
    %v2487 = vmax.f32 %v1463, 0.0
    %v2488 = vmax.f32 %v1464, 0.0
    %v2489 = vmax.f32 %v1465, 0.0
    %v2490 = vmax.f32 %v1466, 0.0
    %v2491 = vmax.f32 %v1467, 0.0
    %v2492 = vmax.f32 %v1468, 0.0
    %v2493 = vmax.f32 %v1469, 0.0
    %v2494 = vmax.f32 %v1470, 0.0
    %v2495 = vmax.f32 %v1471, 0.0
    %v2496 = vmax.f32 %v1472, 0.0
    %v2497 = vmax.f32 %v1473, 0.0
    %v2498 = vmax.f32 %v1474, 0.0
    %v2499 = vmax.f32 %v1475, 0.0
    %v2500 = vmax.f32 %v1476, 0.0
    %v2501 = vmax.f32 %v1477, 0.0
    %v2502 = vmax.f32 %v1478, 0.0
    %v2503 = vmax.f32 %v1479, 0.0
    %v2504 = vmax.f32 %v1480, 0.0
    %v2505 = vmax.f32 %v1481, 0.0
    %v2506 = vmax.f32 %v1482, 0.0
    %v2507 = vmax.f32 %v1483, 0.0
    %v2508 = vmax.f32 %v1484, 0.0
    %v2509 = vmax.f32 %v1485, 0.0
    %v2510 = vmax.f32 %v1486, 0.0
    %v2511 = vmax.f32 %v1487, 0.0
    %v2512 = vmax.f32 %v1488, 0.0
    %v2513 = vmax.f32 %v1489, 0.0
    %v2514 = vmax.f32 %v1490, 0.0
    %v2515 = vmax.f32 %v1491, 0.0
    %v2516 = vmax.f32 %v1492, 0.0
    %v2517 = vmax.f32 %v1493, 0.0
    %v2518 = vmax.f32 %v1494, 0.0
    %v2519 = vmax.f32 %v1495, 0.0
    %v2520 = vmax.f32 %v1496, 0.0
    %v2521 = vmax.f32 %v1497, 0.0
    %v2522 = vmax.f32 %v1498, 0.0
    %v2523 = vmax.f32 %v1499, 0.0
    %v2524 = vmax.f32 %v1500, 0.0
    %v2525 = vmax.f32 %v1501, 0.0
    %v2526 = vmax.f32 %v1502, 0.0
    %v2527 = vmax.f32 %v1503, 0.0
    %v2528 = vmax.f32 %v1504, 0.0
    %v2529 = vmax.f32 %v1505, 0.0
    %v2530 = vmax.f32 %v1506, 0.0
    %v2531 = vmax.f32 %v1507, 0.0
    %v2532 = vmax.f32 %v1508, 0.0
    %v2533 = vmax.f32 %v1509, 0.0
    %v2534 = vmax.f32 %v1510, 0.0
    %v2535 = vmax.f32 %v1511, 0.0
    %v2536 = vmax.f32 %v1512, 0.0
    %v2537 = vmax.f32 %v1513, 0.0
    %v2538 = vmax.f32 %v1514, 0.0
    %v2539 = vmax.f32 %v1515, 0.0
    %v2540 = vmax.f32 %v1516, 0.0
    %v2541 = vmax.f32 %v1517, 0.0
    %v2542 = vmax.f32 %v1518, 0.0
    %v2543 = vmax.f32 %v1519, 0.0
    %v2544 = vmax.f32 %v1520, 0.0
    %v2545 = vmax.f32 %v1521, 0.0
    %v2546 = vmax.f32 %v1522, 0.0
    %v2547 = vmax.f32 %v1523, 0.0
    %v2548 = vmax.f32 %v1524, 0.0
    %v2549 = vmax.f32 %v1525, 0.0
    %v2550 = vmax.f32 %v1526, 0.0
    %v2551 = vmax.f32 %v1527, 0.0
    %v2552 = vmax.f32 %v1528, 0.0
    %v2553 = vmax.f32 %v1529, 0.0
    %v2554 = vmax.f32 %v1530, 0.0
    %v2555 = vmax.f32 %v1531, 0.0
    %v2556 = vmax.f32 %v1532, 0.0
    %v2557 = vmax.f32 %v1533, 0.0
    %v2558 = vmax.f32 %v1534, 0.0
    %v2559 = vmax.f32 %v1535, 0.0
    %v2560 = vmax.f32 %v1536, 0.0
    %v2561 = vmax.f32 %v1537, 0.0
    %v2562 = vmax.f32 %v1538, 0.0
    %v2563 = vmax.f32 %v1539, 0.0
    %v2564 = vmax.f32 %v1540, 0.0
    %v2565 = vmax.f32 %v1541, 0.0
    %v2566 = vmax.f32 %v1542, 0.0
    %v2567 = vmax.f32 %v1543, 0.0
    %v2568 = vmax.f32 %v1544, 0.0
    %v2569 = vmax.f32 %v1545, 0.0
    %v2570 = vmax.f32 %v1546, 0.0
    %v2571 = vmax.f32 %v1547, 0.0
    %v2572 = vmax.f32 %v1548, 0.0
    %v2573 = vmax.f32 %v1549, 0.0
    %v2574 = vmax.f32 %v1550, 0.0
    %v2575 = vmax.f32 %v1551, 0.0
    %v2576 = vmax.f32 %v1552, 0.0
    %v2577 = vmax.f32 %v1553, 0.0
    %v2578 = vmax.f32 %v1554, 0.0
    %v2579 = vmax.f32 %v1555, 0.0
    %v2580 = vmax.f32 %v1556, 0.0
    %v2581 = vmax.f32 %v1557, 0.0
    %v2582 = vmax.f32 %v1558, 0.0
    %v2583 = vmax.f32 %v1559, 0.0
    %v2584 = vmax.f32 %v1560, 0.0
    %v2585 = vmax.f32 %v1561, 0.0
    %v2586 = vmax.f32 %v1562, 0.0
    %v2587 = vmax.f32 %v1563, 0.0
    %v2588 = vmax.f32 %v1564, 0.0
    %v2589 = vmax.f32 %v1565, 0.0
    %v2590 = vmax.f32 %v1566, 0.0
    %v2591 = vmax.f32 %v1567, 0.0
    %v2592 = vmax.f32 %v1568, 0.0
    %v2593 = vmax.f32 %v1569, 0.0
    %v2594 = vmax.f32 %v1570, 0.0
    %v2595 = vmax.f32 %v1571, 0.0
    %v2596 = vmax.f32 %v1572, 0.0
    %v2597 = vmax.f32 %v1573, 0.0
    %v2598 = vmax.f32 %v1574, 0.0
    %v2599 = vmax.f32 %v1575, 0.0
    %v2600 = vmax.f32 %v1576, 0.0
    %v2601 = vmax.f32 %v1577, 0.0
    %v2602 = vmax.f32 %v1578, 0.0
    %v2603 = vmax.f32 %v1579, 0.0
    %v2604 = vmax.f32 %v1580, 0.0
    %v2605 = vmax.f32 %v1581, 0.0
    %v2606 = vmax.f32 %v1582, 0.0
    %v2607 = vmax.f32 %v1583, 0.0
    %v2608 = vmax.f32 %v1584, 0.0
    %v2609 = vmax.f32 %v1585, 0.0
    %v2610 = vmax.f32 %v1586, 0.0
    %v2611 = vmax.f32 %v1587, 0.0
    %v2612 = vmax.f32 %v1588, 0.0
    %v2613 = vmax.f32 %v1589, 0.0
    %v2614 = vmax.f32 %v1590, 0.0
    %v2615 = vmax.f32 %v1591, 0.0
    %v2616 = vmax.f32 %v1592, 0.0
    %v2617 = vmax.f32 %v1593, 0.0
    %v2618 = vmax.f32 %v1594, 0.0
    %v2619 = vmax.f32 %v1595, 0.0
    %v2620 = vmax.f32 %v1596, 0.0
    %v2621 = vmax.f32 %v1597, 0.0
    %v2622 = vmax.f32 %v1598, 0.0
    %v2623 = vmax.f32 %v1599, 0.0
    %v2624 = vmax.f32 %v1600, 0.0
    %v2625 = vmax.f32 %v1601, 0.0
    %v2626 = vmax.f32 %v1602, 0.0
    %v2627 = vmax.f32 %v1603, 0.0
    %v2628 = vmax.f32 %v1604, 0.0
    %v2629 = vmax.f32 %v1605, 0.0
    %v2630 = vmax.f32 %v1606, 0.0
    %v2631 = vmax.f32 %v1607, 0.0
    %v2632 = vmax.f32 %v1608, 0.0
    %v2633 = vmax.f32 %v1609, 0.0
    %v2634 = vmax.f32 %v1610, 0.0
    %v2635 = vmax.f32 %v1611, 0.0
    %v2636 = vmax.f32 %v1612, 0.0
    %v2637 = vmax.f32 %v1613, 0.0
    %v2638 = vmax.f32 %v1614, 0.0
    %v2639 = vmax.f32 %v1615, 0.0
    %v2640 = vmax.f32 %v1616, 0.0
    %v2641 = vmax.f32 %v1617, 0.0
    %v2642 = vmax.f32 %v1618, 0.0
    %v2643 = vmax.f32 %v1619, 0.0
    %v2644 = vmax.f32 %v1620, 0.0
    %v2645 = vmax.f32 %v1621, 0.0
    %v2646 = vmax.f32 %v1622, 0.0
    %v2647 = vmax.f32 %v1623, 0.0
    %v2648 = vmax.f32 %v1624, 0.0
    %v2649 = vmax.f32 %v1625, 0.0
    %v2650 = vmax.f32 %v1626, 0.0
    %v2651 = vmax.f32 %v1627, 0.0
    %v2652 = vmax.f32 %v1628, 0.0
    %v2653 = vmax.f32 %v1629, 0.0
    %v2654 = vmax.f32 %v1630, 0.0
    %v2655 = vmax.f32 %v1631, 0.0
    %v2656 = vmax.f32 %v1632, 0.0
    %v2657 = vmax.f32 %v1633, 0.0
    %v2658 = vmax.f32 %v1634, 0.0
    %v2659 = vmax.f32 %v1635, 0.0
    %v2660 = vmax.f32 %v1636, 0.0
    %v2661 = vmax.f32 %v1637, 0.0
    %v2662 = vmax.f32 %v1638, 0.0
    %v2663 = vmax.f32 %v1639, 0.0
    %v2664 = vmax.f32 %v1640, 0.0
    %v2665 = vmax.f32 %v1641, 0.0
    %v2666 = vmax.f32 %v1642, 0.0
    %v2667 = vmax.f32 %v1643, 0.0
    %v2668 = vmax.f32 %v1644, 0.0
    %v2669 = vmax.f32 %v1645, 0.0
    %v2670 = vmax.f32 %v1646, 0.0
    %v2671 = vmax.f32 %v1647, 0.0
    %v2672 = vmax.f32 %v1648, 0.0
    %v2673 = vmax.f32 %v1649, 0.0
    %v2674 = vmax.f32 %v1650, 0.0
    %v2675 = vmax.f32 %v1651, 0.0
    %v2676 = vmax.f32 %v1652, 0.0
    %v2677 = vmax.f32 %v1653, 0.0
    %v2678 = vmax.f32 %v1654, 0.0
    %v2679 = vmax.f32 %v1655, 0.0
    %v2680 = vmax.f32 %v1656, 0.0
    %v2681 = vmax.f32 %v1657, 0.0
    %v2682 = vmax.f32 %v1658, 0.0
    %v2683 = vmax.f32 %v1659, 0.0
    %v2684 = vmax.f32 %v1660, 0.0
    %v2685 = vmax.f32 %v1661, 0.0
    %v2686 = vmax.f32 %v1662, 0.0
    %v2687 = vmax.f32 %v1663, 0.0
    %v2688 = vmax.f32 %v1664, 0.0
    %v2689 = vmax.f32 %v1665, 0.0
    %v2690 = vmax.f32 %v1666, 0.0
    %v2691 = vmax.f32 %v1667, 0.0
    %v2692 = vmax.f32 %v1668, 0.0
    %v2693 = vmax.f32 %v1669, 0.0
    %v2694 = vmax.f32 %v1670, 0.0
    %v2695 = vmax.f32 %v1671, 0.0
    %v2696 = vmax.f32 %v1672, 0.0
    %v2697 = vmax.f32 %v1673, 0.0
    %v2698 = vmax.f32 %v1674, 0.0
    %v2699 = vmax.f32 %v1675, 0.0
    %v2700 = vmax.f32 %v1676, 0.0
    %v2701 = vmax.f32 %v1677, 0.0
    %v2702 = vmax.f32 %v1678, 0.0
    %v2703 = vmax.f32 %v1679, 0.0
    %v2704 = vmax.f32 %v1680, 0.0
    %v2705 = vmax.f32 %v1681, 0.0
    %v2706 = vmax.f32 %v1682, 0.0
    %v2707 = vmax.f32 %v1683, 0.0
    %v2708 = vmax.f32 %v1684, 0.0
    %v2709 = vmax.f32 %v1685, 0.0
    %v2710 = vmax.f32 %v1686, 0.0
    %v2711 = vmax.f32 %v1687, 0.0
    %v2712 = vmax.f32 %v1688, 0.0
    %v2713 = vmax.f32 %v1689, 0.0
    %v2714 = vmax.f32 %v1690, 0.0
    %v2715 = vmax.f32 %v1691, 0.0
    %v2716 = vmax.f32 %v1692, 0.0
    %v2717 = vmax.f32 %v1693, 0.0
    %v2718 = vmax.f32 %v1694, 0.0
    %v2719 = vmax.f32 %v1695, 0.0
    %v2720 = vmax.f32 %v1696, 0.0
    %v2721 = vmax.f32 %v1697, 0.0
    %v2722 = vmax.f32 %v1698, 0.0
    %v2723 = vmax.f32 %v1699, 0.0
    %v2724 = vmax.f32 %v1700, 0.0
    %v2725 = vmax.f32 %v1701, 0.0
    %v2726 = vmax.f32 %v1702, 0.0
    %v2727 = vmax.f32 %v1703, 0.0
    %v2728 = vmax.f32 %v1704, 0.0
    %v2729 = vmax.f32 %v1705, 0.0
    %v2730 = vmax.f32 %v1706, 0.0
    %v2731 = vmax.f32 %v1707, 0.0
    %v2732 = vmax.f32 %v1708, 0.0
    %v2733 = vmax.f32 %v1709, 0.0
    %v2734 = vmax.f32 %v1710, 0.0
    %v2735 = vmax.f32 %v1711, 0.0
    %v2736 = vmax.f32 %v1712, 0.0
    %v2737 = vmax.f32 %v1713, 0.0
    %v2738 = vmax.f32 %v1714, 0.0
    %v2739 = vmax.f32 %v1715, 0.0
    %v2740 = vmax.f32 %v1716, 0.0
    %v2741 = vmax.f32 %v1717, 0.0
    %v2742 = vmax.f32 %v1718, 0.0
    %v2743 = vmax.f32 %v1719, 0.0
    %v2744 = vmax.f32 %v1720, 0.0
    %v2745 = vmax.f32 %v1721, 0.0
    %v2746 = vmax.f32 %v1722, 0.0
    %v2747 = vmax.f32 %v1723, 0.0
    %v2748 = vmax.f32 %v1724, 0.0
    %v2749 = vmax.f32 %v1725, 0.0
    %v2750 = vmax.f32 %v1726, 0.0
    %v2751 = vmax.f32 %v1727, 0.0
    %v2752 = vmax.f32 %v1728, 0.0
    %v2753 = vmax.f32 %v1729, 0.0
    %v2754 = vmax.f32 %v1730, 0.0
    %v2755 = vmax.f32 %v1731, 0.0
    %v2756 = vmax.f32 %v1732, 0.0
    %v2757 = vmax.f32 %v1733, 0.0
    %v2758 = vmax.f32 %v1734, 0.0
    %v2759 = vmax.f32 %v1735, 0.0
    %v2760 = vmax.f32 %v1736, 0.0
    %v2761 = vmax.f32 %v1737, 0.0
    %v2762 = vmax.f32 %v1738, 0.0
    %v2763 = vmax.f32 %v1739, 0.0
    %v2764 = vmax.f32 %v1740, 0.0
    %v2765 = vmax.f32 %v1741, 0.0
    %v2766 = vmax.f32 %v1742, 0.0
    %v2767 = vmax.f32 %v1743, 0.0
    %v2768 = vmax.f32 %v1744, 0.0
    %v2769 = vmax.f32 %v1745, 0.0
    %v2770 = vmax.f32 %v1746, 0.0
    %v2771 = vmax.f32 %v1747, 0.0
    %v2772 = vmax.f32 %v1748, 0.0
    %v2773 = vmax.f32 %v1749, 0.0
    %v2774 = vmax.f32 %v1750, 0.0
    %v2775 = vmax.f32 %v1751, 0.0
    %v2776 = vmax.f32 %v1752, 0.0
    %v2777 = vmax.f32 %v1753, 0.0
    %v2778 = vmax.f32 %v1754, 0.0
    %v2779 = vmax.f32 %v1755, 0.0
    %v2780 = vmax.f32 %v1756, 0.0
    %v2781 = vmax.f32 %v1757, 0.0
    %v2782 = vmax.f32 %v1758, 0.0
    %v2783 = vmax.f32 %v1759, 0.0
    %v2784 = vmax.f32 %v1760, 0.0
    %v2785 = vmax.f32 %v1761, 0.0
    %v2786 = vmax.f32 %v1762, 0.0
    %v2787 = vmax.f32 %v1763, 0.0
    %v2788 = vmax.f32 %v1764, 0.0
    %v2789 = vmax.f32 %v1765, 0.0
    %v2790 = vmax.f32 %v1766, 0.0
    %v2791 = vmax.f32 %v1767, 0.0
    %v2792 = vmax.f32 %v1768, 0.0
    %v2793 = vmax.f32 %v1769, 0.0
    %v2794 = vmax.f32 %v1770, 0.0
    %v2795 = vmax.f32 %v1771, 0.0
    %v2796 = vmax.f32 %v1772, 0.0
    %v2797 = vmax.f32 %v1773, 0.0
    %v2798 = vmax.f32 %v1774, 0.0
    %v2799 = vmax.f32 %v1775, 0.0
    %v2800 = vmax.f32 %v1776, 0.0
    %v2801 = vmax.f32 %v1777, 0.0
    %v2802 = vmax.f32 %v1778, 0.0
    %v2803 = vmax.f32 %v1779, 0.0
    %v2804 = vmax.f32 %v1780, 0.0
    %v2805 = vmax.f32 %v1781, 0.0
    %v2806 = vmax.f32 %v1782, 0.0
    %v2807 = vmax.f32 %v1783, 0.0
    %v2808 = vmax.f32 %v1784, 0.0
    %v2809 = vmax.f32 %v1785, 0.0
    %v2810 = vmax.f32 %v1786, 0.0
    %v2811 = vmax.f32 %v1787, 0.0
    %v2812 = vmax.f32 %v1788, 0.0
    %v2813 = vmax.f32 %v1789, 0.0
    %v2814 = vmax.f32 %v1790, 0.0
    %v2815 = vmax.f32 %v1791, 0.0
    %v2816 = vmax.f32 %v1792, 0.0
    %v2817 = vmax.f32 %v1793, 0.0
    %v2818 = vmax.f32 %v1794, 0.0
    %v2819 = vmax.f32 %v1795, 0.0
    %v2820 = vmax.f32 %v1796, 0.0
    %v2821 = vmax.f32 %v1797, 0.0
    %v2822 = vmax.f32 %v1798, 0.0
    %v2823 = vmax.f32 %v1799, 0.0
    %v2824 = vmax.f32 %v1800, 0.0
    %v2825 = vmax.f32 %v1801, 0.0
    %v2826 = vmax.f32 %v1802, 0.0
    %v2827 = vmax.f32 %v1803, 0.0
    %v2828 = vmax.f32 %v1804, 0.0
    %v2829 = vmax.f32 %v1805, 0.0
    %v2830 = vmax.f32 %v1806, 0.0
    %v2831 = vmax.f32 %v1807, 0.0
    %v2832 = vmax.f32 %v1808, 0.0
    %v2833 = vmax.f32 %v1809, 0.0
    %v2834 = vmax.f32 %v1810, 0.0
    %v2835 = vmax.f32 %v1811, 0.0
    %v2836 = vmax.f32 %v1812, 0.0
    %v2837 = vmax.f32 %v1813, 0.0
    %v2838 = vmax.f32 %v1814, 0.0
    %v2839 = vmax.f32 %v1815, 0.0
    %v2840 = vmax.f32 %v1816, 0.0
    %v2841 = vmax.f32 %v1817, 0.0
    %v2842 = vmax.f32 %v1818, 0.0
    %v2843 = vmax.f32 %v1819, 0.0
    %v2844 = vmax.f32 %v1820, 0.0
    %v2845 = vmax.f32 %v1821, 0.0
    %v2846 = vmax.f32 %v1822, 0.0
    %v2847 = vmax.f32 %v1823, 0.0
    %v2848 = vmax.f32 %v1824, 0.0
    %v2849 = vmax.f32 %v1825, 0.0
    %v2850 = vmax.f32 %v1826, 0.0
    %v2851 = vmax.f32 %v1827, 0.0
    %v2852 = vmax.f32 %v1828, 0.0
    %v2853 = vmax.f32 %v1829, 0.0
    %v2854 = vmax.f32 %v1830, 0.0
    %v2855 = vmax.f32 %v1831, 0.0
    %v2856 = vmax.f32 %v1832, 0.0
    %v2857 = vmax.f32 %v1833, 0.0
    %v2858 = vmax.f32 %v1834, 0.0
    %v2859 = vmax.f32 %v1835, 0.0
    %v2860 = vmax.f32 %v1836, 0.0
    %v2861 = vmax.f32 %v1837, 0.0
    %v2862 = vmax.f32 %v1838, 0.0
    %v2863 = vmax.f32 %v1839, 0.0
    %v2864 = vmax.f32 %v1840, 0.0
    %v2865 = vmax.f32 %v1841, 0.0
    %v2866 = vmax.f32 %v1842, 0.0
    %v2867 = vmax.f32 %v1843, 0.0
    %v2868 = vmax.f32 %v1844, 0.0
    %v2869 = vmax.f32 %v1845, 0.0
    %v2870 = vmax.f32 %v1846, 0.0
    %v2871 = vmax.f32 %v1847, 0.0
    %v2872 = vmax.f32 %v1848, 0.0
    %v2873 = vmax.f32 %v1849, 0.0
    %v2874 = vmax.f32 %v1850, 0.0
    %v2875 = vmax.f32 %v1851, 0.0
    %v2876 = vmax.f32 %v1852, 0.0
    %v2877 = vmax.f32 %v1853, 0.0
    %v2878 = vmax.f32 %v1854, 0.0
    %v2879 = vmax.f32 %v1855, 0.0
    %v2880 = vmax.f32 %v1856, 0.0
    %v2881 = vmax.f32 %v1857, 0.0
    %v2882 = vmax.f32 %v1858, 0.0
    %v2883 = vmax.f32 %v1859, 0.0
    %v2884 = vmax.f32 %v1860, 0.0
    %v2885 = vmax.f32 %v1861, 0.0
    %v2886 = vmax.f32 %v1862, 0.0
    %v2887 = vmax.f32 %v1863, 0.0
    %v2888 = vmax.f32 %v1864, 0.0
    %v2889 = vmax.f32 %v1865, 0.0
    %v2890 = vmax.f32 %v1866, 0.0
    %v2891 = vmax.f32 %v1867, 0.0
    %v2892 = vmax.f32 %v1868, 0.0
    %v2893 = vmax.f32 %v1869, 0.0
    %v2894 = vmax.f32 %v1870, 0.0
    %v2895 = vmax.f32 %v1871, 0.0
    %v2896 = vmax.f32 %v1872, 0.0
    %v2897 = vmax.f32 %v1873, 0.0
    %v2898 = vmax.f32 %v1874, 0.0
    %v2899 = vmax.f32 %v1875, 0.0
    %v2900 = vmax.f32 %v1876, 0.0
    %v2901 = vmax.f32 %v1877, 0.0
    %v2902 = vmax.f32 %v1878, 0.0
    %v2903 = vmax.f32 %v1879, 0.0
    %v2904 = vmax.f32 %v1880, 0.0
    %v2905 = vmax.f32 %v1881, 0.0
    %v2906 = vmax.f32 %v1882, 0.0
    %v2907 = vmax.f32 %v1883, 0.0
    %v2908 = vmax.f32 %v1884, 0.0
    %v2909 = vmax.f32 %v1885, 0.0
    %v2910 = vmax.f32 %v1886, 0.0
    %v2911 = vmax.f32 %v1887, 0.0
    %v2912 = vmax.f32 %v1888, 0.0
    %v2913 = vmax.f32 %v1889, 0.0
    %v2914 = vmax.f32 %v1890, 0.0
    %v2915 = vmax.f32 %v1891, 0.0
    %v2916 = vmax.f32 %v1892, 0.0
    %v2917 = vmax.f32 %v1893, 0.0
    %v2918 = vmax.f32 %v1894, 0.0
    %v2919 = vmax.f32 %v1895, 0.0
    %v2920 = vmax.f32 %v1896, 0.0
    %v2921 = vmax.f32 %v1897, 0.0
    %v2922 = vmax.f32 %v1898, 0.0
    %v2923 = vmax.f32 %v1899, 0.0
    %v2924 = vmax.f32 %v1900, 0.0
    %v2925 = vmax.f32 %v1901, 0.0
    %v2926 = vmax.f32 %v1902, 0.0
    %v2927 = vmax.f32 %v1903, 0.0
    %v2928 = vmax.f32 %v1904, 0.0
    %v2929 = vmax.f32 %v1905, 0.0
    %v2930 = vmax.f32 %v1906, 0.0
    %v2931 = vmax.f32 %v1907, 0.0
    %v2932 = vmax.f32 %v1908, 0.0
    %v2933 = vmax.f32 %v1909, 0.0
    %v2934 = vmax.f32 %v1910, 0.0
    %v2935 = vmax.f32 %v1911, 0.0
    %v2936 = vmax.f32 %v1912, 0.0
    %v2937 = vmax.f32 %v1913, 0.0
    %v2938 = vmax.f32 %v1914, 0.0
    %v2939 = vmax.f32 %v1915, 0.0
    %v2940 = vmax.f32 %v1916, 0.0
    %v2941 = vmax.f32 %v1917, 0.0
    %v2942 = vmax.f32 %v1918, 0.0
    %v2943 = vmax.f32 %v1919, 0.0
    %v2944 = vmax.f32 %v1920, 0.0
    %v2945 = vmax.f32 %v1921, 0.0
    %v2946 = vmax.f32 %v1922, 0.0
    %v2947 = vmax.f32 %v1923, 0.0
    %v2948 = vmax.f32 %v1924, 0.0
    %v2949 = vmax.f32 %v1925, 0.0
    %v2950 = vmax.f32 %v1926, 0.0
    %v2951 = vmax.f32 %v1927, 0.0
    %v2952 = vmax.f32 %v1928, 0.0
    %v2953 = vmax.f32 %v1929, 0.0
    %v2954 = vmax.f32 %v1930, 0.0
    %v2955 = vmax.f32 %v1931, 0.0
    %v2956 = vmax.f32 %v1932, 0.0
    %v2957 = vmax.f32 %v1933, 0.0
    %v2958 = vmax.f32 %v1934, 0.0
    %v2959 = vmax.f32 %v1935, 0.0
    %v2960 = vmax.f32 %v1936, 0.0
    %v2961 = vmax.f32 %v1937, 0.0
    %v2962 = vmax.f32 %v1938, 0.0
    %v2963 = vmax.f32 %v1939, 0.0
    %v2964 = vmax.f32 %v1940, 0.0
    %v2965 = vmax.f32 %v1941, 0.0
    %v2966 = vmax.f32 %v1942, 0.0
    %v2967 = vmax.f32 %v1943, 0.0
    %v2968 = vmax.f32 %v1944, 0.0
    %v2969 = vmax.f32 %v1945, 0.0
    %v2970 = vmax.f32 %v1946, 0.0
    %v2971 = vmax.f32 %v1947, 0.0
    %v2972 = vmax.f32 %v1948, 0.0
    %v2973 = vmax.f32 %v1949, 0.0
    %v2974 = vmax.f32 %v1950, 0.0
    %v2975 = vmax.f32 %v1951, 0.0
    %v2976 = vmax.f32 %v1952, 0.0
    %v2977 = vmax.f32 %v1953, 0.0
    %v2978 = vmax.f32 %v1954, 0.0
    %v2979 = vmax.f32 %v1955, 0.0
    %v2980 = vmax.f32 %v1956, 0.0
    %v2981 = vmax.f32 %v1957, 0.0
    %v2982 = vmax.f32 %v1958, 0.0
    %v2983 = vmax.f32 %v1959, 0.0
    %v2984 = vmax.f32 %v1960, 0.0
    %v2985 = vmax.f32 %v1961, 0.0
    %v2986 = vmax.f32 %v1962, 0.0
    %v2987 = vmax.f32 %v1963, 0.0
    %v2988 = vmax.f32 %v1964, 0.0
    %v2989 = vmax.f32 %v1965, 0.0
    %v2990 = vmax.f32 %v1966, 0.0
    %v2991 = vmax.f32 %v1967, 0.0
    %v2992 = vmax.f32 %v1968, 0.0
    %v2993 = vmax.f32 %v1969, 0.0
    %v2994 = vmax.f32 %v1970, 0.0
    %v2995 = vmax.f32 %v1971, 0.0
    %v2996 = vmax.f32 %v1972, 0.0
    %v2997 = vmax.f32 %v1973, 0.0
    %v2998 = vmax.f32 %v1974, 0.0
    %v2999 = vmax.f32 %v1975, 0.0
    %v3000 = vmax.f32 %v1976, 0.0
    %v3001 = vmax.f32 %v1977, 0.0
    %v3002 = vmax.f32 %v1978, 0.0
    %v3003 = vmax.f32 %v1979, 0.0
    %v3004 = vmax.f32 %v1980, 0.0
    %v3005 = vmax.f32 %v1981, 0.0
    %v3006 = vmax.f32 %v1982, 0.0
    %v3007 = vmax.f32 %v1983, 0.0
    %v3008 = vmax.f32 %v1984, 0.0
    %v3009 = vmax.f32 %v1985, 0.0
    %v3010 = vmax.f32 %v1986, 0.0
    %v3011 = vmax.f32 %v1987, 0.0
    %v3012 = vmax.f32 %v1988, 0.0
    %v3013 = vmax.f32 %v1989, 0.0
    %v3014 = vmax.f32 %v1990, 0.0
    %v3015 = vmax.f32 %v1991, 0.0
    %v3016 = vmax.f32 %v1992, 0.0
    %v3017 = vmax.f32 %v1993, 0.0
    %v3018 = vmax.f32 %v1994, 0.0
    %v3019 = vmax.f32 %v1995, 0.0
    %v3020 = vmax.f32 %v1996, 0.0
    %v3021 = vmax.f32 %v1997, 0.0
    %v3022 = vmax.f32 %v1998, 0.0
    %v3023 = vmax.f32 %v1999, 0.0
    %v3024 = vmax.f32 %v2000, 0.0
    %v3025 = vmax.f32 %v2001, 0.0
    %v3026 = vmax.f32 %v2002, 0.0
    %v3027 = vmax.f32 %v2003, 0.0
    %v3028 = vmax.f32 %v2004, 0.0
    %v3029 = vmax.f32 %v2005, 0.0
    %v3030 = vmax.f32 %v2006, 0.0
    %v3031 = vmax.f32 %v2007, 0.0
    %v3032 = vmax.f32 %v2008, 0.0
    %v3033 = vmax.f32 %v2009, 0.0
    %v3034 = vmax.f32 %v2010, 0.0
    %v3035 = vmax.f32 %v2011, 0.0
    %v3036 = vmax.f32 %v2012, 0.0
    %v3037 = vmax.f32 %v2013, 0.0
    %v3038 = vmax.f32 %v2014, 0.0
    %v3039 = vmax.f32 %v2015, 0.0
    %v3040 = vmax.f32 %v2016, 0.0
    %v3041 = vmax.f32 %v2017, 0.0
    %v3042 = vmax.f32 %v2018, 0.0
    %v3043 = vmax.f32 %v2019, 0.0
    %v3044 = vmax.f32 %v2020, 0.0
    %v3045 = vmax.f32 %v2021, 0.0
    %v3046 = vmax.f32 %v2022, 0.0
    %v3047 = vmax.f32 %v2023, 0.0
    %v3048 = vmax.f32 %v2024, 0.0
    %v3049 = vmax.f32 %v2025, 0.0
    %v3050 = vmax.f32 %v2026, 0.0
    %v3051 = vmax.f32 %v2027, 0.0
    %v3052 = vmax.f32 %v2028, 0.0
    %v3053 = vmax.f32 %v2029, 0.0
    %v3054 = vmax.f32 %v2030, 0.0
    %v3055 = vmax.f32 %v2031, 0.0
    %v3056 = vmax.f32 %v2032, 0.0
    %v3057 = vmax.f32 %v2033, 0.0
    %v3058 = vmax.f32 %v2034, 0.0
    %v3059 = vmax.f32 %v2035, 0.0
    %v3060 = vmax.f32 %v2036, 0.0
    %v3061 = vmax.f32 %v2037, 0.0
    %v3062 = vmax.f32 %v2038, 0.0
    %v3063 = vmax.f32 %v2039, 0.0
    %v3064 = vmax.f32 %v2040, 0.0
    %v3065 = vmax.f32 %v2041, 0.0
    %v3066 = vmax.f32 %v2042, 0.0
    %v3067 = vmax.f32 %v2043, 0.0
    %v3068 = vmax.f32 %v2044, 0.0
    %v3069 = vmax.f32 %v2045, 0.0
    %v3070 = vmax.f32 %v2046, 0.0
    %v3071 = vmax.f32 %v2047, 0.0
    %v3072 = vmax.f32 %v2048, 0.0
    %v3073 = vmax.f32 %v2049, 0.0
    %v3074 = vmax.f32 %v2050, 0.0
    %v3075 = vmax.f32 %v2051, 0.0
    %v3076 = vmax.f32 %v2052, 0.0
    %v3077 = vmax.f32 %v2053, 0.0
    %v3078 = vmax.f32 %v2054, 0.0
    %v3079 = vmax.f32 %v2055, 0.0
    %v3080 = vmax.f32 %v2056, 0.0
    %v3081 = vmax.f32 %v2057, 0.0
    %v3082 = vmax.f32 %v2058, 0.0
    %v3083 = vmax.f32 %v2059, 0.0
    %v3084 = vmax.f32 %v2060, 0.0
    %v3085 = vmax.f32 %v2061, 0.0
    %v3086 = vmax.f32 %v2062, 0.0
    %v3087 = vmax.f32 %v2063, 0.0
    %v3088 = vmax.f32 %v2064, 0.0
    %v3089 = vmax.f32 %v2065, 0.0
    %v3090 = vmax.f32 %v2066, 0.0
    %v3091 = vmax.f32 %v2067, 0.0
    %v3092 = vmax.f32 %v2068, 0.0
    %v3093 = vmax.f32 %v2069, 0.0
    %v3094 = vmax.f32 %v2070, 0.0
    %v3095 = vmin.f32 %v2071, 6.0
    %v3096 = vmin.f32 %v2072, 6.0
    %v3097 = vmin.f32 %v2073, 6.0
    %v3098 = vmin.f32 %v2074, 6.0
    %v3099 = vmin.f32 %v2075, 6.0
    %v3100 = vmin.f32 %v2076, 6.0
    %v3101 = vmin.f32 %v2077, 6.0
    %v3102 = vmin.f32 %v2078, 6.0
    %v3103 = vmin.f32 %v2079, 6.0
    %v3104 = vmin.f32 %v2080, 6.0
    %v3105 = vmin.f32 %v2081, 6.0
    %v3106 = vmin.f32 %v2082, 6.0
    %v3107 = vmin.f32 %v2083, 6.0
    %v3108 = vmin.f32 %v2084, 6.0
    %v3109 = vmin.f32 %v2085, 6.0
    %v3110 = vmin.f32 %v2086, 6.0
    %v3111 = vmin.f32 %v2087, 6.0
    %v3112 = vmin.f32 %v2088, 6.0
    %v3113 = vmin.f32 %v2089, 6.0
    %v3114 = vmin.f32 %v2090, 6.0
    %v3115 = vmin.f32 %v2091, 6.0
    %v3116 = vmin.f32 %v2092, 6.0
    %v3117 = vmin.f32 %v2093, 6.0
    %v3118 = vmin.f32 %v2094, 6.0
    %v3119 = vmin.f32 %v2095, 6.0
    %v3120 = vmin.f32 %v2096, 6.0
    %v3121 = vmin.f32 %v2097, 6.0
    %v3122 = vmin.f32 %v2098, 6.0
    %v3123 = vmin.f32 %v2099, 6.0
    %v3124 = vmin.f32 %v2100, 6.0
    %v3125 = vmin.f32 %v2101, 6.0
    %v3126 = vmin.f32 %v2102, 6.0
    %v3127 = vmin.f32 %v2103, 6.0
    %v3128 = vmin.f32 %v2104, 6.0
    %v3129 = vmin.f32 %v2105, 6.0
    %v3130 = vmin.f32 %v2106, 6.0
    %v3131 = vmin.f32 %v2107, 6.0
    %v3132 = vmin.f32 %v2108, 6.0
    %v3133 = vmin.f32 %v2109, 6.0
    %v3134 = vmin.f32 %v2110, 6.0
    %v3135 = vmin.f32 %v2111, 6.0
    %v3136 = vmin.f32 %v2112, 6.0
    %v3137 = vmin.f32 %v2113, 6.0
    %v3138 = vmin.f32 %v2114, 6.0
    %v3139 = vmin.f32 %v2115, 6.0
    %v3140 = vmin.f32 %v2116, 6.0
    %v3141 = vmin.f32 %v2117, 6.0
    %v3142 = vmin.f32 %v2118, 6.0
    %v3143 = vmin.f32 %v2119, 6.0
    %v3144 = vmin.f32 %v2120, 6.0
    %v3145 = vmin.f32 %v2121, 6.0
    %v3146 = vmin.f32 %v2122, 6.0
    %v3147 = vmin.f32 %v2123, 6.0
    %v3148 = vmin.f32 %v2124, 6.0
    %v3149 = vmin.f32 %v2125, 6.0
    %v3150 = vmin.f32 %v2126, 6.0
    %v3151 = vmin.f32 %v2127, 6.0
    %v3152 = vmin.f32 %v2128, 6.0
    %v3153 = vmin.f32 %v2129, 6.0
    %v3154 = vmin.f32 %v2130, 6.0
    %v3155 = vmin.f32 %v2131, 6.0
    %v3156 = vmin.f32 %v2132, 6.0
    %v3157 = vmin.f32 %v2133, 6.0
    %v3158 = vmin.f32 %v2134, 6.0
    %v3159 = vmin.f32 %v2135, 6.0
    %v3160 = vmin.f32 %v2136, 6.0
    %v3161 = vmin.f32 %v2137, 6.0
    %v3162 = vmin.f32 %v2138, 6.0
    %v3163 = vmin.f32 %v2139, 6.0
    %v3164 = vmin.f32 %v2140, 6.0
    %v3165 = vmin.f32 %v2141, 6.0
    %v3166 = vmin.f32 %v2142, 6.0
    %v3167 = vmin.f32 %v2143, 6.0
    %v3168 = vmin.f32 %v2144, 6.0
    %v3169 = vmin.f32 %v2145, 6.0
    %v3170 = vmin.f32 %v2146, 6.0
    %v3171 = vmin.f32 %v2147, 6.0
    %v3172 = vmin.f32 %v2148, 6.0
    %v3173 = vmin.f32 %v2149, 6.0
    %v3174 = vmin.f32 %v2150, 6.0
    %v3175 = vmin.f32 %v2151, 6.0
    %v3176 = vmin.f32 %v2152, 6.0
    %v3177 = vmin.f32 %v2153, 6.0
    %v3178 = vmin.f32 %v2154, 6.0
    %v3179 = vmin.f32 %v2155, 6.0
    %v3180 = vmin.f32 %v2156, 6.0
    %v3181 = vmin.f32 %v2157, 6.0
    %v3182 = vmin.f32 %v2158, 6.0
    %v3183 = vmin.f32 %v2159, 6.0
    %v3184 = vmin.f32 %v2160, 6.0
    %v3185 = vmin.f32 %v2161, 6.0
    %v3186 = vmin.f32 %v2162, 6.0
    %v3187 = vmin.f32 %v2163, 6.0
    %v3188 = vmin.f32 %v2164, 6.0
    %v3189 = vmin.f32 %v2165, 6.0
    %v3190 = vmin.f32 %v2166, 6.0
    %v3191 = vmin.f32 %v2167, 6.0
    %v3192 = vmin.f32 %v2168, 6.0
    %v3193 = vmin.f32 %v2169, 6.0
    %v3194 = vmin.f32 %v2170, 6.0
    %v3195 = vmin.f32 %v2171, 6.0
    %v3196 = vmin.f32 %v2172, 6.0
    %v3197 = vmin.f32 %v2173, 6.0
    %v3198 = vmin.f32 %v2174, 6.0
    %v3199 = vmin.f32 %v2175, 6.0
    %v3200 = vmin.f32 %v2176, 6.0
    %v3201 = vmin.f32 %v2177, 6.0
    %v3202 = vmin.f32 %v2178, 6.0
    %v3203 = vmin.f32 %v2179, 6.0
    %v3204 = vmin.f32 %v2180, 6.0
    %v3205 = vmin.f32 %v2181, 6.0
    %v3206 = vmin.f32 %v2182, 6.0
    %v3207 = vmin.f32 %v2183, 6.0
    %v3208 = vmin.f32 %v2184, 6.0
    %v3209 = vmin.f32 %v2185, 6.0
    %v3210 = vmin.f32 %v2186, 6.0
    %v3211 = vmin.f32 %v2187, 6.0
    %v3212 = vmin.f32 %v2188, 6.0
    %v3213 = vmin.f32 %v2189, 6.0
    %v3214 = vmin.f32 %v2190, 6.0
    %v3215 = vmin.f32 %v2191, 6.0
    %v3216 = vmin.f32 %v2192, 6.0
    %v3217 = vmin.f32 %v2193, 6.0
    %v3218 = vmin.f32 %v2194, 6.0
    %v3219 = vmin.f32 %v2195, 6.0
    %v3220 = vmin.f32 %v2196, 6.0
    %v3221 = vmin.f32 %v2197, 6.0
    %v3222 = vmin.f32 %v2198, 6.0
    %v3223 = vmin.f32 %v2199, 6.0
    %v3224 = vmin.f32 %v2200, 6.0
    %v3225 = vmin.f32 %v2201, 6.0
    %v3226 = vmin.f32 %v2202, 6.0
    %v3227 = vmin.f32 %v2203, 6.0
    %v3228 = vmin.f32 %v2204, 6.0
    %v3229 = vmin.f32 %v2205, 6.0
    %v3230 = vmin.f32 %v2206, 6.0
    %v3231 = vmin.f32 %v2207, 6.0
    %v3232 = vmin.f32 %v2208, 6.0
    %v3233 = vmin.f32 %v2209, 6.0
    %v3234 = vmin.f32 %v2210, 6.0
    %v3235 = vmin.f32 %v2211, 6.0
    %v3236 = vmin.f32 %v2212, 6.0
    %v3237 = vmin.f32 %v2213, 6.0
    %v3238 = vmin.f32 %v2214, 6.0
    %v3239 = vmin.f32 %v2215, 6.0
    %v3240 = vmin.f32 %v2216, 6.0
    %v3241 = vmin.f32 %v2217, 6.0
    %v3242 = vmin.f32 %v2218, 6.0
    %v3243 = vmin.f32 %v2219, 6.0
    %v3244 = vmin.f32 %v2220, 6.0
    %v3245 = vmin.f32 %v2221, 6.0
    %v3246 = vmin.f32 %v2222, 6.0
    %v3247 = vmin.f32 %v2223, 6.0
    %v3248 = vmin.f32 %v2224, 6.0
    %v3249 = vmin.f32 %v2225, 6.0
    %v3250 = vmin.f32 %v2226, 6.0
    %v3251 = vmin.f32 %v2227, 6.0
    %v3252 = vmin.f32 %v2228, 6.0
    %v3253 = vmin.f32 %v2229, 6.0
    %v3254 = vmin.f32 %v2230, 6.0
    %v3255 = vmin.f32 %v2231, 6.0
    %v3256 = vmin.f32 %v2232, 6.0
    %v3257 = vmin.f32 %v2233, 6.0
    %v3258 = vmin.f32 %v2234, 6.0
    %v3259 = vmin.f32 %v2235, 6.0
    %v3260 = vmin.f32 %v2236, 6.0
    %v3261 = vmin.f32 %v2237, 6.0
    %v3262 = vmin.f32 %v2238, 6.0
    %v3263 = vmin.f32 %v2239, 6.0
    %v3264 = vmin.f32 %v2240, 6.0
    %v3265 = vmin.f32 %v2241, 6.0
    %v3266 = vmin.f32 %v2242, 6.0
    %v3267 = vmin.f32 %v2243, 6.0
    %v3268 = vmin.f32 %v2244, 6.0
    %v3269 = vmin.f32 %v2245, 6.0
    %v3270 = vmin.f32 %v2246, 6.0
    %v3271 = vmin.f32 %v2247, 6.0
    %v3272 = vmin.f32 %v2248, 6.0
    %v3273 = vmin.f32 %v2249, 6.0
    %v3274 = vmin.f32 %v2250, 6.0
    %v3275 = vmin.f32 %v2251, 6.0
    %v3276 = vmin.f32 %v2252, 6.0
    %v3277 = vmin.f32 %v2253, 6.0
    %v3278 = vmin.f32 %v2254, 6.0
    %v3279 = vmin.f32 %v2255, 6.0
    %v3280 = vmin.f32 %v2256, 6.0
    %v3281 = vmin.f32 %v2257, 6.0
    %v3282 = vmin.f32 %v2258, 6.0
    %v3283 = vmin.f32 %v2259, 6.0
    %v3284 = vmin.f32 %v2260, 6.0
    %v3285 = vmin.f32 %v2261, 6.0
    %v3286 = vmin.f32 %v2262, 6.0
    %v3287 = vmin.f32 %v2263, 6.0
    %v3288 = vmin.f32 %v2264, 6.0
    %v3289 = vmin.f32 %v2265, 6.0
    %v3290 = vmin.f32 %v2266, 6.0
    %v3291 = vmin.f32 %v2267, 6.0
    %v3292 = vmin.f32 %v2268, 6.0
    %v3293 = vmin.f32 %v2269, 6.0
    %v3294 = vmin.f32 %v2270, 6.0
    %v3295 = vmin.f32 %v2271, 6.0
    %v3296 = vmin.f32 %v2272, 6.0
    %v3297 = vmin.f32 %v2273, 6.0
    %v3298 = vmin.f32 %v2274, 6.0
    %v3299 = vmin.f32 %v2275, 6.0
    %v3300 = vmin.f32 %v2276, 6.0
    %v3301 = vmin.f32 %v2277, 6.0
    %v3302 = vmin.f32 %v2278, 6.0
    %v3303 = vmin.f32 %v2279, 6.0
    %v3304 = vmin.f32 %v2280, 6.0
    %v3305 = vmin.f32 %v2281, 6.0
    %v3306 = vmin.f32 %v2282, 6.0
    %v3307 = vmin.f32 %v2283, 6.0
    %v3308 = vmin.f32 %v2284, 6.0
    %v3309 = vmin.f32 %v2285, 6.0
    %v3310 = vmin.f32 %v2286, 6.0
    %v3311 = vmin.f32 %v2287, 6.0
    %v3312 = vmin.f32 %v2288, 6.0
    %v3313 = vmin.f32 %v2289, 6.0
    %v3314 = vmin.f32 %v2290, 6.0
    %v3315 = vmin.f32 %v2291, 6.0
    %v3316 = vmin.f32 %v2292, 6.0
    %v3317 = vmin.f32 %v2293, 6.0
    %v3318 = vmin.f32 %v2294, 6.0
    %v3319 = vmin.f32 %v2295, 6.0
    %v3320 = vmin.f32 %v2296, 6.0
    %v3321 = vmin.f32 %v2297, 6.0
    %v3322 = vmin.f32 %v2298, 6.0
    %v3323 = vmin.f32 %v2299, 6.0
    %v3324 = vmin.f32 %v2300, 6.0
    %v3325 = vmin.f32 %v2301, 6.0
    %v3326 = vmin.f32 %v2302, 6.0
    %v3327 = vmin.f32 %v2303, 6.0
    %v3328 = vmin.f32 %v2304, 6.0
    %v3329 = vmin.f32 %v2305, 6.0
    %v3330 = vmin.f32 %v2306, 6.0
    %v3331 = vmin.f32 %v2307, 6.0
    %v3332 = vmin.f32 %v2308, 6.0
    %v3333 = vmin.f32 %v2309, 6.0
    %v3334 = vmin.f32 %v2310, 6.0
    %v3335 = vmin.f32 %v2311, 6.0
    %v3336 = vmin.f32 %v2312, 6.0
    %v3337 = vmin.f32 %v2313, 6.0
    %v3338 = vmin.f32 %v2314, 6.0
    %v3339 = vmin.f32 %v2315, 6.0
    %v3340 = vmin.f32 %v2316, 6.0
    %v3341 = vmin.f32 %v2317, 6.0
    %v3342 = vmin.f32 %v2318, 6.0
    %v3343 = vmin.f32 %v2319, 6.0
    %v3344 = vmin.f32 %v2320, 6.0
    %v3345 = vmin.f32 %v2321, 6.0
    %v3346 = vmin.f32 %v2322, 6.0
    %v3347 = vmin.f32 %v2323, 6.0
    %v3348 = vmin.f32 %v2324, 6.0
    %v3349 = vmin.f32 %v2325, 6.0
    %v3350 = vmin.f32 %v2326, 6.0
    %v3351 = vmin.f32 %v2327, 6.0
    %v3352 = vmin.f32 %v2328, 6.0
    %v3353 = vmin.f32 %v2329, 6.0
    %v3354 = vmin.f32 %v2330, 6.0
    %v3355 = vmin.f32 %v2331, 6.0
    %v3356 = vmin.f32 %v2332, 6.0
    %v3357 = vmin.f32 %v2333, 6.0
    %v3358 = vmin.f32 %v2334, 6.0
    %v3359 = vmin.f32 %v2335, 6.0
    %v3360 = vmin.f32 %v2336, 6.0
    %v3361 = vmin.f32 %v2337, 6.0
    %v3362 = vmin.f32 %v2338, 6.0
    %v3363 = vmin.f32 %v2339, 6.0
    %v3364 = vmin.f32 %v2340, 6.0
    %v3365 = vmin.f32 %v2341, 6.0
    %v3366 = vmin.f32 %v2342, 6.0
    %v3367 = vmin.f32 %v2343, 6.0
    %v3368 = vmin.f32 %v2344, 6.0
    %v3369 = vmin.f32 %v2345, 6.0
    %v3370 = vmin.f32 %v2346, 6.0
    %v3371 = vmin.f32 %v2347, 6.0
    %v3372 = vmin.f32 %v2348, 6.0
    %v3373 = vmin.f32 %v2349, 6.0
    %v3374 = vmin.f32 %v2350, 6.0
    %v3375 = vmin.f32 %v2351, 6.0
    %v3376 = vmin.f32 %v2352, 6.0
    %v3377 = vmin.f32 %v2353, 6.0
    %v3378 = vmin.f32 %v2354, 6.0
    %v3379 = vmin.f32 %v2355, 6.0
    %v3380 = vmin.f32 %v2356, 6.0
    %v3381 = vmin.f32 %v2357, 6.0
    %v3382 = vmin.f32 %v2358, 6.0
    %v3383 = vmin.f32 %v2359, 6.0
    %v3384 = vmin.f32 %v2360, 6.0
    %v3385 = vmin.f32 %v2361, 6.0
    %v3386 = vmin.f32 %v2362, 6.0
    %v3387 = vmin.f32 %v2363, 6.0
    %v3388 = vmin.f32 %v2364, 6.0
    %v3389 = vmin.f32 %v2365, 6.0
    %v3390 = vmin.f32 %v2366, 6.0
    %v3391 = vmin.f32 %v2367, 6.0
    %v3392 = vmin.f32 %v2368, 6.0
    %v3393 = vmin.f32 %v2369, 6.0
    %v3394 = vmin.f32 %v2370, 6.0
    %v3395 = vmin.f32 %v2371, 6.0
    %v3396 = vmin.f32 %v2372, 6.0
    %v3397 = vmin.f32 %v2373, 6.0
    %v3398 = vmin.f32 %v2374, 6.0
    %v3399 = vmin.f32 %v2375, 6.0
    %v3400 = vmin.f32 %v2376, 6.0
    %v3401 = vmin.f32 %v2377, 6.0
    %v3402 = vmin.f32 %v2378, 6.0
    %v3403 = vmin.f32 %v2379, 6.0
    %v3404 = vmin.f32 %v2380, 6.0
    %v3405 = vmin.f32 %v2381, 6.0
    %v3406 = vmin.f32 %v2382, 6.0
    %v3407 = vmin.f32 %v2383, 6.0
    %v3408 = vmin.f32 %v2384, 6.0
    %v3409 = vmin.f32 %v2385, 6.0
    %v3410 = vmin.f32 %v2386, 6.0
    %v3411 = vmin.f32 %v2387, 6.0
    %v3412 = vmin.f32 %v2388, 6.0
    %v3413 = vmin.f32 %v2389, 6.0
    %v3414 = vmin.f32 %v2390, 6.0
    %v3415 = vmin.f32 %v2391, 6.0
    %v3416 = vmin.f32 %v2392, 6.0
    %v3417 = vmin.f32 %v2393, 6.0
    %v3418 = vmin.f32 %v2394, 6.0
    %v3419 = vmin.f32 %v2395, 6.0
    %v3420 = vmin.f32 %v2396, 6.0
    %v3421 = vmin.f32 %v2397, 6.0
    %v3422 = vmin.f32 %v2398, 6.0
    %v3423 = vmin.f32 %v2399, 6.0
    %v3424 = vmin.f32 %v2400, 6.0
    %v3425 = vmin.f32 %v2401, 6.0
    %v3426 = vmin.f32 %v2402, 6.0
    %v3427 = vmin.f32 %v2403, 6.0
    %v3428 = vmin.f32 %v2404, 6.0
    %v3429 = vmin.f32 %v2405, 6.0
    %v3430 = vmin.f32 %v2406, 6.0
    %v3431 = vmin.f32 %v2407, 6.0
    %v3432 = vmin.f32 %v2408, 6.0
    %v3433 = vmin.f32 %v2409, 6.0
    %v3434 = vmin.f32 %v2410, 6.0
    %v3435 = vmin.f32 %v2411, 6.0
    %v3436 = vmin.f32 %v2412, 6.0
    %v3437 = vmin.f32 %v2413, 6.0
    %v3438 = vmin.f32 %v2414, 6.0
    %v3439 = vmin.f32 %v2415, 6.0
    %v3440 = vmin.f32 %v2416, 6.0
    %v3441 = vmin.f32 %v2417, 6.0
    %v3442 = vmin.f32 %v2418, 6.0
    %v3443 = vmin.f32 %v2419, 6.0
    %v3444 = vmin.f32 %v2420, 6.0
    %v3445 = vmin.f32 %v2421, 6.0
    %v3446 = vmin.f32 %v2422, 6.0
    %v3447 = vmin.f32 %v2423, 6.0
    %v3448 = vmin.f32 %v2424, 6.0
    %v3449 = vmin.f32 %v2425, 6.0
    %v3450 = vmin.f32 %v2426, 6.0
    %v3451 = vmin.f32 %v2427, 6.0
    %v3452 = vmin.f32 %v2428, 6.0
    %v3453 = vmin.f32 %v2429, 6.0
    %v3454 = vmin.f32 %v2430, 6.0
    %v3455 = vmin.f32 %v2431, 6.0
    %v3456 = vmin.f32 %v2432, 6.0
    %v3457 = vmin.f32 %v2433, 6.0
    %v3458 = vmin.f32 %v2434, 6.0
    %v3459 = vmin.f32 %v2435, 6.0
    %v3460 = vmin.f32 %v2436, 6.0
    %v3461 = vmin.f32 %v2437, 6.0
    %v3462 = vmin.f32 %v2438, 6.0
    %v3463 = vmin.f32 %v2439, 6.0
    %v3464 = vmin.f32 %v2440, 6.0
    %v3465 = vmin.f32 %v2441, 6.0
    %v3466 = vmin.f32 %v2442, 6.0
    %v3467 = vmin.f32 %v2443, 6.0
    %v3468 = vmin.f32 %v2444, 6.0
    %v3469 = vmin.f32 %v2445, 6.0
    %v3470 = vmin.f32 %v2446, 6.0
    %v3471 = vmin.f32 %v2447, 6.0
    %v3472 = vmin.f32 %v2448, 6.0
    %v3473 = vmin.f32 %v2449, 6.0
    %v3474 = vmin.f32 %v2450, 6.0
    %v3475 = vmin.f32 %v2451, 6.0
    %v3476 = vmin.f32 %v2452, 6.0
    %v3477 = vmin.f32 %v2453, 6.0
    %v3478 = vmin.f32 %v2454, 6.0
    %v3479 = vmin.f32 %v2455, 6.0
    %v3480 = vmin.f32 %v2456, 6.0
    %v3481 = vmin.f32 %v2457, 6.0
    %v3482 = vmin.f32 %v2458, 6.0
    %v3483 = vmin.f32 %v2459, 6.0
    %v3484 = vmin.f32 %v2460, 6.0
    %v3485 = vmin.f32 %v2461, 6.0
    %v3486 = vmin.f32 %v2462, 6.0
    %v3487 = vmin.f32 %v2463, 6.0
    %v3488 = vmin.f32 %v2464, 6.0
    %v3489 = vmin.f32 %v2465, 6.0
    %v3490 = vmin.f32 %v2466, 6.0
    %v3491 = vmin.f32 %v2467, 6.0
    %v3492 = vmin.f32 %v2468, 6.0
    %v3493 = vmin.f32 %v2469, 6.0
    %v3494 = vmin.f32 %v2470, 6.0
    %v3495 = vmin.f32 %v2471, 6.0
    %v3496 = vmin.f32 %v2472, 6.0
    %v3497 = vmin.f32 %v2473, 6.0
    %v3498 = vmin.f32 %v2474, 6.0
    %v3499 = vmin.f32 %v2475, 6.0
    %v3500 = vmin.f32 %v2476, 6.0
    %v3501 = vmin.f32 %v2477, 6.0
    %v3502 = vmin.f32 %v2478, 6.0
    %v3503 = vmin.f32 %v2479, 6.0
    %v3504 = vmin.f32 %v2480, 6.0
    %v3505 = vmin.f32 %v2481, 6.0
    %v3506 = vmin.f32 %v2482, 6.0
    %v3507 = vmin.f32 %v2483, 6.0
    %v3508 = vmin.f32 %v2484, 6.0
    %v3509 = vmin.f32 %v2485, 6.0
    %v3510 = vmin.f32 %v2486, 6.0
    %v3511 = vmin.f32 %v2487, 6.0
    %v3512 = vmin.f32 %v2488, 6.0
    %v3513 = vmin.f32 %v2489, 6.0
    %v3514 = vmin.f32 %v2490, 6.0
    %v3515 = vmin.f32 %v2491, 6.0
    %v3516 = vmin.f32 %v2492, 6.0
    %v3517 = vmin.f32 %v2493, 6.0
    %v3518 = vmin.f32 %v2494, 6.0
    %v3519 = vmin.f32 %v2495, 6.0
    %v3520 = vmin.f32 %v2496, 6.0
    %v3521 = vmin.f32 %v2497, 6.0
    %v3522 = vmin.f32 %v2498, 6.0
    %v3523 = vmin.f32 %v2499, 6.0
    %v3524 = vmin.f32 %v2500, 6.0
    %v3525 = vmin.f32 %v2501, 6.0
    %v3526 = vmin.f32 %v2502, 6.0
    %v3527 = vmin.f32 %v2503, 6.0
    %v3528 = vmin.f32 %v2504, 6.0
    %v3529 = vmin.f32 %v2505, 6.0
    %v3530 = vmin.f32 %v2506, 6.0
    %v3531 = vmin.f32 %v2507, 6.0
    %v3532 = vmin.f32 %v2508, 6.0
    %v3533 = vmin.f32 %v2509, 6.0
    %v3534 = vmin.f32 %v2510, 6.0
    %v3535 = vmin.f32 %v2511, 6.0
    %v3536 = vmin.f32 %v2512, 6.0
    %v3537 = vmin.f32 %v2513, 6.0
    %v3538 = vmin.f32 %v2514, 6.0
    %v3539 = vmin.f32 %v2515, 6.0
    %v3540 = vmin.f32 %v2516, 6.0
    %v3541 = vmin.f32 %v2517, 6.0
    %v3542 = vmin.f32 %v2518, 6.0
    %v3543 = vmin.f32 %v2519, 6.0
    %v3544 = vmin.f32 %v2520, 6.0
    %v3545 = vmin.f32 %v2521, 6.0
    %v3546 = vmin.f32 %v2522, 6.0
    %v3547 = vmin.f32 %v2523, 6.0
    %v3548 = vmin.f32 %v2524, 6.0
    %v3549 = vmin.f32 %v2525, 6.0
    %v3550 = vmin.f32 %v2526, 6.0
    %v3551 = vmin.f32 %v2527, 6.0
    %v3552 = vmin.f32 %v2528, 6.0
    %v3553 = vmin.f32 %v2529, 6.0
    %v3554 = vmin.f32 %v2530, 6.0
    %v3555 = vmin.f32 %v2531, 6.0
    %v3556 = vmin.f32 %v2532, 6.0
    %v3557 = vmin.f32 %v2533, 6.0
    %v3558 = vmin.f32 %v2534, 6.0
    %v3559 = vmin.f32 %v2535, 6.0
    %v3560 = vmin.f32 %v2536, 6.0
    %v3561 = vmin.f32 %v2537, 6.0
    %v3562 = vmin.f32 %v2538, 6.0
    %v3563 = vmin.f32 %v2539, 6.0
    %v3564 = vmin.f32 %v2540, 6.0
    %v3565 = vmin.f32 %v2541, 6.0
    %v3566 = vmin.f32 %v2542, 6.0
    %v3567 = vmin.f32 %v2543, 6.0
    %v3568 = vmin.f32 %v2544, 6.0
    %v3569 = vmin.f32 %v2545, 6.0
    %v3570 = vmin.f32 %v2546, 6.0
    %v3571 = vmin.f32 %v2547, 6.0
    %v3572 = vmin.f32 %v2548, 6.0
    %v3573 = vmin.f32 %v2549, 6.0
    %v3574 = vmin.f32 %v2550, 6.0
    %v3575 = vmin.f32 %v2551, 6.0
    %v3576 = vmin.f32 %v2552, 6.0
    %v3577 = vmin.f32 %v2553, 6.0
    %v3578 = vmin.f32 %v2554, 6.0
    %v3579 = vmin.f32 %v2555, 6.0
    %v3580 = vmin.f32 %v2556, 6.0
    %v3581 = vmin.f32 %v2557, 6.0
    %v3582 = vmin.f32 %v2558, 6.0
    %v3583 = vmin.f32 %v2559, 6.0
    %v3584 = vmin.f32 %v2560, 6.0
    %v3585 = vmin.f32 %v2561, 6.0
    %v3586 = vmin.f32 %v2562, 6.0
    %v3587 = vmin.f32 %v2563, 6.0
    %v3588 = vmin.f32 %v2564, 6.0
    %v3589 = vmin.f32 %v2565, 6.0
    %v3590 = vmin.f32 %v2566, 6.0
    %v3591 = vmin.f32 %v2567, 6.0
    %v3592 = vmin.f32 %v2568, 6.0
    %v3593 = vmin.f32 %v2569, 6.0
    %v3594 = vmin.f32 %v2570, 6.0
    %v3595 = vmin.f32 %v2571, 6.0
    %v3596 = vmin.f32 %v2572, 6.0
    %v3597 = vmin.f32 %v2573, 6.0
    %v3598 = vmin.f32 %v2574, 6.0
    %v3599 = vmin.f32 %v2575, 6.0
    %v3600 = vmin.f32 %v2576, 6.0
    %v3601 = vmin.f32 %v2577, 6.0
    %v3602 = vmin.f32 %v2578, 6.0
    %v3603 = vmin.f32 %v2579, 6.0
    %v3604 = vmin.f32 %v2580, 6.0
    %v3605 = vmin.f32 %v2581, 6.0
    %v3606 = vmin.f32 %v2582, 6.0
    %v3607 = vmin.f32 %v2583, 6.0
    %v3608 = vmin.f32 %v2584, 6.0
    %v3609 = vmin.f32 %v2585, 6.0
    %v3610 = vmin.f32 %v2586, 6.0
    %v3611 = vmin.f32 %v2587, 6.0
    %v3612 = vmin.f32 %v2588, 6.0
    %v3613 = vmin.f32 %v2589, 6.0
    %v3614 = vmin.f32 %v2590, 6.0
    %v3615 = vmin.f32 %v2591, 6.0
    %v3616 = vmin.f32 %v2592, 6.0
    %v3617 = vmin.f32 %v2593, 6.0
    %v3618 = vmin.f32 %v2594, 6.0
    %v3619 = vmin.f32 %v2595, 6.0
    %v3620 = vmin.f32 %v2596, 6.0
    %v3621 = vmin.f32 %v2597, 6.0
    %v3622 = vmin.f32 %v2598, 6.0
    %v3623 = vmin.f32 %v2599, 6.0
    %v3624 = vmin.f32 %v2600, 6.0
    %v3625 = vmin.f32 %v2601, 6.0
    %v3626 = vmin.f32 %v2602, 6.0
    %v3627 = vmin.f32 %v2603, 6.0
    %v3628 = vmin.f32 %v2604, 6.0
    %v3629 = vmin.f32 %v2605, 6.0
    %v3630 = vmin.f32 %v2606, 6.0
    %v3631 = vmin.f32 %v2607, 6.0
    %v3632 = vmin.f32 %v2608, 6.0
    %v3633 = vmin.f32 %v2609, 6.0
    %v3634 = vmin.f32 %v2610, 6.0
    %v3635 = vmin.f32 %v2611, 6.0
    %v3636 = vmin.f32 %v2612, 6.0
    %v3637 = vmin.f32 %v2613, 6.0
    %v3638 = vmin.f32 %v2614, 6.0
    %v3639 = vmin.f32 %v2615, 6.0
    %v3640 = vmin.f32 %v2616, 6.0
    %v3641 = vmin.f32 %v2617, 6.0
    %v3642 = vmin.f32 %v2618, 6.0
    %v3643 = vmin.f32 %v2619, 6.0
    %v3644 = vmin.f32 %v2620, 6.0
    %v3645 = vmin.f32 %v2621, 6.0
    %v3646 = vmin.f32 %v2622, 6.0
    %v3647 = vmin.f32 %v2623, 6.0
    %v3648 = vmin.f32 %v2624, 6.0
    %v3649 = vmin.f32 %v2625, 6.0
    %v3650 = vmin.f32 %v2626, 6.0
    %v3651 = vmin.f32 %v2627, 6.0
    %v3652 = vmin.f32 %v2628, 6.0
    %v3653 = vmin.f32 %v2629, 6.0
    %v3654 = vmin.f32 %v2630, 6.0
    %v3655 = vmin.f32 %v2631, 6.0
    %v3656 = vmin.f32 %v2632, 6.0
    %v3657 = vmin.f32 %v2633, 6.0
    %v3658 = vmin.f32 %v2634, 6.0
    %v3659 = vmin.f32 %v2635, 6.0
    %v3660 = vmin.f32 %v2636, 6.0
    %v3661 = vmin.f32 %v2637, 6.0
    %v3662 = vmin.f32 %v2638, 6.0
    %v3663 = vmin.f32 %v2639, 6.0
    %v3664 = vmin.f32 %v2640, 6.0
    %v3665 = vmin.f32 %v2641, 6.0
    %v3666 = vmin.f32 %v2642, 6.0
    %v3667 = vmin.f32 %v2643, 6.0
    %v3668 = vmin.f32 %v2644, 6.0
    %v3669 = vmin.f32 %v2645, 6.0
    %v3670 = vmin.f32 %v2646, 6.0
    %v3671 = vmin.f32 %v2647, 6.0
    %v3672 = vmin.f32 %v2648, 6.0
    %v3673 = vmin.f32 %v2649, 6.0
    %v3674 = vmin.f32 %v2650, 6.0
    %v3675 = vmin.f32 %v2651, 6.0
    %v3676 = vmin.f32 %v2652, 6.0
    %v3677 = vmin.f32 %v2653, 6.0
    %v3678 = vmin.f32 %v2654, 6.0
    %v3679 = vmin.f32 %v2655, 6.0
    %v3680 = vmin.f32 %v2656, 6.0
    %v3681 = vmin.f32 %v2657, 6.0
    %v3682 = vmin.f32 %v2658, 6.0
    %v3683 = vmin.f32 %v2659, 6.0
    %v3684 = vmin.f32 %v2660, 6.0
    %v3685 = vmin.f32 %v2661, 6.0
    %v3686 = vmin.f32 %v2662, 6.0
    %v3687 = vmin.f32 %v2663, 6.0
    %v3688 = vmin.f32 %v2664, 6.0
    %v3689 = vmin.f32 %v2665, 6.0
    %v3690 = vmin.f32 %v2666, 6.0
    %v3691 = vmin.f32 %v2667, 6.0
    %v3692 = vmin.f32 %v2668, 6.0
    %v3693 = vmin.f32 %v2669, 6.0
    %v3694 = vmin.f32 %v2670, 6.0
    %v3695 = vmin.f32 %v2671, 6.0
    %v3696 = vmin.f32 %v2672, 6.0
    %v3697 = vmin.f32 %v2673, 6.0
    %v3698 = vmin.f32 %v2674, 6.0
    %v3699 = vmin.f32 %v2675, 6.0
    %v3700 = vmin.f32 %v2676, 6.0
    %v3701 = vmin.f32 %v2677, 6.0
    %v3702 = vmin.f32 %v2678, 6.0
    %v3703 = vmin.f32 %v2679, 6.0
    %v3704 = vmin.f32 %v2680, 6.0
    %v3705 = vmin.f32 %v2681, 6.0
    %v3706 = vmin.f32 %v2682, 6.0
    %v3707 = vmin.f32 %v2683, 6.0
    %v3708 = vmin.f32 %v2684, 6.0
    %v3709 = vmin.f32 %v2685, 6.0
    %v3710 = vmin.f32 %v2686, 6.0
    %v3711 = vmin.f32 %v2687, 6.0
    %v3712 = vmin.f32 %v2688, 6.0
    %v3713 = vmin.f32 %v2689, 6.0
    %v3714 = vmin.f32 %v2690, 6.0
    %v3715 = vmin.f32 %v2691, 6.0
    %v3716 = vmin.f32 %v2692, 6.0
    %v3717 = vmin.f32 %v2693, 6.0
    %v3718 = vmin.f32 %v2694, 6.0
    %v3719 = vmin.f32 %v2695, 6.0
    %v3720 = vmin.f32 %v2696, 6.0
    %v3721 = vmin.f32 %v2697, 6.0
    %v3722 = vmin.f32 %v2698, 6.0
    %v3723 = vmin.f32 %v2699, 6.0
    %v3724 = vmin.f32 %v2700, 6.0
    %v3725 = vmin.f32 %v2701, 6.0
    %v3726 = vmin.f32 %v2702, 6.0
    %v3727 = vmin.f32 %v2703, 6.0
    %v3728 = vmin.f32 %v2704, 6.0
    %v3729 = vmin.f32 %v2705, 6.0
    %v3730 = vmin.f32 %v2706, 6.0
    %v3731 = vmin.f32 %v2707, 6.0
    %v3732 = vmin.f32 %v2708, 6.0
    %v3733 = vmin.f32 %v2709, 6.0
    %v3734 = vmin.f32 %v2710, 6.0
    %v3735 = vmin.f32 %v2711, 6.0
    %v3736 = vmin.f32 %v2712, 6.0
    %v3737 = vmin.f32 %v2713, 6.0
    %v3738 = vmin.f32 %v2714, 6.0
    %v3739 = vmin.f32 %v2715, 6.0
    %v3740 = vmin.f32 %v2716, 6.0
    %v3741 = vmin.f32 %v2717, 6.0
    %v3742 = vmin.f32 %v2718, 6.0
    %v3743 = vmin.f32 %v2719, 6.0
    %v3744 = vmin.f32 %v2720, 6.0
    %v3745 = vmin.f32 %v2721, 6.0
    %v3746 = vmin.f32 %v2722, 6.0
    %v3747 = vmin.f32 %v2723, 6.0
    %v3748 = vmin.f32 %v2724, 6.0
    %v3749 = vmin.f32 %v2725, 6.0
    %v3750 = vmin.f32 %v2726, 6.0
    %v3751 = vmin.f32 %v2727, 6.0
    %v3752 = vmin.f32 %v2728, 6.0
    %v3753 = vmin.f32 %v2729, 6.0
    %v3754 = vmin.f32 %v2730, 6.0
    %v3755 = vmin.f32 %v2731, 6.0
    %v3756 = vmin.f32 %v2732, 6.0
    %v3757 = vmin.f32 %v2733, 6.0
    %v3758 = vmin.f32 %v2734, 6.0
    %v3759 = vmin.f32 %v2735, 6.0
    %v3760 = vmin.f32 %v2736, 6.0
    %v3761 = vmin.f32 %v2737, 6.0
    %v3762 = vmin.f32 %v2738, 6.0
    %v3763 = vmin.f32 %v2739, 6.0
    %v3764 = vmin.f32 %v2740, 6.0
    %v3765 = vmin.f32 %v2741, 6.0
    %v3766 = vmin.f32 %v2742, 6.0
    %v3767 = vmin.f32 %v2743, 6.0
    %v3768 = vmin.f32 %v2744, 6.0
    %v3769 = vmin.f32 %v2745, 6.0
    %v3770 = vmin.f32 %v2746, 6.0
    %v3771 = vmin.f32 %v2747, 6.0
    %v3772 = vmin.f32 %v2748, 6.0
    %v3773 = vmin.f32 %v2749, 6.0
    %v3774 = vmin.f32 %v2750, 6.0
    %v3775 = vmin.f32 %v2751, 6.0
    %v3776 = vmin.f32 %v2752, 6.0
    %v3777 = vmin.f32 %v2753, 6.0
    %v3778 = vmin.f32 %v2754, 6.0
    %v3779 = vmin.f32 %v2755, 6.0
    %v3780 = vmin.f32 %v2756, 6.0
    %v3781 = vmin.f32 %v2757, 6.0
    %v3782 = vmin.f32 %v2758, 6.0
    %v3783 = vmin.f32 %v2759, 6.0
    %v3784 = vmin.f32 %v2760, 6.0
    %v3785 = vmin.f32 %v2761, 6.0
    %v3786 = vmin.f32 %v2762, 6.0
    %v3787 = vmin.f32 %v2763, 6.0
    %v3788 = vmin.f32 %v2764, 6.0
    %v3789 = vmin.f32 %v2765, 6.0
    %v3790 = vmin.f32 %v2766, 6.0
    %v3791 = vmin.f32 %v2767, 6.0
    %v3792 = vmin.f32 %v2768, 6.0
    %v3793 = vmin.f32 %v2769, 6.0
    %v3794 = vmin.f32 %v2770, 6.0
    %v3795 = vmin.f32 %v2771, 6.0
    %v3796 = vmin.f32 %v2772, 6.0
    %v3797 = vmin.f32 %v2773, 6.0
    %v3798 = vmin.f32 %v2774, 6.0
    %v3799 = vmin.f32 %v2775, 6.0
    %v3800 = vmin.f32 %v2776, 6.0
    %v3801 = vmin.f32 %v2777, 6.0
    %v3802 = vmin.f32 %v2778, 6.0
    %v3803 = vmin.f32 %v2779, 6.0
    %v3804 = vmin.f32 %v2780, 6.0
    %v3805 = vmin.f32 %v2781, 6.0
    %v3806 = vmin.f32 %v2782, 6.0
    %v3807 = vmin.f32 %v2783, 6.0
    %v3808 = vmin.f32 %v2784, 6.0
    %v3809 = vmin.f32 %v2785, 6.0
    %v3810 = vmin.f32 %v2786, 6.0
    %v3811 = vmin.f32 %v2787, 6.0
    %v3812 = vmin.f32 %v2788, 6.0
    %v3813 = vmin.f32 %v2789, 6.0
    %v3814 = vmin.f32 %v2790, 6.0
    %v3815 = vmin.f32 %v2791, 6.0
    %v3816 = vmin.f32 %v2792, 6.0
    %v3817 = vmin.f32 %v2793, 6.0
    %v3818 = vmin.f32 %v2794, 6.0
    %v3819 = vmin.f32 %v2795, 6.0
    %v3820 = vmin.f32 %v2796, 6.0
    %v3821 = vmin.f32 %v2797, 6.0
    %v3822 = vmin.f32 %v2798, 6.0
    %v3823 = vmin.f32 %v2799, 6.0
    %v3824 = vmin.f32 %v2800, 6.0
    %v3825 = vmin.f32 %v2801, 6.0
    %v3826 = vmin.f32 %v2802, 6.0
    %v3827 = vmin.f32 %v2803, 6.0
    %v3828 = vmin.f32 %v2804, 6.0
    %v3829 = vmin.f32 %v2805, 6.0
    %v3830 = vmin.f32 %v2806, 6.0
    %v3831 = vmin.f32 %v2807, 6.0
    %v3832 = vmin.f32 %v2808, 6.0
    %v3833 = vmin.f32 %v2809, 6.0
    %v3834 = vmin.f32 %v2810, 6.0
    %v3835 = vmin.f32 %v2811, 6.0
    %v3836 = vmin.f32 %v2812, 6.0
    %v3837 = vmin.f32 %v2813, 6.0
    %v3838 = vmin.f32 %v2814, 6.0
    %v3839 = vmin.f32 %v2815, 6.0
    %v3840 = vmin.f32 %v2816, 6.0
    %v3841 = vmin.f32 %v2817, 6.0
    %v3842 = vmin.f32 %v2818, 6.0
    %v3843 = vmin.f32 %v2819, 6.0
    %v3844 = vmin.f32 %v2820, 6.0
    %v3845 = vmin.f32 %v2821, 6.0
    %v3846 = vmin.f32 %v2822, 6.0
    %v3847 = vmin.f32 %v2823, 6.0
    %v3848 = vmin.f32 %v2824, 6.0
    %v3849 = vmin.f32 %v2825, 6.0
    %v3850 = vmin.f32 %v2826, 6.0
    %v3851 = vmin.f32 %v2827, 6.0
    %v3852 = vmin.f32 %v2828, 6.0
    %v3853 = vmin.f32 %v2829, 6.0
    %v3854 = vmin.f32 %v2830, 6.0
    %v3855 = vmin.f32 %v2831, 6.0
    %v3856 = vmin.f32 %v2832, 6.0
    %v3857 = vmin.f32 %v2833, 6.0
    %v3858 = vmin.f32 %v2834, 6.0
    %v3859 = vmin.f32 %v2835, 6.0
    %v3860 = vmin.f32 %v2836, 6.0
    %v3861 = vmin.f32 %v2837, 6.0
    %v3862 = vmin.f32 %v2838, 6.0
    %v3863 = vmin.f32 %v2839, 6.0
    %v3864 = vmin.f32 %v2840, 6.0
    %v3865 = vmin.f32 %v2841, 6.0
    %v3866 = vmin.f32 %v2842, 6.0
    %v3867 = vmin.f32 %v2843, 6.0
    %v3868 = vmin.f32 %v2844, 6.0
    %v3869 = vmin.f32 %v2845, 6.0
    %v3870 = vmin.f32 %v2846, 6.0
    %v3871 = vmin.f32 %v2847, 6.0
    %v3872 = vmin.f32 %v2848, 6.0
    %v3873 = vmin.f32 %v2849, 6.0
    %v3874 = vmin.f32 %v2850, 6.0
    %v3875 = vmin.f32 %v2851, 6.0
    %v3876 = vmin.f32 %v2852, 6.0
    %v3877 = vmin.f32 %v2853, 6.0
    %v3878 = vmin.f32 %v2854, 6.0
    %v3879 = vmin.f32 %v2855, 6.0
    %v3880 = vmin.f32 %v2856, 6.0
    %v3881 = vmin.f32 %v2857, 6.0
    %v3882 = vmin.f32 %v2858, 6.0
    %v3883 = vmin.f32 %v2859, 6.0
    %v3884 = vmin.f32 %v2860, 6.0
    %v3885 = vmin.f32 %v2861, 6.0
    %v3886 = vmin.f32 %v2862, 6.0
    %v3887 = vmin.f32 %v2863, 6.0
    %v3888 = vmin.f32 %v2864, 6.0
    %v3889 = vmin.f32 %v2865, 6.0
    %v3890 = vmin.f32 %v2866, 6.0
    %v3891 = vmin.f32 %v2867, 6.0
    %v3892 = vmin.f32 %v2868, 6.0
    %v3893 = vmin.f32 %v2869, 6.0
    %v3894 = vmin.f32 %v2870, 6.0
    %v3895 = vmin.f32 %v2871, 6.0
    %v3896 = vmin.f32 %v2872, 6.0
    %v3897 = vmin.f32 %v2873, 6.0
    %v3898 = vmin.f32 %v2874, 6.0
    %v3899 = vmin.f32 %v2875, 6.0
    %v3900 = vmin.f32 %v2876, 6.0
    %v3901 = vmin.f32 %v2877, 6.0
    %v3902 = vmin.f32 %v2878, 6.0
    %v3903 = vmin.f32 %v2879, 6.0
    %v3904 = vmin.f32 %v2880, 6.0
    %v3905 = vmin.f32 %v2881, 6.0
    %v3906 = vmin.f32 %v2882, 6.0
    %v3907 = vmin.f32 %v2883, 6.0
    %v3908 = vmin.f32 %v2884, 6.0
    %v3909 = vmin.f32 %v2885, 6.0
    %v3910 = vmin.f32 %v2886, 6.0
    %v3911 = vmin.f32 %v2887, 6.0
    %v3912 = vmin.f32 %v2888, 6.0
    %v3913 = vmin.f32 %v2889, 6.0
    %v3914 = vmin.f32 %v2890, 6.0
    %v3915 = vmin.f32 %v2891, 6.0
    %v3916 = vmin.f32 %v2892, 6.0
    %v3917 = vmin.f32 %v2893, 6.0
    %v3918 = vmin.f32 %v2894, 6.0
    %v3919 = vmin.f32 %v2895, 6.0
    %v3920 = vmin.f32 %v2896, 6.0
    %v3921 = vmin.f32 %v2897, 6.0
    %v3922 = vmin.f32 %v2898, 6.0
    %v3923 = vmin.f32 %v2899, 6.0
    %v3924 = vmin.f32 %v2900, 6.0
    %v3925 = vmin.f32 %v2901, 6.0
    %v3926 = vmin.f32 %v2902, 6.0
    %v3927 = vmin.f32 %v2903, 6.0
    %v3928 = vmin.f32 %v2904, 6.0
    %v3929 = vmin.f32 %v2905, 6.0
    %v3930 = vmin.f32 %v2906, 6.0
    %v3931 = vmin.f32 %v2907, 6.0
    %v3932 = vmin.f32 %v2908, 6.0
    %v3933 = vmin.f32 %v2909, 6.0
    %v3934 = vmin.f32 %v2910, 6.0
    %v3935 = vmin.f32 %v2911, 6.0
    %v3936 = vmin.f32 %v2912, 6.0
    %v3937 = vmin.f32 %v2913, 6.0
    %v3938 = vmin.f32 %v2914, 6.0
    %v3939 = vmin.f32 %v2915, 6.0
    %v3940 = vmin.f32 %v2916, 6.0
    %v3941 = vmin.f32 %v2917, 6.0
    %v3942 = vmin.f32 %v2918, 6.0
    %v3943 = vmin.f32 %v2919, 6.0
    %v3944 = vmin.f32 %v2920, 6.0
    %v3945 = vmin.f32 %v2921, 6.0
    %v3946 = vmin.f32 %v2922, 6.0
    %v3947 = vmin.f32 %v2923, 6.0
    %v3948 = vmin.f32 %v2924, 6.0
    %v3949 = vmin.f32 %v2925, 6.0
    %v3950 = vmin.f32 %v2926, 6.0
    %v3951 = vmin.f32 %v2927, 6.0
    %v3952 = vmin.f32 %v2928, 6.0
    %v3953 = vmin.f32 %v2929, 6.0
    %v3954 = vmin.f32 %v2930, 6.0
    %v3955 = vmin.f32 %v2931, 6.0
    %v3956 = vmin.f32 %v2932, 6.0
    %v3957 = vmin.f32 %v2933, 6.0
    %v3958 = vmin.f32 %v2934, 6.0
    %v3959 = vmin.f32 %v2935, 6.0
    %v3960 = vmin.f32 %v2936, 6.0
    %v3961 = vmin.f32 %v2937, 6.0
    %v3962 = vmin.f32 %v2938, 6.0
    %v3963 = vmin.f32 %v2939, 6.0
    %v3964 = vmin.f32 %v2940, 6.0
    %v3965 = vmin.f32 %v2941, 6.0
    %v3966 = vmin.f32 %v2942, 6.0
    %v3967 = vmin.f32 %v2943, 6.0
    %v3968 = vmin.f32 %v2944, 6.0
    %v3969 = vmin.f32 %v2945, 6.0
    %v3970 = vmin.f32 %v2946, 6.0
    %v3971 = vmin.f32 %v2947, 6.0
    %v3972 = vmin.f32 %v2948, 6.0
    %v3973 = vmin.f32 %v2949, 6.0
    %v3974 = vmin.f32 %v2950, 6.0
    %v3975 = vmin.f32 %v2951, 6.0
    %v3976 = vmin.f32 %v2952, 6.0
    %v3977 = vmin.f32 %v2953, 6.0
    %v3978 = vmin.f32 %v2954, 6.0
    %v3979 = vmin.f32 %v2955, 6.0
    %v3980 = vmin.f32 %v2956, 6.0
    %v3981 = vmin.f32 %v2957, 6.0
    %v3982 = vmin.f32 %v2958, 6.0
    %v3983 = vmin.f32 %v2959, 6.0
    %v3984 = vmin.f32 %v2960, 6.0
    %v3985 = vmin.f32 %v2961, 6.0
    %v3986 = vmin.f32 %v2962, 6.0
    %v3987 = vmin.f32 %v2963, 6.0
    %v3988 = vmin.f32 %v2964, 6.0
    %v3989 = vmin.f32 %v2965, 6.0
    %v3990 = vmin.f32 %v2966, 6.0
    %v3991 = vmin.f32 %v2967, 6.0
    %v3992 = vmin.f32 %v2968, 6.0
    %v3993 = vmin.f32 %v2969, 6.0
    %v3994 = vmin.f32 %v2970, 6.0
    %v3995 = vmin.f32 %v2971, 6.0
    %v3996 = vmin.f32 %v2972, 6.0
    %v3997 = vmin.f32 %v2973, 6.0
    %v3998 = vmin.f32 %v2974, 6.0
    %v3999 = vmin.f32 %v2975, 6.0
    %v4000 = vmin.f32 %v2976, 6.0
    %v4001 = vmin.f32 %v2977, 6.0
    %v4002 = vmin.f32 %v2978, 6.0
    %v4003 = vmin.f32 %v2979, 6.0
    %v4004 = vmin.f32 %v2980, 6.0
    %v4005 = vmin.f32 %v2981, 6.0
    %v4006 = vmin.f32 %v2982, 6.0
    %v4007 = vmin.f32 %v2983, 6.0
    %v4008 = vmin.f32 %v2984, 6.0
    %v4009 = vmin.f32 %v2985, 6.0
    %v4010 = vmin.f32 %v2986, 6.0
    %v4011 = vmin.f32 %v2987, 6.0
    %v4012 = vmin.f32 %v2988, 6.0
    %v4013 = vmin.f32 %v2989, 6.0
    %v4014 = vmin.f32 %v2990, 6.0
    %v4015 = vmin.f32 %v2991, 6.0
    %v4016 = vmin.f32 %v2992, 6.0
    %v4017 = vmin.f32 %v2993, 6.0
    %v4018 = vmin.f32 %v2994, 6.0
    %v4019 = vmin.f32 %v2995, 6.0
    %v4020 = vmin.f32 %v2996, 6.0
    %v4021 = vmin.f32 %v2997, 6.0
    %v4022 = vmin.f32 %v2998, 6.0
    %v4023 = vmin.f32 %v2999, 6.0
    %v4024 = vmin.f32 %v3000, 6.0
    %v4025 = vmin.f32 %v3001, 6.0
    %v4026 = vmin.f32 %v3002, 6.0
    %v4027 = vmin.f32 %v3003, 6.0
    %v4028 = vmin.f32 %v3004, 6.0
    %v4029 = vmin.f32 %v3005, 6.0
    %v4030 = vmin.f32 %v3006, 6.0
    %v4031 = vmin.f32 %v3007, 6.0
    %v4032 = vmin.f32 %v3008, 6.0
    %v4033 = vmin.f32 %v3009, 6.0
    %v4034 = vmin.f32 %v3010, 6.0
    %v4035 = vmin.f32 %v3011, 6.0
    %v4036 = vmin.f32 %v3012, 6.0
    %v4037 = vmin.f32 %v3013, 6.0
    %v4038 = vmin.f32 %v3014, 6.0
    %v4039 = vmin.f32 %v3015, 6.0
    %v4040 = vmin.f32 %v3016, 6.0
    %v4041 = vmin.f32 %v3017, 6.0
    %v4042 = vmin.f32 %v3018, 6.0
    %v4043 = vmin.f32 %v3019, 6.0
    %v4044 = vmin.f32 %v3020, 6.0
    %v4045 = vmin.f32 %v3021, 6.0
    %v4046 = vmin.f32 %v3022, 6.0
    %v4047 = vmin.f32 %v3023, 6.0
    %v4048 = vmin.f32 %v3024, 6.0
    %v4049 = vmin.f32 %v3025, 6.0
    %v4050 = vmin.f32 %v3026, 6.0
    %v4051 = vmin.f32 %v3027, 6.0
    %v4052 = vmin.f32 %v3028, 6.0
    %v4053 = vmin.f32 %v3029, 6.0
    %v4054 = vmin.f32 %v3030, 6.0
    %v4055 = vmin.f32 %v3031, 6.0
    %v4056 = vmin.f32 %v3032, 6.0
    %v4057 = vmin.f32 %v3033, 6.0
    %v4058 = vmin.f32 %v3034, 6.0
    %v4059 = vmin.f32 %v3035, 6.0
    %v4060 = vmin.f32 %v3036, 6.0
    %v4061 = vmin.f32 %v3037, 6.0
    %v4062 = vmin.f32 %v3038, 6.0
    %v4063 = vmin.f32 %v3039, 6.0
    %v4064 = vmin.f32 %v3040, 6.0
    %v4065 = vmin.f32 %v3041, 6.0
    %v4066 = vmin.f32 %v3042, 6.0
    %v4067 = vmin.f32 %v3043, 6.0
    %v4068 = vmin.f32 %v3044, 6.0
    %v4069 = vmin.f32 %v3045, 6.0
    %v4070 = vmin.f32 %v3046, 6.0
    %v4071 = vmin.f32 %v3047, 6.0
    %v4072 = vmin.f32 %v3048, 6.0
    %v4073 = vmin.f32 %v3049, 6.0
    %v4074 = vmin.f32 %v3050, 6.0
    %v4075 = vmin.f32 %v3051, 6.0
    %v4076 = vmin.f32 %v3052, 6.0
    %v4077 = vmin.f32 %v3053, 6.0
    %v4078 = vmin.f32 %v3054, 6.0
    %v4079 = vmin.f32 %v3055, 6.0
    %v4080 = vmin.f32 %v3056, 6.0
    %v4081 = vmin.f32 %v3057, 6.0
    %v4082 = vmin.f32 %v3058, 6.0
    %v4083 = vmin.f32 %v3059, 6.0
    %v4084 = vmin.f32 %v3060, 6.0
    %v4085 = vmin.f32 %v3061, 6.0
    %v4086 = vmin.f32 %v3062, 6.0
    %v4087 = vmin.f32 %v3063, 6.0
    %v4088 = vmin.f32 %v3064, 6.0
    %v4089 = vmin.f32 %v3065, 6.0
    %v4090 = vmin.f32 %v3066, 6.0
    %v4091 = vmin.f32 %v3067, 6.0
    %v4092 = vmin.f32 %v3068, 6.0
    %v4093 = vmin.f32 %v3069, 6.0
    %v4094 = vmin.f32 %v3070, 6.0
    %v4095 = vmin.f32 %v3071, 6.0
    %v4096 = vmin.f32 %v3072, 6.0
    %v4097 = vmin.f32 %v3073, 6.0
    %v4098 = vmin.f32 %v3074, 6.0
    %v4099 = vmin.f32 %v3075, 6.0
    %v4100 = vmin.f32 %v3076, 6.0
    %v4101 = vmin.f32 %v3077, 6.0
    %v4102 = vmin.f32 %v3078, 6.0
    %v4103 = vmin.f32 %v3079, 6.0
    %v4104 = vmin.f32 %v3080, 6.0
    %v4105 = vmin.f32 %v3081, 6.0
    %v4106 = vmin.f32 %v3082, 6.0
    %v4107 = vmin.f32 %v3083, 6.0
    %v4108 = vmin.f32 %v3084, 6.0
    %v4109 = vmin.f32 %v3085, 6.0
    %v4110 = vmin.f32 %v3086, 6.0
    %v4111 = vmin.f32 %v3087, 6.0
    %v4112 = vmin.f32 %v3088, 6.0
    %v4113 = vmin.f32 %v3089, 6.0
    %v4114 = vmin.f32 %v3090, 6.0
    %v4115 = vmin.f32 %v3091, 6.0
    %v4116 = vmin.f32 %v3092, 6.0
    %v4117 = vmin.f32 %v3093, 6.0
    %v4118 = vmin.f32 %v3094, 6.0
    %v4119 = vmul.f32 %v3095, 0.16666667
    %v4120 = vmul.f32 %v3096, 0.16666667
    %v4121 = vmul.f32 %v3097, 0.16666667
    %v4122 = vmul.f32 %v3098, 0.16666667
    %v4123 = vmul.f32 %v3099, 0.16666667
    %v4124 = vmul.f32 %v3100, 0.16666667
    %v4125 = vmul.f32 %v3101, 0.16666667
    %v4126 = vmul.f32 %v3102, 0.16666667
    %v4127 = vmul.f32 %v3103, 0.16666667
    %v4128 = vmul.f32 %v3104, 0.16666667
    %v4129 = vmul.f32 %v3105, 0.16666667
    %v4130 = vmul.f32 %v3106, 0.16666667
    %v4131 = vmul.f32 %v3107, 0.16666667
    %v4132 = vmul.f32 %v3108, 0.16666667
    %v4133 = vmul.f32 %v3109, 0.16666667
    %v4134 = vmul.f32 %v3110, 0.16666667
    %v4135 = vmul.f32 %v3111, 0.16666667
    %v4136 = vmul.f32 %v3112, 0.16666667
    %v4137 = vmul.f32 %v3113, 0.16666667
    %v4138 = vmul.f32 %v3114, 0.16666667
    %v4139 = vmul.f32 %v3115, 0.16666667
    %v4140 = vmul.f32 %v3116, 0.16666667
    %v4141 = vmul.f32 %v3117, 0.16666667
    %v4142 = vmul.f32 %v3118, 0.16666667
    %v4143 = vmul.f32 %v3119, 0.16666667
    %v4144 = vmul.f32 %v3120, 0.16666667
    %v4145 = vmul.f32 %v3121, 0.16666667
    %v4146 = vmul.f32 %v3122, 0.16666667
    %v4147 = vmul.f32 %v3123, 0.16666667
    %v4148 = vmul.f32 %v3124, 0.16666667
    %v4149 = vmul.f32 %v3125, 0.16666667
    %v4150 = vmul.f32 %v3126, 0.16666667
    %v4151 = vmul.f32 %v3127, 0.16666667
    %v4152 = vmul.f32 %v3128, 0.16666667
    %v4153 = vmul.f32 %v3129, 0.16666667
    %v4154 = vmul.f32 %v3130, 0.16666667
    %v4155 = vmul.f32 %v3131, 0.16666667
    %v4156 = vmul.f32 %v3132, 0.16666667
    %v4157 = vmul.f32 %v3133, 0.16666667
    %v4158 = vmul.f32 %v3134, 0.16666667
    %v4159 = vmul.f32 %v3135, 0.16666667
    %v4160 = vmul.f32 %v3136, 0.16666667
    %v4161 = vmul.f32 %v3137, 0.16666667
    %v4162 = vmul.f32 %v3138, 0.16666667
    %v4163 = vmul.f32 %v3139, 0.16666667
    %v4164 = vmul.f32 %v3140, 0.16666667
    %v4165 = vmul.f32 %v3141, 0.16666667
    %v4166 = vmul.f32 %v3142, 0.16666667
    %v4167 = vmul.f32 %v3143, 0.16666667
    %v4168 = vmul.f32 %v3144, 0.16666667
    %v4169 = vmul.f32 %v3145, 0.16666667
    %v4170 = vmul.f32 %v3146, 0.16666667
    %v4171 = vmul.f32 %v3147, 0.16666667
    %v4172 = vmul.f32 %v3148, 0.16666667
    %v4173 = vmul.f32 %v3149, 0.16666667
    %v4174 = vmul.f32 %v3150, 0.16666667
    %v4175 = vmul.f32 %v3151, 0.16666667
    %v4176 = vmul.f32 %v3152, 0.16666667
    %v4177 = vmul.f32 %v3153, 0.16666667
    %v4178 = vmul.f32 %v3154, 0.16666667
    %v4179 = vmul.f32 %v3155, 0.16666667
    %v4180 = vmul.f32 %v3156, 0.16666667
    %v4181 = vmul.f32 %v3157, 0.16666667
    %v4182 = vmul.f32 %v3158, 0.16666667
    %v4183 = vmul.f32 %v3159, 0.16666667
    %v4184 = vmul.f32 %v3160, 0.16666667
    %v4185 = vmul.f32 %v3161, 0.16666667
    %v4186 = vmul.f32 %v3162, 0.16666667
    %v4187 = vmul.f32 %v3163, 0.16666667
    %v4188 = vmul.f32 %v3164, 0.16666667
    %v4189 = vmul.f32 %v3165, 0.16666667
    %v4190 = vmul.f32 %v3166, 0.16666667
    %v4191 = vmul.f32 %v3167, 0.16666667
    %v4192 = vmul.f32 %v3168, 0.16666667
    %v4193 = vmul.f32 %v3169, 0.16666667
    %v4194 = vmul.f32 %v3170, 0.16666667
    %v4195 = vmul.f32 %v3171, 0.16666667
    %v4196 = vmul.f32 %v3172, 0.16666667
    %v4197 = vmul.f32 %v3173, 0.16666667
    %v4198 = vmul.f32 %v3174, 0.16666667
    %v4199 = vmul.f32 %v3175, 0.16666667
    %v4200 = vmul.f32 %v3176, 0.16666667
    %v4201 = vmul.f32 %v3177, 0.16666667
    %v4202 = vmul.f32 %v3178, 0.16666667
    %v4203 = vmul.f32 %v3179, 0.16666667
    %v4204 = vmul.f32 %v3180, 0.16666667
    %v4205 = vmul.f32 %v3181, 0.16666667
    %v4206 = vmul.f32 %v3182, 0.16666667
    %v4207 = vmul.f32 %v3183, 0.16666667
    %v4208 = vmul.f32 %v3184, 0.16666667
    %v4209 = vmul.f32 %v3185, 0.16666667
    %v4210 = vmul.f32 %v3186, 0.16666667
    %v4211 = vmul.f32 %v3187, 0.16666667
    %v4212 = vmul.f32 %v3188, 0.16666667
    %v4213 = vmul.f32 %v3189, 0.16666667
    %v4214 = vmul.f32 %v3190, 0.16666667
    %v4215 = vmul.f32 %v3191, 0.16666667
    %v4216 = vmul.f32 %v3192, 0.16666667
    %v4217 = vmul.f32 %v3193, 0.16666667
    %v4218 = vmul.f32 %v3194, 0.16666667
    %v4219 = vmul.f32 %v3195, 0.16666667
    %v4220 = vmul.f32 %v3196, 0.16666667
    %v4221 = vmul.f32 %v3197, 0.16666667
    %v4222 = vmul.f32 %v3198, 0.16666667
    %v4223 = vmul.f32 %v3199, 0.16666667
    %v4224 = vmul.f32 %v3200, 0.16666667
    %v4225 = vmul.f32 %v3201, 0.16666667
    %v4226 = vmul.f32 %v3202, 0.16666667
    %v4227 = vmul.f32 %v3203, 0.16666667
    %v4228 = vmul.f32 %v3204, 0.16666667
    %v4229 = vmul.f32 %v3205, 0.16666667
    %v4230 = vmul.f32 %v3206, 0.16666667
    %v4231 = vmul.f32 %v3207, 0.16666667
    %v4232 = vmul.f32 %v3208, 0.16666667
    %v4233 = vmul.f32 %v3209, 0.16666667
    %v4234 = vmul.f32 %v3210, 0.16666667
    %v4235 = vmul.f32 %v3211, 0.16666667
    %v4236 = vmul.f32 %v3212, 0.16666667
    %v4237 = vmul.f32 %v3213, 0.16666667
    %v4238 = vmul.f32 %v3214, 0.16666667
    %v4239 = vmul.f32 %v3215, 0.16666667
    %v4240 = vmul.f32 %v3216, 0.16666667
    %v4241 = vmul.f32 %v3217, 0.16666667
    %v4242 = vmul.f32 %v3218, 0.16666667
    %v4243 = vmul.f32 %v3219, 0.16666667
    %v4244 = vmul.f32 %v3220, 0.16666667
    %v4245 = vmul.f32 %v3221, 0.16666667
    %v4246 = vmul.f32 %v3222, 0.16666667
    %v4247 = vmul.f32 %v3223, 0.16666667
    %v4248 = vmul.f32 %v3224, 0.16666667
    %v4249 = vmul.f32 %v3225, 0.16666667
    %v4250 = vmul.f32 %v3226, 0.16666667
    %v4251 = vmul.f32 %v3227, 0.16666667
    %v4252 = vmul.f32 %v3228, 0.16666667
    %v4253 = vmul.f32 %v3229, 0.16666667
    %v4254 = vmul.f32 %v3230, 0.16666667
    %v4255 = vmul.f32 %v3231, 0.16666667
    %v4256 = vmul.f32 %v3232, 0.16666667
    %v4257 = vmul.f32 %v3233, 0.16666667
    %v4258 = vmul.f32 %v3234, 0.16666667
    %v4259 = vmul.f32 %v3235, 0.16666667
    %v4260 = vmul.f32 %v3236, 0.16666667
    %v4261 = vmul.f32 %v3237, 0.16666667
    %v4262 = vmul.f32 %v3238, 0.16666667
    %v4263 = vmul.f32 %v3239, 0.16666667
    %v4264 = vmul.f32 %v3240, 0.16666667
    %v4265 = vmul.f32 %v3241, 0.16666667
    %v4266 = vmul.f32 %v3242, 0.16666667
    %v4267 = vmul.f32 %v3243, 0.16666667
    %v4268 = vmul.f32 %v3244, 0.16666667
    %v4269 = vmul.f32 %v3245, 0.16666667
    %v4270 = vmul.f32 %v3246, 0.16666667
    %v4271 = vmul.f32 %v3247, 0.16666667
    %v4272 = vmul.f32 %v3248, 0.16666667
    %v4273 = vmul.f32 %v3249, 0.16666667
    %v4274 = vmul.f32 %v3250, 0.16666667
    %v4275 = vmul.f32 %v3251, 0.16666667
    %v4276 = vmul.f32 %v3252, 0.16666667
    %v4277 = vmul.f32 %v3253, 0.16666667
    %v4278 = vmul.f32 %v3254, 0.16666667
    %v4279 = vmul.f32 %v3255, 0.16666667
    %v4280 = vmul.f32 %v3256, 0.16666667
    %v4281 = vmul.f32 %v3257, 0.16666667
    %v4282 = vmul.f32 %v3258, 0.16666667
    %v4283 = vmul.f32 %v3259, 0.16666667
    %v4284 = vmul.f32 %v3260, 0.16666667
    %v4285 = vmul.f32 %v3261, 0.16666667
    %v4286 = vmul.f32 %v3262, 0.16666667
    %v4287 = vmul.f32 %v3263, 0.16666667
    %v4288 = vmul.f32 %v3264, 0.16666667
    %v4289 = vmul.f32 %v3265, 0.16666667
    %v4290 = vmul.f32 %v3266, 0.16666667
    %v4291 = vmul.f32 %v3267, 0.16666667
    %v4292 = vmul.f32 %v3268, 0.16666667
    %v4293 = vmul.f32 %v3269, 0.16666667
    %v4294 = vmul.f32 %v3270, 0.16666667
    %v4295 = vmul.f32 %v3271, 0.16666667
    %v4296 = vmul.f32 %v3272, 0.16666667
    %v4297 = vmul.f32 %v3273, 0.16666667
    %v4298 = vmul.f32 %v3274, 0.16666667
    %v4299 = vmul.f32 %v3275, 0.16666667
    %v4300 = vmul.f32 %v3276, 0.16666667
    %v4301 = vmul.f32 %v3277, 0.16666667
    %v4302 = vmul.f32 %v3278, 0.16666667
    %v4303 = vmul.f32 %v3279, 0.16666667
    %v4304 = vmul.f32 %v3280, 0.16666667
    %v4305 = vmul.f32 %v3281, 0.16666667
    %v4306 = vmul.f32 %v3282, 0.16666667
    %v4307 = vmul.f32 %v3283, 0.16666667
    %v4308 = vmul.f32 %v3284, 0.16666667
    %v4309 = vmul.f32 %v3285, 0.16666667
    %v4310 = vmul.f32 %v3286, 0.16666667
    %v4311 = vmul.f32 %v3287, 0.16666667
    %v4312 = vmul.f32 %v3288, 0.16666667
    %v4313 = vmul.f32 %v3289, 0.16666667
    %v4314 = vmul.f32 %v3290, 0.16666667
    %v4315 = vmul.f32 %v3291, 0.16666667
    %v4316 = vmul.f32 %v3292, 0.16666667
    %v4317 = vmul.f32 %v3293, 0.16666667
    %v4318 = vmul.f32 %v3294, 0.16666667
    %v4319 = vmul.f32 %v3295, 0.16666667
    %v4320 = vmul.f32 %v3296, 0.16666667
    %v4321 = vmul.f32 %v3297, 0.16666667
    %v4322 = vmul.f32 %v3298, 0.16666667
    %v4323 = vmul.f32 %v3299, 0.16666667
    %v4324 = vmul.f32 %v3300, 0.16666667
    %v4325 = vmul.f32 %v3301, 0.16666667
    %v4326 = vmul.f32 %v3302, 0.16666667
    %v4327 = vmul.f32 %v3303, 0.16666667
    %v4328 = vmul.f32 %v3304, 0.16666667
    %v4329 = vmul.f32 %v3305, 0.16666667
    %v4330 = vmul.f32 %v3306, 0.16666667
    %v4331 = vmul.f32 %v3307, 0.16666667
    %v4332 = vmul.f32 %v3308, 0.16666667
    %v4333 = vmul.f32 %v3309, 0.16666667
    %v4334 = vmul.f32 %v3310, 0.16666667
    %v4335 = vmul.f32 %v3311, 0.16666667
    %v4336 = vmul.f32 %v3312, 0.16666667
    %v4337 = vmul.f32 %v3313, 0.16666667
    %v4338 = vmul.f32 %v3314, 0.16666667
    %v4339 = vmul.f32 %v3315, 0.16666667
    %v4340 = vmul.f32 %v3316, 0.16666667
    %v4341 = vmul.f32 %v3317, 0.16666667
    %v4342 = vmul.f32 %v3318, 0.16666667
    %v4343 = vmul.f32 %v3319, 0.16666667
    %v4344 = vmul.f32 %v3320, 0.16666667
    %v4345 = vmul.f32 %v3321, 0.16666667
    %v4346 = vmul.f32 %v3322, 0.16666667
    %v4347 = vmul.f32 %v3323, 0.16666667
    %v4348 = vmul.f32 %v3324, 0.16666667
    %v4349 = vmul.f32 %v3325, 0.16666667
    %v4350 = vmul.f32 %v3326, 0.16666667
    %v4351 = vmul.f32 %v3327, 0.16666667
    %v4352 = vmul.f32 %v3328, 0.16666667
    %v4353 = vmul.f32 %v3329, 0.16666667
    %v4354 = vmul.f32 %v3330, 0.16666667
    %v4355 = vmul.f32 %v3331, 0.16666667
    %v4356 = vmul.f32 %v3332, 0.16666667
    %v4357 = vmul.f32 %v3333, 0.16666667
    %v4358 = vmul.f32 %v3334, 0.16666667
    %v4359 = vmul.f32 %v3335, 0.16666667
    %v4360 = vmul.f32 %v3336, 0.16666667
    %v4361 = vmul.f32 %v3337, 0.16666667
    %v4362 = vmul.f32 %v3338, 0.16666667
    %v4363 = vmul.f32 %v3339, 0.16666667
    %v4364 = vmul.f32 %v3340, 0.16666667
    %v4365 = vmul.f32 %v3341, 0.16666667
    %v4366 = vmul.f32 %v3342, 0.16666667
    %v4367 = vmul.f32 %v3343, 0.16666667
    %v4368 = vmul.f32 %v3344, 0.16666667
    %v4369 = vmul.f32 %v3345, 0.16666667
    %v4370 = vmul.f32 %v3346, 0.16666667
    %v4371 = vmul.f32 %v3347, 0.16666667
    %v4372 = vmul.f32 %v3348, 0.16666667
    %v4373 = vmul.f32 %v3349, 0.16666667
    %v4374 = vmul.f32 %v3350, 0.16666667
    %v4375 = vmul.f32 %v3351, 0.16666667
    %v4376 = vmul.f32 %v3352, 0.16666667
    %v4377 = vmul.f32 %v3353, 0.16666667
    %v4378 = vmul.f32 %v3354, 0.16666667
    %v4379 = vmul.f32 %v3355, 0.16666667
    %v4380 = vmul.f32 %v3356, 0.16666667
    %v4381 = vmul.f32 %v3357, 0.16666667
    %v4382 = vmul.f32 %v3358, 0.16666667
    %v4383 = vmul.f32 %v3359, 0.16666667
    %v4384 = vmul.f32 %v3360, 0.16666667
    %v4385 = vmul.f32 %v3361, 0.16666667
    %v4386 = vmul.f32 %v3362, 0.16666667
    %v4387 = vmul.f32 %v3363, 0.16666667
    %v4388 = vmul.f32 %v3364, 0.16666667
    %v4389 = vmul.f32 %v3365, 0.16666667
    %v4390 = vmul.f32 %v3366, 0.16666667
    %v4391 = vmul.f32 %v3367, 0.16666667
    %v4392 = vmul.f32 %v3368, 0.16666667
    %v4393 = vmul.f32 %v3369, 0.16666667
    %v4394 = vmul.f32 %v3370, 0.16666667
    %v4395 = vmul.f32 %v3371, 0.16666667
    %v4396 = vmul.f32 %v3372, 0.16666667
    %v4397 = vmul.f32 %v3373, 0.16666667
    %v4398 = vmul.f32 %v3374, 0.16666667
    %v4399 = vmul.f32 %v3375, 0.16666667
    %v4400 = vmul.f32 %v3376, 0.16666667
    %v4401 = vmul.f32 %v3377, 0.16666667
    %v4402 = vmul.f32 %v3378, 0.16666667
    %v4403 = vmul.f32 %v3379, 0.16666667
    %v4404 = vmul.f32 %v3380, 0.16666667
    %v4405 = vmul.f32 %v3381, 0.16666667
    %v4406 = vmul.f32 %v3382, 0.16666667
    %v4407 = vmul.f32 %v3383, 0.16666667
    %v4408 = vmul.f32 %v3384, 0.16666667
    %v4409 = vmul.f32 %v3385, 0.16666667
    %v4410 = vmul.f32 %v3386, 0.16666667
    %v4411 = vmul.f32 %v3387, 0.16666667
    %v4412 = vmul.f32 %v3388, 0.16666667
    %v4413 = vmul.f32 %v3389, 0.16666667
    %v4414 = vmul.f32 %v3390, 0.16666667
    %v4415 = vmul.f32 %v3391, 0.16666667
    %v4416 = vmul.f32 %v3392, 0.16666667
    %v4417 = vmul.f32 %v3393, 0.16666667
    %v4418 = vmul.f32 %v3394, 0.16666667
    %v4419 = vmul.f32 %v3395, 0.16666667
    %v4420 = vmul.f32 %v3396, 0.16666667
    %v4421 = vmul.f32 %v3397, 0.16666667
    %v4422 = vmul.f32 %v3398, 0.16666667
    %v4423 = vmul.f32 %v3399, 0.16666667
    %v4424 = vmul.f32 %v3400, 0.16666667
    %v4425 = vmul.f32 %v3401, 0.16666667
    %v4426 = vmul.f32 %v3402, 0.16666667
    %v4427 = vmul.f32 %v3403, 0.16666667
    %v4428 = vmul.f32 %v3404, 0.16666667
    %v4429 = vmul.f32 %v3405, 0.16666667
    %v4430 = vmul.f32 %v3406, 0.16666667
    %v4431 = vmul.f32 %v3407, 0.16666667
    %v4432 = vmul.f32 %v3408, 0.16666667
    %v4433 = vmul.f32 %v3409, 0.16666667
    %v4434 = vmul.f32 %v3410, 0.16666667
    %v4435 = vmul.f32 %v3411, 0.16666667
    %v4436 = vmul.f32 %v3412, 0.16666667
    %v4437 = vmul.f32 %v3413, 0.16666667
    %v4438 = vmul.f32 %v3414, 0.16666667
    %v4439 = vmul.f32 %v3415, 0.16666667
    %v4440 = vmul.f32 %v3416, 0.16666667
    %v4441 = vmul.f32 %v3417, 0.16666667
    %v4442 = vmul.f32 %v3418, 0.16666667
    %v4443 = vmul.f32 %v3419, 0.16666667
    %v4444 = vmul.f32 %v3420, 0.16666667
    %v4445 = vmul.f32 %v3421, 0.16666667
    %v4446 = vmul.f32 %v3422, 0.16666667
    %v4447 = vmul.f32 %v3423, 0.16666667
    %v4448 = vmul.f32 %v3424, 0.16666667
    %v4449 = vmul.f32 %v3425, 0.16666667
    %v4450 = vmul.f32 %v3426, 0.16666667
    %v4451 = vmul.f32 %v3427, 0.16666667
    %v4452 = vmul.f32 %v3428, 0.16666667
    %v4453 = vmul.f32 %v3429, 0.16666667
    %v4454 = vmul.f32 %v3430, 0.16666667
    %v4455 = vmul.f32 %v3431, 0.16666667
    %v4456 = vmul.f32 %v3432, 0.16666667
    %v4457 = vmul.f32 %v3433, 0.16666667
    %v4458 = vmul.f32 %v3434, 0.16666667
    %v4459 = vmul.f32 %v3435, 0.16666667
    %v4460 = vmul.f32 %v3436, 0.16666667
    %v4461 = vmul.f32 %v3437, 0.16666667
    %v4462 = vmul.f32 %v3438, 0.16666667
    %v4463 = vmul.f32 %v3439, 0.16666667
    %v4464 = vmul.f32 %v3440, 0.16666667
    %v4465 = vmul.f32 %v3441, 0.16666667
    %v4466 = vmul.f32 %v3442, 0.16666667
    %v4467 = vmul.f32 %v3443, 0.16666667
    %v4468 = vmul.f32 %v3444, 0.16666667
    %v4469 = vmul.f32 %v3445, 0.16666667
    %v4470 = vmul.f32 %v3446, 0.16666667
    %v4471 = vmul.f32 %v3447, 0.16666667
    %v4472 = vmul.f32 %v3448, 0.16666667
    %v4473 = vmul.f32 %v3449, 0.16666667
    %v4474 = vmul.f32 %v3450, 0.16666667
    %v4475 = vmul.f32 %v3451, 0.16666667
    %v4476 = vmul.f32 %v3452, 0.16666667
    %v4477 = vmul.f32 %v3453, 0.16666667
    %v4478 = vmul.f32 %v3454, 0.16666667
    %v4479 = vmul.f32 %v3455, 0.16666667
    %v4480 = vmul.f32 %v3456, 0.16666667
    %v4481 = vmul.f32 %v3457, 0.16666667
    %v4482 = vmul.f32 %v3458, 0.16666667
    %v4483 = vmul.f32 %v3459, 0.16666667
    %v4484 = vmul.f32 %v3460, 0.16666667
    %v4485 = vmul.f32 %v3461, 0.16666667
    %v4486 = vmul.f32 %v3462, 0.16666667
    %v4487 = vmul.f32 %v3463, 0.16666667
    %v4488 = vmul.f32 %v3464, 0.16666667
    %v4489 = vmul.f32 %v3465, 0.16666667
    %v4490 = vmul.f32 %v3466, 0.16666667
    %v4491 = vmul.f32 %v3467, 0.16666667
    %v4492 = vmul.f32 %v3468, 0.16666667
    %v4493 = vmul.f32 %v3469, 0.16666667
    %v4494 = vmul.f32 %v3470, 0.16666667
    %v4495 = vmul.f32 %v3471, 0.16666667
    %v4496 = vmul.f32 %v3472, 0.16666667
    %v4497 = vmul.f32 %v3473, 0.16666667
    %v4498 = vmul.f32 %v3474, 0.16666667
    %v4499 = vmul.f32 %v3475, 0.16666667
    %v4500 = vmul.f32 %v3476, 0.16666667
    %v4501 = vmul.f32 %v3477, 0.16666667
    %v4502 = vmul.f32 %v3478, 0.16666667
    %v4503 = vmul.f32 %v3479, 0.16666667
    %v4504 = vmul.f32 %v3480, 0.16666667
    %v4505 = vmul.f32 %v3481, 0.16666667
    %v4506 = vmul.f32 %v3482, 0.16666667
    %v4507 = vmul.f32 %v3483, 0.16666667
    %v4508 = vmul.f32 %v3484, 0.16666667
    %v4509 = vmul.f32 %v3485, 0.16666667
    %v4510 = vmul.f32 %v3486, 0.16666667
    %v4511 = vmul.f32 %v3487, 0.16666667
    %v4512 = vmul.f32 %v3488, 0.16666667
    %v4513 = vmul.f32 %v3489, 0.16666667
    %v4514 = vmul.f32 %v3490, 0.16666667
    %v4515 = vmul.f32 %v3491, 0.16666667
    %v4516 = vmul.f32 %v3492, 0.16666667
    %v4517 = vmul.f32 %v3493, 0.16666667
    %v4518 = vmul.f32 %v3494, 0.16666667
    %v4519 = vmul.f32 %v3495, 0.16666667
    %v4520 = vmul.f32 %v3496, 0.16666667
    %v4521 = vmul.f32 %v3497, 0.16666667
    %v4522 = vmul.f32 %v3498, 0.16666667
    %v4523 = vmul.f32 %v3499, 0.16666667
    %v4524 = vmul.f32 %v3500, 0.16666667
    %v4525 = vmul.f32 %v3501, 0.16666667
    %v4526 = vmul.f32 %v3502, 0.16666667
    %v4527 = vmul.f32 %v3503, 0.16666667
    %v4528 = vmul.f32 %v3504, 0.16666667
    %v4529 = vmul.f32 %v3505, 0.16666667
    %v4530 = vmul.f32 %v3506, 0.16666667
    %v4531 = vmul.f32 %v3507, 0.16666667
    %v4532 = vmul.f32 %v3508, 0.16666667
    %v4533 = vmul.f32 %v3509, 0.16666667
    %v4534 = vmul.f32 %v3510, 0.16666667
    %v4535 = vmul.f32 %v3511, 0.16666667
    %v4536 = vmul.f32 %v3512, 0.16666667
    %v4537 = vmul.f32 %v3513, 0.16666667
    %v4538 = vmul.f32 %v3514, 0.16666667
    %v4539 = vmul.f32 %v3515, 0.16666667
    %v4540 = vmul.f32 %v3516, 0.16666667
    %v4541 = vmul.f32 %v3517, 0.16666667
    %v4542 = vmul.f32 %v3518, 0.16666667
    %v4543 = vmul.f32 %v3519, 0.16666667
    %v4544 = vmul.f32 %v3520, 0.16666667
    %v4545 = vmul.f32 %v3521, 0.16666667
    %v4546 = vmul.f32 %v3522, 0.16666667
    %v4547 = vmul.f32 %v3523, 0.16666667
    %v4548 = vmul.f32 %v3524, 0.16666667
    %v4549 = vmul.f32 %v3525, 0.16666667
    %v4550 = vmul.f32 %v3526, 0.16666667
    %v4551 = vmul.f32 %v3527, 0.16666667
    %v4552 = vmul.f32 %v3528, 0.16666667
    %v4553 = vmul.f32 %v3529, 0.16666667
    %v4554 = vmul.f32 %v3530, 0.16666667
    %v4555 = vmul.f32 %v3531, 0.16666667
    %v4556 = vmul.f32 %v3532, 0.16666667
    %v4557 = vmul.f32 %v3533, 0.16666667
    %v4558 = vmul.f32 %v3534, 0.16666667
    %v4559 = vmul.f32 %v3535, 0.16666667
    %v4560 = vmul.f32 %v3536, 0.16666667
    %v4561 = vmul.f32 %v3537, 0.16666667
    %v4562 = vmul.f32 %v3538, 0.16666667
    %v4563 = vmul.f32 %v3539, 0.16666667
    %v4564 = vmul.f32 %v3540, 0.16666667
    %v4565 = vmul.f32 %v3541, 0.16666667
    %v4566 = vmul.f32 %v3542, 0.16666667
    %v4567 = vmul.f32 %v3543, 0.16666667
    %v4568 = vmul.f32 %v3544, 0.16666667
    %v4569 = vmul.f32 %v3545, 0.16666667
    %v4570 = vmul.f32 %v3546, 0.16666667
    %v4571 = vmul.f32 %v3547, 0.16666667
    %v4572 = vmul.f32 %v3548, 0.16666667
    %v4573 = vmul.f32 %v3549, 0.16666667
    %v4574 = vmul.f32 %v3550, 0.16666667
    %v4575 = vmul.f32 %v3551, 0.16666667
    %v4576 = vmul.f32 %v3552, 0.16666667
    %v4577 = vmul.f32 %v3553, 0.16666667
    %v4578 = vmul.f32 %v3554, 0.16666667
    %v4579 = vmul.f32 %v3555, 0.16666667
    %v4580 = vmul.f32 %v3556, 0.16666667
    %v4581 = vmul.f32 %v3557, 0.16666667
    %v4582 = vmul.f32 %v3558, 0.16666667
    %v4583 = vmul.f32 %v3559, 0.16666667
    %v4584 = vmul.f32 %v3560, 0.16666667
    %v4585 = vmul.f32 %v3561, 0.16666667
    %v4586 = vmul.f32 %v3562, 0.16666667
    %v4587 = vmul.f32 %v3563, 0.16666667
    %v4588 = vmul.f32 %v3564, 0.16666667
    %v4589 = vmul.f32 %v3565, 0.16666667
    %v4590 = vmul.f32 %v3566, 0.16666667
    %v4591 = vmul.f32 %v3567, 0.16666667
    %v4592 = vmul.f32 %v3568, 0.16666667
    %v4593 = vmul.f32 %v3569, 0.16666667
    %v4594 = vmul.f32 %v3570, 0.16666667
    %v4595 = vmul.f32 %v3571, 0.16666667
    %v4596 = vmul.f32 %v3572, 0.16666667
    %v4597 = vmul.f32 %v3573, 0.16666667
    %v4598 = vmul.f32 %v3574, 0.16666667
    %v4599 = vmul.f32 %v3575, 0.16666667
    %v4600 = vmul.f32 %v3576, 0.16666667
    %v4601 = vmul.f32 %v3577, 0.16666667
    %v4602 = vmul.f32 %v3578, 0.16666667
    %v4603 = vmul.f32 %v3579, 0.16666667
    %v4604 = vmul.f32 %v3580, 0.16666667
    %v4605 = vmul.f32 %v3581, 0.16666667
    %v4606 = vmul.f32 %v3582, 0.16666667
    %v4607 = vmul.f32 %v3583, 0.16666667
    %v4608 = vmul.f32 %v3584, 0.16666667
    %v4609 = vmul.f32 %v3585, 0.16666667
    %v4610 = vmul.f32 %v3586, 0.16666667
    %v4611 = vmul.f32 %v3587, 0.16666667
    %v4612 = vmul.f32 %v3588, 0.16666667
    %v4613 = vmul.f32 %v3589, 0.16666667
    %v4614 = vmul.f32 %v3590, 0.16666667
    %v4615 = vmul.f32 %v3591, 0.16666667
    %v4616 = vmul.f32 %v3592, 0.16666667
    %v4617 = vmul.f32 %v3593, 0.16666667
    %v4618 = vmul.f32 %v3594, 0.16666667
    %v4619 = vmul.f32 %v3595, 0.16666667
    %v4620 = vmul.f32 %v3596, 0.16666667
    %v4621 = vmul.f32 %v3597, 0.16666667
    %v4622 = vmul.f32 %v3598, 0.16666667
    %v4623 = vmul.f32 %v3599, 0.16666667
    %v4624 = vmul.f32 %v3600, 0.16666667
    %v4625 = vmul.f32 %v3601, 0.16666667
    %v4626 = vmul.f32 %v3602, 0.16666667
    %v4627 = vmul.f32 %v3603, 0.16666667
    %v4628 = vmul.f32 %v3604, 0.16666667
    %v4629 = vmul.f32 %v3605, 0.16666667
    %v4630 = vmul.f32 %v3606, 0.16666667
    %v4631 = vmul.f32 %v3607, 0.16666667
    %v4632 = vmul.f32 %v3608, 0.16666667
    %v4633 = vmul.f32 %v3609, 0.16666667
    %v4634 = vmul.f32 %v3610, 0.16666667
    %v4635 = vmul.f32 %v3611, 0.16666667
    %v4636 = vmul.f32 %v3612, 0.16666667
    %v4637 = vmul.f32 %v3613, 0.16666667
    %v4638 = vmul.f32 %v3614, 0.16666667
    %v4639 = vmul.f32 %v3615, 0.16666667
    %v4640 = vmul.f32 %v3616, 0.16666667
    %v4641 = vmul.f32 %v3617, 0.16666667
    %v4642 = vmul.f32 %v3618, 0.16666667
    %v4643 = vmul.f32 %v3619, 0.16666667
    %v4644 = vmul.f32 %v3620, 0.16666667
    %v4645 = vmul.f32 %v3621, 0.16666667
    %v4646 = vmul.f32 %v3622, 0.16666667
    %v4647 = vmul.f32 %v3623, 0.16666667
    %v4648 = vmul.f32 %v3624, 0.16666667
    %v4649 = vmul.f32 %v3625, 0.16666667
    %v4650 = vmul.f32 %v3626, 0.16666667
    %v4651 = vmul.f32 %v3627, 0.16666667
    %v4652 = vmul.f32 %v3628, 0.16666667
    %v4653 = vmul.f32 %v3629, 0.16666667
    %v4654 = vmul.f32 %v3630, 0.16666667
    %v4655 = vmul.f32 %v3631, 0.16666667
    %v4656 = vmul.f32 %v3632, 0.16666667
    %v4657 = vmul.f32 %v3633, 0.16666667
    %v4658 = vmul.f32 %v3634, 0.16666667
    %v4659 = vmul.f32 %v3635, 0.16666667
    %v4660 = vmul.f32 %v3636, 0.16666667
    %v4661 = vmul.f32 %v3637, 0.16666667
    %v4662 = vmul.f32 %v3638, 0.16666667
    %v4663 = vmul.f32 %v3639, 0.16666667
    %v4664 = vmul.f32 %v3640, 0.16666667
    %v4665 = vmul.f32 %v3641, 0.16666667
    %v4666 = vmul.f32 %v3642, 0.16666667
    %v4667 = vmul.f32 %v3643, 0.16666667
    %v4668 = vmul.f32 %v3644, 0.16666667
    %v4669 = vmul.f32 %v3645, 0.16666667
    %v4670 = vmul.f32 %v3646, 0.16666667
    %v4671 = vmul.f32 %v3647, 0.16666667
    %v4672 = vmul.f32 %v3648, 0.16666667
    %v4673 = vmul.f32 %v3649, 0.16666667
    %v4674 = vmul.f32 %v3650, 0.16666667
    %v4675 = vmul.f32 %v3651, 0.16666667
    %v4676 = vmul.f32 %v3652, 0.16666667
    %v4677 = vmul.f32 %v3653, 0.16666667
    %v4678 = vmul.f32 %v3654, 0.16666667
    %v4679 = vmul.f32 %v3655, 0.16666667
    %v4680 = vmul.f32 %v3656, 0.16666667
    %v4681 = vmul.f32 %v3657, 0.16666667
    %v4682 = vmul.f32 %v3658, 0.16666667
    %v4683 = vmul.f32 %v3659, 0.16666667
    %v4684 = vmul.f32 %v3660, 0.16666667
    %v4685 = vmul.f32 %v3661, 0.16666667
    %v4686 = vmul.f32 %v3662, 0.16666667
    %v4687 = vmul.f32 %v3663, 0.16666667
    %v4688 = vmul.f32 %v3664, 0.16666667
    %v4689 = vmul.f32 %v3665, 0.16666667
    %v4690 = vmul.f32 %v3666, 0.16666667
    %v4691 = vmul.f32 %v3667, 0.16666667
    %v4692 = vmul.f32 %v3668, 0.16666667
    %v4693 = vmul.f32 %v3669, 0.16666667
    %v4694 = vmul.f32 %v3670, 0.16666667
    %v4695 = vmul.f32 %v3671, 0.16666667
    %v4696 = vmul.f32 %v3672, 0.16666667
    %v4697 = vmul.f32 %v3673, 0.16666667
    %v4698 = vmul.f32 %v3674, 0.16666667
    %v4699 = vmul.f32 %v3675, 0.16666667
    %v4700 = vmul.f32 %v3676, 0.16666667
    %v4701 = vmul.f32 %v3677, 0.16666667
    %v4702 = vmul.f32 %v3678, 0.16666667
    %v4703 = vmul.f32 %v3679, 0.16666667
    %v4704 = vmul.f32 %v3680, 0.16666667
    %v4705 = vmul.f32 %v3681, 0.16666667
    %v4706 = vmul.f32 %v3682, 0.16666667
    %v4707 = vmul.f32 %v3683, 0.16666667
    %v4708 = vmul.f32 %v3684, 0.16666667
    %v4709 = vmul.f32 %v3685, 0.16666667
    %v4710 = vmul.f32 %v3686, 0.16666667
    %v4711 = vmul.f32 %v3687, 0.16666667
    %v4712 = vmul.f32 %v3688, 0.16666667
    %v4713 = vmul.f32 %v3689, 0.16666667
    %v4714 = vmul.f32 %v3690, 0.16666667
    %v4715 = vmul.f32 %v3691, 0.16666667
    %v4716 = vmul.f32 %v3692, 0.16666667
    %v4717 = vmul.f32 %v3693, 0.16666667
    %v4718 = vmul.f32 %v3694, 0.16666667
    %v4719 = vmul.f32 %v3695, 0.16666667
    %v4720 = vmul.f32 %v3696, 0.16666667
    %v4721 = vmul.f32 %v3697, 0.16666667
    %v4722 = vmul.f32 %v3698, 0.16666667
    %v4723 = vmul.f32 %v3699, 0.16666667
    %v4724 = vmul.f32 %v3700, 0.16666667
    %v4725 = vmul.f32 %v3701, 0.16666667
    %v4726 = vmul.f32 %v3702, 0.16666667
    %v4727 = vmul.f32 %v3703, 0.16666667
    %v4728 = vmul.f32 %v3704, 0.16666667
    %v4729 = vmul.f32 %v3705, 0.16666667
    %v4730 = vmul.f32 %v3706, 0.16666667
    %v4731 = vmul.f32 %v3707, 0.16666667
    %v4732 = vmul.f32 %v3708, 0.16666667
    %v4733 = vmul.f32 %v3709, 0.16666667
    %v4734 = vmul.f32 %v3710, 0.16666667
    %v4735 = vmul.f32 %v3711, 0.16666667
    %v4736 = vmul.f32 %v3712, 0.16666667
    %v4737 = vmul.f32 %v3713, 0.16666667
    %v4738 = vmul.f32 %v3714, 0.16666667
    %v4739 = vmul.f32 %v3715, 0.16666667
    %v4740 = vmul.f32 %v3716, 0.16666667
    %v4741 = vmul.f32 %v3717, 0.16666667
    %v4742 = vmul.f32 %v3718, 0.16666667
    %v4743 = vmul.f32 %v3719, 0.16666667
    %v4744 = vmul.f32 %v3720, 0.16666667
    %v4745 = vmul.f32 %v3721, 0.16666667
    %v4746 = vmul.f32 %v3722, 0.16666667
    %v4747 = vmul.f32 %v3723, 0.16666667
    %v4748 = vmul.f32 %v3724, 0.16666667
    %v4749 = vmul.f32 %v3725, 0.16666667
    %v4750 = vmul.f32 %v3726, 0.16666667
    %v4751 = vmul.f32 %v3727, 0.16666667
    %v4752 = vmul.f32 %v3728, 0.16666667
    %v4753 = vmul.f32 %v3729, 0.16666667
    %v4754 = vmul.f32 %v3730, 0.16666667
    %v4755 = vmul.f32 %v3731, 0.16666667
    %v4756 = vmul.f32 %v3732, 0.16666667
    %v4757 = vmul.f32 %v3733, 0.16666667
    %v4758 = vmul.f32 %v3734, 0.16666667
    %v4759 = vmul.f32 %v3735, 0.16666667
    %v4760 = vmul.f32 %v3736, 0.16666667
    %v4761 = vmul.f32 %v3737, 0.16666667
    %v4762 = vmul.f32 %v3738, 0.16666667
    %v4763 = vmul.f32 %v3739, 0.16666667
    %v4764 = vmul.f32 %v3740, 0.16666667
    %v4765 = vmul.f32 %v3741, 0.16666667
    %v4766 = vmul.f32 %v3742, 0.16666667
    %v4767 = vmul.f32 %v3743, 0.16666667
    %v4768 = vmul.f32 %v3744, 0.16666667
    %v4769 = vmul.f32 %v3745, 0.16666667
    %v4770 = vmul.f32 %v3746, 0.16666667
    %v4771 = vmul.f32 %v3747, 0.16666667
    %v4772 = vmul.f32 %v3748, 0.16666667
    %v4773 = vmul.f32 %v3749, 0.16666667
    %v4774 = vmul.f32 %v3750, 0.16666667
    %v4775 = vmul.f32 %v3751, 0.16666667
    %v4776 = vmul.f32 %v3752, 0.16666667
    %v4777 = vmul.f32 %v3753, 0.16666667
    %v4778 = vmul.f32 %v3754, 0.16666667
    %v4779 = vmul.f32 %v3755, 0.16666667
    %v4780 = vmul.f32 %v3756, 0.16666667
    %v4781 = vmul.f32 %v3757, 0.16666667
    %v4782 = vmul.f32 %v3758, 0.16666667
    %v4783 = vmul.f32 %v3759, 0.16666667
    %v4784 = vmul.f32 %v3760, 0.16666667
    %v4785 = vmul.f32 %v3761, 0.16666667
    %v4786 = vmul.f32 %v3762, 0.16666667
    %v4787 = vmul.f32 %v3763, 0.16666667
    %v4788 = vmul.f32 %v3764, 0.16666667
    %v4789 = vmul.f32 %v3765, 0.16666667
    %v4790 = vmul.f32 %v3766, 0.16666667
    %v4791 = vmul.f32 %v3767, 0.16666667
    %v4792 = vmul.f32 %v3768, 0.16666667
    %v4793 = vmul.f32 %v3769, 0.16666667
    %v4794 = vmul.f32 %v3770, 0.16666667
    %v4795 = vmul.f32 %v3771, 0.16666667
    %v4796 = vmul.f32 %v3772, 0.16666667
    %v4797 = vmul.f32 %v3773, 0.16666667
    %v4798 = vmul.f32 %v3774, 0.16666667
    %v4799 = vmul.f32 %v3775, 0.16666667
    %v4800 = vmul.f32 %v3776, 0.16666667
    %v4801 = vmul.f32 %v3777, 0.16666667
    %v4802 = vmul.f32 %v3778, 0.16666667
    %v4803 = vmul.f32 %v3779, 0.16666667
    %v4804 = vmul.f32 %v3780, 0.16666667
    %v4805 = vmul.f32 %v3781, 0.16666667
    %v4806 = vmul.f32 %v3782, 0.16666667
    %v4807 = vmul.f32 %v3783, 0.16666667
    %v4808 = vmul.f32 %v3784, 0.16666667
    %v4809 = vmul.f32 %v3785, 0.16666667
    %v4810 = vmul.f32 %v3786, 0.16666667
    %v4811 = vmul.f32 %v3787, 0.16666667
    %v4812 = vmul.f32 %v3788, 0.16666667
    %v4813 = vmul.f32 %v3789, 0.16666667
    %v4814 = vmul.f32 %v3790, 0.16666667
    %v4815 = vmul.f32 %v3791, 0.16666667
    %v4816 = vmul.f32 %v3792, 0.16666667
    %v4817 = vmul.f32 %v3793, 0.16666667
    %v4818 = vmul.f32 %v3794, 0.16666667
    %v4819 = vmul.f32 %v3795, 0.16666667
    %v4820 = vmul.f32 %v3796, 0.16666667
    %v4821 = vmul.f32 %v3797, 0.16666667
    %v4822 = vmul.f32 %v3798, 0.16666667
    %v4823 = vmul.f32 %v3799, 0.16666667
    %v4824 = vmul.f32 %v3800, 0.16666667
    %v4825 = vmul.f32 %v3801, 0.16666667
    %v4826 = vmul.f32 %v3802, 0.16666667
    %v4827 = vmul.f32 %v3803, 0.16666667
    %v4828 = vmul.f32 %v3804, 0.16666667
    %v4829 = vmul.f32 %v3805, 0.16666667
    %v4830 = vmul.f32 %v3806, 0.16666667
    %v4831 = vmul.f32 %v3807, 0.16666667
    %v4832 = vmul.f32 %v3808, 0.16666667
    %v4833 = vmul.f32 %v3809, 0.16666667
    %v4834 = vmul.f32 %v3810, 0.16666667
    %v4835 = vmul.f32 %v3811, 0.16666667
    %v4836 = vmul.f32 %v3812, 0.16666667
    %v4837 = vmul.f32 %v3813, 0.16666667
    %v4838 = vmul.f32 %v3814, 0.16666667
    %v4839 = vmul.f32 %v3815, 0.16666667
    %v4840 = vmul.f32 %v3816, 0.16666667
    %v4841 = vmul.f32 %v3817, 0.16666667
    %v4842 = vmul.f32 %v3818, 0.16666667
    %v4843 = vmul.f32 %v3819, 0.16666667
    %v4844 = vmul.f32 %v3820, 0.16666667
    %v4845 = vmul.f32 %v3821, 0.16666667
    %v4846 = vmul.f32 %v3822, 0.16666667
    %v4847 = vmul.f32 %v3823, 0.16666667
    %v4848 = vmul.f32 %v3824, 0.16666667
    %v4849 = vmul.f32 %v3825, 0.16666667
    %v4850 = vmul.f32 %v3826, 0.16666667
    %v4851 = vmul.f32 %v3827, 0.16666667
    %v4852 = vmul.f32 %v3828, 0.16666667
    %v4853 = vmul.f32 %v3829, 0.16666667
    %v4854 = vmul.f32 %v3830, 0.16666667
    %v4855 = vmul.f32 %v3831, 0.16666667
    %v4856 = vmul.f32 %v3832, 0.16666667
    %v4857 = vmul.f32 %v3833, 0.16666667
    %v4858 = vmul.f32 %v3834, 0.16666667
    %v4859 = vmul.f32 %v3835, 0.16666667
    %v4860 = vmul.f32 %v3836, 0.16666667
    %v4861 = vmul.f32 %v3837, 0.16666667
    %v4862 = vmul.f32 %v3838, 0.16666667
    %v4863 = vmul.f32 %v3839, 0.16666667
    %v4864 = vmul.f32 %v3840, 0.16666667
    %v4865 = vmul.f32 %v3841, 0.16666667
    %v4866 = vmul.f32 %v3842, 0.16666667
    %v4867 = vmul.f32 %v3843, 0.16666667
    %v4868 = vmul.f32 %v3844, 0.16666667
    %v4869 = vmul.f32 %v3845, 0.16666667
    %v4870 = vmul.f32 %v3846, 0.16666667
    %v4871 = vmul.f32 %v3847, 0.16666667
    %v4872 = vmul.f32 %v3848, 0.16666667
    %v4873 = vmul.f32 %v3849, 0.16666667
    %v4874 = vmul.f32 %v3850, 0.16666667
    %v4875 = vmul.f32 %v3851, 0.16666667
    %v4876 = vmul.f32 %v3852, 0.16666667
    %v4877 = vmul.f32 %v3853, 0.16666667
    %v4878 = vmul.f32 %v3854, 0.16666667
    %v4879 = vmul.f32 %v3855, 0.16666667
    %v4880 = vmul.f32 %v3856, 0.16666667
    %v4881 = vmul.f32 %v3857, 0.16666667
    %v4882 = vmul.f32 %v3858, 0.16666667
    %v4883 = vmul.f32 %v3859, 0.16666667
    %v4884 = vmul.f32 %v3860, 0.16666667
    %v4885 = vmul.f32 %v3861, 0.16666667
    %v4886 = vmul.f32 %v3862, 0.16666667
    %v4887 = vmul.f32 %v3863, 0.16666667
    %v4888 = vmul.f32 %v3864, 0.16666667
    %v4889 = vmul.f32 %v3865, 0.16666667
    %v4890 = vmul.f32 %v3866, 0.16666667
    %v4891 = vmul.f32 %v3867, 0.16666667
    %v4892 = vmul.f32 %v3868, 0.16666667
    %v4893 = vmul.f32 %v3869, 0.16666667
    %v4894 = vmul.f32 %v3870, 0.16666667
    %v4895 = vmul.f32 %v3871, 0.16666667
    %v4896 = vmul.f32 %v3872, 0.16666667
    %v4897 = vmul.f32 %v3873, 0.16666667
    %v4898 = vmul.f32 %v3874, 0.16666667
    %v4899 = vmul.f32 %v3875, 0.16666667
    %v4900 = vmul.f32 %v3876, 0.16666667
    %v4901 = vmul.f32 %v3877, 0.16666667
    %v4902 = vmul.f32 %v3878, 0.16666667
    %v4903 = vmul.f32 %v3879, 0.16666667
    %v4904 = vmul.f32 %v3880, 0.16666667
    %v4905 = vmul.f32 %v3881, 0.16666667
    %v4906 = vmul.f32 %v3882, 0.16666667
    %v4907 = vmul.f32 %v3883, 0.16666667
    %v4908 = vmul.f32 %v3884, 0.16666667
    %v4909 = vmul.f32 %v3885, 0.16666667
    %v4910 = vmul.f32 %v3886, 0.16666667
    %v4911 = vmul.f32 %v3887, 0.16666667
    %v4912 = vmul.f32 %v3888, 0.16666667
    %v4913 = vmul.f32 %v3889, 0.16666667
    %v4914 = vmul.f32 %v3890, 0.16666667
    %v4915 = vmul.f32 %v3891, 0.16666667
    %v4916 = vmul.f32 %v3892, 0.16666667
    %v4917 = vmul.f32 %v3893, 0.16666667
    %v4918 = vmul.f32 %v3894, 0.16666667
    %v4919 = vmul.f32 %v3895, 0.16666667
    %v4920 = vmul.f32 %v3896, 0.16666667
    %v4921 = vmul.f32 %v3897, 0.16666667
    %v4922 = vmul.f32 %v3898, 0.16666667
    %v4923 = vmul.f32 %v3899, 0.16666667
    %v4924 = vmul.f32 %v3900, 0.16666667
    %v4925 = vmul.f32 %v3901, 0.16666667
    %v4926 = vmul.f32 %v3902, 0.16666667
    %v4927 = vmul.f32 %v3903, 0.16666667
    %v4928 = vmul.f32 %v3904, 0.16666667
    %v4929 = vmul.f32 %v3905, 0.16666667
    %v4930 = vmul.f32 %v3906, 0.16666667
    %v4931 = vmul.f32 %v3907, 0.16666667
    %v4932 = vmul.f32 %v3908, 0.16666667
    %v4933 = vmul.f32 %v3909, 0.16666667
    %v4934 = vmul.f32 %v3910, 0.16666667
    %v4935 = vmul.f32 %v3911, 0.16666667
    %v4936 = vmul.f32 %v3912, 0.16666667
    %v4937 = vmul.f32 %v3913, 0.16666667
    %v4938 = vmul.f32 %v3914, 0.16666667
    %v4939 = vmul.f32 %v3915, 0.16666667
    %v4940 = vmul.f32 %v3916, 0.16666667
    %v4941 = vmul.f32 %v3917, 0.16666667
    %v4942 = vmul.f32 %v3918, 0.16666667
    %v4943 = vmul.f32 %v3919, 0.16666667
    %v4944 = vmul.f32 %v3920, 0.16666667
    %v4945 = vmul.f32 %v3921, 0.16666667
    %v4946 = vmul.f32 %v3922, 0.16666667
    %v4947 = vmul.f32 %v3923, 0.16666667
    %v4948 = vmul.f32 %v3924, 0.16666667
    %v4949 = vmul.f32 %v3925, 0.16666667
    %v4950 = vmul.f32 %v3926, 0.16666667
    %v4951 = vmul.f32 %v3927, 0.16666667
    %v4952 = vmul.f32 %v3928, 0.16666667
    %v4953 = vmul.f32 %v3929, 0.16666667
    %v4954 = vmul.f32 %v3930, 0.16666667
    %v4955 = vmul.f32 %v3931, 0.16666667
    %v4956 = vmul.f32 %v3932, 0.16666667
    %v4957 = vmul.f32 %v3933, 0.16666667
    %v4958 = vmul.f32 %v3934, 0.16666667
    %v4959 = vmul.f32 %v3935, 0.16666667
    %v4960 = vmul.f32 %v3936, 0.16666667
    %v4961 = vmul.f32 %v3937, 0.16666667
    %v4962 = vmul.f32 %v3938, 0.16666667
    %v4963 = vmul.f32 %v3939, 0.16666667
    %v4964 = vmul.f32 %v3940, 0.16666667
    %v4965 = vmul.f32 %v3941, 0.16666667
    %v4966 = vmul.f32 %v3942, 0.16666667
    %v4967 = vmul.f32 %v3943, 0.16666667
    %v4968 = vmul.f32 %v3944, 0.16666667
    %v4969 = vmul.f32 %v3945, 0.16666667
    %v4970 = vmul.f32 %v3946, 0.16666667
    %v4971 = vmul.f32 %v3947, 0.16666667
    %v4972 = vmul.f32 %v3948, 0.16666667
    %v4973 = vmul.f32 %v3949, 0.16666667
    %v4974 = vmul.f32 %v3950, 0.16666667
    %v4975 = vmul.f32 %v3951, 0.16666667
    %v4976 = vmul.f32 %v3952, 0.16666667
    %v4977 = vmul.f32 %v3953, 0.16666667
    %v4978 = vmul.f32 %v3954, 0.16666667
    %v4979 = vmul.f32 %v3955, 0.16666667
    %v4980 = vmul.f32 %v3956, 0.16666667
    %v4981 = vmul.f32 %v3957, 0.16666667
    %v4982 = vmul.f32 %v3958, 0.16666667
    %v4983 = vmul.f32 %v3959, 0.16666667
    %v4984 = vmul.f32 %v3960, 0.16666667
    %v4985 = vmul.f32 %v3961, 0.16666667
    %v4986 = vmul.f32 %v3962, 0.16666667
    %v4987 = vmul.f32 %v3963, 0.16666667
    %v4988 = vmul.f32 %v3964, 0.16666667
    %v4989 = vmul.f32 %v3965, 0.16666667
    %v4990 = vmul.f32 %v3966, 0.16666667
    %v4991 = vmul.f32 %v3967, 0.16666667
    %v4992 = vmul.f32 %v3968, 0.16666667
    %v4993 = vmul.f32 %v3969, 0.16666667
    %v4994 = vmul.f32 %v3970, 0.16666667
    %v4995 = vmul.f32 %v3971, 0.16666667
    %v4996 = vmul.f32 %v3972, 0.16666667
    %v4997 = vmul.f32 %v3973, 0.16666667
    %v4998 = vmul.f32 %v3974, 0.16666667
    %v4999 = vmul.f32 %v3975, 0.16666667
    %v5000 = vmul.f32 %v3976, 0.16666667
    %v5001 = vmul.f32 %v3977, 0.16666667
    %v5002 = vmul.f32 %v3978, 0.16666667
    %v5003 = vmul.f32 %v3979, 0.16666667
    %v5004 = vmul.f32 %v3980, 0.16666667
    %v5005 = vmul.f32 %v3981, 0.16666667
    %v5006 = vmul.f32 %v3982, 0.16666667
    %v5007 = vmul.f32 %v3983, 0.16666667
    %v5008 = vmul.f32 %v3984, 0.16666667
    %v5009 = vmul.f32 %v3985, 0.16666667
    %v5010 = vmul.f32 %v3986, 0.16666667
    %v5011 = vmul.f32 %v3987, 0.16666667
    %v5012 = vmul.f32 %v3988, 0.16666667
    %v5013 = vmul.f32 %v3989, 0.16666667
    %v5014 = vmul.f32 %v3990, 0.16666667
    %v5015 = vmul.f32 %v3991, 0.16666667
    %v5016 = vmul.f32 %v3992, 0.16666667
    %v5017 = vmul.f32 %v3993, 0.16666667
    %v5018 = vmul.f32 %v3994, 0.16666667
    %v5019 = vmul.f32 %v3995, 0.16666667
    %v5020 = vmul.f32 %v3996, 0.16666667
    %v5021 = vmul.f32 %v3997, 0.16666667
    %v5022 = vmul.f32 %v3998, 0.16666667
    %v5023 = vmul.f32 %v3999, 0.16666667
    %v5024 = vmul.f32 %v4000, 0.16666667
    %v5025 = vmul.f32 %v4001, 0.16666667
    %v5026 = vmul.f32 %v4002, 0.16666667
    %v5027 = vmul.f32 %v4003, 0.16666667
    %v5028 = vmul.f32 %v4004, 0.16666667
    %v5029 = vmul.f32 %v4005, 0.16666667
    %v5030 = vmul.f32 %v4006, 0.16666667
    %v5031 = vmul.f32 %v4007, 0.16666667
    %v5032 = vmul.f32 %v4008, 0.16666667
    %v5033 = vmul.f32 %v4009, 0.16666667
    %v5034 = vmul.f32 %v4010, 0.16666667
    %v5035 = vmul.f32 %v4011, 0.16666667
    %v5036 = vmul.f32 %v4012, 0.16666667
    %v5037 = vmul.f32 %v4013, 0.16666667
    %v5038 = vmul.f32 %v4014, 0.16666667
    %v5039 = vmul.f32 %v4015, 0.16666667
    %v5040 = vmul.f32 %v4016, 0.16666667
    %v5041 = vmul.f32 %v4017, 0.16666667
    %v5042 = vmul.f32 %v4018, 0.16666667
    %v5043 = vmul.f32 %v4019, 0.16666667
    %v5044 = vmul.f32 %v4020, 0.16666667
    %v5045 = vmul.f32 %v4021, 0.16666667
    %v5046 = vmul.f32 %v4022, 0.16666667
    %v5047 = vmul.f32 %v4023, 0.16666667
    %v5048 = vmul.f32 %v4024, 0.16666667
    %v5049 = vmul.f32 %v4025, 0.16666667
    %v5050 = vmul.f32 %v4026, 0.16666667
    %v5051 = vmul.f32 %v4027, 0.16666667
    %v5052 = vmul.f32 %v4028, 0.16666667
    %v5053 = vmul.f32 %v4029, 0.16666667
    %v5054 = vmul.f32 %v4030, 0.16666667
    %v5055 = vmul.f32 %v4031, 0.16666667
    %v5056 = vmul.f32 %v4032, 0.16666667
    %v5057 = vmul.f32 %v4033, 0.16666667
    %v5058 = vmul.f32 %v4034, 0.16666667
    %v5059 = vmul.f32 %v4035, 0.16666667
    %v5060 = vmul.f32 %v4036, 0.16666667
    %v5061 = vmul.f32 %v4037, 0.16666667
    %v5062 = vmul.f32 %v4038, 0.16666667
    %v5063 = vmul.f32 %v4039, 0.16666667
    %v5064 = vmul.f32 %v4040, 0.16666667
    %v5065 = vmul.f32 %v4041, 0.16666667
    %v5066 = vmul.f32 %v4042, 0.16666667
    %v5067 = vmul.f32 %v4043, 0.16666667
    %v5068 = vmul.f32 %v4044, 0.16666667
    %v5069 = vmul.f32 %v4045, 0.16666667
    %v5070 = vmul.f32 %v4046, 0.16666667
    %v5071 = vmul.f32 %v4047, 0.16666667
    %v5072 = vmul.f32 %v4048, 0.16666667
    %v5073 = vmul.f32 %v4049, 0.16666667
    %v5074 = vmul.f32 %v4050, 0.16666667
    %v5075 = vmul.f32 %v4051, 0.16666667
    %v5076 = vmul.f32 %v4052, 0.16666667
    %v5077 = vmul.f32 %v4053, 0.16666667
    %v5078 = vmul.f32 %v4054, 0.16666667
    %v5079 = vmul.f32 %v4055, 0.16666667
    %v5080 = vmul.f32 %v4056, 0.16666667
    %v5081 = vmul.f32 %v4057, 0.16666667
    %v5082 = vmul.f32 %v4058, 0.16666667
    %v5083 = vmul.f32 %v4059, 0.16666667
    %v5084 = vmul.f32 %v4060, 0.16666667
    %v5085 = vmul.f32 %v4061, 0.16666667
    %v5086 = vmul.f32 %v4062, 0.16666667
    %v5087 = vmul.f32 %v4063, 0.16666667
    %v5088 = vmul.f32 %v4064, 0.16666667
    %v5089 = vmul.f32 %v4065, 0.16666667
    %v5090 = vmul.f32 %v4066, 0.16666667
    %v5091 = vmul.f32 %v4067, 0.16666667
    %v5092 = vmul.f32 %v4068, 0.16666667
    %v5093 = vmul.f32 %v4069, 0.16666667
    %v5094 = vmul.f32 %v4070, 0.16666667
    %v5095 = vmul.f32 %v4071, 0.16666667
    %v5096 = vmul.f32 %v4072, 0.16666667
    %v5097 = vmul.f32 %v4073, 0.16666667
    %v5098 = vmul.f32 %v4074, 0.16666667
    %v5099 = vmul.f32 %v4075, 0.16666667
    %v5100 = vmul.f32 %v4076, 0.16666667
    %v5101 = vmul.f32 %v4077, 0.16666667
    %v5102 = vmul.f32 %v4078, 0.16666667
    %v5103 = vmul.f32 %v4079, 0.16666667
    %v5104 = vmul.f32 %v4080, 0.16666667
    %v5105 = vmul.f32 %v4081, 0.16666667
    %v5106 = vmul.f32 %v4082, 0.16666667
    %v5107 = vmul.f32 %v4083, 0.16666667
    %v5108 = vmul.f32 %v4084, 0.16666667
    %v5109 = vmul.f32 %v4085, 0.16666667
    %v5110 = vmul.f32 %v4086, 0.16666667
    %v5111 = vmul.f32 %v4087, 0.16666667
    %v5112 = vmul.f32 %v4088, 0.16666667
    %v5113 = vmul.f32 %v4089, 0.16666667
    %v5114 = vmul.f32 %v4090, 0.16666667
    %v5115 = vmul.f32 %v4091, 0.16666667
    %v5116 = vmul.f32 %v4092, 0.16666667
    %v5117 = vmul.f32 %v4093, 0.16666667
    %v5118 = vmul.f32 %v4094, 0.16666667
    %v5119 = vmul.f32 %v4095, 0.16666667
    %v5120 = vmul.f32 %v4096, 0.16666667
    %v5121 = vmul.f32 %v4097, 0.16666667
    %v5122 = vmul.f32 %v4098, 0.16666667
    %v5123 = vmul.f32 %v4099, 0.16666667
    %v5124 = vmul.f32 %v4100, 0.16666667
    %v5125 = vmul.f32 %v4101, 0.16666667
    %v5126 = vmul.f32 %v4102, 0.16666667
    %v5127 = vmul.f32 %v4103, 0.16666667
    %v5128 = vmul.f32 %v4104, 0.16666667
    %v5129 = vmul.f32 %v4105, 0.16666667
    %v5130 = vmul.f32 %v4106, 0.16666667
    %v5131 = vmul.f32 %v4107, 0.16666667
    %v5132 = vmul.f32 %v4108, 0.16666667
    %v5133 = vmul.f32 %v4109, 0.16666667
    %v5134 = vmul.f32 %v4110, 0.16666667
    %v5135 = vmul.f32 %v4111, 0.16666667
    %v5136 = vmul.f32 %v4112, 0.16666667
    %v5137 = vmul.f32 %v4113, 0.16666667
    %v5138 = vmul.f32 %v4114, 0.16666667
    %v5139 = vmul.f32 %v4115, 0.16666667
    %v5140 = vmul.f32 %v4116, 0.16666667
    %v5141 = vmul.f32 %v4117, 0.16666667
    %v5142 = vmul.f32 %v4118, 0.16666667
    %5143 = vst [vmem:[#allocation5] sm:$0xff] %v4119
    %5144 = vst [vmem:[#allocation5 + $0x8] sm:$0xff] %v4120
    %5145 = vst [vmem:[#allocation5 + $0x10] sm:$0xff] %v4121
    %5146 = vst [vmem:[#allocation5 + $0x18] sm:$0xff] %v4122
    %5147 = vst [vmem:[#allocation5 + $0x20] sm:$0xff] %v4123
    %5148 = vst [vmem:[#allocation5 + $0x28] sm:$0xff] %v4124
    %5149 = vst [vmem:[#allocation5 + $0x30] sm:$0xff] %v4125
    %5150 = vst [vmem:[#allocation5 + $0x38] sm:$0xff] %v4126
    %5151 = vst [vmem:[#allocation5 + $0x40] sm:$0xff] %v4127
    %5152 = vst [vmem:[#allocation5 + $0x48] sm:$0xff] %v4128
    %5153 = vst [vmem:[#allocation5 + $0x50] sm:$0xff] %v4129
    %5154 = vst [vmem:[#allocation5 + $0x58] sm:$0xff] %v4130
    %5155 = vst [vmem:[#allocation5 + $0x60] sm:$0xff] %v4131
    %5156 = vst [vmem:[#allocation5 + $0x68] sm:$0xff] %v4132
    %5157 = vst [vmem:[#allocation5 + $0x70] sm:$0xff] %v4133
    %5158 = vst [vmem:[#allocation5 + $0x78] sm:$0xff] %v4134
    %5159 = vst [vmem:[#allocation5 + $0x80] sm:$0xff] %v4135
    %5160 = vst [vmem:[#allocation5 + $0x88] sm:$0xff] %v4136
    %5161 = vst [vmem:[#allocation5 + $0x90] sm:$0xff] %v4137
    %5162 = vst [vmem:[#allocation5 + $0x98] sm:$0xff] %v4138
    %5163 = vst [vmem:[#allocation5 + $0xa0] sm:$0xff] %v4139
    %5164 = vst [vmem:[#allocation5 + $0xa8] sm:$0xff] %v4140
    %5165 = vst [vmem:[#allocation5 + $0xb0] sm:$0xff] %v4141
    %5166 = vst [vmem:[#allocation5 + $0xb8] sm:$0xff] %v4142
    %5167 = vst [vmem:[#allocation5 + $0xc0] sm:$0xff] %v4143
    %5168 = vst [vmem:[#allocation5 + $0xc8] sm:$0xff] %v4144
    %5169 = vst [vmem:[#allocation5 + $0xd0] sm:$0xff] %v4145
    %5170 = vst [vmem:[#allocation5 + $0xd8] sm:$0xff] %v4146
    %5171 = vst [vmem:[#allocation5 + $0xe0] sm:$0xff] %v4147
    %5172 = vst [vmem:[#allocation5 + $0xe8] sm:$0xff] %v4148
    %5173 = vst [vmem:[#allocation5 + $0xf0] sm:$0xff] %v4149
    %5174 = vst [vmem:[#allocation5 + $0xf8] sm:$0xff] %v4150
    %5175 = vst [vmem:[#allocation5 + $0x100] sm:$0xff] %v4151
    %5176 = vst [vmem:[#allocation5 + $0x108] sm:$0xff] %v4152
    %5177 = vst [vmem:[#allocation5 + $0x110] sm:$0xff] %v4153
    %5178 = vst [vmem:[#allocation5 + $0x118] sm:$0xff] %v4154
    %5179 = vst [vmem:[#allocation5 + $0x120] sm:$0xff] %v4155
    %5180 = vst [vmem:[#allocation5 + $0x128] sm:$0xff] %v4156
    %5181 = vst [vmem:[#allocation5 + $0x130] sm:$0xff] %v4157
    %5182 = vst [vmem:[#allocation5 + $0x138] sm:$0xff] %v4158
    %5183 = vst [vmem:[#allocation5 + $0x140] sm:$0xff] %v4159
    %5184 = vst [vmem:[#allocation5 + $0x148] sm:$0xff] %v4160
    %5185 = vst [vmem:[#allocation5 + $0x150] sm:$0xff] %v4161
    %5186 = vst [vmem:[#allocation5 + $0x158] sm:$0xff] %v4162
    %5187 = vst [vmem:[#allocation5 + $0x160] sm:$0xff] %v4163
    %5188 = vst [vmem:[#allocation5 + $0x168] sm:$0xff] %v4164
    %5189 = vst [vmem:[#allocation5 + $0x170] sm:$0xff] %v4165
    %5190 = vst [vmem:[#allocation5 + $0x178] sm:$0xff] %v4166
    %5191 = vst [vmem:[#allocation5 + $0x180] sm:$0xff] %v4167
    %5192 = vst [vmem:[#allocation5 + $0x188] sm:$0xff] %v4168
    %5193 = vst [vmem:[#allocation5 + $0x190] sm:$0xff] %v4169
    %5194 = vst [vmem:[#allocation5 + $0x198] sm:$0xff] %v4170
    %5195 = vst [vmem:[#allocation5 + $0x1a0] sm:$0xff] %v4171
    %5196 = vst [vmem:[#allocation5 + $0x1a8] sm:$0xff] %v4172
    %5197 = vst [vmem:[#allocation5 + $0x1b0] sm:$0xff] %v4173
    %5198 = vst [vmem:[#allocation5 + $0x1b8] sm:$0xff] %v4174
    %5199 = vst [vmem:[#allocation5 + $0x1c0] sm:$0xff] %v4175
    %5200 = vst [vmem:[#allocation5 + $0x1c8] sm:$0xff] %v4176
    %5201 = vst [vmem:[#allocation5 + $0x1d0] sm:$0xff] %v4177
    %5202 = vst [vmem:[#allocation5 + $0x1d8] sm:$0xff] %v4178
    %5203 = vst [vmem:[#allocation5 + $0x1e0] sm:$0xff] %v4179
    %5204 = vst [vmem:[#allocation5 + $0x1e8] sm:$0xff] %v4180
    %5205 = vst [vmem:[#allocation5 + $0x1f0] sm:$0xff] %v4181
    %5206 = vst [vmem:[#allocation5 + $0x1f8] sm:$0xff] %v4182
    %5207 = vst [vmem:[#allocation5 + $0x200] sm:$0xff] %v4183
    %5208 = vst [vmem:[#allocation5 + $0x208] sm:$0xff] %v4184
    %5209 = vst [vmem:[#allocation5 + $0x210] sm:$0xff] %v4185
    %5210 = vst [vmem:[#allocation5 + $0x218] sm:$0xff] %v4186
    %5211 = vst [vmem:[#allocation5 + $0x220] sm:$0xff] %v4187
    %5212 = vst [vmem:[#allocation5 + $0x228] sm:$0xff] %v4188
    %5213 = vst [vmem:[#allocation5 + $0x230] sm:$0xff] %v4189
    %5214 = vst [vmem:[#allocation5 + $0x238] sm:$0xff] %v4190
    %5215 = vst [vmem:[#allocation5 + $0x240] sm:$0xff] %v4191
    %5216 = vst [vmem:[#allocation5 + $0x248] sm:$0xff] %v4192
    %5217 = vst [vmem:[#allocation5 + $0x250] sm:$0xff] %v4193
    %5218 = vst [vmem:[#allocation5 + $0x258] sm:$0xff] %v4194
    %5219 = vst [vmem:[#allocation5 + $0x260] sm:$0xff] %v4195
    %5220 = vst [vmem:[#allocation5 + $0x268] sm:$0xff] %v4196
    %5221 = vst [vmem:[#allocation5 + $0x270] sm:$0xff] %v4197
    %5222 = vst [vmem:[#allocation5 + $0x278] sm:$0xff] %v4198
    %5223 = vst [vmem:[#allocation5 + $0x280] sm:$0xff] %v4199
    %5224 = vst [vmem:[#allocation5 + $0x288] sm:$0xff] %v4200
    %5225 = vst [vmem:[#allocation5 + $0x290] sm:$0xff] %v4201
    %5226 = vst [vmem:[#allocation5 + $0x298] sm:$0xff] %v4202
    %5227 = vst [vmem:[#allocation5 + $0x2a0] sm:$0xff] %v4203
    %5228 = vst [vmem:[#allocation5 + $0x2a8] sm:$0xff] %v4204
    %5229 = vst [vmem:[#allocation5 + $0x2b0] sm:$0xff] %v4205
    %5230 = vst [vmem:[#allocation5 + $0x2b8] sm:$0xff] %v4206
    %5231 = vst [vmem:[#allocation5 + $0x2c0] sm:$0xff] %v4207
    %5232 = vst [vmem:[#allocation5 + $0x2c8] sm:$0xff] %v4208
    %5233 = vst [vmem:[#allocation5 + $0x2d0] sm:$0xff] %v4209
    %5234 = vst [vmem:[#allocation5 + $0x2d8] sm:$0xff] %v4210
    %5235 = vst [vmem:[#allocation5 + $0x2e0] sm:$0xff] %v4211
    %5236 = vst [vmem:[#allocation5 + $0x2e8] sm:$0xff] %v4212
    %5237 = vst [vmem:[#allocation5 + $0x2f0] sm:$0xff] %v4213
    %5238 = vst [vmem:[#allocation5 + $0x2f8] sm:$0xff] %v4214
    %5239 = vst [vmem:[#allocation5 + $0x300] sm:$0xff] %v4215
    %5240 = vst [vmem:[#allocation5 + $0x308] sm:$0xff] %v4216
    %5241 = vst [vmem:[#allocation5 + $0x310] sm:$0xff] %v4217
    %5242 = vst [vmem:[#allocation5 + $0x318] sm:$0xff] %v4218
    %5243 = vst [vmem:[#allocation5 + $0x320] sm:$0xff] %v4219
    %5244 = vst [vmem:[#allocation5 + $0x328] sm:$0xff] %v4220
    %5245 = vst [vmem:[#allocation5 + $0x330] sm:$0xff] %v4221
    %5246 = vst [vmem:[#allocation5 + $0x338] sm:$0xff] %v4222
    %5247 = vst [vmem:[#allocation5 + $0x340] sm:$0xff] %v4223
    %5248 = vst [vmem:[#allocation5 + $0x348] sm:$0xff] %v4224
    %5249 = vst [vmem:[#allocation5 + $0x350] sm:$0xff] %v4225
    %5250 = vst [vmem:[#allocation5 + $0x358] sm:$0xff] %v4226
    %5251 = vst [vmem:[#allocation5 + $0x360] sm:$0xff] %v4227
    %5252 = vst [vmem:[#allocation5 + $0x368] sm:$0xff] %v4228
    %5253 = vst [vmem:[#allocation5 + $0x370] sm:$0xff] %v4229
    %5254 = vst [vmem:[#allocation5 + $0x378] sm:$0xff] %v4230
    %5255 = vst [vmem:[#allocation5 + $0x380] sm:$0xff] %v4231
    %5256 = vst [vmem:[#allocation5 + $0x388] sm:$0xff] %v4232
    %5257 = vst [vmem:[#allocation5 + $0x390] sm:$0xff] %v4233
    %5258 = vst [vmem:[#allocation5 + $0x398] sm:$0xff] %v4234
    %5259 = vst [vmem:[#allocation5 + $0x3a0] sm:$0xff] %v4235
    %5260 = vst [vmem:[#allocation5 + $0x3a8] sm:$0xff] %v4236
    %5261 = vst [vmem:[#allocation5 + $0x3b0] sm:$0xff] %v4237
    %5262 = vst [vmem:[#allocation5 + $0x3b8] sm:$0xff] %v4238
    %5263 = vst [vmem:[#allocation5 + $0x3c0] sm:$0xff] %v4239
    %5264 = vst [vmem:[#allocation5 + $0x3c8] sm:$0xff] %v4240
    %5265 = vst [vmem:[#allocation5 + $0x3d0] sm:$0xff] %v4241
    %5266 = vst [vmem:[#allocation5 + $0x3d8] sm:$0xff] %v4242
    %5267 = vst [vmem:[#allocation5 + $0x3e0] sm:$0xff] %v4243
    %5268 = vst [vmem:[#allocation5 + $0x3e8] sm:$0xff] %v4244
    %5269 = vst [vmem:[#allocation5 + $0x3f0] sm:$0xff] %v4245
    %5270 = vst [vmem:[#allocation5 + $0x3f8] sm:$0xff] %v4246
    %5271 = vst [vmem:[#allocation5 + $0x400] sm:$0xff] %v4247
    %5272 = vst [vmem:[#allocation5 + $0x408] sm:$0xff] %v4248
    %5273 = vst [vmem:[#allocation5 + $0x410] sm:$0xff] %v4249
    %5274 = vst [vmem:[#allocation5 + $0x418] sm:$0xff] %v4250
    %5275 = vst [vmem:[#allocation5 + $0x420] sm:$0xff] %v4251
    %5276 = vst [vmem:[#allocation5 + $0x428] sm:$0xff] %v4252
    %5277 = vst [vmem:[#allocation5 + $0x430] sm:$0xff] %v4253
    %5278 = vst [vmem:[#allocation5 + $0x438] sm:$0xff] %v4254
    %5279 = vst [vmem:[#allocation5 + $0x440] sm:$0xff] %v4255
    %5280 = vst [vmem:[#allocation5 + $0x448] sm:$0xff] %v4256
    %5281 = vst [vmem:[#allocation5 + $0x450] sm:$0xff] %v4257
    %5282 = vst [vmem:[#allocation5 + $0x458] sm:$0xff] %v4258
    %5283 = vst [vmem:[#allocation5 + $0x460] sm:$0xff] %v4259
    %5284 = vst [vmem:[#allocation5 + $0x468] sm:$0xff] %v4260
    %5285 = vst [vmem:[#allocation5 + $0x470] sm:$0xff] %v4261
    %5286 = vst [vmem:[#allocation5 + $0x478] sm:$0xff] %v4262
    %5287 = vst [vmem:[#allocation5 + $0x480] sm:$0xff] %v4263
    %5288 = vst [vmem:[#allocation5 + $0x488] sm:$0xff] %v4264
    %5289 = vst [vmem:[#allocation5 + $0x490] sm:$0xff] %v4265
    %5290 = vst [vmem:[#allocation5 + $0x498] sm:$0xff] %v4266
    %5291 = vst [vmem:[#allocation5 + $0x4a0] sm:$0xff] %v4267
    %5292 = vst [vmem:[#allocation5 + $0x4a8] sm:$0xff] %v4268
    %5293 = vst [vmem:[#allocation5 + $0x4b0] sm:$0xff] %v4269
    %5294 = vst [vmem:[#allocation5 + $0x4b8] sm:$0xff] %v4270
    %5295 = vst [vmem:[#allocation5 + $0x4c0] sm:$0xff] %v4271
    %5296 = vst [vmem:[#allocation5 + $0x4c8] sm:$0xff] %v4272
    %5297 = vst [vmem:[#allocation5 + $0x4d0] sm:$0xff] %v4273
    %5298 = vst [vmem:[#allocation5 + $0x4d8] sm:$0xff] %v4274
    %5299 = vst [vmem:[#allocation5 + $0x4e0] sm:$0xff] %v4275
    %5300 = vst [vmem:[#allocation5 + $0x4e8] sm:$0xff] %v4276
    %5301 = vst [vmem:[#allocation5 + $0x4f0] sm:$0xff] %v4277
    %5302 = vst [vmem:[#allocation5 + $0x4f8] sm:$0xff] %v4278
    %5303 = vst [vmem:[#allocation5 + $0x500] sm:$0xff] %v4279
    %5304 = vst [vmem:[#allocation5 + $0x508] sm:$0xff] %v4280
    %5305 = vst [vmem:[#allocation5 + $0x510] sm:$0xff] %v4281
    %5306 = vst [vmem:[#allocation5 + $0x518] sm:$0xff] %v4282
    %5307 = vst [vmem:[#allocation5 + $0x520] sm:$0xff] %v4283
    %5308 = vst [vmem:[#allocation5 + $0x528] sm:$0xff] %v4284
    %5309 = vst [vmem:[#allocation5 + $0x530] sm:$0xff] %v4285
    %5310 = vst [vmem:[#allocation5 + $0x538] sm:$0xff] %v4286
    %5311 = vst [vmem:[#allocation5 + $0x540] sm:$0xff] %v4287
    %5312 = vst [vmem:[#allocation5 + $0x548] sm:$0xff] %v4288
    %5313 = vst [vmem:[#allocation5 + $0x550] sm:$0xff] %v4289
    %5314 = vst [vmem:[#allocation5 + $0x558] sm:$0xff] %v4290
    %5315 = vst [vmem:[#allocation5 + $0x560] sm:$0xff] %v4291
    %5316 = vst [vmem:[#allocation5 + $0x568] sm:$0xff] %v4292
    %5317 = vst [vmem:[#allocation5 + $0x570] sm:$0xff] %v4293
    %5318 = vst [vmem:[#allocation5 + $0x578] sm:$0xff] %v4294
    %5319 = vst [vmem:[#allocation5 + $0x580] sm:$0xff] %v4295
    %5320 = vst [vmem:[#allocation5 + $0x588] sm:$0xff] %v4296
    %5321 = vst [vmem:[#allocation5 + $0x590] sm:$0xff] %v4297
    %5322 = vst [vmem:[#allocation5 + $0x598] sm:$0xff] %v4298
    %5323 = vst [vmem:[#allocation5 + $0x5a0] sm:$0xff] %v4299
    %5324 = vst [vmem:[#allocation5 + $0x5a8] sm:$0xff] %v4300
    %5325 = vst [vmem:[#allocation5 + $0x5b0] sm:$0xff] %v4301
    %5326 = vst [vmem:[#allocation5 + $0x5b8] sm:$0xff] %v4302
    %5327 = vst [vmem:[#allocation5 + $0x5c0] sm:$0xff] %v4303
    %5328 = vst [vmem:[#allocation5 + $0x5c8] sm:$0xff] %v4304
    %5329 = vst [vmem:[#allocation5 + $0x5d0] sm:$0xff] %v4305
    %5330 = vst [vmem:[#allocation5 + $0x5d8] sm:$0xff] %v4306
    %5331 = vst [vmem:[#allocation5 + $0x5e0] sm:$0xff] %v4307
    %5332 = vst [vmem:[#allocation5 + $0x5e8] sm:$0xff] %v4308
    %5333 = vst [vmem:[#allocation5 + $0x5f0] sm:$0xff] %v4309
    %5334 = vst [vmem:[#allocation5 + $0x5f8] sm:$0xff] %v4310
    %5335 = vst [vmem:[#allocation5 + $0x600] sm:$0xff] %v4311
    %5336 = vst [vmem:[#allocation5 + $0x608] sm:$0xff] %v4312
    %5337 = vst [vmem:[#allocation5 + $0x610] sm:$0xff] %v4313
    %5338 = vst [vmem:[#allocation5 + $0x618] sm:$0xff] %v4314
    %5339 = vst [vmem:[#allocation5 + $0x620] sm:$0xff] %v4315
    %5340 = vst [vmem:[#allocation5 + $0x628] sm:$0xff] %v4316
    %5341 = vst [vmem:[#allocation5 + $0x630] sm:$0xff] %v4317
    %5342 = vst [vmem:[#allocation5 + $0x638] sm:$0xff] %v4318
    %5343 = vst [vmem:[#allocation5 + $0x640] sm:$0xff] %v4319
    %5344 = vst [vmem:[#allocation5 + $0x648] sm:$0xff] %v4320
    %5345 = vst [vmem:[#allocation5 + $0x650] sm:$0xff] %v4321
    %5346 = vst [vmem:[#allocation5 + $0x658] sm:$0xff] %v4322
    %5347 = vst [vmem:[#allocation5 + $0x660] sm:$0xff] %v4323
    %5348 = vst [vmem:[#allocation5 + $0x668] sm:$0xff] %v4324
    %5349 = vst [vmem:[#allocation5 + $0x670] sm:$0xff] %v4325
    %5350 = vst [vmem:[#allocation5 + $0x678] sm:$0xff] %v4326
    %5351 = vst [vmem:[#allocation5 + $0x680] sm:$0xff] %v4327
    %5352 = vst [vmem:[#allocation5 + $0x688] sm:$0xff] %v4328
    %5353 = vst [vmem:[#allocation5 + $0x690] sm:$0xff] %v4329
    %5354 = vst [vmem:[#allocation5 + $0x698] sm:$0xff] %v4330
    %5355 = vst [vmem:[#allocation5 + $0x6a0] sm:$0xff] %v4331
    %5356 = vst [vmem:[#allocation5 + $0x6a8] sm:$0xff] %v4332
    %5357 = vst [vmem:[#allocation5 + $0x6b0] sm:$0xff] %v4333
    %5358 = vst [vmem:[#allocation5 + $0x6b8] sm:$0xff] %v4334
    %5359 = vst [vmem:[#allocation5 + $0x6c0] sm:$0xff] %v4335
    %5360 = vst [vmem:[#allocation5 + $0x6c8] sm:$0xff] %v4336
    %5361 = vst [vmem:[#allocation5 + $0x6d0] sm:$0xff] %v4337
    %5362 = vst [vmem:[#allocation5 + $0x6d8] sm:$0xff] %v4338
    %5363 = vst [vmem:[#allocation5 + $0x6e0] sm:$0xff] %v4339
    %5364 = vst [vmem:[#allocation5 + $0x6e8] sm:$0xff] %v4340
    %5365 = vst [vmem:[#allocation5 + $0x6f0] sm:$0xff] %v4341
    %5366 = vst [vmem:[#allocation5 + $0x6f8] sm:$0xff] %v4342
    %5367 = vst [vmem:[#allocation5 + $0x700] sm:$0xff] %v4343
    %5368 = vst [vmem:[#allocation5 + $0x708] sm:$0xff] %v4344
    %5369 = vst [vmem:[#allocation5 + $0x710] sm:$0xff] %v4345
    %5370 = vst [vmem:[#allocation5 + $0x718] sm:$0xff] %v4346
    %5371 = vst [vmem:[#allocation5 + $0x720] sm:$0xff] %v4347
    %5372 = vst [vmem:[#allocation5 + $0x728] sm:$0xff] %v4348
    %5373 = vst [vmem:[#allocation5 + $0x730] sm:$0xff] %v4349
    %5374 = vst [vmem:[#allocation5 + $0x738] sm:$0xff] %v4350
    %5375 = vst [vmem:[#allocation5 + $0x740] sm:$0xff] %v4351
    %5376 = vst [vmem:[#allocation5 + $0x748] sm:$0xff] %v4352
    %5377 = vst [vmem:[#allocation5 + $0x750] sm:$0xff] %v4353
    %5378 = vst [vmem:[#allocation5 + $0x758] sm:$0xff] %v4354
    %5379 = vst [vmem:[#allocation5 + $0x760] sm:$0xff] %v4355
    %5380 = vst [vmem:[#allocation5 + $0x768] sm:$0xff] %v4356
    %5381 = vst [vmem:[#allocation5 + $0x770] sm:$0xff] %v4357
    %5382 = vst [vmem:[#allocation5 + $0x778] sm:$0xff] %v4358
    %5383 = vst [vmem:[#allocation5 + $0x780] sm:$0xff] %v4359
    %5384 = vst [vmem:[#allocation5 + $0x788] sm:$0xff] %v4360
    %5385 = vst [vmem:[#allocation5 + $0x790] sm:$0xff] %v4361
    %5386 = vst [vmem:[#allocation5 + $0x798] sm:$0xff] %v4362
    %5387 = vst [vmem:[#allocation5 + $0x7a0] sm:$0xff] %v4363
    %5388 = vst [vmem:[#allocation5 + $0x7a8] sm:$0xff] %v4364
    %5389 = vst [vmem:[#allocation5 + $0x7b0] sm:$0xff] %v4365
    %5390 = vst [vmem:[#allocation5 + $0x7b8] sm:$0xff] %v4366
    %5391 = vst [vmem:[#allocation5 + $0x7c0] sm:$0xff] %v4367
    %5392 = vst [vmem:[#allocation5 + $0x7c8] sm:$0xff] %v4368
    %5393 = vst [vmem:[#allocation5 + $0x7d0] sm:$0xff] %v4369
    %5394 = vst [vmem:[#allocation5 + $0x7d8] sm:$0xff] %v4370
    %5395 = vst [vmem:[#allocation5 + $0x7e0] sm:$0xff] %v4371
    %5396 = vst [vmem:[#allocation5 + $0x7e8] sm:$0xff] %v4372
    %5397 = vst [vmem:[#allocation5 + $0x7f0] sm:$0xff] %v4373
    %5398 = vst [vmem:[#allocation5 + $0x7f8] sm:$0xff] %v4374
    %5399 = vst [vmem:[#allocation5 + $0x800] sm:$0xff] %v4375
    %5400 = vst [vmem:[#allocation5 + $0x808] sm:$0xff] %v4376
    %5401 = vst [vmem:[#allocation5 + $0x810] sm:$0xff] %v4377
    %5402 = vst [vmem:[#allocation5 + $0x818] sm:$0xff] %v4378
    %5403 = vst [vmem:[#allocation5 + $0x820] sm:$0xff] %v4379
    %5404 = vst [vmem:[#allocation5 + $0x828] sm:$0xff] %v4380
    %5405 = vst [vmem:[#allocation5 + $0x830] sm:$0xff] %v4381
    %5406 = vst [vmem:[#allocation5 + $0x838] sm:$0xff] %v4382
    %5407 = vst [vmem:[#allocation5 + $0x840] sm:$0xff] %v4383
    %5408 = vst [vmem:[#allocation5 + $0x848] sm:$0xff] %v4384
    %5409 = vst [vmem:[#allocation5 + $0x850] sm:$0xff] %v4385
    %5410 = vst [vmem:[#allocation5 + $0x858] sm:$0xff] %v4386
    %5411 = vst [vmem:[#allocation5 + $0x860] sm:$0xff] %v4387
    %5412 = vst [vmem:[#allocation5 + $0x868] sm:$0xff] %v4388
    %5413 = vst [vmem:[#allocation5 + $0x870] sm:$0xff] %v4389
    %5414 = vst [vmem:[#allocation5 + $0x878] sm:$0xff] %v4390
    %5415 = vst [vmem:[#allocation5 + $0x880] sm:$0xff] %v4391
    %5416 = vst [vmem:[#allocation5 + $0x888] sm:$0xff] %v4392
    %5417 = vst [vmem:[#allocation5 + $0x890] sm:$0xff] %v4393
    %5418 = vst [vmem:[#allocation5 + $0x898] sm:$0xff] %v4394
    %5419 = vst [vmem:[#allocation5 + $0x8a0] sm:$0xff] %v4395
    %5420 = vst [vmem:[#allocation5 + $0x8a8] sm:$0xff] %v4396
    %5421 = vst [vmem:[#allocation5 + $0x8b0] sm:$0xff] %v4397
    %5422 = vst [vmem:[#allocation5 + $0x8b8] sm:$0xff] %v4398
    %5423 = vst [vmem:[#allocation5 + $0x8c0] sm:$0xff] %v4399
    %5424 = vst [vmem:[#allocation5 + $0x8c8] sm:$0xff] %v4400
    %5425 = vst [vmem:[#allocation5 + $0x8d0] sm:$0xff] %v4401
    %5426 = vst [vmem:[#allocation5 + $0x8d8] sm:$0xff] %v4402
    %5427 = vst [vmem:[#allocation5 + $0x8e0] sm:$0xff] %v4403
    %5428 = vst [vmem:[#allocation5 + $0x8e8] sm:$0xff] %v4404
    %5429 = vst [vmem:[#allocation5 + $0x8f0] sm:$0xff] %v4405
    %5430 = vst [vmem:[#allocation5 + $0x8f8] sm:$0xff] %v4406
    %5431 = vst [vmem:[#allocation5 + $0x900] sm:$0xff] %v4407
    %5432 = vst [vmem:[#allocation5 + $0x908] sm:$0xff] %v4408
    %5433 = vst [vmem:[#allocation5 + $0x910] sm:$0xff] %v4409
    %5434 = vst [vmem:[#allocation5 + $0x918] sm:$0xff] %v4410
    %5435 = vst [vmem:[#allocation5 + $0x920] sm:$0xff] %v4411
    %5436 = vst [vmem:[#allocation5 + $0x928] sm:$0xff] %v4412
    %5437 = vst [vmem:[#allocation5 + $0x930] sm:$0xff] %v4413
    %5438 = vst [vmem:[#allocation5 + $0x938] sm:$0xff] %v4414
    %5439 = vst [vmem:[#allocation5 + $0x940] sm:$0xff] %v4415
    %5440 = vst [vmem:[#allocation5 + $0x948] sm:$0xff] %v4416
    %5441 = vst [vmem:[#allocation5 + $0x950] sm:$0xff] %v4417
    %5442 = vst [vmem:[#allocation5 + $0x958] sm:$0xff] %v4418
    %5443 = vst [vmem:[#allocation5 + $0x960] sm:$0xff] %v4419
    %5444 = vst [vmem:[#allocation5 + $0x968] sm:$0xff] %v4420
    %5445 = vst [vmem:[#allocation5 + $0x970] sm:$0xff] %v4421
    %5446 = vst [vmem:[#allocation5 + $0x978] sm:$0xff] %v4422
    %5447 = vst [vmem:[#allocation5 + $0x980] sm:$0xff] %v4423
    %5448 = vst [vmem:[#allocation5 + $0x988] sm:$0xff] %v4424
    %5449 = vst [vmem:[#allocation5 + $0x990] sm:$0xff] %v4425
    %5450 = vst [vmem:[#allocation5 + $0x998] sm:$0xff] %v4426
    %5451 = vst [vmem:[#allocation5 + $0x9a0] sm:$0xff] %v4427
    %5452 = vst [vmem:[#allocation5 + $0x9a8] sm:$0xff] %v4428
    %5453 = vst [vmem:[#allocation5 + $0x9b0] sm:$0xff] %v4429
    %5454 = vst [vmem:[#allocation5 + $0x9b8] sm:$0xff] %v4430
    %5455 = vst [vmem:[#allocation5 + $0x9c0] sm:$0xff] %v4431
    %5456 = vst [vmem:[#allocation5 + $0x9c8] sm:$0xff] %v4432
    %5457 = vst [vmem:[#allocation5 + $0x9d0] sm:$0xff] %v4433
    %5458 = vst [vmem:[#allocation5 + $0x9d8] sm:$0xff] %v4434
    %5459 = vst [vmem:[#allocation5 + $0x9e0] sm:$0xff] %v4435
    %5460 = vst [vmem:[#allocation5 + $0x9e8] sm:$0xff] %v4436
    %5461 = vst [vmem:[#allocation5 + $0x9f0] sm:$0xff] %v4437
    %5462 = vst [vmem:[#allocation5 + $0x9f8] sm:$0xff] %v4438
    %5463 = vst [vmem:[#allocation5 + $0xa00] sm:$0xff] %v4439
    %5464 = vst [vmem:[#allocation5 + $0xa08] sm:$0xff] %v4440
    %5465 = vst [vmem:[#allocation5 + $0xa10] sm:$0xff] %v4441
    %5466 = vst [vmem:[#allocation5 + $0xa18] sm:$0xff] %v4442
    %5467 = vst [vmem:[#allocation5 + $0xa20] sm:$0xff] %v4443
    %5468 = vst [vmem:[#allocation5 + $0xa28] sm:$0xff] %v4444
    %5469 = vst [vmem:[#allocation5 + $0xa30] sm:$0xff] %v4445
    %5470 = vst [vmem:[#allocation5 + $0xa38] sm:$0xff] %v4446
    %5471 = vst [vmem:[#allocation5 + $0xa40] sm:$0xff] %v4447
    %5472 = vst [vmem:[#allocation5 + $0xa48] sm:$0xff] %v4448
    %5473 = vst [vmem:[#allocation5 + $0xa50] sm:$0xff] %v4449
    %5474 = vst [vmem:[#allocation5 + $0xa58] sm:$0xff] %v4450
    %5475 = vst [vmem:[#allocation5 + $0xa60] sm:$0xff] %v4451
    %5476 = vst [vmem:[#allocation5 + $0xa68] sm:$0xff] %v4452
    %5477 = vst [vmem:[#allocation5 + $0xa70] sm:$0xff] %v4453
    %5478 = vst [vmem:[#allocation5 + $0xa78] sm:$0xff] %v4454
    %5479 = vst [vmem:[#allocation5 + $0xa80] sm:$0xff] %v4455
    %5480 = vst [vmem:[#allocation5 + $0xa88] sm:$0xff] %v4456
    %5481 = vst [vmem:[#allocation5 + $0xa90] sm:$0xff] %v4457
    %5482 = vst [vmem:[#allocation5 + $0xa98] sm:$0xff] %v4458
    %5483 = vst [vmem:[#allocation5 + $0xaa0] sm:$0xff] %v4459
    %5484 = vst [vmem:[#allocation5 + $0xaa8] sm:$0xff] %v4460
    %5485 = vst [vmem:[#allocation5 + $0xab0] sm:$0xff] %v4461
    %5486 = vst [vmem:[#allocation5 + $0xab8] sm:$0xff] %v4462
    %5487 = vst [vmem:[#allocation5 + $0xac0] sm:$0xff] %v4463
    %5488 = vst [vmem:[#allocation5 + $0xac8] sm:$0xff] %v4464
    %5489 = vst [vmem:[#allocation5 + $0xad0] sm:$0xff] %v4465
    %5490 = vst [vmem:[#allocation5 + $0xad8] sm:$0xff] %v4466
    %5491 = vst [vmem:[#allocation5 + $0xae0] sm:$0xff] %v4467
    %5492 = vst [vmem:[#allocation5 + $0xae8] sm:$0xff] %v4468
    %5493 = vst [vmem:[#allocation5 + $0xaf0] sm:$0xff] %v4469
    %5494 = vst [vmem:[#allocation5 + $0xaf8] sm:$0xff] %v4470
    %5495 = vst [vmem:[#allocation5 + $0xb00] sm:$0xff] %v4471
    %5496 = vst [vmem:[#allocation5 + $0xb08] sm:$0xff] %v4472
    %5497 = vst [vmem:[#allocation5 + $0xb10] sm:$0xff] %v4473
    %5498 = vst [vmem:[#allocation5 + $0xb18] sm:$0xff] %v4474
    %5499 = vst [vmem:[#allocation5 + $0xb20] sm:$0xff] %v4475
    %5500 = vst [vmem:[#allocation5 + $0xb28] sm:$0xff] %v4476
    %5501 = vst [vmem:[#allocation5 + $0xb30] sm:$0xff] %v4477
    %5502 = vst [vmem:[#allocation5 + $0xb38] sm:$0xff] %v4478
    %5503 = vst [vmem:[#allocation5 + $0xb40] sm:$0xff] %v4479
    %5504 = vst [vmem:[#allocation5 + $0xb48] sm:$0xff] %v4480
    %5505 = vst [vmem:[#allocation5 + $0xb50] sm:$0xff] %v4481
    %5506 = vst [vmem:[#allocation5 + $0xb58] sm:$0xff] %v4482
    %5507 = vst [vmem:[#allocation5 + $0xb60] sm:$0xff] %v4483
    %5508 = vst [vmem:[#allocation5 + $0xb68] sm:$0xff] %v4484
    %5509 = vst [vmem:[#allocation5 + $0xb70] sm:$0xff] %v4485
    %5510 = vst [vmem:[#allocation5 + $0xb78] sm:$0xff] %v4486
    %5511 = vst [vmem:[#allocation5 + $0xb80] sm:$0xff] %v4487
    %5512 = vst [vmem:[#allocation5 + $0xb88] sm:$0xff] %v4488
    %5513 = vst [vmem:[#allocation5 + $0xb90] sm:$0xff] %v4489
    %5514 = vst [vmem:[#allocation5 + $0xb98] sm:$0xff] %v4490
    %5515 = vst [vmem:[#allocation5 + $0xba0] sm:$0xff] %v4491
    %5516 = vst [vmem:[#allocation5 + $0xba8] sm:$0xff] %v4492
    %5517 = vst [vmem:[#allocation5 + $0xbb0] sm:$0xff] %v4493
    %5518 = vst [vmem:[#allocation5 + $0xbb8] sm:$0xff] %v4494
    %5519 = vst [vmem:[#allocation5 + $0xbc0] sm:$0xff] %v4495
    %5520 = vst [vmem:[#allocation5 + $0xbc8] sm:$0xff] %v4496
    %5521 = vst [vmem:[#allocation5 + $0xbd0] sm:$0xff] %v4497
    %5522 = vst [vmem:[#allocation5 + $0xbd8] sm:$0xff] %v4498
    %5523 = vst [vmem:[#allocation5 + $0xbe0] sm:$0xff] %v4499
    %5524 = vst [vmem:[#allocation5 + $0xbe8] sm:$0xff] %v4500
    %5525 = vst [vmem:[#allocation5 + $0xbf0] sm:$0xff] %v4501
    %5526 = vst [vmem:[#allocation5 + $0xbf8] sm:$0xff] %v4502
    %5527 = vst [vmem:[#allocation5 + $0xc00] sm:$0xff] %v4503
    %5528 = vst [vmem:[#allocation5 + $0xc08] sm:$0xff] %v4504
    %5529 = vst [vmem:[#allocation5 + $0xc10] sm:$0xff] %v4505
    %5530 = vst [vmem:[#allocation5 + $0xc18] sm:$0xff] %v4506
    %5531 = vst [vmem:[#allocation5 + $0xc20] sm:$0xff] %v4507
    %5532 = vst [vmem:[#allocation5 + $0xc28] sm:$0xff] %v4508
    %5533 = vst [vmem:[#allocation5 + $0xc30] sm:$0xff] %v4509
    %5534 = vst [vmem:[#allocation5 + $0xc38] sm:$0xff] %v4510
    %5535 = vst [vmem:[#allocation5 + $0xc40] sm:$0xff] %v4511
    %5536 = vst [vmem:[#allocation5 + $0xc48] sm:$0xff] %v4512
    %5537 = vst [vmem:[#allocation5 + $0xc50] sm:$0xff] %v4513
    %5538 = vst [vmem:[#allocation5 + $0xc58] sm:$0xff] %v4514
    %5539 = vst [vmem:[#allocation5 + $0xc60] sm:$0xff] %v4515
    %5540 = vst [vmem:[#allocation5 + $0xc68] sm:$0xff] %v4516
    %5541 = vst [vmem:[#allocation5 + $0xc70] sm:$0xff] %v4517
    %5542 = vst [vmem:[#allocation5 + $0xc78] sm:$0xff] %v4518
    %5543 = vst [vmem:[#allocation5 + $0xc80] sm:$0xff] %v4519
    %5544 = vst [vmem:[#allocation5 + $0xc88] sm:$0xff] %v4520
    %5545 = vst [vmem:[#allocation5 + $0xc90] sm:$0xff] %v4521
    %5546 = vst [vmem:[#allocation5 + $0xc98] sm:$0xff] %v4522
    %5547 = vst [vmem:[#allocation5 + $0xca0] sm:$0xff] %v4523
    %5548 = vst [vmem:[#allocation5 + $0xca8] sm:$0xff] %v4524
    %5549 = vst [vmem:[#allocation5 + $0xcb0] sm:$0xff] %v4525
    %5550 = vst [vmem:[#allocation5 + $0xcb8] sm:$0xff] %v4526
    %5551 = vst [vmem:[#allocation5 + $0xcc0] sm:$0xff] %v4527
    %5552 = vst [vmem:[#allocation5 + $0xcc8] sm:$0xff] %v4528
    %5553 = vst [vmem:[#allocation5 + $0xcd0] sm:$0xff] %v4529
    %5554 = vst [vmem:[#allocation5 + $0xcd8] sm:$0xff] %v4530
    %5555 = vst [vmem:[#allocation5 + $0xce0] sm:$0xff] %v4531
    %5556 = vst [vmem:[#allocation5 + $0xce8] sm:$0xff] %v4532
    %5557 = vst [vmem:[#allocation5 + $0xcf0] sm:$0xff] %v4533
    %5558 = vst [vmem:[#allocation5 + $0xcf8] sm:$0xff] %v4534
    %5559 = vst [vmem:[#allocation5 + $0xd00] sm:$0xff] %v4535
    %5560 = vst [vmem:[#allocation5 + $0xd08] sm:$0xff] %v4536
    %5561 = vst [vmem:[#allocation5 + $0xd10] sm:$0xff] %v4537
    %5562 = vst [vmem:[#allocation5 + $0xd18] sm:$0xff] %v4538
    %5563 = vst [vmem:[#allocation5 + $0xd20] sm:$0xff] %v4539
    %5564 = vst [vmem:[#allocation5 + $0xd28] sm:$0xff] %v4540
    %5565 = vst [vmem:[#allocation5 + $0xd30] sm:$0xff] %v4541
    %5566 = vst [vmem:[#allocation5 + $0xd38] sm:$0xff] %v4542
    %5567 = vst [vmem:[#allocation5 + $0xd40] sm:$0xff] %v4543
    %5568 = vst [vmem:[#allocation5 + $0xd48] sm:$0xff] %v4544
    %5569 = vst [vmem:[#allocation5 + $0xd50] sm:$0xff] %v4545
    %5570 = vst [vmem:[#allocation5 + $0xd58] sm:$0xff] %v4546
    %5571 = vst [vmem:[#allocation5 + $0xd60] sm:$0xff] %v4547
    %5572 = vst [vmem:[#allocation5 + $0xd68] sm:$0xff] %v4548
    %5573 = vst [vmem:[#allocation5 + $0xd70] sm:$0xff] %v4549
    %5574 = vst [vmem:[#allocation5 + $0xd78] sm:$0xff] %v4550
    %5575 = vst [vmem:[#allocation5 + $0xd80] sm:$0xff] %v4551
    %5576 = vst [vmem:[#allocation5 + $0xd88] sm:$0xff] %v4552
    %5577 = vst [vmem:[#allocation5 + $0xd90] sm:$0xff] %v4553
    %5578 = vst [vmem:[#allocation5 + $0xd98] sm:$0xff] %v4554
    %5579 = vst [vmem:[#allocation5 + $0xda0] sm:$0xff] %v4555
    %5580 = vst [vmem:[#allocation5 + $0xda8] sm:$0xff] %v4556
    %5581 = vst [vmem:[#allocation5 + $0xdb0] sm:$0xff] %v4557
    %5582 = vst [vmem:[#allocation5 + $0xdb8] sm:$0xff] %v4558
    %5583 = vst [vmem:[#allocation5 + $0xdc0] sm:$0xff] %v4559
    %5584 = vst [vmem:[#allocation5 + $0xdc8] sm:$0xff] %v4560
    %5585 = vst [vmem:[#allocation5 + $0xdd0] sm:$0xff] %v4561
    %5586 = vst [vmem:[#allocation5 + $0xdd8] sm:$0xff] %v4562
    %5587 = vst [vmem:[#allocation5 + $0xde0] sm:$0xff] %v4563
    %5588 = vst [vmem:[#allocation5 + $0xde8] sm:$0xff] %v4564
    %5589 = vst [vmem:[#allocation5 + $0xdf0] sm:$0xff] %v4565
    %5590 = vst [vmem:[#allocation5 + $0xdf8] sm:$0xff] %v4566
    %5591 = vst [vmem:[#allocation5 + $0xe00] sm:$0xff] %v4567
    %5592 = vst [vmem:[#allocation5 + $0xe08] sm:$0xff] %v4568
    %5593 = vst [vmem:[#allocation5 + $0xe10] sm:$0xff] %v4569
    %5594 = vst [vmem:[#allocation5 + $0xe18] sm:$0xff] %v4570
    %5595 = vst [vmem:[#allocation5 + $0xe20] sm:$0xff] %v4571
    %5596 = vst [vmem:[#allocation5 + $0xe28] sm:$0xff] %v4572
    %5597 = vst [vmem:[#allocation5 + $0xe30] sm:$0xff] %v4573
    %5598 = vst [vmem:[#allocation5 + $0xe38] sm:$0xff] %v4574
    %5599 = vst [vmem:[#allocation5 + $0xe40] sm:$0xff] %v4575
    %5600 = vst [vmem:[#allocation5 + $0xe48] sm:$0xff] %v4576
    %5601 = vst [vmem:[#allocation5 + $0xe50] sm:$0xff] %v4577
    %5602 = vst [vmem:[#allocation5 + $0xe58] sm:$0xff] %v4578
    %5603 = vst [vmem:[#allocation5 + $0xe60] sm:$0xff] %v4579
    %5604 = vst [vmem:[#allocation5 + $0xe68] sm:$0xff] %v4580
    %5605 = vst [vmem:[#allocation5 + $0xe70] sm:$0xff] %v4581
    %5606 = vst [vmem:[#allocation5 + $0xe78] sm:$0xff] %v4582
    %5607 = vst [vmem:[#allocation5 + $0xe80] sm:$0xff] %v4583
    %5608 = vst [vmem:[#allocation5 + $0xe88] sm:$0xff] %v4584
    %5609 = vst [vmem:[#allocation5 + $0xe90] sm:$0xff] %v4585
    %5610 = vst [vmem:[#allocation5 + $0xe98] sm:$0xff] %v4586
    %5611 = vst [vmem:[#allocation5 + $0xea0] sm:$0xff] %v4587
    %5612 = vst [vmem:[#allocation5 + $0xea8] sm:$0xff] %v4588
    %5613 = vst [vmem:[#allocation5 + $0xeb0] sm:$0xff] %v4589
    %5614 = vst [vmem:[#allocation5 + $0xeb8] sm:$0xff] %v4590
    %5615 = vst [vmem:[#allocation5 + $0xec0] sm:$0xff] %v4591
    %5616 = vst [vmem:[#allocation5 + $0xec8] sm:$0xff] %v4592
    %5617 = vst [vmem:[#allocation5 + $0xed0] sm:$0xff] %v4593
    %5618 = vst [vmem:[#allocation5 + $0xed8] sm:$0xff] %v4594
    %5619 = vst [vmem:[#allocation5 + $0xee0] sm:$0xff] %v4595
    %5620 = vst [vmem:[#allocation5 + $0xee8] sm:$0xff] %v4596
    %5621 = vst [vmem:[#allocation5 + $0xef0] sm:$0xff] %v4597
    %5622 = vst [vmem:[#allocation5 + $0xef8] sm:$0xff] %v4598
    %5623 = vst [vmem:[#allocation5 + $0xf00] sm:$0xff] %v4599
    %5624 = vst [vmem:[#allocation5 + $0xf08] sm:$0xff] %v4600
    %5625 = vst [vmem:[#allocation5 + $0xf10] sm:$0xff] %v4601
    %5626 = vst [vmem:[#allocation5 + $0xf18] sm:$0xff] %v4602
    %5627 = vst [vmem:[#allocation5 + $0xf20] sm:$0xff] %v4603
    %5628 = vst [vmem:[#allocation5 + $0xf28] sm:$0xff] %v4604
    %5629 = vst [vmem:[#allocation5 + $0xf30] sm:$0xff] %v4605
    %5630 = vst [vmem:[#allocation5 + $0xf38] sm:$0xff] %v4606
    %5631 = vst [vmem:[#allocation5 + $0xf40] sm:$0xff] %v4607
    %5632 = vst [vmem:[#allocation5 + $0xf48] sm:$0xff] %v4608
    %5633 = vst [vmem:[#allocation5 + $0xf50] sm:$0xff] %v4609
    %5634 = vst [vmem:[#allocation5 + $0xf58] sm:$0xff] %v4610
    %5635 = vst [vmem:[#allocation5 + $0xf60] sm:$0xff] %v4611
    %5636 = vst [vmem:[#allocation5 + $0xf68] sm:$0xff] %v4612
    %5637 = vst [vmem:[#allocation5 + $0xf70] sm:$0xff] %v4613
    %5638 = vst [vmem:[#allocation5 + $0xf78] sm:$0xff] %v4614
    %5639 = vst [vmem:[#allocation5 + $0xf80] sm:$0xff] %v4615
    %5640 = vst [vmem:[#allocation5 + $0xf88] sm:$0xff] %v4616
    %5641 = vst [vmem:[#allocation5 + $0xf90] sm:$0xff] %v4617
    %5642 = vst [vmem:[#allocation5 + $0xf98] sm:$0xff] %v4618
    %5643 = vst [vmem:[#allocation5 + $0xfa0] sm:$0xff] %v4619
    %5644 = vst [vmem:[#allocation5 + $0xfa8] sm:$0xff] %v4620
    %5645 = vst [vmem:[#allocation5 + $0xfb0] sm:$0xff] %v4621
    %5646 = vst [vmem:[#allocation5 + $0xfb8] sm:$0xff] %v4622
    %5647 = vst [vmem:[#allocation5 + $0xfc0] sm:$0xff] %v4623
    %5648 = vst [vmem:[#allocation5 + $0xfc8] sm:$0xff] %v4624
    %5649 = vst [vmem:[#allocation5 + $0xfd0] sm:$0xff] %v4625
    %5650 = vst [vmem:[#allocation5 + $0xfd8] sm:$0xff] %v4626
    %5651 = vst [vmem:[#allocation5 + $0xfe0] sm:$0xff] %v4627
    %5652 = vst [vmem:[#allocation5 + $0xfe8] sm:$0xff] %v4628
    %5653 = vst [vmem:[#allocation5 + $0xff0] sm:$0xff] %v4629
    %5654 = vst [vmem:[#allocation5 + $0xff8] sm:$0xff] %v4630
    %5655 = vst [vmem:[#allocation5 + $0x1000] sm:$0xff] %v4631
    %5656 = vst [vmem:[#allocation5 + $0x1008] sm:$0xff] %v4632
    %5657 = vst [vmem:[#allocation5 + $0x1010] sm:$0xff] %v4633
    %5658 = vst [vmem:[#allocation5 + $0x1018] sm:$0xff] %v4634
    %5659 = vst [vmem:[#allocation5 + $0x1020] sm:$0xff] %v4635
    %5660 = vst [vmem:[#allocation5 + $0x1028] sm:$0xff] %v4636
    %5661 = vst [vmem:[#allocation5 + $0x1030] sm:$0xff] %v4637
    %5662 = vst [vmem:[#allocation5 + $0x1038] sm:$0xff] %v4638
    %5663 = vst [vmem:[#allocation5 + $0x1040] sm:$0xff] %v4639
    %5664 = vst [vmem:[#allocation5 + $0x1048] sm:$0xff] %v4640
    %5665 = vst [vmem:[#allocation5 + $0x1050] sm:$0xff] %v4641
    %5666 = vst [vmem:[#allocation5 + $0x1058] sm:$0xff] %v4642
    %5667 = vst [vmem:[#allocation5 + $0x1060] sm:$0xff] %v4643
    %5668 = vst [vmem:[#allocation5 + $0x1068] sm:$0xff] %v4644
    %5669 = vst [vmem:[#allocation5 + $0x1070] sm:$0xff] %v4645
    %5670 = vst [vmem:[#allocation5 + $0x1078] sm:$0xff] %v4646
    %5671 = vst [vmem:[#allocation5 + $0x1080] sm:$0xff] %v4647
    %5672 = vst [vmem:[#allocation5 + $0x1088] sm:$0xff] %v4648
    %5673 = vst [vmem:[#allocation5 + $0x1090] sm:$0xff] %v4649
    %5674 = vst [vmem:[#allocation5 + $0x1098] sm:$0xff] %v4650
    %5675 = vst [vmem:[#allocation5 + $0x10a0] sm:$0xff] %v4651
    %5676 = vst [vmem:[#allocation5 + $0x10a8] sm:$0xff] %v4652
    %5677 = vst [vmem:[#allocation5 + $0x10b0] sm:$0xff] %v4653
    %5678 = vst [vmem:[#allocation5 + $0x10b8] sm:$0xff] %v4654
    %5679 = vst [vmem:[#allocation5 + $0x10c0] sm:$0xff] %v4655
    %5680 = vst [vmem:[#allocation5 + $0x10c8] sm:$0xff] %v4656
    %5681 = vst [vmem:[#allocation5 + $0x10d0] sm:$0xff] %v4657
    %5682 = vst [vmem:[#allocation5 + $0x10d8] sm:$0xff] %v4658
    %5683 = vst [vmem:[#allocation5 + $0x10e0] sm:$0xff] %v4659
    %5684 = vst [vmem:[#allocation5 + $0x10e8] sm:$0xff] %v4660
    %5685 = vst [vmem:[#allocation5 + $0x10f0] sm:$0xff] %v4661
    %5686 = vst [vmem:[#allocation5 + $0x10f8] sm:$0xff] %v4662
    %5687 = vst [vmem:[#allocation5 + $0x1100] sm:$0xff] %v4663
    %5688 = vst [vmem:[#allocation5 + $0x1108] sm:$0xff] %v4664
    %5689 = vst [vmem:[#allocation5 + $0x1110] sm:$0xff] %v4665
    %5690 = vst [vmem:[#allocation5 + $0x1118] sm:$0xff] %v4666
    %5691 = vst [vmem:[#allocation5 + $0x1120] sm:$0xff] %v4667
    %5692 = vst [vmem:[#allocation5 + $0x1128] sm:$0xff] %v4668
    %5693 = vst [vmem:[#allocation5 + $0x1130] sm:$0xff] %v4669
    %5694 = vst [vmem:[#allocation5 + $0x1138] sm:$0xff] %v4670
    %5695 = vst [vmem:[#allocation5 + $0x1140] sm:$0xff] %v4671
    %5696 = vst [vmem:[#allocation5 + $0x1148] sm:$0xff] %v4672
    %5697 = vst [vmem:[#allocation5 + $0x1150] sm:$0xff] %v4673
    %5698 = vst [vmem:[#allocation5 + $0x1158] sm:$0xff] %v4674
    %5699 = vst [vmem:[#allocation5 + $0x1160] sm:$0xff] %v4675
    %5700 = vst [vmem:[#allocation5 + $0x1168] sm:$0xff] %v4676
    %5701 = vst [vmem:[#allocation5 + $0x1170] sm:$0xff] %v4677
    %5702 = vst [vmem:[#allocation5 + $0x1178] sm:$0xff] %v4678
    %5703 = vst [vmem:[#allocation5 + $0x1180] sm:$0xff] %v4679
    %5704 = vst [vmem:[#allocation5 + $0x1188] sm:$0xff] %v4680
    %5705 = vst [vmem:[#allocation5 + $0x1190] sm:$0xff] %v4681
    %5706 = vst [vmem:[#allocation5 + $0x1198] sm:$0xff] %v4682
    %5707 = vst [vmem:[#allocation5 + $0x11a0] sm:$0xff] %v4683
    %5708 = vst [vmem:[#allocation5 + $0x11a8] sm:$0xff] %v4684
    %5709 = vst [vmem:[#allocation5 + $0x11b0] sm:$0xff] %v4685
    %5710 = vst [vmem:[#allocation5 + $0x11b8] sm:$0xff] %v4686
    %5711 = vst [vmem:[#allocation5 + $0x11c0] sm:$0xff] %v4687
    %5712 = vst [vmem:[#allocation5 + $0x11c8] sm:$0xff] %v4688
    %5713 = vst [vmem:[#allocation5 + $0x11d0] sm:$0xff] %v4689
    %5714 = vst [vmem:[#allocation5 + $0x11d8] sm:$0xff] %v4690
    %5715 = vst [vmem:[#allocation5 + $0x11e0] sm:$0xff] %v4691
    %5716 = vst [vmem:[#allocation5 + $0x11e8] sm:$0xff] %v4692
    %5717 = vst [vmem:[#allocation5 + $0x11f0] sm:$0xff] %v4693
    %5718 = vst [vmem:[#allocation5 + $0x11f8] sm:$0xff] %v4694
    %5719 = vst [vmem:[#allocation5 + $0x1200] sm:$0xff] %v4695
    %5720 = vst [vmem:[#allocation5 + $0x1208] sm:$0xff] %v4696
    %5721 = vst [vmem:[#allocation5 + $0x1210] sm:$0xff] %v4697
    %5722 = vst [vmem:[#allocation5 + $0x1218] sm:$0xff] %v4698
    %5723 = vst [vmem:[#allocation5 + $0x1220] sm:$0xff] %v4699
    %5724 = vst [vmem:[#allocation5 + $0x1228] sm:$0xff] %v4700
    %5725 = vst [vmem:[#allocation5 + $0x1230] sm:$0xff] %v4701
    %5726 = vst [vmem:[#allocation5 + $0x1238] sm:$0xff] %v4702
    %5727 = vst [vmem:[#allocation5 + $0x1240] sm:$0xff] %v4703
    %5728 = vst [vmem:[#allocation5 + $0x1248] sm:$0xff] %v4704
    %5729 = vst [vmem:[#allocation5 + $0x1250] sm:$0xff] %v4705
    %5730 = vst [vmem:[#allocation5 + $0x1258] sm:$0xff] %v4706
    %5731 = vst [vmem:[#allocation5 + $0x1260] sm:$0xff] %v4707
    %5732 = vst [vmem:[#allocation5 + $0x1268] sm:$0xff] %v4708
    %5733 = vst [vmem:[#allocation5 + $0x1270] sm:$0xff] %v4709
    %5734 = vst [vmem:[#allocation5 + $0x1278] sm:$0xff] %v4710
    %5735 = vst [vmem:[#allocation5 + $0x1280] sm:$0xff] %v4711
    %5736 = vst [vmem:[#allocation5 + $0x1288] sm:$0xff] %v4712
    %5737 = vst [vmem:[#allocation5 + $0x1290] sm:$0xff] %v4713
    %5738 = vst [vmem:[#allocation5 + $0x1298] sm:$0xff] %v4714
    %5739 = vst [vmem:[#allocation5 + $0x12a0] sm:$0xff] %v4715
    %5740 = vst [vmem:[#allocation5 + $0x12a8] sm:$0xff] %v4716
    %5741 = vst [vmem:[#allocation5 + $0x12b0] sm:$0xff] %v4717
    %5742 = vst [vmem:[#allocation5 + $0x12b8] sm:$0xff] %v4718
    %5743 = vst [vmem:[#allocation5 + $0x12c0] sm:$0xff] %v4719
    %5744 = vst [vmem:[#allocation5 + $0x12c8] sm:$0xff] %v4720
    %5745 = vst [vmem:[#allocation5 + $0x12d0] sm:$0xff] %v4721
    %5746 = vst [vmem:[#allocation5 + $0x12d8] sm:$0xff] %v4722
    %5747 = vst [vmem:[#allocation5 + $0x12e0] sm:$0xff] %v4723
    %5748 = vst [vmem:[#allocation5 + $0x12e8] sm:$0xff] %v4724
    %5749 = vst [vmem:[#allocation5 + $0x12f0] sm:$0xff] %v4725
    %5750 = vst [vmem:[#allocation5 + $0x12f8] sm:$0xff] %v4726
    %5751 = vst [vmem:[#allocation5 + $0x1300] sm:$0xff] %v4727
    %5752 = vst [vmem:[#allocation5 + $0x1308] sm:$0xff] %v4728
    %5753 = vst [vmem:[#allocation5 + $0x1310] sm:$0xff] %v4729
    %5754 = vst [vmem:[#allocation5 + $0x1318] sm:$0xff] %v4730
    %5755 = vst [vmem:[#allocation5 + $0x1320] sm:$0xff] %v4731
    %5756 = vst [vmem:[#allocation5 + $0x1328] sm:$0xff] %v4732
    %5757 = vst [vmem:[#allocation5 + $0x1330] sm:$0xff] %v4733
    %5758 = vst [vmem:[#allocation5 + $0x1338] sm:$0xff] %v4734
    %5759 = vst [vmem:[#allocation5 + $0x1340] sm:$0xff] %v4735
    %5760 = vst [vmem:[#allocation5 + $0x1348] sm:$0xff] %v4736
    %5761 = vst [vmem:[#allocation5 + $0x1350] sm:$0xff] %v4737
    %5762 = vst [vmem:[#allocation5 + $0x1358] sm:$0xff] %v4738
    %5763 = vst [vmem:[#allocation5 + $0x1360] sm:$0xff] %v4739
    %5764 = vst [vmem:[#allocation5 + $0x1368] sm:$0xff] %v4740
    %5765 = vst [vmem:[#allocation5 + $0x1370] sm:$0xff] %v4741
    %5766 = vst [vmem:[#allocation5 + $0x1378] sm:$0xff] %v4742
    %5767 = vst [vmem:[#allocation5 + $0x1380] sm:$0xff] %v4743
    %5768 = vst [vmem:[#allocation5 + $0x1388] sm:$0xff] %v4744
    %5769 = vst [vmem:[#allocation5 + $0x1390] sm:$0xff] %v4745
    %5770 = vst [vmem:[#allocation5 + $0x1398] sm:$0xff] %v4746
    %5771 = vst [vmem:[#allocation5 + $0x13a0] sm:$0xff] %v4747
    %5772 = vst [vmem:[#allocation5 + $0x13a8] sm:$0xff] %v4748
    %5773 = vst [vmem:[#allocation5 + $0x13b0] sm:$0xff] %v4749
    %5774 = vst [vmem:[#allocation5 + $0x13b8] sm:$0xff] %v4750
    %5775 = vst [vmem:[#allocation5 + $0x13c0] sm:$0xff] %v4751
    %5776 = vst [vmem:[#allocation5 + $0x13c8] sm:$0xff] %v4752
    %5777 = vst [vmem:[#allocation5 + $0x13d0] sm:$0xff] %v4753
    %5778 = vst [vmem:[#allocation5 + $0x13d8] sm:$0xff] %v4754
    %5779 = vst [vmem:[#allocation5 + $0x13e0] sm:$0xff] %v4755
    %5780 = vst [vmem:[#allocation5 + $0x13e8] sm:$0xff] %v4756
    %5781 = vst [vmem:[#allocation5 + $0x13f0] sm:$0xff] %v4757
    %5782 = vst [vmem:[#allocation5 + $0x13f8] sm:$0xff] %v4758
    %5783 = vst [vmem:[#allocation5 + $0x1400] sm:$0xff] %v4759
    %5784 = vst [vmem:[#allocation5 + $0x1408] sm:$0xff] %v4760
    %5785 = vst [vmem:[#allocation5 + $0x1410] sm:$0xff] %v4761
    %5786 = vst [vmem:[#allocation5 + $0x1418] sm:$0xff] %v4762
    %5787 = vst [vmem:[#allocation5 + $0x1420] sm:$0xff] %v4763
    %5788 = vst [vmem:[#allocation5 + $0x1428] sm:$0xff] %v4764
    %5789 = vst [vmem:[#allocation5 + $0x1430] sm:$0xff] %v4765
    %5790 = vst [vmem:[#allocation5 + $0x1438] sm:$0xff] %v4766
    %5791 = vst [vmem:[#allocation5 + $0x1440] sm:$0xff] %v4767
    %5792 = vst [vmem:[#allocation5 + $0x1448] sm:$0xff] %v4768
    %5793 = vst [vmem:[#allocation5 + $0x1450] sm:$0xff] %v4769
    %5794 = vst [vmem:[#allocation5 + $0x1458] sm:$0xff] %v4770
    %5795 = vst [vmem:[#allocation5 + $0x1460] sm:$0xff] %v4771
    %5796 = vst [vmem:[#allocation5 + $0x1468] sm:$0xff] %v4772
    %5797 = vst [vmem:[#allocation5 + $0x1470] sm:$0xff] %v4773
    %5798 = vst [vmem:[#allocation5 + $0x1478] sm:$0xff] %v4774
    %5799 = vst [vmem:[#allocation5 + $0x1480] sm:$0xff] %v4775
    %5800 = vst [vmem:[#allocation5 + $0x1488] sm:$0xff] %v4776
    %5801 = vst [vmem:[#allocation5 + $0x1490] sm:$0xff] %v4777
    %5802 = vst [vmem:[#allocation5 + $0x1498] sm:$0xff] %v4778
    %5803 = vst [vmem:[#allocation5 + $0x14a0] sm:$0xff] %v4779
    %5804 = vst [vmem:[#allocation5 + $0x14a8] sm:$0xff] %v4780
    %5805 = vst [vmem:[#allocation5 + $0x14b0] sm:$0xff] %v4781
    %5806 = vst [vmem:[#allocation5 + $0x14b8] sm:$0xff] %v4782
    %5807 = vst [vmem:[#allocation5 + $0x14c0] sm:$0xff] %v4783
    %5808 = vst [vmem:[#allocation5 + $0x14c8] sm:$0xff] %v4784
    %5809 = vst [vmem:[#allocation5 + $0x14d0] sm:$0xff] %v4785
    %5810 = vst [vmem:[#allocation5 + $0x14d8] sm:$0xff] %v4786
    %5811 = vst [vmem:[#allocation5 + $0x14e0] sm:$0xff] %v4787
    %5812 = vst [vmem:[#allocation5 + $0x14e8] sm:$0xff] %v4788
    %5813 = vst [vmem:[#allocation5 + $0x14f0] sm:$0xff] %v4789
    %5814 = vst [vmem:[#allocation5 + $0x14f8] sm:$0xff] %v4790
    %5815 = vst [vmem:[#allocation5 + $0x1500] sm:$0xff] %v4791
    %5816 = vst [vmem:[#allocation5 + $0x1508] sm:$0xff] %v4792
    %5817 = vst [vmem:[#allocation5 + $0x1510] sm:$0xff] %v4793
    %5818 = vst [vmem:[#allocation5 + $0x1518] sm:$0xff] %v4794
    %5819 = vst [vmem:[#allocation5 + $0x1520] sm:$0xff] %v4795
    %5820 = vst [vmem:[#allocation5 + $0x1528] sm:$0xff] %v4796
    %5821 = vst [vmem:[#allocation5 + $0x1530] sm:$0xff] %v4797
    %5822 = vst [vmem:[#allocation5 + $0x1538] sm:$0xff] %v4798
    %5823 = vst [vmem:[#allocation5 + $0x1540] sm:$0xff] %v4799
    %5824 = vst [vmem:[#allocation5 + $0x1548] sm:$0xff] %v4800
    %5825 = vst [vmem:[#allocation5 + $0x1550] sm:$0xff] %v4801
    %5826 = vst [vmem:[#allocation5 + $0x1558] sm:$0xff] %v4802
    %5827 = vst [vmem:[#allocation5 + $0x1560] sm:$0xff] %v4803
    %5828 = vst [vmem:[#allocation5 + $0x1568] sm:$0xff] %v4804
    %5829 = vst [vmem:[#allocation5 + $0x1570] sm:$0xff] %v4805
    %5830 = vst [vmem:[#allocation5 + $0x1578] sm:$0xff] %v4806
    %5831 = vst [vmem:[#allocation5 + $0x1580] sm:$0xff] %v4807
    %5832 = vst [vmem:[#allocation5 + $0x1588] sm:$0xff] %v4808
    %5833 = vst [vmem:[#allocation5 + $0x1590] sm:$0xff] %v4809
    %5834 = vst [vmem:[#allocation5 + $0x1598] sm:$0xff] %v4810
    %5835 = vst [vmem:[#allocation5 + $0x15a0] sm:$0xff] %v4811
    %5836 = vst [vmem:[#allocation5 + $0x15a8] sm:$0xff] %v4812
    %5837 = vst [vmem:[#allocation5 + $0x15b0] sm:$0xff] %v4813
    %5838 = vst [vmem:[#allocation5 + $0x15b8] sm:$0xff] %v4814
    %5839 = vst [vmem:[#allocation5 + $0x15c0] sm:$0xff] %v4815
    %5840 = vst [vmem:[#allocation5 + $0x15c8] sm:$0xff] %v4816
    %5841 = vst [vmem:[#allocation5 + $0x15d0] sm:$0xff] %v4817
    %5842 = vst [vmem:[#allocation5 + $0x15d8] sm:$0xff] %v4818
    %5843 = vst [vmem:[#allocation5 + $0x15e0] sm:$0xff] %v4819
    %5844 = vst [vmem:[#allocation5 + $0x15e8] sm:$0xff] %v4820
    %5845 = vst [vmem:[#allocation5 + $0x15f0] sm:$0xff] %v4821
    %5846 = vst [vmem:[#allocation5 + $0x15f8] sm:$0xff] %v4822
    %5847 = vst [vmem:[#allocation5 + $0x1600] sm:$0xff] %v4823
    %5848 = vst [vmem:[#allocation5 + $0x1608] sm:$0xff] %v4824
    %5849 = vst [vmem:[#allocation5 + $0x1610] sm:$0xff] %v4825
    %5850 = vst [vmem:[#allocation5 + $0x1618] sm:$0xff] %v4826
    %5851 = vst [vmem:[#allocation5 + $0x1620] sm:$0xff] %v4827
    %5852 = vst [vmem:[#allocation5 + $0x1628] sm:$0xff] %v4828
    %5853 = vst [vmem:[#allocation5 + $0x1630] sm:$0xff] %v4829
    %5854 = vst [vmem:[#allocation5 + $0x1638] sm:$0xff] %v4830
    %5855 = vst [vmem:[#allocation5 + $0x1640] sm:$0xff] %v4831
    %5856 = vst [vmem:[#allocation5 + $0x1648] sm:$0xff] %v4832
    %5857 = vst [vmem:[#allocation5 + $0x1650] sm:$0xff] %v4833
    %5858 = vst [vmem:[#allocation5 + $0x1658] sm:$0xff] %v4834
    %5859 = vst [vmem:[#allocation5 + $0x1660] sm:$0xff] %v4835
    %5860 = vst [vmem:[#allocation5 + $0x1668] sm:$0xff] %v4836
    %5861 = vst [vmem:[#allocation5 + $0x1670] sm:$0xff] %v4837
    %5862 = vst [vmem:[#allocation5 + $0x1678] sm:$0xff] %v4838
    %5863 = vst [vmem:[#allocation5 + $0x1680] sm:$0xff] %v4839
    %5864 = vst [vmem:[#allocation5 + $0x1688] sm:$0xff] %v4840
    %5865 = vst [vmem:[#allocation5 + $0x1690] sm:$0xff] %v4841
    %5866 = vst [vmem:[#allocation5 + $0x1698] sm:$0xff] %v4842
    %5867 = vst [vmem:[#allocation5 + $0x16a0] sm:$0xff] %v4843
    %5868 = vst [vmem:[#allocation5 + $0x16a8] sm:$0xff] %v4844
    %5869 = vst [vmem:[#allocation5 + $0x16b0] sm:$0xff] %v4845
    %5870 = vst [vmem:[#allocation5 + $0x16b8] sm:$0xff] %v4846
    %5871 = vst [vmem:[#allocation5 + $0x16c0] sm:$0xff] %v4847
    %5872 = vst [vmem:[#allocation5 + $0x16c8] sm:$0xff] %v4848
    %5873 = vst [vmem:[#allocation5 + $0x16d0] sm:$0xff] %v4849
    %5874 = vst [vmem:[#allocation5 + $0x16d8] sm:$0xff] %v4850
    %5875 = vst [vmem:[#allocation5 + $0x16e0] sm:$0xff] %v4851
    %5876 = vst [vmem:[#allocation5 + $0x16e8] sm:$0xff] %v4852
    %5877 = vst [vmem:[#allocation5 + $0x16f0] sm:$0xff] %v4853
    %5878 = vst [vmem:[#allocation5 + $0x16f8] sm:$0xff] %v4854
    %5879 = vst [vmem:[#allocation5 + $0x1700] sm:$0xff] %v4855
    %5880 = vst [vmem:[#allocation5 + $0x1708] sm:$0xff] %v4856
    %5881 = vst [vmem:[#allocation5 + $0x1710] sm:$0xff] %v4857
    %5882 = vst [vmem:[#allocation5 + $0x1718] sm:$0xff] %v4858
    %5883 = vst [vmem:[#allocation5 + $0x1720] sm:$0xff] %v4859
    %5884 = vst [vmem:[#allocation5 + $0x1728] sm:$0xff] %v4860
    %5885 = vst [vmem:[#allocation5 + $0x1730] sm:$0xff] %v4861
    %5886 = vst [vmem:[#allocation5 + $0x1738] sm:$0xff] %v4862
    %5887 = vst [vmem:[#allocation5 + $0x1740] sm:$0xff] %v4863
    %5888 = vst [vmem:[#allocation5 + $0x1748] sm:$0xff] %v4864
    %5889 = vst [vmem:[#allocation5 + $0x1750] sm:$0xff] %v4865
    %5890 = vst [vmem:[#allocation5 + $0x1758] sm:$0xff] %v4866
    %5891 = vst [vmem:[#allocation5 + $0x1760] sm:$0xff] %v4867
    %5892 = vst [vmem:[#allocation5 + $0x1768] sm:$0xff] %v4868
    %5893 = vst [vmem:[#allocation5 + $0x1770] sm:$0xff] %v4869
    %5894 = vst [vmem:[#allocation5 + $0x1778] sm:$0xff] %v4870
    %5895 = vst [vmem:[#allocation5 + $0x1780] sm:$0xff] %v4871
    %5896 = vst [vmem:[#allocation5 + $0x1788] sm:$0xff] %v4872
    %5897 = vst [vmem:[#allocation5 + $0x1790] sm:$0xff] %v4873
    %5898 = vst [vmem:[#allocation5 + $0x1798] sm:$0xff] %v4874
    %5899 = vst [vmem:[#allocation5 + $0x17a0] sm:$0xff] %v4875
    %5900 = vst [vmem:[#allocation5 + $0x17a8] sm:$0xff] %v4876
    %5901 = vst [vmem:[#allocation5 + $0x17b0] sm:$0xff] %v4877
    %5902 = vst [vmem:[#allocation5 + $0x17b8] sm:$0xff] %v4878
    %5903 = vst [vmem:[#allocation5 + $0x17c0] sm:$0xff] %v4879
    %5904 = vst [vmem:[#allocation5 + $0x17c8] sm:$0xff] %v4880
    %5905 = vst [vmem:[#allocation5 + $0x17d0] sm:$0xff] %v4881
    %5906 = vst [vmem:[#allocation5 + $0x17d8] sm:$0xff] %v4882
    %5907 = vst [vmem:[#allocation5 + $0x17e0] sm:$0xff] %v4883
    %5908 = vst [vmem:[#allocation5 + $0x17e8] sm:$0xff] %v4884
    %5909 = vst [vmem:[#allocation5 + $0x17f0] sm:$0xff] %v4885
    %5910 = vst [vmem:[#allocation5 + $0x17f8] sm:$0xff] %v4886
    %5911 = vst [vmem:[#allocation5 + $0x1800] sm:$0xff] %v4887
    %5912 = vst [vmem:[#allocation5 + $0x1808] sm:$0xff] %v4888
    %5913 = vst [vmem:[#allocation5 + $0x1810] sm:$0xff] %v4889
    %5914 = vst [vmem:[#allocation5 + $0x1818] sm:$0xff] %v4890
    %5915 = vst [vmem:[#allocation5 + $0x1820] sm:$0xff] %v4891
    %5916 = vst [vmem:[#allocation5 + $0x1828] sm:$0xff] %v4892
    %5917 = vst [vmem:[#allocation5 + $0x1830] sm:$0xff] %v4893
    %5918 = vst [vmem:[#allocation5 + $0x1838] sm:$0xff] %v4894
    %5919 = vst [vmem:[#allocation5 + $0x1840] sm:$0xff] %v4895
    %5920 = vst [vmem:[#allocation5 + $0x1848] sm:$0xff] %v4896
    %5921 = vst [vmem:[#allocation5 + $0x1850] sm:$0xff] %v4897
    %5922 = vst [vmem:[#allocation5 + $0x1858] sm:$0xff] %v4898
    %5923 = vst [vmem:[#allocation5 + $0x1860] sm:$0xff] %v4899
    %5924 = vst [vmem:[#allocation5 + $0x1868] sm:$0xff] %v4900
    %5925 = vst [vmem:[#allocation5 + $0x1870] sm:$0xff] %v4901
    %5926 = vst [vmem:[#allocation5 + $0x1878] sm:$0xff] %v4902
    %5927 = vst [vmem:[#allocation5 + $0x1880] sm:$0xff] %v4903
    %5928 = vst [vmem:[#allocation5 + $0x1888] sm:$0xff] %v4904
    %5929 = vst [vmem:[#allocation5 + $0x1890] sm:$0xff] %v4905
    %5930 = vst [vmem:[#allocation5 + $0x1898] sm:$0xff] %v4906
    %5931 = vst [vmem:[#allocation5 + $0x18a0] sm:$0xff] %v4907
    %5932 = vst [vmem:[#allocation5 + $0x18a8] sm:$0xff] %v4908
    %5933 = vst [vmem:[#allocation5 + $0x18b0] sm:$0xff] %v4909
    %5934 = vst [vmem:[#allocation5 + $0x18b8] sm:$0xff] %v4910
    %5935 = vst [vmem:[#allocation5 + $0x18c0] sm:$0xff] %v4911
    %5936 = vst [vmem:[#allocation5 + $0x18c8] sm:$0xff] %v4912
    %5937 = vst [vmem:[#allocation5 + $0x18d0] sm:$0xff] %v4913
    %5938 = vst [vmem:[#allocation5 + $0x18d8] sm:$0xff] %v4914
    %5939 = vst [vmem:[#allocation5 + $0x18e0] sm:$0xff] %v4915
    %5940 = vst [vmem:[#allocation5 + $0x18e8] sm:$0xff] %v4916
    %5941 = vst [vmem:[#allocation5 + $0x18f0] sm:$0xff] %v4917
    %5942 = vst [vmem:[#allocation5 + $0x18f8] sm:$0xff] %v4918
    %5943 = vst [vmem:[#allocation5 + $0x1900] sm:$0xff] %v4919
    %5944 = vst [vmem:[#allocation5 + $0x1908] sm:$0xff] %v4920
    %5945 = vst [vmem:[#allocation5 + $0x1910] sm:$0xff] %v4921
    %5946 = vst [vmem:[#allocation5 + $0x1918] sm:$0xff] %v4922
    %5947 = vst [vmem:[#allocation5 + $0x1920] sm:$0xff] %v4923
    %5948 = vst [vmem:[#allocation5 + $0x1928] sm:$0xff] %v4924
    %5949 = vst [vmem:[#allocation5 + $0x1930] sm:$0xff] %v4925
    %5950 = vst [vmem:[#allocation5 + $0x1938] sm:$0xff] %v4926
    %5951 = vst [vmem:[#allocation5 + $0x1940] sm:$0xff] %v4927
    %5952 = vst [vmem:[#allocation5 + $0x1948] sm:$0xff] %v4928
    %5953 = vst [vmem:[#allocation5 + $0x1950] sm:$0xff] %v4929
    %5954 = vst [vmem:[#allocation5 + $0x1958] sm:$0xff] %v4930
    %5955 = vst [vmem:[#allocation5 + $0x1960] sm:$0xff] %v4931
    %5956 = vst [vmem:[#allocation5 + $0x1968] sm:$0xff] %v4932
    %5957 = vst [vmem:[#allocation5 + $0x1970] sm:$0xff] %v4933
    %5958 = vst [vmem:[#allocation5 + $0x1978] sm:$0xff] %v4934
    %5959 = vst [vmem:[#allocation5 + $0x1980] sm:$0xff] %v4935
    %5960 = vst [vmem:[#allocation5 + $0x1988] sm:$0xff] %v4936
    %5961 = vst [vmem:[#allocation5 + $0x1990] sm:$0xff] %v4937
    %5962 = vst [vmem:[#allocation5 + $0x1998] sm:$0xff] %v4938
    %5963 = vst [vmem:[#allocation5 + $0x19a0] sm:$0xff] %v4939
    %5964 = vst [vmem:[#allocation5 + $0x19a8] sm:$0xff] %v4940
    %5965 = vst [vmem:[#allocation5 + $0x19b0] sm:$0xff] %v4941
    %5966 = vst [vmem:[#allocation5 + $0x19b8] sm:$0xff] %v4942
    %5967 = vst [vmem:[#allocation5 + $0x19c0] sm:$0xff] %v4943
    %5968 = vst [vmem:[#allocation5 + $0x19c8] sm:$0xff] %v4944
    %5969 = vst [vmem:[#allocation5 + $0x19d0] sm:$0xff] %v4945
    %5970 = vst [vmem:[#allocation5 + $0x19d8] sm:$0xff] %v4946
    %5971 = vst [vmem:[#allocation5 + $0x19e0] sm:$0xff] %v4947
    %5972 = vst [vmem:[#allocation5 + $0x19e8] sm:$0xff] %v4948
    %5973 = vst [vmem:[#allocation5 + $0x19f0] sm:$0xff] %v4949
    %5974 = vst [vmem:[#allocation5 + $0x19f8] sm:$0xff] %v4950
    %5975 = vst [vmem:[#allocation5 + $0x1a00] sm:$0xff] %v4951
    %5976 = vst [vmem:[#allocation5 + $0x1a08] sm:$0xff] %v4952
    %5977 = vst [vmem:[#allocation5 + $0x1a10] sm:$0xff] %v4953
    %5978 = vst [vmem:[#allocation5 + $0x1a18] sm:$0xff] %v4954
    %5979 = vst [vmem:[#allocation5 + $0x1a20] sm:$0xff] %v4955
    %5980 = vst [vmem:[#allocation5 + $0x1a28] sm:$0xff] %v4956
    %5981 = vst [vmem:[#allocation5 + $0x1a30] sm:$0xff] %v4957
    %5982 = vst [vmem:[#allocation5 + $0x1a38] sm:$0xff] %v4958
    %5983 = vst [vmem:[#allocation5 + $0x1a40] sm:$0xff] %v4959
    %5984 = vst [vmem:[#allocation5 + $0x1a48] sm:$0xff] %v4960
    %5985 = vst [vmem:[#allocation5 + $0x1a50] sm:$0xff] %v4961
    %5986 = vst [vmem:[#allocation5 + $0x1a58] sm:$0xff] %v4962
    %5987 = vst [vmem:[#allocation5 + $0x1a60] sm:$0xff] %v4963
    %5988 = vst [vmem:[#allocation5 + $0x1a68] sm:$0xff] %v4964
    %5989 = vst [vmem:[#allocation5 + $0x1a70] sm:$0xff] %v4965
    %5990 = vst [vmem:[#allocation5 + $0x1a78] sm:$0xff] %v4966
    %5991 = vst [vmem:[#allocation5 + $0x1a80] sm:$0xff] %v4967
    %5992 = vst [vmem:[#allocation5 + $0x1a88] sm:$0xff] %v4968
    %5993 = vst [vmem:[#allocation5 + $0x1a90] sm:$0xff] %v4969
    %5994 = vst [vmem:[#allocation5 + $0x1a98] sm:$0xff] %v4970
    %5995 = vst [vmem:[#allocation5 + $0x1aa0] sm:$0xff] %v4971
    %5996 = vst [vmem:[#allocation5 + $0x1aa8] sm:$0xff] %v4972
    %5997 = vst [vmem:[#allocation5 + $0x1ab0] sm:$0xff] %v4973
    %5998 = vst [vmem:[#allocation5 + $0x1ab8] sm:$0xff] %v4974
    %5999 = vst [vmem:[#allocation5 + $0x1ac0] sm:$0xff] %v4975
    %6000 = vst [vmem:[#allocation5 + $0x1ac8] sm:$0xff] %v4976
    %6001 = vst [vmem:[#allocation5 + $0x1ad0] sm:$0xff] %v4977
    %6002 = vst [vmem:[#allocation5 + $0x1ad8] sm:$0xff] %v4978
    %6003 = vst [vmem:[#allocation5 + $0x1ae0] sm:$0xff] %v4979
    %6004 = vst [vmem:[#allocation5 + $0x1ae8] sm:$0xff] %v4980
    %6005 = vst [vmem:[#allocation5 + $0x1af0] sm:$0xff] %v4981
    %6006 = vst [vmem:[#allocation5 + $0x1af8] sm:$0xff] %v4982
    %6007 = vst [vmem:[#allocation5 + $0x1b00] sm:$0xff] %v4983
    %6008 = vst [vmem:[#allocation5 + $0x1b08] sm:$0xff] %v4984
    %6009 = vst [vmem:[#allocation5 + $0x1b10] sm:$0xff] %v4985
    %6010 = vst [vmem:[#allocation5 + $0x1b18] sm:$0xff] %v4986
    %6011 = vst [vmem:[#allocation5 + $0x1b20] sm:$0xff] %v4987
    %6012 = vst [vmem:[#allocation5 + $0x1b28] sm:$0xff] %v4988
    %6013 = vst [vmem:[#allocation5 + $0x1b30] sm:$0xff] %v4989
    %6014 = vst [vmem:[#allocation5 + $0x1b38] sm:$0xff] %v4990
    %6015 = vst [vmem:[#allocation5 + $0x1b40] sm:$0xff] %v4991
    %6016 = vst [vmem:[#allocation5 + $0x1b48] sm:$0xff] %v4992
    %6017 = vst [vmem:[#allocation5 + $0x1b50] sm:$0xff] %v4993
    %6018 = vst [vmem:[#allocation5 + $0x1b58] sm:$0xff] %v4994
    %6019 = vst [vmem:[#allocation5 + $0x1b60] sm:$0xff] %v4995
    %6020 = vst [vmem:[#allocation5 + $0x1b68] sm:$0xff] %v4996
    %6021 = vst [vmem:[#allocation5 + $0x1b70] sm:$0xff] %v4997
    %6022 = vst [vmem:[#allocation5 + $0x1b78] sm:$0xff] %v4998
    %6023 = vst [vmem:[#allocation5 + $0x1b80] sm:$0xff] %v4999
    %6024 = vst [vmem:[#allocation5 + $0x1b88] sm:$0xff] %v5000
    %6025 = vst [vmem:[#allocation5 + $0x1b90] sm:$0xff] %v5001
    %6026 = vst [vmem:[#allocation5 + $0x1b98] sm:$0xff] %v5002
    %6027 = vst [vmem:[#allocation5 + $0x1ba0] sm:$0xff] %v5003
    %6028 = vst [vmem:[#allocation5 + $0x1ba8] sm:$0xff] %v5004
    %6029 = vst [vmem:[#allocation5 + $0x1bb0] sm:$0xff] %v5005
    %6030 = vst [vmem:[#allocation5 + $0x1bb8] sm:$0xff] %v5006
    %6031 = vst [vmem:[#allocation5 + $0x1bc0] sm:$0xff] %v5007
    %6032 = vst [vmem:[#allocation5 + $0x1bc8] sm:$0xff] %v5008
    %6033 = vst [vmem:[#allocation5 + $0x1bd0] sm:$0xff] %v5009
    %6034 = vst [vmem:[#allocation5 + $0x1bd8] sm:$0xff] %v5010
    %6035 = vst [vmem:[#allocation5 + $0x1be0] sm:$0xff] %v5011
    %6036 = vst [vmem:[#allocation5 + $0x1be8] sm:$0xff] %v5012
    %6037 = vst [vmem:[#allocation5 + $0x1bf0] sm:$0xff] %v5013
    %6038 = vst [vmem:[#allocation5 + $0x1bf8] sm:$0xff] %v5014
    %6039 = vst [vmem:[#allocation5 + $0x1c00] sm:$0xff] %v5015
    %6040 = vst [vmem:[#allocation5 + $0x1c08] sm:$0xff] %v5016
    %6041 = vst [vmem:[#allocation5 + $0x1c10] sm:$0xff] %v5017
    %6042 = vst [vmem:[#allocation5 + $0x1c18] sm:$0xff] %v5018
    %6043 = vst [vmem:[#allocation5 + $0x1c20] sm:$0xff] %v5019
    %6044 = vst [vmem:[#allocation5 + $0x1c28] sm:$0xff] %v5020
    %6045 = vst [vmem:[#allocation5 + $0x1c30] sm:$0xff] %v5021
    %6046 = vst [vmem:[#allocation5 + $0x1c38] sm:$0xff] %v5022
    %6047 = vst [vmem:[#allocation5 + $0x1c40] sm:$0xff] %v5023
    %6048 = vst [vmem:[#allocation5 + $0x1c48] sm:$0xff] %v5024
    %6049 = vst [vmem:[#allocation5 + $0x1c50] sm:$0xff] %v5025
    %6050 = vst [vmem:[#allocation5 + $0x1c58] sm:$0xff] %v5026
    %6051 = vst [vmem:[#allocation5 + $0x1c60] sm:$0xff] %v5027
    %6052 = vst [vmem:[#allocation5 + $0x1c68] sm:$0xff] %v5028
    %6053 = vst [vmem:[#allocation5 + $0x1c70] sm:$0xff] %v5029
    %6054 = vst [vmem:[#allocation5 + $0x1c78] sm:$0xff] %v5030
    %6055 = vst [vmem:[#allocation5 + $0x1c80] sm:$0xff] %v5031
    %6056 = vst [vmem:[#allocation5 + $0x1c88] sm:$0xff] %v5032
    %6057 = vst [vmem:[#allocation5 + $0x1c90] sm:$0xff] %v5033
    %6058 = vst [vmem:[#allocation5 + $0x1c98] sm:$0xff] %v5034
    %6059 = vst [vmem:[#allocation5 + $0x1ca0] sm:$0xff] %v5035
    %6060 = vst [vmem:[#allocation5 + $0x1ca8] sm:$0xff] %v5036
    %6061 = vst [vmem:[#allocation5 + $0x1cb0] sm:$0xff] %v5037
    %6062 = vst [vmem:[#allocation5 + $0x1cb8] sm:$0xff] %v5038
    %6063 = vst [vmem:[#allocation5 + $0x1cc0] sm:$0xff] %v5039
    %6064 = vst [vmem:[#allocation5 + $0x1cc8] sm:$0xff] %v5040
    %6065 = vst [vmem:[#allocation5 + $0x1cd0] sm:$0xff] %v5041
    %6066 = vst [vmem:[#allocation5 + $0x1cd8] sm:$0xff] %v5042
    %6067 = vst [vmem:[#allocation5 + $0x1ce0] sm:$0xff] %v5043
    %6068 = vst [vmem:[#allocation5 + $0x1ce8] sm:$0xff] %v5044
    %6069 = vst [vmem:[#allocation5 + $0x1cf0] sm:$0xff] %v5045
    %6070 = vst [vmem:[#allocation5 + $0x1cf8] sm:$0xff] %v5046
    %6071 = vst [vmem:[#allocation5 + $0x1d00] sm:$0xff] %v5047
    %6072 = vst [vmem:[#allocation5 + $0x1d08] sm:$0xff] %v5048
    %6073 = vst [vmem:[#allocation5 + $0x1d10] sm:$0xff] %v5049
    %6074 = vst [vmem:[#allocation5 + $0x1d18] sm:$0xff] %v5050
    %6075 = vst [vmem:[#allocation5 + $0x1d20] sm:$0xff] %v5051
    %6076 = vst [vmem:[#allocation5 + $0x1d28] sm:$0xff] %v5052
    %6077 = vst [vmem:[#allocation5 + $0x1d30] sm:$0xff] %v5053
    %6078 = vst [vmem:[#allocation5 + $0x1d38] sm:$0xff] %v5054
    %6079 = vst [vmem:[#allocation5 + $0x1d40] sm:$0xff] %v5055
    %6080 = vst [vmem:[#allocation5 + $0x1d48] sm:$0xff] %v5056
    %6081 = vst [vmem:[#allocation5 + $0x1d50] sm:$0xff] %v5057
    %6082 = vst [vmem:[#allocation5 + $0x1d58] sm:$0xff] %v5058
    %6083 = vst [vmem:[#allocation5 + $0x1d60] sm:$0xff] %v5059
    %6084 = vst [vmem:[#allocation5 + $0x1d68] sm:$0xff] %v5060
    %6085 = vst [vmem:[#allocation5 + $0x1d70] sm:$0xff] %v5061
    %6086 = vst [vmem:[#allocation5 + $0x1d78] sm:$0xff] %v5062
    %6087 = vst [vmem:[#allocation5 + $0x1d80] sm:$0xff] %v5063
    %6088 = vst [vmem:[#allocation5 + $0x1d88] sm:$0xff] %v5064
    %6089 = vst [vmem:[#allocation5 + $0x1d90] sm:$0xff] %v5065
    %6090 = vst [vmem:[#allocation5 + $0x1d98] sm:$0xff] %v5066
    %6091 = vst [vmem:[#allocation5 + $0x1da0] sm:$0xff] %v5067
    %6092 = vst [vmem:[#allocation5 + $0x1da8] sm:$0xff] %v5068
    %6093 = vst [vmem:[#allocation5 + $0x1db0] sm:$0xff] %v5069
    %6094 = vst [vmem:[#allocation5 + $0x1db8] sm:$0xff] %v5070
    %6095 = vst [vmem:[#allocation5 + $0x1dc0] sm:$0xff] %v5071
    %6096 = vst [vmem:[#allocation5 + $0x1dc8] sm:$0xff] %v5072
    %6097 = vst [vmem:[#allocation5 + $0x1dd0] sm:$0xff] %v5073
    %6098 = vst [vmem:[#allocation5 + $0x1dd8] sm:$0xff] %v5074
    %6099 = vst [vmem:[#allocation5 + $0x1de0] sm:$0xff] %v5075
    %6100 = vst [vmem:[#allocation5 + $0x1de8] sm:$0xff] %v5076
    %6101 = vst [vmem:[#allocation5 + $0x1df0] sm:$0xff] %v5077
    %6102 = vst [vmem:[#allocation5 + $0x1df8] sm:$0xff] %v5078
    %6103 = vst [vmem:[#allocation5 + $0x1e00] sm:$0xff] %v5079
    %6104 = vst [vmem:[#allocation5 + $0x1e08] sm:$0xff] %v5080
    %6105 = vst [vmem:[#allocation5 + $0x1e10] sm:$0xff] %v5081
    %6106 = vst [vmem:[#allocation5 + $0x1e18] sm:$0xff] %v5082
    %6107 = vst [vmem:[#allocation5 + $0x1e20] sm:$0xff] %v5083
    %6108 = vst [vmem:[#allocation5 + $0x1e28] sm:$0xff] %v5084
    %6109 = vst [vmem:[#allocation5 + $0x1e30] sm:$0xff] %v5085
    %6110 = vst [vmem:[#allocation5 + $0x1e38] sm:$0xff] %v5086
    %6111 = vst [vmem:[#allocation5 + $0x1e40] sm:$0xff] %v5087
    %6112 = vst [vmem:[#allocation5 + $0x1e48] sm:$0xff] %v5088
    %6113 = vst [vmem:[#allocation5 + $0x1e50] sm:$0xff] %v5089
    %6114 = vst [vmem:[#allocation5 + $0x1e58] sm:$0xff] %v5090
    %6115 = vst [vmem:[#allocation5 + $0x1e60] sm:$0xff] %v5091
    %6116 = vst [vmem:[#allocation5 + $0x1e68] sm:$0xff] %v5092
    %6117 = vst [vmem:[#allocation5 + $0x1e70] sm:$0xff] %v5093
    %6118 = vst [vmem:[#allocation5 + $0x1e78] sm:$0xff] %v5094
    %6119 = vst [vmem:[#allocation5 + $0x1e80] sm:$0xff] %v5095
    %6120 = vst [vmem:[#allocation5 + $0x1e88] sm:$0xff] %v5096
    %6121 = vst [vmem:[#allocation5 + $0x1e90] sm:$0xff] %v5097
    %6122 = vst [vmem:[#allocation5 + $0x1e98] sm:$0xff] %v5098
    %6123 = vst [vmem:[#allocation5 + $0x1ea0] sm:$0xff] %v5099
    %6124 = vst [vmem:[#allocation5 + $0x1ea8] sm:$0xff] %v5100
    %6125 = vst [vmem:[#allocation5 + $0x1eb0] sm:$0xff] %v5101
    %6126 = vst [vmem:[#allocation5 + $0x1eb8] sm:$0xff] %v5102
    %6127 = vst [vmem:[#allocation5 + $0x1ec0] sm:$0xff] %v5103
    %6128 = vst [vmem:[#allocation5 + $0x1ec8] sm:$0xff] %v5104
    %6129 = vst [vmem:[#allocation5 + $0x1ed0] sm:$0xff] %v5105
    %6130 = vst [vmem:[#allocation5 + $0x1ed8] sm:$0xff] %v5106
    %6131 = vst [vmem:[#allocation5 + $0x1ee0] sm:$0xff] %v5107
    %6132 = vst [vmem:[#allocation5 + $0x1ee8] sm:$0xff] %v5108
    %6133 = vst [vmem:[#allocation5 + $0x1ef0] sm:$0xff] %v5109
    %6134 = vst [vmem:[#allocation5 + $0x1ef8] sm:$0xff] %v5110
    %6135 = vst [vmem:[#allocation5 + $0x1f00] sm:$0xff] %v5111
    %6136 = vst [vmem:[#allocation5 + $0x1f08] sm:$0xff] %v5112
    %6137 = vst [vmem:[#allocation5 + $0x1f10] sm:$0xff] %v5113
    %6138 = vst [vmem:[#allocation5 + $0x1f18] sm:$0xff] %v5114
    %6139 = vst [vmem:[#allocation5 + $0x1f20] sm:$0xff] %v5115
    %6140 = vst [vmem:[#allocation5 + $0x1f28] sm:$0xff] %v5116
    %6141 = vst [vmem:[#allocation5 + $0x1f30] sm:$0xff] %v5117
    %6142 = vst [vmem:[#allocation5 + $0x1f38] sm:$0xff] %v5118
    %6143 = vst [vmem:[#allocation5 + $0x1f40] sm:$0xff] %v5119
    %6144 = vst [vmem:[#allocation5 + $0x1f48] sm:$0xff] %v5120
    %6145 = vst [vmem:[#allocation5 + $0x1f50] sm:$0xff] %v5121
    %6146 = vst [vmem:[#allocation5 + $0x1f58] sm:$0xff] %v5122
    %6147 = vst [vmem:[#allocation5 + $0x1f60] sm:$0xff] %v5123
    %6148 = vst [vmem:[#allocation5 + $0x1f68] sm:$0xff] %v5124
    %6149 = vst [vmem:[#allocation5 + $0x1f70] sm:$0xff] %v5125
    %6150 = vst [vmem:[#allocation5 + $0x1f78] sm:$0xff] %v5126
    %6151 = vst [vmem:[#allocation5 + $0x1f80] sm:$0xff] %v5127
    %6152 = vst [vmem:[#allocation5 + $0x1f88] sm:$0xff] %v5128
    %6153 = vst [vmem:[#allocation5 + $0x1f90] sm:$0xff] %v5129
    %6154 = vst [vmem:[#allocation5 + $0x1f98] sm:$0xff] %v5130
    %6155 = vst [vmem:[#allocation5 + $0x1fa0] sm:$0xff] %v5131
    %6156 = vst [vmem:[#allocation5 + $0x1fa8] sm:$0xff] %v5132
    %6157 = vst [vmem:[#allocation5 + $0x1fb0] sm:$0xff] %v5133
    %6158 = vst [vmem:[#allocation5 + $0x1fb8] sm:$0xff] %v5134
    %6159 = vst [vmem:[#allocation5 + $0x1fc0] sm:$0xff] %v5135
    %6160 = vst [vmem:[#allocation5 + $0x1fc8] sm:$0xff] %v5136
    %6161 = vst [vmem:[#allocation5 + $0x1fd0] sm:$0xff] %v5137
    %6162 = vst [vmem:[#allocation5 + $0x1fd8] sm:$0xff] %v5138
    %6163 = vst [vmem:[#allocation5 + $0x1fe0] sm:$0xff] %v5139
    %6164 = vst [vmem:[#allocation5 + $0x1fe8] sm:$0xff] %v5140
    %6165 = vst [vmem:[#allocation5 + $0x1ff0] sm:$0xff] %v5141
    %6166 = vst [vmem:[#allocation5 + $0x1ff8] sm:$0xff] %v5142
    // Predicated region
    $region10: #{tpu_custom_call.1} parent=1 // pred_check
      _
    $region11: #{tpu_custom_call.1} parent=1 // pred_check_branch
      %6168 = sbr.rel (0) target = $region13
    $region12: #{tpu_custom_call.1} parent=1 // pred_region
      %s6170 = ssub.s32 131072, 131072
      %6171 = vsyncadd [#allocation4], %s6170
      %s6172 = sshll.u32 [#allocation5], 4
      %s6173 = int_to_ptr.vmem [resolvable:$true] %s6172
      %6178 = dma.vmem_to_hbm [thread:$0]  %s6173, 131072, %s1, [#allocation4], 2048, 2048, 128
    $region13: #{tpu_custom_call.1} parent=1 // pred_fallthru
      _
    // Predicated region
    $region14: #{tpu_custom_call.1} parent=1 // pred_check
      _
    $region15: #{tpu_custom_call.1} parent=1 // pred_check_branch
      %6180 = sbr.rel (0) target = $region17
    $region16: #{tpu_custom_call.1} parent=1 // pred_region
      %6181 = dma.done [#allocation4], 131072
    $region17: #{tpu_custom_call.1} parent=1 // pred_fallthru
      _
    %6182 = vsyncpa [#allocation3], 1
    %6183 = vsyncpa [#allocation4], 1

</llo_original>
